<compile_context>
chip_gen: v7x
topology: tpu7x:2x2x1
jax: 0.10.0
libtpu: 0.0.40
codegen_flags: <defaults>
</compile_context>

<pallas_src>
import functools

import jax
import jax.numpy as jnp
import numpy as np
from jax.experimental import pallas as pl
from jax.experimental.pallas import tpu as pltpu


def _erf_poly(x):
    # Abramowitz & Stegun 7.1.26 rational approximation (max abs err ~1.5e-7).
    # Uses only exp / mul / add / div / select, all natively supported by Mosaic.
    a1, a2, a3, a4, a5 = 0.254829592, -0.284496736, 1.421413741, -1.453152027, 1.061405429
    p = 0.3275911
    ax = jnp.abs(x)
    t = 1.0 / (1.0 + p * ax)
    poly = ((((a5 * t + a4) * t + a3) * t + a2) * t + a1) * t
    y = 1.0 - poly * jnp.exp(-ax * ax)
    return jnp.where(x >= 0, y, -y)


def _gelu_exact(x):
    # Exact (erf-based) GELU to match torch.nn.GELU() default.
    return 0.5 * x * (1.0 + _erf_poly(x * 0.7071067811865476))


def _transformer_layer_kernel(x_ref, wqkv_ref, bqkv_ref, wo_ref, bo_ref,
                              ln1_g_ref, ln1_b_ref, ln2_g_ref, ln2_b_ref,
                              w1_ref, b1_ref, w2_ref, b2_ref,
                              o_ref, *, num_heads, eps):
    R, S, H = x_ref.shape
    dk = H // num_heads
    RS = R * S

    # Input rows for this block, flattened to a lane-friendly (R*S, H) slab.
    x2 = x_ref[...].reshape(RS, H).astype(jnp.float32)

    # ---- LayerNorm 1 (over H) ----
    mu = jnp.mean(x2, axis=-1, keepdims=True)
    xc = x2 - mu
    var = jnp.mean(xc * xc, axis=-1, keepdims=True)
    y = xc * jax.lax.rsqrt(var + eps) * ln1_g_ref[...] + ln1_b_ref[...]

    # ---- fused Q/K/V projection (1/sqrt(dk) already folded into the Q columns) ----
    qkv = jnp.dot(y, wqkv_ref[...], preferred_element_type=jnp.float32) + bqkv_ref[...]
    q = qkv[:, 0:H]
    k = qkv[:, H:2 * H]
    v = qkv[:, 2 * H:3 * H]

    # ---- per-head attention, batched over the R rows of this block ----
    # Output projection is accumulated per head:  ctx @ Wo == sum_h ctx_h @ Wo[h*dk:(h+1)*dk]
    # (no concatenate / no per-head output scratch).
    wo = wo_ref[...]
    acc = jnp.zeros((RS, H), jnp.float32)
    for h in range(num_heads):           # static, tiny loop over heads
        lo = h * dk
        hi = lo + dk
        qh = q[:, lo:hi].reshape(R, S, dk)
        kh = k[:, lo:hi].reshape(R, S, dk)
        vh = v[:, lo:hi].reshape(R, S, dk)
        s = jnp.einsum('rsd,rtd->rst', qh, kh,
                       preferred_element_type=jnp.float32)        # (R, S, S)
        s = s - jnp.max(s, axis=-1, keepdims=True)
        e = jnp.exp(s)
        denom = jnp.sum(e, axis=-1, keepdims=True)
        p = e * pl.reciprocal(denom, approx=True)                 # softmax(dim=-1)
        ctx = jnp.einsum('rst,rtd->rsd', p, vh,
                         preferred_element_type=jnp.float32)      # (R, S, dk)
        acc = acc + jnp.dot(ctx.reshape(RS, dk), wo[lo:hi, :],
                            preferred_element_type=jnp.float32)
    att = acc + bo_ref[...]

    # ---- residual 1 ----
    z = x2 + att

    # ---- LayerNorm 2 ----
    mu2 = jnp.mean(z, axis=-1, keepdims=True)
    zc = z - mu2
    var2 = jnp.mean(zc * zc, axis=-1, keepdims=True)
    y2 = zc * jax.lax.rsqrt(var2 + eps) * ln2_g_ref[...] + ln2_b_ref[...]

    # ---- FFN: Linear -> GELU -> Linear ----
    h1 = jnp.dot(y2, w1_ref[...], preferred_element_type=jnp.float32) + b1_ref[...]
    h1 = _gelu_exact(h1)
    h2 = jnp.dot(h1, w2_ref[...], preferred_element_type=jnp.float32) + b2_ref[...]

    # ---- residual 2 + store ----
    out = z + h2
    o_ref[...] = out.reshape(R, S, H).astype(o_ref.dtype)


def transformer_layer_hop_forward(x, raw_params, *, num_heads,
                                  rows_per_block=256, eps=1e-5):
    """x: (N0, B, S, H) float32.  Returns (N0, B, S, H).

    raw_params = (wq, bq, wk, bk, wv, bv, wo, bo,
                  ln1_g, ln1_b, ln2_g, ln2_b, w1, b1, w2, b2)
    with linear weights stored as (in, out) and biases / LN params as (1, dim).
    """
    (wq, bq, wk, bk, wv, bv, wo, bo,
     ln1_g, ln1_b, ln2_g, ln2_b, w1, b1, w2, b2) = raw_params

    N0, B, S, H = x.shape
    F = w1.shape[1]
    dk = H // num_heads
    scale = dk ** (-0.5)

    # Fold the attention scale into the Q projection and fuse Q|K|V -> one matmul.
    wqkv = jnp.concatenate([wq * scale, wk, wv], axis=1)     # (H, 3H)
    bqkv = jnp.concatenate([bq * scale, bk, bv], axis=1)     # (1, 3H)

    NR = N0 * B
    R = int(min(rows_per_block, NR))
    NR_pad = ((NR + R - 1) // R) * R

    xf = x.reshape(NR, S, H)
    if NR_pad != NR:
        # Zero-pad the tail block; padded rows are numerically benign (LN eps keeps
        # them finite) and are sliced off below.
        xf = jnp.pad(xf, ((0, NR_pad - NR), (0, 0), (0, 0)))

    row_spec = pl.BlockSpec((R, S, H), lambda n: (n, 0, 0))

    def full(shape):
        return pl.BlockSpec(shape, lambda n: (0, 0))

    kernel = functools.partial(_transformer_layer_kernel,
                               num_heads=num_heads, eps=eps)

    out_flat = pl.pallas_call(
        kernel,
        out_shape=jax.ShapeDtypeStruct((NR_pad, S, H), x.dtype),
        grid_spec=pltpu.PrefetchScalarGridSpec(
            num_scalar_prefetch=0,
            grid=(NR_pad // R,),
            in_specs=[row_spec,
                      full((H, 3 * H)), full((1, 3 * H)),     # fused QKV
                      full((H, H)), full((1, H)),             # output projection
                      full((1, H)), full((1, H)),             # LN1 gamma/beta
                      full((1, H)), full((1, H)),             # LN2 gamma/beta
                      full((H, F)), full((1, F)),             # FFN layer1
                      full((F, H)), full((1, H))],            # FFN layer2
            out_specs=row_spec),
        compiler_params=pltpu.CompilerParams(
            dimension_semantics=("parallel",)),
    )(xf, wqkv, bqkv, wo, bo, ln1_g, ln1_b, ln2_g, ln2_b, w1, b1, w2, b2)

    return out_flat[:NR].reshape(N0, B, S, H)


def _reference(x, raw_params, *, num_heads, eps=1e-5):
    """Pure-JAX reference mirroring the PyTorch TransformerLayer_hop forward (eval)."""
    (wq, bq, wk, bk, wv, bv, wo, bo,
     ln1_g, ln1_b, ln2_g, ln2_b, w1, b1, w2, b2) = raw_params
    N0, B, S, H = x.shape
    dk = H // num_heads
    scale = dk ** (-0.5)

    def ln(u, g, b):
        mu = jnp.mean(u, axis=-1, keepdims=True)
        var = jnp.mean((u - mu) ** 2, axis=-1, keepdims=True)
        return (u - mu) / jnp.sqrt(var + eps) * g + b

    def lin(u, w, bb):
        return jnp.einsum('...h,ho->...o', u, w) + bb

    y = ln(x, ln1_g, ln1_b)
    q = lin(y, wq, bq).reshape(N0, B, S, num_heads, dk)
    k = lin(y, wk, bk).reshape(N0, B, S, num_heads, dk)
    v = lin(y, wv, bv).reshape(N0, B, S, num_heads, dk)
    q = jnp.moveaxis(q, 3, 2) * scale          # (N0, B, nh, S, dk)
    k = jnp.moveaxis(k, 3, 2)
    v = jnp.moveaxis(v, 3, 2)
    s = jnp.einsum('nbhsd,nbhtd->nbhst', q, k)
    p = jax.nn.softmax(s, axis=-1)
    c = jnp.einsum('nbhst,nbhtd->nbhsd', p, v)
    c = jnp.moveaxis(c, 2, 3).reshape(N0, B, S, H)
    att = lin(c, wo, bo)
    z = x + att
    y2 = ln(z, ln2_g, ln2_b)
    h1 = jax.nn.gelu(lin(y2, w1, b1), approximate=False)
    return z + lin(h1, w2, b2)


if __name__ == "__main__":
    # Small shapes consistent with the module: x is (hops, batch, seq, hidden).
    N0, B, S, H = 4, 4, 8, 32
    F = 64
    num_heads = 4

    key = jax.random.PRNGKey(0)
    ks = jax.random.split(key, 20)

    def init_linear(kw, kb, fan_in, fan_out):
        bound = 1.0 / np.sqrt(fan_in)
        w = jax.random.uniform(kw, (fan_in, fan_out), jnp.float32, -bound, bound)
        bb = jax.random.uniform(kb, (1, fan_out), jnp.float32, -bound, bound)
        return w, bb

    x = jax.random.normal(ks[0], (N0, B, S, H), dtype=jnp.float32)

    wq, bq = init_linear(ks[1], ks[2], H, H)
    wk, bk = init_linear(ks[3], ks[4], H, H)
    wv, bv = init_linear(ks[5], ks[6], H, H)
    wo, bo = init_linear(ks[7], ks[8], H, H)
    w1, b1 = init_linear(ks[9], ks[10], H, F)
    w2, b2 = init_linear(ks[11], ks[12], F, H)
    ln1_g = 1.0 + 0.1 * jax.random.normal(ks[13], (1, H), jnp.float32)
    ln1_b = 0.1 * jax.random.normal(ks[14], (1, H), jnp.float32)
    ln2_g = 1.0 + 0.1 * jax.random.normal(ks[15], (1, H), jnp.float32)
    ln2_b = 0.1 * jax.random.normal(ks[16], (1, H), jnp.float32)

    raw_params = (wq, bq, wk, bk, wv, bv, wo, bo,
                  ln1_g, ln1_b, ln2_g, ln2_b, w1, b1, w2, b2)

    # rows_per_block=8 -> 2 grid steps for this tiny example (exercises the
    # pipeline and both v7x TensorCores); default is 256 for realistic sizes.
    out = transformer_layer_hop_forward(x, raw_params, num_heads=num_heads,
                                        rows_per_block=8)
    out = jax.block_until_ready(out)

    ref = jax.block_until_ready(_reference(x, raw_params, num_heads=num_heads))

    # Tolerance relaxed (vs 1e-5) for the EUP approximate-reciprocal softmax
    # normalization and the polynomial erf used for exact GELU in-kernel.
    np.testing.assert_allclose(np.asarray(out), np.asarray(ref),
                               rtol=1e-2, atol=1e-2)

    print("KERNEL_OK")
</pallas_src>

<mosaic_0001>
module attributes {stable_mosaic.version = 11 : i64} {
  func.func @_transformer_layer_kernel(%arg0: i32, %arg1: memref<8x8x32xf32, #tpu.memory_space<vmem>>, %arg2: memref<32x96xf32, #tpu.memory_space<vmem>>, %arg3: memref<1x96xf32, #tpu.memory_space<vmem>>, %arg4: memref<32x32xf32, #tpu.memory_space<vmem>>, %arg5: memref<1x32xf32, #tpu.memory_space<vmem>>, %arg6: memref<1x32xf32, #tpu.memory_space<vmem>>, %arg7: memref<1x32xf32, #tpu.memory_space<vmem>>, %arg8: memref<1x32xf32, #tpu.memory_space<vmem>>, %arg9: memref<1x32xf32, #tpu.memory_space<vmem>>, %arg10: memref<32x64xf32, #tpu.memory_space<vmem>>, %arg11: memref<1x64xf32, #tpu.memory_space<vmem>>, %arg12: memref<64x32xf32, #tpu.memory_space<vmem>>, %arg13: memref<1x32xf32, #tpu.memory_space<vmem>>, %arg14: memref<8x8x32xf32, #tpu.memory_space<vmem>>) attributes {dimension_semantics = [#tpu.dimension_semantics<parallel>], iteration_bounds = array<i64: 2>, scalar_prefetch = 0 : i64, scratch_operands = 0 : i64, tpu.core_type = #tpu.core_type<tc>, window_params = [{transform_indices = @transform_0, window_bounds = array<i64: 8, 8, 32>}, {pipeline_mode = #tpu.pipeline_mode<synchronous>, transform_indices = @transform_1, window_bounds = array<i64: 32, 96>}, {pipeline_mode = #tpu.pipeline_mode<synchronous>, transform_indices = @transform_2, window_bounds = array<i64: 1, 96>}, {pipeline_mode = #tpu.pipeline_mode<synchronous>, transform_indices = @transform_3, window_bounds = array<i64: 32, 32>}, {pipeline_mode = #tpu.pipeline_mode<synchronous>, transform_indices = @transform_4, window_bounds = array<i64: 1, 32>}, {pipeline_mode = #tpu.pipeline_mode<synchronous>, transform_indices = @transform_5, window_bounds = array<i64: 1, 32>}, {pipeline_mode = #tpu.pipeline_mode<synchronous>, transform_indices = @transform_6, window_bounds = array<i64: 1, 32>}, {pipeline_mode = #tpu.pipeline_mode<synchronous>, transform_indices = @transform_7, window_bounds = array<i64: 1, 32>}, {pipeline_mode = #tpu.pipeline_mode<synchronous>, transform_indices = @transform_8, window_bounds = array<i64: 1, 32>}, {pipeline_mode = #tpu.pipeline_mode<synchronous>, transform_indices = @transform_9, window_bounds = array<i64: 32, 64>}, {pipeline_mode = #tpu.pipeline_mode<synchronous>, transform_indices = @transform_10, window_bounds = array<i64: 1, 64>}, {pipeline_mode = #tpu.pipeline_mode<synchronous>, transform_indices = @transform_11, window_bounds = array<i64: 64, 32>}, {pipeline_mode = #tpu.pipeline_mode<synchronous>, transform_indices = @transform_12, window_bounds = array<i64: 1, 32>}, {transform_indices = @transform_13, window_bounds = array<i64: 8, 8, 32>}]} {
    %c0 = arith.constant 0 : index
    %c0_0 = arith.constant 0 : index
    %c0_1 = arith.constant 0 : index
    %0 = vector.load %arg1[%c0, %c0_0, %c0_1] : memref<8x8x32xf32, #tpu.memory_space<vmem>>, vector<8x8x32xf32>
    %1 = vector.shape_cast %0 : vector<8x8x32xf32> to vector<64x32xf32>
    %cst = arith.constant dense<0.000000e+00> : vector<64xf32>
    %2 = vector.multi_reduction <add>, %1, %cst [1] : vector<64x32xf32> to vector<64xf32>
    %3 = vector.shape_cast %2 : vector<64xf32> to vector<64x1xf32>
    %cst_2 = arith.constant 3.200000e+01 : f32
    %4 = vector.broadcast %cst_2 : f32 to vector<64x1xf32>
    %5 = arith.divf %3, %4 : vector<64x1xf32>
    %6 = vector.broadcast %5 : vector<64x1xf32> to vector<64x32xf32>
    %7 = arith.subf %1, %6 : vector<64x32xf32>
    %8 = arith.mulf %7, %7 : vector<64x32xf32>
    %cst_3 = arith.constant dense<0.000000e+00> : vector<64xf32>
    %9 = vector.multi_reduction <add>, %8, %cst_3 [1] : vector<64x32xf32> to vector<64xf32>
    %10 = vector.shape_cast %9 : vector<64xf32> to vector<64x1xf32>
    %cst_4 = arith.constant 3.200000e+01 : f32
    %11 = vector.broadcast %cst_4 : f32 to vector<64x1xf32>
    %12 = arith.divf %10, %11 : vector<64x1xf32>
    %cst_5 = arith.constant 9.99999974E-6 : f32
    %13 = vector.broadcast %cst_5 : f32 to vector<64x1xf32>
    %14 = arith.addf %12, %13 : vector<64x1xf32>
    %15 = math.rsqrt %14 : vector<64x1xf32>
    %16 = vector.broadcast %15 : vector<64x1xf32> to vector<64x32xf32>
    %17 = arith.mulf %7, %16 : vector<64x32xf32>
    %c0_6 = arith.constant 0 : index
    %c0_7 = arith.constant 0 : index
    %18 = vector.load %arg6[%c0_6, %c0_7] : memref<1x32xf32, #tpu.memory_space<vmem>>, vector<1x32xf32>
    %19 = vector.broadcast %18 : vector<1x32xf32> to vector<64x32xf32>
    %20 = arith.mulf %17, %19 : vector<64x32xf32>
    %c0_8 = arith.constant 0 : index
    %c0_9 = arith.constant 0 : index
    %21 = vector.load %arg7[%c0_8, %c0_9] : memref<1x32xf32, #tpu.memory_space<vmem>>, vector<1x32xf32>
    %22 = vector.broadcast %21 : vector<1x32xf32> to vector<64x32xf32>
    %23 = arith.addf %20, %22 : vector<64x32xf32>
    %c0_10 = arith.constant 0 : index
    %c0_11 = arith.constant 0 : index
    %24 = vector.load %arg2[%c0_10, %c0_11] : memref<32x96xf32, #tpu.memory_space<vmem>>, vector<32x96xf32>
    %cst_12 = arith.constant dense<0.000000e+00> : vector<64x96xf32>
    %25 = tpu.matmul %23, %24, %cst_12 {dimension_numbers = #tpu.dot_dimension_numbers<[1], [0], [0], [1], [0, 0, 1, 1], [], []>} : vector<64x32xf32>, vector<32x96xf32>, vector<64x96xf32> -> vector<64x96xf32>
    %c0_13 = arith.constant 0 : index
    %c0_14 = arith.constant 0 : index
    %26 = vector.load %arg3[%c0_13, %c0_14] : memref<1x96xf32, #tpu.memory_space<vmem>>, vector<1x96xf32>
    %27 = vector.broadcast %26 : vector<1x96xf32> to vector<64x96xf32>
    %28 = arith.addf %25, %27 : vector<64x96xf32>
    %29 = vector.extract_strided_slice %28 {offsets = [0, 0], sizes = [64, 32], strides = [1, 1]} : vector<64x96xf32> to vector<64x32xf32>
    %30 = vector.extract_strided_slice %28 {offsets = [0, 32], sizes = [64, 32], strides = [1, 1]} : vector<64x96xf32> to vector<64x32xf32>
    %31 = vector.extract_strided_slice %28 {offsets = [0, 64], sizes = [64, 32], strides = [1, 1]} : vector<64x96xf32> to vector<64x32xf32>
    %c0_15 = arith.constant 0 : index
    %c0_16 = arith.constant 0 : index
    %32 = vector.load %arg4[%c0_15, %c0_16] : memref<32x32xf32, #tpu.memory_space<vmem>>, vector<32x32xf32>
    %cst_17 = arith.constant 0.000000e+00 : f32
    %33 = vector.broadcast %cst_17 : f32 to vector<64x32xf32>
    %34 = vector.extract_strided_slice %29 {offsets = [0, 0], sizes = [64, 8], strides = [1, 1]} : vector<64x32xf32> to vector<64x8xf32>
    %35 = vector.shape_cast %34 : vector<64x8xf32> to vector<8x8x8xf32>
    %36 = vector.extract_strided_slice %30 {offsets = [0, 0], sizes = [64, 8], strides = [1, 1]} : vector<64x32xf32> to vector<64x8xf32>
    %37 = vector.shape_cast %36 : vector<64x8xf32> to vector<8x8x8xf32>
    %38 = vector.extract_strided_slice %31 {offsets = [0, 0], sizes = [64, 8], strides = [1, 1]} : vector<64x32xf32> to vector<64x8xf32>
    %39 = vector.shape_cast %38 : vector<64x8xf32> to vector<8x8x8xf32>
    "tpu.trace_start"() <{level = 10 : i32, message = "rsd,rtd->rst"}> : () -> ()
    %cst_18 = arith.constant dense<0.000000e+00> : vector<8x8x8xf32>
    %40 = tpu.matmul %35, %37, %cst_18 {dimension_numbers = #tpu.dot_dimension_numbers<[2], [2], [1], [1], [0, 0, 0, 1, 1, 1], [0], [0]>} : vector<8x8x8xf32>, vector<8x8x8xf32>, vector<8x8x8xf32> -> vector<8x8x8xf32>
    "tpu.trace_stop"() : () -> ()
    %cst_19 = arith.constant dense<0xFF800000> : vector<8x8xf32>
    %41 = vector.multi_reduction <maximumf>, %40, %cst_19 [2] : vector<8x8x8xf32> to vector<8x8xf32>
    %42 = vector.shape_cast %41 : vector<8x8xf32> to vector<8x8x1xf32>
    %43 = vector.broadcast %42 : vector<8x8x1xf32> to vector<8x8x8xf32>
    %44 = arith.subf %40, %43 : vector<8x8x8xf32>
    %45 = math.exp %44 : vector<8x8x8xf32>
    %cst_20 = arith.constant dense<0.000000e+00> : vector<8x8xf32>
    %46 = vector.multi_reduction <add>, %45, %cst_20 [2] : vector<8x8x8xf32> to vector<8x8xf32>
    %47 = vector.shape_cast %46 : vector<8x8xf32> to vector<8x8x1xf32>
    %48 = tpu.reciprocal %47 {approx = true} : vector<8x8x1xf32> -> vector<8x8x1xf32>
    %49 = vector.broadcast %48 : vector<8x8x1xf32> to vector<8x8x8xf32>
    %50 = arith.mulf %45, %49 : vector<8x8x8xf32>
    "tpu.trace_start"() <{level = 10 : i32, message = "rst,rtd->rsd"}> : () -> ()
    %cst_21 = arith.constant dense<0.000000e+00> : vector<8x8x8xf32>
    %51 = tpu.matmul %50, %39, %cst_21 {dimension_numbers = #tpu.dot_dimension_numbers<[2], [1], [1], [2], [0, 0, 0, 1, 1, 2], [0], [0]>} : vector<8x8x8xf32>, vector<8x8x8xf32>, vector<8x8x8xf32> -> vector<8x8x8xf32>
    "tpu.trace_stop"() : () -> ()
    %52 = vector.shape_cast %51 : vector<8x8x8xf32> to vector<64x8xf32>
    %53 = vector.extract_strided_slice %32 {offsets = [0, 0], sizes = [8, 32], strides = [1, 1]} : vector<32x32xf32> to vector<8x32xf32>
    %cst_22 = arith.constant dense<0.000000e+00> : vector<64x32xf32>
    %54 = tpu.matmul %52, %53, %cst_22 {dimension_numbers = #tpu.dot_dimension_numbers<[1], [0], [0], [1], [0, 0, 1, 1], [], []>} : vector<64x8xf32>, vector<8x32xf32>, vector<64x32xf32> -> vector<64x32xf32>
    %55 = arith.addf %33, %54 : vector<64x32xf32>
    %56 = vector.extract_strided_slice %29 {offsets = [0, 8], sizes = [64, 8], strides = [1, 1]} : vector<64x32xf32> to vector<64x8xf32>
    %57 = vector.shape_cast %56 : vector<64x8xf32> to vector<8x8x8xf32>
    %58 = vector.extract_strided_slice %30 {offsets = [0, 8], sizes = [64, 8], strides = [1, 1]} : vector<64x32xf32> to vector<64x8xf32>
    %59 = vector.shape_cast %58 : vector<64x8xf32> to vector<8x8x8xf32>
    %60 = vector.extract_strided_slice %31 {offsets = [0, 8], sizes = [64, 8], strides = [1, 1]} : vector<64x32xf32> to vector<64x8xf32>
    %61 = vector.shape_cast %60 : vector<64x8xf32> to vector<8x8x8xf32>
    "tpu.trace_start"() <{level = 10 : i32, message = "rsd,rtd->rst"}> : () -> ()
    %cst_23 = arith.constant dense<0.000000e+00> : vector<8x8x8xf32>
    %62 = tpu.matmul %57, %59, %cst_23 {dimension_numbers = #tpu.dot_dimension_numbers<[2], [2], [1], [1], [0, 0, 0, 1, 1, 1], [0], [0]>} : vector<8x8x8xf32>, vector<8x8x8xf32>, vector<8x8x8xf32> -> vector<8x8x8xf32>
    "tpu.trace_stop"() : () -> ()
    %cst_24 = arith.constant dense<0xFF800000> : vector<8x8xf32>
    %63 = vector.multi_reduction <maximumf>, %62, %cst_24 [2] : vector<8x8x8xf32> to vector<8x8xf32>
    %64 = vector.shape_cast %63 : vector<8x8xf32> to vector<8x8x1xf32>
    %65 = vector.broadcast %64 : vector<8x8x1xf32> to vector<8x8x8xf32>
    %66 = arith.subf %62, %65 : vector<8x8x8xf32>
    %67 = math.exp %66 : vector<8x8x8xf32>
    %cst_25 = arith.constant dense<0.000000e+00> : vector<8x8xf32>
    %68 = vector.multi_reduction <add>, %67, %cst_25 [2] : vector<8x8x8xf32> to vector<8x8xf32>
    %69 = vector.shape_cast %68 : vector<8x8xf32> to vector<8x8x1xf32>
    %70 = tpu.reciprocal %69 {approx = true} : vector<8x8x1xf32> -> vector<8x8x1xf32>
    %71 = vector.broadcast %70 : vector<8x8x1xf32> to vector<8x8x8xf32>
    %72 = arith.mulf %67, %71 : vector<8x8x8xf32>
    "tpu.trace_start"() <{level = 10 : i32, message = "rst,rtd->rsd"}> : () -> ()
    %cst_26 = arith.constant dense<0.000000e+00> : vector<8x8x8xf32>
    %73 = tpu.matmul %72, %61, %cst_26 {dimension_numbers = #tpu.dot_dimension_numbers<[2], [1], [1], [2], [0, 0, 0, 1, 1, 2], [0], [0]>} : vector<8x8x8xf32>, vector<8x8x8xf32>, vector<8x8x8xf32> -> vector<8x8x8xf32>
    "tpu.trace_stop"() : () -> ()
    %74 = vector.shape_cast %73 : vector<8x8x8xf32> to vector<64x8xf32>
    %75 = vector.extract_strided_slice %32 {offsets = [8, 0], sizes = [8, 32], strides = [1, 1]} : vector<32x32xf32> to vector<8x32xf32>
    %cst_27 = arith.constant dense<0.000000e+00> : vector<64x32xf32>
    %76 = tpu.matmul %74, %75, %cst_27 {dimension_numbers = #tpu.dot_dimension_numbers<[1], [0], [0], [1], [0, 0, 1, 1], [], []>} : vector<64x8xf32>, vector<8x32xf32>, vector<64x32xf32> -> vector<64x32xf32>
    %77 = arith.addf %55, %76 : vector<64x32xf32>
    %78 = vector.extract_strided_slice %29 {offsets = [0, 16], sizes = [64, 8], strides = [1, 1]} : vector<64x32xf32> to vector<64x8xf32>
    %79 = vector.shape_cast %78 : vector<64x8xf32> to vector<8x8x8xf32>
    %80 = vector.extract_strided_slice %30 {offsets = [0, 16], sizes = [64, 8], strides = [1, 1]} : vector<64x32xf32> to vector<64x8xf32>
    %81 = vector.shape_cast %80 : vector<64x8xf32> to vector<8x8x8xf32>
    %82 = vector.extract_strided_slice %31 {offsets = [0, 16], sizes = [64, 8], strides = [1, 1]} : vector<64x32xf32> to vector<64x8xf32>
    %83 = vector.shape_cast %82 : vector<64x8xf32> to vector<8x8x8xf32>
    "tpu.trace_start"() <{level = 10 : i32, message = "rsd,rtd->rst"}> : () -> ()
    %cst_28 = arith.constant dense<0.000000e+00> : vector<8x8x8xf32>
    %84 = tpu.matmul %79, %81, %cst_28 {dimension_numbers = #tpu.dot_dimension_numbers<[2], [2], [1], [1], [0, 0, 0, 1, 1, 1], [0], [0]>} : vector<8x8x8xf32>, vector<8x8x8xf32>, vector<8x8x8xf32> -> vector<8x8x8xf32>
    "tpu.trace_stop"() : () -> ()
    %cst_29 = arith.constant dense<0xFF800000> : vector<8x8xf32>
    %85 = vector.multi_reduction <maximumf>, %84, %cst_29 [2] : vector<8x8x8xf32> to vector<8x8xf32>
    %86 = vector.shape_cast %85 : vector<8x8xf32> to vector<8x8x1xf32>
    %87 = vector.broadcast %86 : vector<8x8x1xf32> to vector<8x8x8xf32>
    %88 = arith.subf %84, %87 : vector<8x8x8xf32>
    %89 = math.exp %88 : vector<8x8x8xf32>
    %cst_30 = arith.constant dense<0.000000e+00> : vector<8x8xf32>
    %90 = vector.multi_reduction <add>, %89, %cst_30 [2] : vector<8x8x8xf32> to vector<8x8xf32>
    %91 = vector.shape_cast %90 : vector<8x8xf32> to vector<8x8x1xf32>
    %92 = tpu.reciprocal %91 {approx = true} : vector<8x8x1xf32> -> vector<8x8x1xf32>
    %93 = vector.broadcast %92 : vector<8x8x1xf32> to vector<8x8x8xf32>
    %94 = arith.mulf %89, %93 : vector<8x8x8xf32>
    "tpu.trace_start"() <{level = 10 : i32, message = "rst,rtd->rsd"}> : () -> ()
    %cst_31 = arith.constant dense<0.000000e+00> : vector<8x8x8xf32>
    %95 = tpu.matmul %94, %83, %cst_31 {dimension_numbers = #tpu.dot_dimension_numbers<[2], [1], [1], [2], [0, 0, 0, 1, 1, 2], [0], [0]>} : vector<8x8x8xf32>, vector<8x8x8xf32>, vector<8x8x8xf32> -> vector<8x8x8xf32>
    "tpu.trace_stop"() : () -> ()
    %96 = vector.shape_cast %95 : vector<8x8x8xf32> to vector<64x8xf32>
    %97 = vector.extract_strided_slice %32 {offsets = [16, 0], sizes = [8, 32], strides = [1, 1]} : vector<32x32xf32> to vector<8x32xf32>
    %cst_32 = arith.constant dense<0.000000e+00> : vector<64x32xf32>
    %98 = tpu.matmul %96, %97, %cst_32 {dimension_numbers = #tpu.dot_dimension_numbers<[1], [0], [0], [1], [0, 0, 1, 1], [], []>} : vector<64x8xf32>, vector<8x32xf32>, vector<64x32xf32> -> vector<64x32xf32>
    %99 = arith.addf %77, %98 : vector<64x32xf32>
    %100 = vector.extract_strided_slice %29 {offsets = [0, 24], sizes = [64, 8], strides = [1, 1]} : vector<64x32xf32> to vector<64x8xf32>
    %101 = vector.shape_cast %100 : vector<64x8xf32> to vector<8x8x8xf32>
    %102 = vector.extract_strided_slice %30 {offsets = [0, 24], sizes = [64, 8], strides = [1, 1]} : vector<64x32xf32> to vector<64x8xf32>
    %103 = vector.shape_cast %102 : vector<64x8xf32> to vector<8x8x8xf32>
    %104 = vector.extract_strided_slice %31 {offsets = [0, 24], sizes = [64, 8], strides = [1, 1]} : vector<64x32xf32> to vector<64x8xf32>
    %105 = vector.shape_cast %104 : vector<64x8xf32> to vector<8x8x8xf32>
    "tpu.trace_start"() <{level = 10 : i32, message = "rsd,rtd->rst"}> : () -> ()
    %cst_33 = arith.constant dense<0.000000e+00> : vector<8x8x8xf32>
    %106 = tpu.matmul %101, %103, %cst_33 {dimension_numbers = #tpu.dot_dimension_numbers<[2], [2], [1], [1], [0, 0, 0, 1, 1, 1], [0], [0]>} : vector<8x8x8xf32>, vector<8x8x8xf32>, vector<8x8x8xf32> -> vector<8x8x8xf32>
    "tpu.trace_stop"() : () -> ()
    %cst_34 = arith.constant dense<0xFF800000> : vector<8x8xf32>
    %107 = vector.multi_reduction <maximumf>, %106, %cst_34 [2] : vector<8x8x8xf32> to vector<8x8xf32>
    %108 = vector.shape_cast %107 : vector<8x8xf32> to vector<8x8x1xf32>
    %109 = vector.broadcast %108 : vector<8x8x1xf32> to vector<8x8x8xf32>
    %110 = arith.subf %106, %109 : vector<8x8x8xf32>
    %111 = math.exp %110 : vector<8x8x8xf32>
    %cst_35 = arith.constant dense<0.000000e+00> : vector<8x8xf32>
    %112 = vector.multi_reduction <add>, %111, %cst_35 [2] : vector<8x8x8xf32> to vector<8x8xf32>
    %113 = vector.shape_cast %112 : vector<8x8xf32> to vector<8x8x1xf32>
    %114 = tpu.reciprocal %113 {approx = true} : vector<8x8x1xf32> -> vector<8x8x1xf32>
    %115 = vector.broadcast %114 : vector<8x8x1xf32> to vector<8x8x8xf32>
    %116 = arith.mulf %111, %115 : vector<8x8x8xf32>
    "tpu.trace_start"() <{level = 10 : i32, message = "rst,rtd->rsd"}> : () -> ()
    %cst_36 = arith.constant dense<0.000000e+00> : vector<8x8x8xf32>
    %117 = tpu.matmul %116, %105, %cst_36 {dimension_numbers = #tpu.dot_dimension_numbers<[2], [1], [1], [2], [0, 0, 0, 1, 1, 2], [0], [0]>} : vector<8x8x8xf32>, vector<8x8x8xf32>, vector<8x8x8xf32> -> vector<8x8x8xf32>
    "tpu.trace_stop"() : () -> ()
    %118 = vector.shape_cast %117 : vector<8x8x8xf32> to vector<64x8xf32>
    %119 = vector.extract_strided_slice %32 {offsets = [24, 0], sizes = [8, 32], strides = [1, 1]} : vector<32x32xf32> to vector<8x32xf32>
    %cst_37 = arith.constant dense<0.000000e+00> : vector<64x32xf32>
    %120 = tpu.matmul %118, %119, %cst_37 {dimension_numbers = #tpu.dot_dimension_numbers<[1], [0], [0], [1], [0, 0, 1, 1], [], []>} : vector<64x8xf32>, vector<8x32xf32>, vector<64x32xf32> -> vector<64x32xf32>
    %121 = arith.addf %99, %120 : vector<64x32xf32>
    %c0_38 = arith.constant 0 : index
    %c0_39 = arith.constant 0 : index
    %122 = vector.load %arg5[%c0_38, %c0_39] : memref<1x32xf32, #tpu.memory_space<vmem>>, vector<1x32xf32>
    %123 = vector.broadcast %122 : vector<1x32xf32> to vector<64x32xf32>
    %124 = arith.addf %121, %123 : vector<64x32xf32>
    %125 = arith.addf %1, %124 : vector<64x32xf32>
    %cst_40 = arith.constant dense<0.000000e+00> : vector<64xf32>
    %126 = vector.multi_reduction <add>, %125, %cst_40 [1] : vector<64x32xf32> to vector<64xf32>
    %127 = vector.shape_cast %126 : vector<64xf32> to vector<64x1xf32>
    %cst_41 = arith.constant 3.200000e+01 : f32
    %128 = vector.broadcast %cst_41 : f32 to vector<64x1xf32>
    %129 = arith.divf %127, %128 : vector<64x1xf32>
    %130 = vector.broadcast %129 : vector<64x1xf32> to vector<64x32xf32>
    %131 = arith.subf %125, %130 : vector<64x32xf32>
    %132 = arith.mulf %131, %131 : vector<64x32xf32>
    %cst_42 = arith.constant dense<0.000000e+00> : vector<64xf32>
    %133 = vector.multi_reduction <add>, %132, %cst_42 [1] : vector<64x32xf32> to vector<64xf32>
    %134 = vector.shape_cast %133 : vector<64xf32> to vector<64x1xf32>
    %cst_43 = arith.constant 3.200000e+01 : f32
    %135 = vector.broadcast %cst_43 : f32 to vector<64x1xf32>
    %136 = arith.divf %134, %135 : vector<64x1xf32>
    %cst_44 = arith.constant 9.99999974E-6 : f32
    %137 = vector.broadcast %cst_44 : f32 to vector<64x1xf32>
    %138 = arith.addf %136, %137 : vector<64x1xf32>
    %139 = math.rsqrt %138 : vector<64x1xf32>
    %140 = vector.broadcast %139 : vector<64x1xf32> to vector<64x32xf32>
    %141 = arith.mulf %131, %140 : vector<64x32xf32>
    %c0_45 = arith.constant 0 : index
    %c0_46 = arith.constant 0 : index
    %142 = vector.load %arg8[%c0_45, %c0_46] : memref<1x32xf32, #tpu.memory_space<vmem>>, vector<1x32xf32>
    %143 = vector.broadcast %142 : vector<1x32xf32> to vector<64x32xf32>
    %144 = arith.mulf %141, %143 : vector<64x32xf32>
    %c0_47 = arith.constant 0 : index
    %c0_48 = arith.constant 0 : index
    %145 = vector.load %arg9[%c0_47, %c0_48] : memref<1x32xf32, #tpu.memory_space<vmem>>, vector<1x32xf32>
    %146 = vector.broadcast %145 : vector<1x32xf32> to vector<64x32xf32>
    %147 = arith.addf %144, %146 : vector<64x32xf32>
    %c0_49 = arith.constant 0 : index
    %c0_50 = arith.constant 0 : index
    %148 = vector.load %arg10[%c0_49, %c0_50] : memref<32x64xf32, #tpu.memory_space<vmem>>, vector<32x64xf32>
    %cst_51 = arith.constant dense<0.000000e+00> : vector<64x64xf32>
    %149 = tpu.matmul %147, %148, %cst_51 {dimension_numbers = #tpu.dot_dimension_numbers<[1], [0], [0], [1], [0, 0, 1, 1], [], []>} : vector<64x32xf32>, vector<32x64xf32>, vector<64x64xf32> -> vector<64x64xf32>
    %c0_52 = arith.constant 0 : index
    %c0_53 = arith.constant 0 : index
    %150 = vector.load %arg11[%c0_52, %c0_53] : memref<1x64xf32, #tpu.memory_space<vmem>>, vector<1x64xf32>
    %151 = vector.broadcast %150 : vector<1x64xf32> to vector<64x64xf32>
    %152 = arith.addf %149, %151 : vector<64x64xf32>
    %cst_54 = arith.constant 5.000000e-01 : f32
    %153 = vector.broadcast %cst_54 : f32 to vector<64x64xf32>
    %154 = arith.mulf %153, %152 : vector<64x64xf32>
    %cst_55 = arith.constant 0.707106769 : f32
    %155 = vector.broadcast %cst_55 : f32 to vector<64x64xf32>
    %156 = arith.mulf %152, %155 : vector<64x64xf32>
    %157 = math.absf %156 : vector<64x64xf32>
    %cst_56 = arith.constant 0.327591091 : f32
    %158 = vector.broadcast %cst_56 : f32 to vector<64x64xf32>
    %159 = arith.mulf %158, %157 : vector<64x64xf32>
    %cst_57 = arith.constant 1.000000e+00 : f32
    %160 = vector.broadcast %cst_57 : f32 to vector<64x64xf32>
    %161 = arith.addf %160, %159 : vector<64x64xf32>
    %cst_58 = arith.constant 1.000000e+00 : f32
    %162 = vector.broadcast %cst_58 : f32 to vector<64x64xf32>
    %163 = arith.divf %162, %161 : vector<64x64xf32>
    %cst_59 = arith.constant 1.06140542 : f32
    %164 = vector.broadcast %cst_59 : f32 to vector<64x64xf32>
    %165 = arith.mulf %164, %163 : vector<64x64xf32>
    %cst_60 = arith.constant -1.45315206 : f32
    %166 = vector.broadcast %cst_60 : f32 to vector<64x64xf32>
    %167 = arith.addf %165, %166 : vector<64x64xf32>
    %168 = arith.mulf %167, %163 : vector<64x64xf32>
    %cst_61 = arith.constant 1.42141378 : f32
    %169 = vector.broadcast %cst_61 : f32 to vector<64x64xf32>
    %170 = arith.addf %168, %169 : vector<64x64xf32>
    %171 = arith.mulf %170, %163 : vector<64x64xf32>
    %cst_62 = arith.constant -0.284496725 : f32
    %172 = vector.broadcast %cst_62 : f32 to vector<64x64xf32>
    %173 = arith.addf %171, %172 : vector<64x64xf32>
    %174 = arith.mulf %173, %163 : vector<64x64xf32>
    %cst_63 = arith.constant 0.254829586 : f32
    %175 = vector.broadcast %cst_63 : f32 to vector<64x64xf32>
    %176 = arith.addf %174, %175 : vector<64x64xf32>
    %177 = arith.mulf %176, %163 : vector<64x64xf32>
    %cst_64 = arith.constant 0.000000e+00 : f32
    %178 = vector.broadcast %cst_64 : f32 to vector<64x64xf32>
    %179 = arith.subf %178, %157 : vector<64x64xf32>
    %180 = arith.mulf %179, %157 : vector<64x64xf32>
    %181 = math.exp %180 : vector<64x64xf32>
    %182 = arith.mulf %177, %181 : vector<64x64xf32>
    %cst_65 = arith.constant 1.000000e+00 : f32
    %183 = vector.broadcast %cst_65 : f32 to vector<64x64xf32>
    %184 = arith.subf %183, %182 : vector<64x64xf32>
    %cst_66 = arith.constant 0.000000e+00 : f32
    %185 = vector.broadcast %cst_66 : f32 to vector<64x64xf32>
    %186 = arith.cmpf oge, %156, %185 : vector<64x64xf32>
    %cst_67 = arith.constant 0.000000e+00 : f32
    %187 = vector.broadcast %cst_67 : f32 to vector<64x64xf32>
    %188 = arith.subf %187, %184 : vector<64x64xf32>
    %189 = arith.select %186, %184, %188 : vector<64x64xi1>, vector<64x64xf32>
    %cst_68 = arith.constant 1.000000e+00 : f32
    %190 = vector.broadcast %cst_68 : f32 to vector<64x64xf32>
    %191 = arith.addf %190, %189 : vector<64x64xf32>
    %192 = arith.mulf %154, %191 : vector<64x64xf32>
    %c0_69 = arith.constant 0 : index
    %c0_70 = arith.constant 0 : index
    %193 = vector.load %arg12[%c0_69, %c0_70] : memref<64x32xf32, #tpu.memory_space<vmem>>, vector<64x32xf32>
    %cst_71 = arith.constant dense<0.000000e+00> : vector<64x32xf32>
    %194 = tpu.matmul %192, %193, %cst_71 {dimension_numbers = #tpu.dot_dimension_numbers<[1], [0], [0], [1], [0, 0, 1, 1], [], []>} : vector<64x64xf32>, vector<64x32xf32>, vector<64x32xf32> -> vector<64x32xf32>
    %c0_72 = arith.constant 0 : index
    %c0_73 = arith.constant 0 : index
    %195 = vector.load %arg13[%c0_72, %c0_73] : memref<1x32xf32, #tpu.memory_space<vmem>>, vector<1x32xf32>
    %196 = vector.broadcast %195 : vector<1x32xf32> to vector<64x32xf32>
    %197 = arith.addf %194, %196 : vector<64x32xf32>
    %198 = arith.addf %125, %197 : vector<64x32xf32>
    %199 = vector.shape_cast %198 : vector<64x32xf32> to vector<8x8x32xf32>
    %c0_74 = arith.constant 0 : index
    %c0_75 = arith.constant 0 : index
    %c0_76 = arith.constant 0 : index
    %200 = vector.load %arg14[%c0_74, %c0_75, %c0_76] : memref<8x8x32xf32, #tpu.memory_space<vmem>>, vector<8x8x32xf32>
    tpu.vector_store %arg14[%c0_74, %c0_75, %c0_76], %199 {strides = array<i32>} : memref<8x8x32xf32, #tpu.memory_space<vmem>>, vector<8x8x32xf32>,
    return
  }
  func.func @transform_0(%arg0: i32) -> (i32, i32, i32) {
    %c0_i32 = arith.constant 0 : i32
    %c0_i32_0 = arith.constant 0 : i32
    %c0_i32_1 = arith.constant 0 : i32
    return %arg0, %c0_i32, %c0_i32_0 : i32, i32, i32
  }
  func.func @transform_1(%arg0: i32) -> (i32, i32) {
    %c0_i32 = arith.constant 0 : i32
    %c0_i32_0 = arith.constant 0 : i32
    %c0_i32_1 = arith.constant 0 : i32
    return %c0_i32, %c0_i32_0 : i32, i32
  }
  func.func @transform_2(%arg0: i32) -> (i32, i32) {
    %c0_i32 = arith.constant 0 : i32
    %c0_i32_0 = arith.constant 0 : i32
    %c0_i32_1 = arith.constant 0 : i32
    return %c0_i32, %c0_i32_0 : i32, i32
  }
  func.func @transform_3(%arg0: i32) -> (i32, i32) {
    %c0_i32 = arith.constant 0 : i32
    %c0_i32_0 = arith.constant 0 : i32
    %c0_i32_1 = arith.constant 0 : i32
    return %c0_i32, %c0_i32_0 : i32, i32
  }
  func.func @transform_4(%arg0: i32) -> (i32, i32) {
    %c0_i32 = arith.constant 0 : i32
    %c0_i32_0 = arith.constant 0 : i32
    %c0_i32_1 = arith.constant 0 : i32
    return %c0_i32, %c0_i32_0 : i32, i32
  }
  func.func @transform_5(%arg0: i32) -> (i32, i32) {
    %c0_i32 = arith.constant 0 : i32
    %c0_i32_0 = arith.constant 0 : i32
    %c0_i32_1 = arith.constant 0 : i32
    return %c0_i32, %c0_i32_0 : i32, i32
  }
  func.func @transform_6(%arg0: i32) -> (i32, i32) {
    %c0_i32 = arith.constant 0 : i32
    %c0_i32_0 = arith.constant 0 : i32
    %c0_i32_1 = arith.constant 0 : i32
    return %c0_i32, %c0_i32_0 : i32, i32
  }
  func.func @transform_7(%arg0: i32) -> (i32, i32) {
    %c0_i32 = arith.constant 0 : i32
    %c0_i32_0 = arith.constant 0 : i32
    %c0_i32_1 = arith.constant 0 : i32
    return %c0_i32, %c0_i32_0 : i32, i32
  }
  func.func @transform_8(%arg0: i32) -> (i32, i32) {
    %c0_i32 = arith.constant 0 : i32
    %c0_i32_0 = arith.constant 0 : i32
    %c0_i32_1 = arith.constant 0 : i32
    return %c0_i32, %c0_i32_0 : i32, i32
  }
  func.func @transform_9(%arg0: i32) -> (i32, i32) {
    %c0_i32 = arith.constant 0 : i32
    %c0_i32_0 = arith.constant 0 : i32
    %c0_i32_1 = arith.constant 0 : i32
    return %c0_i32, %c0_i32_0 : i32, i32
  }
  func.func @transform_10(%arg0: i32) -> (i32, i32) {
    %c0_i32 = arith.constant 0 : i32
    %c0_i32_0 = arith.constant 0 : i32
    %c0_i32_1 = arith.constant 0 : i32
    return %c0_i32, %c0_i32_0 : i32, i32
  }
  func.func @transform_11(%arg0: i32) -> (i32, i32) {
    %c0_i32 = arith.constant 0 : i32
    %c0_i32_0 = arith.constant 0 : i32
    %c0_i32_1 = arith.constant 0 : i32
    return %c0_i32, %c0_i32_0 : i32, i32
  }
  func.func @transform_12(%arg0: i32) -> (i32, i32) {
    %c0_i32 = arith.constant 0 : i32
    %c0_i32_0 = arith.constant 0 : i32
    %c0_i32_1 = arith.constant 0 : i32
    return %c0_i32, %c0_i32_0 : i32, i32
  }
  func.func @transform_13(%arg0: i32) -> (i32, i32, i32) {
    %c0_i32 = arith.constant 0 : i32
    %c0_i32_0 = arith.constant 0 : i32
    %c0_i32_1 = arith.constant 0 : i32
    return %arg0, %c0_i32, %c0_i32_0 : i32, i32, i32
  }
}

</mosaic_0001>

<llo_original>
// kernel: tpu_custom_call.1
$region0: #{tpu_custom_call.1}
  #allocation0 [shape = 'u32[]', space=smem, size = 0x4, offset = 0x4, fixed_abs, tag = 'smem constant byte address 0x4 - core index']
  #allocation1 [shape = 'u32[144,128]{1,0:T(1,128)}', space=vmem, size = 0x12000, scoped, tag = 'internal scratch']
  %s0 = inlined_call_operand.hbm [shape: f32[16,8,32], index: 0, kind: input, shape index: {}]
  %s1 = inlined_call_operand.vmem [shape: f32[32,96], index: 1, kind: input, shape index: {}]
  %s2 = inlined_call_operand.vmem [shape: f32[1,96], index: 2, kind: input, shape index: {}]
  %s3 = inlined_call_operand.vmem [shape: f32[32,32], index: 3, kind: input, shape index: {}]
  %s4 = inlined_call_operand.vmem [shape: f32[1,32], index: 4, kind: input, shape index: {}]
  %s5 = inlined_call_operand.vmem [shape: f32[1,32], index: 5, kind: input, shape index: {}]
  %s6 = inlined_call_operand.vmem [shape: f32[1,32], index: 6, kind: input, shape index: {}]
  %s7 = inlined_call_operand.vmem [shape: f32[1,32], index: 7, kind: input, shape index: {}]
  %s8 = inlined_call_operand.vmem [shape: f32[1,32], index: 8, kind: input, shape index: {}]
  %s9 = inlined_call_operand.vmem [shape: f32[32,64], index: 9, kind: input, shape index: {}]
  %s10 = inlined_call_operand.vmem [shape: f32[1,64], index: 10, kind: input, shape index: {}]
  %s11 = inlined_call_operand.vmem [shape: f32[64,32], index: 11, kind: input, shape index: {}]
  %s12 = inlined_call_operand.vmem [shape: f32[1,32], index: 12, kind: input, shape index: {}]
  %s13 = inlined_call_operand.hbm [shape: f32[16,8,32], index: 13, kind: output, shape index: {}]
  %s14 = sld [smem:[#allocation0]]
  $region89: #{tpu_custom_call.1} parent=0
    _
  %s16 = ssub.s32 1, %s14
  %s17 = scalar_select 0, %s16, %s14
  $region1: #{tpu_custom_call.1} parent=0
    #allocation2 [shape = 'u8[65536]{0}', space=vmem, size = 0x10000, scoped, tag = 'input window, operand 0']
    #allocation3 [shape = 's32[2]{0}', space=sflag, size = 0x8, scoped, tag = 'scoped memory for tpu_custom_call.1']
    #allocation4 [shape = 's32[2]{0}', space=sflag, size = 0x8, scoped, tag = 'scoped memory for tpu_custom_call.1']
    #allocation5 [shape = 'u8[65536]{0}', space=vmem, size = 0x10000, scoped, tag = 'output window, operand 0']
    %18 = vsyncpa [#allocation3], 0
    %s19 = scalar_lea.sflag [#allocation3], 1
    %20 = vsyncpa %s19, 0
    %21 = vsyncpa [#allocation4], 0
    %s22 = scalar_lea.sflag [#allocation4], 1
    %23 = vsyncpa %s22, 0
    loop: start=0, step=1, limit=4
    $region2: #{tpu_custom_call.1} parent=1 // loop_pre_header
      _
    $region3: #{tpu_custom_call.1} parent=1 // loop_header
      %s25 = sphi 0, %s29
      %p26 = scmp.ge.s32.totalorder %s25, 4
      %s35 = sphi 0, %s37
      %s38 = sphi 0, %s35
      %s39 = sphi 0, %s38
      %s55 = sphi 0, %s39
      %s59 = sphi 0, %s59
      %s61 = sphi 0, %s59
      %s62 = sphi 0, %s61
      %s76 = sphi 0, %s62
      %s80 = sphi 0, %s80
      %s82 = sphi 0, %s80
      %s83 = sphi 0, %s82
      %s97 = sphi 0, %s83
      %s101 = sphi 0, %s101
      %s103 = sphi 0, %s101
      %s104 = sphi 0, %s103
      %s118 = sphi 0, %s104
      %s122 = sphi 0, %s122
      %s124 = sphi 0, %s122
      %s125 = sphi 0, %s124
      %s139 = sphi 0, %s125
      %s143 = sphi 0, %s143
      %s145 = sphi 0, %s143
      %s146 = sphi 0, %s145
      %s160 = sphi 0, %s146
      %s164 = sphi 0, %s164
      %s166 = sphi 0, %s164
      %s167 = sphi 0, %s166
      %s181 = sphi 0, %s167
      %s185 = sphi 0, %s185
      %s187 = sphi 0, %s185
      %s188 = sphi 0, %s187
      %s202 = sphi 0, %s188
      %s206 = sphi 0, %s206
      %s208 = sphi 0, %s206
      %s209 = sphi 0, %s208
      %s223 = sphi 0, %s209
      %s227 = sphi 0, %s227
      %s229 = sphi 0, %s227
      %s230 = sphi 0, %s229
      %s244 = sphi 0, %s230
      %s248 = sphi 0, %s248
      %s250 = sphi 0, %s248
      %s251 = sphi 0, %s250
      %s265 = sphi 0, %s251
      %s269 = sphi 0, %s269
      %s271 = sphi 0, %s269
      %s272 = sphi 0, %s271
      %s286 = sphi 0, %s272
      %s290 = sphi 0, %s290
      %s292 = sphi 0, %s290
      %s293 = sphi 0, %s292
      %s307 = sphi 0, %s293
      %s313 = sphi 0, %s315
      %s316 = sphi 0, %s313
      %s317 = sphi 0, %s316
      %s333 = sphi 0, %s317
    $region4: #{tpu_custom_call.1} parent=1 // loop_header_branch
      %28 = sbr.rel (%p26) target = $region8
    $region5: #{tpu_custom_call.1} parent=1 // loop_body
      %s30 = ssub.s32 %s25, 1
      %s31 = ssub.s32 %s25, 2
      %s32 = sadd.s32 %s25, 1
      %s33 = ssub.s32 %s25, %s32
      %p34 = scmp.eq.s32.totalorder %s33, 0
      %s36 = sadd.s32 %s35, 1
      %s37 = scalar_select %p34, %s35, %s36
      %p40 = pneg %p34
      %p41 = scmp.eq.s32.totalorder %s25, 1
      %p42 = por %p40, %p41
      %p43 = scmp.ne.s32.totalorder %s35, %s38
      %p44 = scmp.eq.s32.totalorder %s25, 0
      %p45 = por %p43, %p44
      %p46 = scmp.ne.s32.totalorder %s35, %s38
      %p47 = scmp.eq.s32.totalorder %s30, 1
      %p48 = por %p46, %p47
      %p49 = scmp.ne.s32.totalorder %s38, %s39
      %p50 = scmp.eq.s32.totalorder %s30, 0
      %p51 = por %p49, %p50
      %p52 = scmp.ne.s32.totalorder %s38, %s39
      %p53 = scmp.eq.s32.totalorder %s31, 1
      %p54 = por %p52, %p53
      %p56 = scmp.ne.s32.totalorder %s39, %s55
      %p57 = scmp.eq.s32.totalorder %s31, 0
      %p58 = por %p56, %p57
      %s60 = sadd.s32 %s59, 1
      %p63 = scmp.eq.s32.totalorder %s25, 1
      %p64 = scmp.ne.s32.totalorder %s59, %s61
      %p65 = scmp.eq.s32.totalorder %s25, 0
      %p66 = por %p64, %p65
      %p67 = scmp.ne.s32.totalorder %s59, %s61
      %p68 = scmp.eq.s32.totalorder %s30, 1
      %p69 = por %p67, %p68
      %p70 = scmp.ne.s32.totalorder %s61, %s62
      %p71 = scmp.eq.s32.totalorder %s30, 0
      %p72 = por %p70, %p71
      %p73 = scmp.ne.s32.totalorder %s61, %s62
      %p74 = scmp.eq.s32.totalorder %s31, 1
      %p75 = por %p73, %p74
      %p77 = scmp.ne.s32.totalorder %s62, %s76
      %p78 = scmp.eq.s32.totalorder %s31, 0
      %p79 = por %p77, %p78
      %s81 = sadd.s32 %s80, 1
      %p84 = scmp.eq.s32.totalorder %s25, 1
      %p85 = scmp.ne.s32.totalorder %s80, %s82
      %p86 = scmp.eq.s32.totalorder %s25, 0
      %p87 = por %p85, %p86
      %p88 = scmp.ne.s32.totalorder %s80, %s82
      %p89 = scmp.eq.s32.totalorder %s30, 1
      %p90 = por %p88, %p89
      %p91 = scmp.ne.s32.totalorder %s82, %s83
      %p92 = scmp.eq.s32.totalorder %s30, 0
      %p93 = por %p91, %p92
      %p94 = scmp.ne.s32.totalorder %s82, %s83
      %p95 = scmp.eq.s32.totalorder %s31, 1
      %p96 = por %p94, %p95
      %p98 = scmp.ne.s32.totalorder %s83, %s97
      %p99 = scmp.eq.s32.totalorder %s31, 0
      %p100 = por %p98, %p99
      %s102 = sadd.s32 %s101, 1
      %p105 = scmp.eq.s32.totalorder %s25, 1
      %p106 = scmp.ne.s32.totalorder %s101, %s103
      %p107 = scmp.eq.s32.totalorder %s25, 0
      %p108 = por %p106, %p107
      %p109 = scmp.ne.s32.totalorder %s101, %s103
      %p110 = scmp.eq.s32.totalorder %s30, 1
      %p111 = por %p109, %p110
      %p112 = scmp.ne.s32.totalorder %s103, %s104
      %p113 = scmp.eq.s32.totalorder %s30, 0
      %p114 = por %p112, %p113
      %p115 = scmp.ne.s32.totalorder %s103, %s104
      %p116 = scmp.eq.s32.totalorder %s31, 1
      %p117 = por %p115, %p116
      %p119 = scmp.ne.s32.totalorder %s104, %s118
      %p120 = scmp.eq.s32.totalorder %s31, 0
      %p121 = por %p119, %p120
      %s123 = sadd.s32 %s122, 1
      %p126 = scmp.eq.s32.totalorder %s25, 1
      %p127 = scmp.ne.s32.totalorder %s122, %s124
      %p128 = scmp.eq.s32.totalorder %s25, 0
      %p129 = por %p127, %p128
      %p130 = scmp.ne.s32.totalorder %s122, %s124
      %p131 = scmp.eq.s32.totalorder %s30, 1
      %p132 = por %p130, %p131
      %p133 = scmp.ne.s32.totalorder %s124, %s125
      %p134 = scmp.eq.s32.totalorder %s30, 0
      %p135 = por %p133, %p134
      %p136 = scmp.ne.s32.totalorder %s124, %s125
      %p137 = scmp.eq.s32.totalorder %s31, 1
      %p138 = por %p136, %p137
      %p140 = scmp.ne.s32.totalorder %s125, %s139
      %p141 = scmp.eq.s32.totalorder %s31, 0
      %p142 = por %p140, %p141
      %s144 = sadd.s32 %s143, 1
      %p147 = scmp.eq.s32.totalorder %s25, 1
      %p148 = scmp.ne.s32.totalorder %s143, %s145
      %p149 = scmp.eq.s32.totalorder %s25, 0
      %p150 = por %p148, %p149
      %p151 = scmp.ne.s32.totalorder %s143, %s145
      %p152 = scmp.eq.s32.totalorder %s30, 1
      %p153 = por %p151, %p152
      %p154 = scmp.ne.s32.totalorder %s145, %s146
      %p155 = scmp.eq.s32.totalorder %s30, 0
      %p156 = por %p154, %p155
      %p157 = scmp.ne.s32.totalorder %s145, %s146
      %p158 = scmp.eq.s32.totalorder %s31, 1
      %p159 = por %p157, %p158
      %p161 = scmp.ne.s32.totalorder %s146, %s160
      %p162 = scmp.eq.s32.totalorder %s31, 0
      %p163 = por %p161, %p162
      %s165 = sadd.s32 %s164, 1
      %p168 = scmp.eq.s32.totalorder %s25, 1
      %p169 = scmp.ne.s32.totalorder %s164, %s166
      %p170 = scmp.eq.s32.totalorder %s25, 0
      %p171 = por %p169, %p170
      %p172 = scmp.ne.s32.totalorder %s164, %s166
      %p173 = scmp.eq.s32.totalorder %s30, 1
      %p174 = por %p172, %p173
      %p175 = scmp.ne.s32.totalorder %s166, %s167
      %p176 = scmp.eq.s32.totalorder %s30, 0
      %p177 = por %p175, %p176
      %p178 = scmp.ne.s32.totalorder %s166, %s167
      %p179 = scmp.eq.s32.totalorder %s31, 1
      %p180 = por %p178, %p179
      %p182 = scmp.ne.s32.totalorder %s167, %s181
      %p183 = scmp.eq.s32.totalorder %s31, 0
      %p184 = por %p182, %p183
      %s186 = sadd.s32 %s185, 1
      %p189 = scmp.eq.s32.totalorder %s25, 1
      %p190 = scmp.ne.s32.totalorder %s185, %s187
      %p191 = scmp.eq.s32.totalorder %s25, 0
      %p192 = por %p190, %p191
      %p193 = scmp.ne.s32.totalorder %s185, %s187
      %p194 = scmp.eq.s32.totalorder %s30, 1
      %p195 = por %p193, %p194
      %p196 = scmp.ne.s32.totalorder %s187, %s188
      %p197 = scmp.eq.s32.totalorder %s30, 0
      %p198 = por %p196, %p197
      %p199 = scmp.ne.s32.totalorder %s187, %s188
      %p200 = scmp.eq.s32.totalorder %s31, 1
      %p201 = por %p199, %p200
      %p203 = scmp.ne.s32.totalorder %s188, %s202
      %p204 = scmp.eq.s32.totalorder %s31, 0
      %p205 = por %p203, %p204
      %s207 = sadd.s32 %s206, 1
      %p210 = scmp.eq.s32.totalorder %s25, 1
      %p211 = scmp.ne.s32.totalorder %s206, %s208
      %p212 = scmp.eq.s32.totalorder %s25, 0
      %p213 = por %p211, %p212
      %p214 = scmp.ne.s32.totalorder %s206, %s208
      %p215 = scmp.eq.s32.totalorder %s30, 1
      %p216 = por %p214, %p215
      %p217 = scmp.ne.s32.totalorder %s208, %s209
      %p218 = scmp.eq.s32.totalorder %s30, 0
      %p219 = por %p217, %p218
      %p220 = scmp.ne.s32.totalorder %s208, %s209
      %p221 = scmp.eq.s32.totalorder %s31, 1
      %p222 = por %p220, %p221
      %p224 = scmp.ne.s32.totalorder %s209, %s223
      %p225 = scmp.eq.s32.totalorder %s31, 0
      %p226 = por %p224, %p225
      %s228 = sadd.s32 %s227, 1
      %p231 = scmp.eq.s32.totalorder %s25, 1
      %p232 = scmp.ne.s32.totalorder %s227, %s229
      %p233 = scmp.eq.s32.totalorder %s25, 0
      %p234 = por %p232, %p233
      %p235 = scmp.ne.s32.totalorder %s227, %s229
      %p236 = scmp.eq.s32.totalorder %s30, 1
      %p237 = por %p235, %p236
      %p238 = scmp.ne.s32.totalorder %s229, %s230
      %p239 = scmp.eq.s32.totalorder %s30, 0
      %p240 = por %p238, %p239
      %p241 = scmp.ne.s32.totalorder %s229, %s230
      %p242 = scmp.eq.s32.totalorder %s31, 1
      %p243 = por %p241, %p242
      %p245 = scmp.ne.s32.totalorder %s230, %s244
      %p246 = scmp.eq.s32.totalorder %s31, 0
      %p247 = por %p245, %p246
      %s249 = sadd.s32 %s248, 1
      %p252 = scmp.eq.s32.totalorder %s25, 1
      %p253 = scmp.ne.s32.totalorder %s248, %s250
      %p254 = scmp.eq.s32.totalorder %s25, 0
      %p255 = por %p253, %p254
      %p256 = scmp.ne.s32.totalorder %s248, %s250
      %p257 = scmp.eq.s32.totalorder %s30, 1
      %p258 = por %p256, %p257
      %p259 = scmp.ne.s32.totalorder %s250, %s251
      %p260 = scmp.eq.s32.totalorder %s30, 0
      %p261 = por %p259, %p260
      %p262 = scmp.ne.s32.totalorder %s250, %s251
      %p263 = scmp.eq.s32.totalorder %s31, 1
      %p264 = por %p262, %p263
      %p266 = scmp.ne.s32.totalorder %s251, %s265
      %p267 = scmp.eq.s32.totalorder %s31, 0
      %p268 = por %p266, %p267
      %s270 = sadd.s32 %s269, 1
      %p273 = scmp.eq.s32.totalorder %s25, 1
      %p274 = scmp.ne.s32.totalorder %s269, %s271
      %p275 = scmp.eq.s32.totalorder %s25, 0
      %p276 = por %p274, %p275
      %p277 = scmp.ne.s32.totalorder %s269, %s271
      %p278 = scmp.eq.s32.totalorder %s30, 1
      %p279 = por %p277, %p278
      %p280 = scmp.ne.s32.totalorder %s271, %s272
      %p281 = scmp.eq.s32.totalorder %s30, 0
      %p282 = por %p280, %p281
      %p283 = scmp.ne.s32.totalorder %s271, %s272
      %p284 = scmp.eq.s32.totalorder %s31, 1
      %p285 = por %p283, %p284
      %p287 = scmp.ne.s32.totalorder %s272, %s286
      %p288 = scmp.eq.s32.totalorder %s31, 0
      %p289 = por %p287, %p288
      %s291 = sadd.s32 %s290, 1
      %p294 = scmp.eq.s32.totalorder %s25, 1
      %p295 = scmp.ne.s32.totalorder %s290, %s292
      %p296 = scmp.eq.s32.totalorder %s25, 0
      %p297 = por %p295, %p296
      %p298 = scmp.ne.s32.totalorder %s290, %s292
      %p299 = scmp.eq.s32.totalorder %s30, 1
      %p300 = por %p298, %p299
      %p301 = scmp.ne.s32.totalorder %s292, %s293
      %p302 = scmp.eq.s32.totalorder %s30, 0
      %p303 = por %p301, %p302
      %p304 = scmp.ne.s32.totalorder %s292, %s293
      %p305 = scmp.eq.s32.totalorder %s31, 1
      %p306 = por %p304, %p305
      %p308 = scmp.ne.s32.totalorder %s293, %s307
      %p309 = scmp.eq.s32.totalorder %s31, 0
      %p310 = por %p308, %p309
      %s311 = ssub.s32 %s25, %s32
      %p312 = scmp.eq.s32.totalorder %s311, 0
      %s314 = sadd.s32 %s313, 1
      %s315 = scalar_select %p312, %s313, %s314
      %p318 = pneg %p312
      %p319 = scmp.eq.s32.totalorder %s25, 1
      %p320 = por %p318, %p319
      %p321 = scmp.ne.s32.totalorder %s313, %s316
      %p322 = scmp.eq.s32.totalorder %s25, 0
      %p323 = por %p321, %p322
      %p324 = scmp.ne.s32.totalorder %s313, %s316
      %p325 = scmp.eq.s32.totalorder %s30, 1
      %p326 = por %p324, %p325
      %p327 = scmp.ne.s32.totalorder %s316, %s317
      %p328 = scmp.eq.s32.totalorder %s30, 0
      %p329 = por %p327, %p328
      %p330 = scmp.ne.s32.totalorder %s316, %s317
      %p331 = scmp.eq.s32.totalorder %s31, 1
      %p332 = por %p330, %p331
      %p334 = scmp.ne.s32.totalorder %s317, %s333
      %p335 = scmp.eq.s32.totalorder %s31, 0
      %p336 = por %p334, %p335
      %p337 = scmp.le.s32.totalorder 1, %s25
      %p338 = scmp.lt.s32.totalorder %s25, 3
      %p339 = pnand %p337, %p338
      %p340 = pneg %p339
      // Predicated region
      $region9: #{tpu_custom_call.1} parent=5 // pred_check
        _
      $region10: #{tpu_custom_call.1} parent=5 // pred_check_branch
        %342 = sbr.rel (%p339) target = $region12
      $region11: #{tpu_custom_call.1} parent=5 // pred_region
        %s343 = ssub.s32 %s25, 1
        // Predicated region
        $region13: #{tpu_custom_call.1} parent=11 // pred_check
          %p344 = pneg %p72
        $region14: #{tpu_custom_call.1} parent=11 // pred_check_branch
          %346 = sbr.rel (%p344) target = $region16
        $region15: #{tpu_custom_call.1} parent=11 // pred_region
          _
        $region16: #{tpu_custom_call.1} parent=11 // pred_fallthru
          _
        // Predicated region
        $region17: #{tpu_custom_call.1} parent=11 // pred_check
          %p347 = pneg %p93
        $region18: #{tpu_custom_call.1} parent=11 // pred_check_branch
          %349 = sbr.rel (%p347) target = $region20
        $region19: #{tpu_custom_call.1} parent=11 // pred_region
          _
        $region20: #{tpu_custom_call.1} parent=11 // pred_fallthru
          _
        // Predicated region
        $region21: #{tpu_custom_call.1} parent=11 // pred_check
          %p350 = pneg %p114
        $region22: #{tpu_custom_call.1} parent=11 // pred_check_branch
          %352 = sbr.rel (%p350) target = $region24
        $region23: #{tpu_custom_call.1} parent=11 // pred_region
          _
        $region24: #{tpu_custom_call.1} parent=11 // pred_fallthru
          _
        // Predicated region
        $region25: #{tpu_custom_call.1} parent=11 // pred_check
          %p353 = pneg %p135
        $region26: #{tpu_custom_call.1} parent=11 // pred_check_branch
          %355 = sbr.rel (%p353) target = $region28
        $region27: #{tpu_custom_call.1} parent=11 // pred_region
          _
        $region28: #{tpu_custom_call.1} parent=11 // pred_fallthru
          _
        // Predicated region
        $region29: #{tpu_custom_call.1} parent=11 // pred_check
          %p356 = pneg %p156
        $region30: #{tpu_custom_call.1} parent=11 // pred_check_branch
          %358 = sbr.rel (%p356) target = $region32
        $region31: #{tpu_custom_call.1} parent=11 // pred_region
          _
        $region32: #{tpu_custom_call.1} parent=11 // pred_fallthru
          _
        // Predicated region
        $region33: #{tpu_custom_call.1} parent=11 // pred_check
          %p359 = pneg %p177
        $region34: #{tpu_custom_call.1} parent=11 // pred_check_branch
          %361 = sbr.rel (%p359) target = $region36
        $region35: #{tpu_custom_call.1} parent=11 // pred_region
          _
        $region36: #{tpu_custom_call.1} parent=11 // pred_fallthru
          _
        // Predicated region
        $region37: #{tpu_custom_call.1} parent=11 // pred_check
          %p362 = pneg %p198
        $region38: #{tpu_custom_call.1} parent=11 // pred_check_branch
          %364 = sbr.rel (%p362) target = $region40
        $region39: #{tpu_custom_call.1} parent=11 // pred_region
          _
        $region40: #{tpu_custom_call.1} parent=11 // pred_fallthru
          _
        // Predicated region
        $region41: #{tpu_custom_call.1} parent=11 // pred_check
          %p365 = pneg %p219
        $region42: #{tpu_custom_call.1} parent=11 // pred_check_branch
          %367 = sbr.rel (%p365) target = $region44
        $region43: #{tpu_custom_call.1} parent=11 // pred_region
          _
        $region44: #{tpu_custom_call.1} parent=11 // pred_fallthru
          _
        // Predicated region
        $region45: #{tpu_custom_call.1} parent=11 // pred_check
          %p368 = pneg %p240
        $region46: #{tpu_custom_call.1} parent=11 // pred_check_branch
          %370 = sbr.rel (%p368) target = $region48
        $region47: #{tpu_custom_call.1} parent=11 // pred_region
          _
        $region48: #{tpu_custom_call.1} parent=11 // pred_fallthru
          _
        // Predicated region
        $region49: #{tpu_custom_call.1} parent=11 // pred_check
          %p371 = pneg %p261
        $region50: #{tpu_custom_call.1} parent=11 // pred_check_branch
          %373 = sbr.rel (%p371) target = $region52
        $region51: #{tpu_custom_call.1} parent=11 // pred_region
          _
        $region52: #{tpu_custom_call.1} parent=11 // pred_fallthru
          _
        // Predicated region
        $region53: #{tpu_custom_call.1} parent=11 // pred_check
          %p374 = pneg %p282
        $region54: #{tpu_custom_call.1} parent=11 // pred_check_branch
          %376 = sbr.rel (%p374) target = $region56
        $region55: #{tpu_custom_call.1} parent=11 // pred_region
          _
        $region56: #{tpu_custom_call.1} parent=11 // pred_fallthru
          _
        // Predicated region
        $region57: #{tpu_custom_call.1} parent=11 // pred_check
          %p377 = pneg %p303
        $region58: #{tpu_custom_call.1} parent=11 // pred_check_branch
          %379 = sbr.rel (%p377) target = $region60
        $region59: #{tpu_custom_call.1} parent=11 // pred_region
          _
        $region60: #{tpu_custom_call.1} parent=11 // pred_fallthru
          _
      $region12: #{tpu_custom_call.1} parent=5 // pred_fallthru
        _
      %p380 = scmp.lt.s32.totalorder %s25, 2
      // Predicated region
      $region61: #{tpu_custom_call.1} parent=5 // pred_check
        %p381 = pneg %p380
      $region62: #{tpu_custom_call.1} parent=5 // pred_check_branch
        %383 = sbr.rel (%p381) target = $region64
      $region63: #{tpu_custom_call.1} parent=5 // pred_region
        // Predicated region
        $region65: #{tpu_custom_call.1} parent=63 // pred_check
          %p384 = pneg %p45
        $region66: #{tpu_custom_call.1} parent=63 // pred_check_branch
          %386 = sbr.rel (%p384) target = $region68
        $region67: #{tpu_custom_call.1} parent=63 // pred_region
          %s387 = sand.u32 %s35, 1
          %s388 = scalar_lea.sflag [#allocation3], %s387
          %s389 = sand.u32 %s35, 1
          %s390 = smul.addr %s389, 64
          %s391 = scalar_lea.vmem [#allocation2], %s390
          %s392 = smul.u32 8, %s25
          %s394 = ssub.s32 1024, 1024
          %395 = vsyncadd %s388, %s394
          %s396 = smul.addr %s392, 128
          %s397 = scalar_lea.hbm %s0, %s396
          %s398 = sshll.u32 %s391, 4
          %s399 = int_to_ptr.vmem [resolvable:$true] %s398
          %404 = dma.hbm_to_vmem [thread:$0]  %s397, 1024, %s399, %s388, 128, 128, 8
        $region68: #{tpu_custom_call.1} parent=63 // pred_fallthru
          _
      $region64: #{tpu_custom_call.1} parent=5 // pred_fallthru
        _
      %p405 = scmp.le.s32.totalorder 1, %s25
      %p406 = scmp.lt.s32.totalorder %s25, 3
      %p407 = pnand %p405, %p406
      %p408 = pneg %p407
      // Predicated region
      $region69: #{tpu_custom_call.1} parent=5 // pred_check
        _
      $region70: #{tpu_custom_call.1} parent=5 // pred_check_branch
        %410 = sbr.rel (%p407) target = $region72
      $region71: #{tpu_custom_call.1} parent=5 // pred_region
        %s411 = ssub.s32 %s25, 1
        %s412 = sand.u32 %s38, 1
        %s413 = scalar_lea.sflag [#allocation3], %s412
        %s414 = sand.u32 %s38, 1
        %s415 = smul.addr %s414, 64
        %s416 = scalar_lea.vmem [#allocation2], %s415
        // Predicated region
        $region73: #{tpu_custom_call.1} parent=71 // pred_check
          %p417 = pneg %p51
        $region74: #{tpu_custom_call.1} parent=71 // pred_check_branch
          %419 = sbr.rel (%p417) target = $region76
        $region75: #{tpu_custom_call.1} parent=71 // pred_region
          %420 = dma.done %s413, 1024
        $region76: #{tpu_custom_call.1} parent=71 // pred_fallthru
          _
        %s421 = sand.u32 %s38, 1
        %s422 = scalar_lea.sflag [#allocation3], %s421
        %s423 = sand.u32 %s38, 1
        %s424 = smul.addr %s423, 64
        %s425 = scalar_lea.vmem [#allocation2], %s424
        %p426 = pneg %p51
        %p427 = pneg %p48
        %p428 = pneg %p72
        %p429 = pneg %p69
        %p430 = pneg %p93
        %p431 = pneg %p90
        %p432 = pneg %p114
        %p433 = pneg %p111
        %p434 = pneg %p135
        %p435 = pneg %p132
        %p436 = pneg %p156
        %p437 = pneg %p153
        %p438 = pneg %p177
        %p439 = pneg %p174
        %p440 = pneg %p198
        %p441 = pneg %p195
        %p442 = pneg %p219
        %p443 = pneg %p216
        %p444 = pneg %p240
        %p445 = pneg %p237
        %p446 = pneg %p261
        %p447 = pneg %p258
        %p448 = pneg %p282
        %p449 = pneg %p279
        %p450 = pneg %p303
        %p451 = pneg %p300
        %p452 = pneg %p329
        %p453 = pneg %p326
        %s454 = sand.u32 %s316, 1
        %s455 = scalar_lea.sflag [#allocation4], %s454
        %s456 = sand.u32 %s316, 1
        %s457 = smul.addr %s456, 64
        %s458 = scalar_lea.vmem [#allocation5], %s457
        %s459 = smul.u32 8, %s30
        %s460 = smul.u32 8, %s30
        %v461 = vld [vmem:[%s416] sm:$0xff]
        %v462 = vld [vmem:[%s416 + $0x8] sm:$0xff]
        %v463 = vld [vmem:[%s416 + $0x10] sm:$0xff]
        %v464 = vld [vmem:[%s416 + $0x18] sm:$0xff]
        %v465 = vld [vmem:[%s416 + $0x20] sm:$0xff]
        %v466 = vld [vmem:[%s416 + $0x28] sm:$0xff]
        %v467 = vld [vmem:[%s416 + $0x30] sm:$0xff]
        %v468 = vld [vmem:[%s416 + $0x38] sm:$0xff]
        %vm469 = vcmask 261120
        %v470 = vsel %vm469, %v461, 0.0
        %471 = vadd.xlane.f32.xlu0 %v470
        %v472 = vpop.xlane.xlu0 %471
        %v473 = vsel %vm469, %v462, 0.0
        %474 = vadd.xlane.f32.xlu0 %v473
        %v475 = vpop.xlane.xlu0 %474
        %v476 = vsel %vm469, %v463, 0.0
        %477 = vadd.xlane.f32.xlu0 %v476
        %v478 = vpop.xlane.xlu0 %477
        %v479 = vsel %vm469, %v464, 0.0
        %480 = vadd.xlane.f32.xlu0 %v479
        %v481 = vpop.xlane.xlu0 %480
        %v482 = vsel %vm469, %v465, 0.0
        %483 = vadd.xlane.f32.xlu0 %v482
        %v484 = vpop.xlane.xlu0 %483
        %v485 = vsel %vm469, %v466, 0.0
        %486 = vadd.xlane.f32.xlu0 %v485
        %v487 = vpop.xlane.xlu0 %486
        %v488 = vsel %vm469, %v467, 0.0
        %489 = vadd.xlane.f32.xlu0 %v488
        %v490 = vpop.xlane.xlu0 %489
        %v491 = vsel %vm469, %v468, 0.0
        %492 = vadd.xlane.f32.xlu0 %v491
        %v493 = vpop.xlane.xlu0 %492
        %v494 = vrcp.pop 32.0
        %v495 = vmul.f32 %v472, %v494
        %v496 = vmul.f32 %v475, %v494
        %v497 = vmul.f32 %v478, %v494
        %v498 = vmul.f32 %v481, %v494
        %v499 = vmul.f32 %v484, %v494
        %v500 = vmul.f32 %v487, %v494
        %v501 = vmul.f32 %v490, %v494
        %v502 = vmul.f32 %v493, %v494
        %v503 = vsub.f32 %v461, %v495
        %v504 = vsub.f32 %v462, %v496
        %v505 = vsub.f32 %v463, %v497
        %v506 = vsub.f32 %v464, %v498
        %v507 = vsub.f32 %v465, %v499
        %v508 = vsub.f32 %v466, %v500
        %v509 = vsub.f32 %v467, %v501
        %v510 = vsub.f32 %v468, %v502
        %v511 = vmul.f32 %v503, %v503
        %v512 = vmul.f32 %v504, %v504
        %v513 = vmul.f32 %v505, %v505
        %v514 = vmul.f32 %v506, %v506
        %v515 = vmul.f32 %v507, %v507
        %v516 = vmul.f32 %v508, %v508
        %v517 = vmul.f32 %v509, %v509
        %v518 = vmul.f32 %v510, %v510
        %v519 = vsel %vm469, %v511, 0.0
        %520 = vadd.xlane.f32.xlu0 %v519
        %v521 = vpop.xlane.xlu0 %520
        %v522 = vsel %vm469, %v512, 0.0
        %523 = vadd.xlane.f32.xlu0 %v522
        %v524 = vpop.xlane.xlu0 %523
        %v525 = vsel %vm469, %v513, 0.0
        %526 = vadd.xlane.f32.xlu0 %v525
        %v527 = vpop.xlane.xlu0 %526
        %v528 = vsel %vm469, %v514, 0.0
        %529 = vadd.xlane.f32.xlu0 %v528
        %v530 = vpop.xlane.xlu0 %529
        %v531 = vsel %vm469, %v515, 0.0
        %532 = vadd.xlane.f32.xlu0 %v531
        %v533 = vpop.xlane.xlu0 %532
        %v534 = vsel %vm469, %v516, 0.0
        %535 = vadd.xlane.f32.xlu0 %v534
        %v536 = vpop.xlane.xlu0 %535
        %v537 = vsel %vm469, %v517, 0.0
        %538 = vadd.xlane.f32.xlu0 %v537
        %v539 = vpop.xlane.xlu0 %538
        %v540 = vsel %vm469, %v518, 0.0
        %541 = vadd.xlane.f32.xlu0 %v540
        %v542 = vpop.xlane.xlu0 %541
        %v543 = vmul.f32 %v521, %v494
        %v544 = vmul.f32 %v524, %v494
        %v545 = vmul.f32 %v527, %v494
        %v546 = vmul.f32 %v530, %v494
        %v547 = vmul.f32 %v533, %v494
        %v548 = vmul.f32 %v536, %v494
        %v549 = vmul.f32 %v539, %v494
        %v550 = vmul.f32 %v542, %v494
        %v551 = vadd.f32 %v543, 1e-05
        %v552 = vadd.f32 %v544, 1e-05
        %v553 = vadd.f32 %v545, 1e-05
        %v554 = vadd.f32 %v546, 1e-05
        %v555 = vadd.f32 %v547, 1e-05
        %v556 = vadd.f32 %v548, 1e-05
        %v557 = vadd.f32 %v549, 1e-05
        %v558 = vadd.f32 %v550, 1e-05
        %v559 = vrsqrt.pop %v551
        %v560 = vrsqrt.pop %v552
        %v561 = vrsqrt.pop %v553
        %v562 = vrsqrt.pop %v554
        %v563 = vrsqrt.pop %v555
        %v564 = vrsqrt.pop %v556
        %v565 = vrsqrt.pop %v557
        %v566 = vrsqrt.pop %v558
        %v567 = vmul.f32 %v503, %v559
        %v568 = vmul.f32 %v504, %v560
        %v569 = vmul.f32 %v505, %v561
        %v570 = vmul.f32 %v506, %v562
        %v571 = vmul.f32 %v507, %v563
        %v572 = vmul.f32 %v508, %v564
        %v573 = vmul.f32 %v509, %v565
        %v574 = vmul.f32 %v510, %v566
        %v575 = vld [vmem:[%s5] sm:$0x1]
        %v577 = vlaneseq
        %v578 = vshrl.u32 %v577, 7
        %v579 = vsub.s32 0, %v578
        %v580 = vrot.slane %v575, %v579
        %v582 = vmul.f32 %v567, %v580
        %v583 = vmul.f32 %v568, %v580
        %v584 = vmul.f32 %v569, %v580
        %v585 = vmul.f32 %v570, %v580
        %v586 = vmul.f32 %v571, %v580
        %v587 = vmul.f32 %v572, %v580
        %v588 = vmul.f32 %v573, %v580
        %v589 = vmul.f32 %v574, %v580
        %v590 = vld [vmem:[%s6] sm:$0x1]
        %v592 = vlaneseq
        %v593 = vshrl.u32 %v592, 7
        %v594 = vsub.s32 0, %v593
        %v595 = vrot.slane %v590, %v594
        %v597 = vadd.f32 %v582, %v595
        %v598 = vadd.f32 %v583, %v595
        %v599 = vadd.f32 %v584, %v595
        %v600 = vadd.f32 %v585, %v595
        %v601 = vadd.f32 %v586, %v595
        %v602 = vadd.f32 %v587, %v595
        %v603 = vadd.f32 %v588, %v595
        %v604 = vadd.f32 %v589, %v595
        %v605 = vld [vmem:[%s1] sm:$0xff]
        %v606 = vld [vmem:[%s1 + $0x8] sm:$0xff]
        %v607 = vld [vmem:[%s1 + $0x10] sm:$0xff]
        %v608 = vld [vmem:[%s1 + $0x18] sm:$0xff]
        %v609 = vld [vmem:[%s2] sm:$0x1]
        %v611 = vlaneseq
        %v612 = vshrl.u32 %v611, 7
        %v613 = vsub.s32 0, %v612
        %v614 = vrot.slane %v609, %v613
        %v617 = vsel %vm469, %v597, 0
        %v620 = vsel %vm469, %v598, 0
        %v623 = vsel %vm469, %v599, 0
        %v626 = vsel %vm469, %v600, 0
        %v629 = vsel %vm469, %v601, 0
        %v632 = vsel %vm469, %v602, 0
        %v635 = vsel %vm469, %v603, 0
        %v638 = vsel %vm469, %v604, 0
        %640 = vmatprep.subr.mxu0 0.0
        %641 = vmatpush1.msra.mxu0 %v605
        %642 = vmatprep.subr.mxu0 0.0
        %643 = vmatpush1.msra.mxu0 %v606
        %644 = vmatprep.subr.mxu0 0.0
        %645 = vmatpush1.msra.mxu0 %v607
        %646 = vmatprep.subr.mxu0 0.0
        %647 = vmatpush1.msra.mxu0 %v608
        %648 = vmatprep.subr.mxu0 0.0
        %649 = vmatpush1.msra.mxu0 0.0
        %650 = vmatprep.subr.mxu0 0.0
        %651 = vmatpush1.msra.mxu0 0.0
        %652 = vmatprep.subr.mxu0 0.0
        %653 = vmatpush1.msra.mxu0 0.0
        %654 = vmatprep.subr.mxu0 0.0
        %655 = vmatpush1.msra.mxu0 0.0
        %656 = vmatprep.subr.mxu0 0.0
        %657 = vmatpush1.msra.mxu0 0.0
        %658 = vmatprep.subr.mxu0 0.0
        %659 = vmatpush1.msra.mxu0 0.0
        %660 = vmatprep.subr.mxu0 0.0
        %661 = vmatpush1.msra.mxu0 0.0
        %662 = vmatprep.subr.mxu0 0.0
        %663 = vmatpush1.msra.mxu0 0.0
        %664 = vmatprep.subr.mxu0 0.0
        %665 = vmatpush1.msra.mxu0 0.0
        %666 = vmatprep.subr.mxu0 0.0
        %667 = vmatpush1.msra.mxu0 0.0
        %668 = vmatprep.subr.mxu0 0.0
        %669 = vmatpush1.msra.mxu0 0.0
        %670 = vmatprep.subr.mxu0 0.0
        %671 = vmatpush1.msra.mxu0 0.0
        %672 = vmatprep.subr.mxu0 0.0
        %673 = vmatpush1.msra.mxu0 0.0
        %674 = vmatprep.subr.mxu0 0.0
        %675 = vmatpush1.msra.mxu0 0.0
        %676 = vmatprep.subr.mxu0 0.0
        %677 = vmatpush1.msra.mxu0 0.0
        %678 = vmatprep.subr.mxu0 0.0
        %679 = vmatpush1.msra.mxu0 0.0
        %680 = vmatprep.subr.mxu0 0.0
        %681 = vmatpush1.msra.mxu0 0.0
        %682 = vmatprep.subr.mxu0 0.0
        %683 = vmatpush1.msra.mxu0 0.0
        %684 = vmatprep.subr.mxu0 0.0
        %685 = vmatpush1.msra.mxu0 0.0
        %686 = vmatprep.subr.mxu0 0.0
        %687 = vmatpush1.msra.mxu0 0.0
        %688 = vmatprep.subr.mxu0 0.0
        %689 = vmatpush1.msra.mxu0 0.0
        %690 = vmatprep.subr.mxu0 0.0
        %691 = vmatpush1.msra.mxu0 0.0
        %692 = vmatprep.subr.mxu0 0.0
        %693 = vmatpush1.msra.mxu0 0.0
        %694 = vmatprep.subr.mxu0 0.0
        %695 = vmatpush1.msra.mxu0 0.0
        %696 = vmatprep.subr.mxu0 0.0
        %697 = vmatpush1.msra.mxu0 0.0
        %698 = vmatprep.subr.mxu0 0.0
        %699 = vmatpush1.msra.mxu0 0.0
        %700 = vmatprep.subr.mxu0 0.0
        %701 = vmatpush1.msra.mxu0 0.0
        %702 = vmatprep.subr.mxu0 0.0
        %703 = vmatpush1.msra.mxu0 0.0
        %704 = vmatprep.mubr.f32.mxu0 0.0
        %705 = vmatmul.mubr.f32.gmra.mrb[0].mxu0 %v617
        %v706 = vpop.f32.mrb[0].mxu0
        %v707 = vadd.f32 %v614, %v706
        %v708 = vpop.f32.mrb[0].mxu0
        %709 = vmatprep.mubr.f32.mxu0 0.0
        %710 = vmatmul.mubr.f32.gmra.mrb[0].mxu0 %v620
        %v711 = vpop.f32.mrb[0].mxu0
        %v712 = vadd.f32 %v614, %v711
        %v713 = vpop.f32.mrb[0].mxu0
        %714 = vmatprep.mubr.f32.mxu0 0.0
        %715 = vmatmul.mubr.f32.gmra.mrb[0].mxu0 %v623
        %v716 = vpop.f32.mrb[0].mxu0
        %v717 = vadd.f32 %v614, %v716
        %v718 = vpop.f32.mrb[0].mxu0
        %719 = vmatprep.mubr.f32.mxu0 0.0
        %720 = vmatmul.mubr.f32.gmra.mrb[0].mxu0 %v626
        %v721 = vpop.f32.mrb[0].mxu0
        %v722 = vadd.f32 %v614, %v721
        %v723 = vpop.f32.mrb[0].mxu0
        %724 = vmatprep.mubr.f32.mxu0 0.0
        %725 = vmatmul.mubr.f32.gmra.mrb[0].mxu0 %v629
        %v726 = vpop.f32.mrb[0].mxu0
        %v727 = vadd.f32 %v614, %v726
        %v728 = vpop.f32.mrb[0].mxu0
        %729 = vmatprep.mubr.f32.mxu0 0.0
        %730 = vmatmul.mubr.f32.gmra.mrb[0].mxu0 %v632
        %v731 = vpop.f32.mrb[0].mxu0
        %v732 = vadd.f32 %v614, %v731
        %v733 = vpop.f32.mrb[0].mxu0
        %734 = vmatprep.mubr.f32.mxu0 0.0
        %735 = vmatmul.mubr.f32.gmra.mrb[0].mxu0 %v635
        %v736 = vpop.f32.mrb[0].mxu0
        %v737 = vadd.f32 %v614, %v736
        %v738 = vpop.f32.mrb[0].mxu0
        %739 = vmatprep.mubr.f32.mxu0 0.0
        %740 = vmatmul.mubr.f32.gmra.mrb[0].mxu0 %v638
        %v741 = vpop.f32.mrb[0].mxu0
        %v742 = vadd.f32 %v614, %v741
        %v743 = vpop.f32.mrb[0].mxu0
        %744 = vdwg.mxu0
        %v745 = vld [vmem:[%s3] sm:$0xff]
        %v746 = vld [vmem:[%s3 + $0x8] sm:$0xff]
        %v747 = vld [vmem:[%s3 + $0x10] sm:$0xff]
        %v748 = vld [vmem:[%s3 + $0x18] sm:$0xff]
        %750 = vrot.lane.b32.xlu0 %v707, 96
        %v751 = vpop.permute.xlu0 %750
        %vm752 = vcmask 64512
        %v753 = vsel %vm752, %v707, 0
        %v755 = vsel %vm752, %v751, 0
        %757 = vmatprep.subr.mxu0 0.0
        %758 = vmatpush1.xpose.msra.mxu0 %v755
        %759 = vmatprep.subr.mxu0 0.0
        %760 = vmatpush1.xpose.msra.mxu0 0.0
        %761 = vmatprep.subr.mxu0 0.0
        %762 = vmatpush1.xpose.msra.mxu0 0.0
        %763 = vmatprep.subr.mxu0 0.0
        %764 = vmatpush1.xpose.msra.mxu0 0.0
        %765 = vmatprep.subr.mxu0 0.0
        %766 = vmatpush1.xpose.msra.mxu0 0.0
        %767 = vmatprep.subr.mxu0 0.0
        %768 = vmatpush1.xpose.msra.mxu0 0.0
        %769 = vmatprep.subr.mxu0 0.0
        %770 = vmatpush1.xpose.msra.mxu0 0.0
        %771 = vmatprep.subr.mxu0 0.0
        %772 = vmatpush1.xpose.msra.mxu0 0.0
        %773 = vmatprep.subr.mxu0 0.0
        %774 = vmatpush1.xpose.msra.mxu0 0.0
        %775 = vmatprep.subr.mxu0 0.0
        %776 = vmatpush1.xpose.msra.mxu0 0.0
        %777 = vmatprep.subr.mxu0 0.0
        %778 = vmatpush1.xpose.msra.mxu0 0.0
        %779 = vmatprep.subr.mxu0 0.0
        %780 = vmatpush1.xpose.msra.mxu0 0.0
        %781 = vmatprep.subr.mxu0 0.0
        %782 = vmatpush1.xpose.msra.mxu0 0.0
        %783 = vmatprep.subr.mxu0 0.0
        %784 = vmatpush1.xpose.msra.mxu0 0.0
        %785 = vmatprep.subr.mxu0 0.0
        %786 = vmatpush1.xpose.msra.mxu0 0.0
        %787 = vmatprep.subr.mxu0 0.0
        %788 = vmatpush1.xpose.msra.mxu0 0.0
        %789 = vmatprep.subr.mxu0 0.0
        %790 = vmatpush1.xpose.msra.mxu0 0.0
        %791 = vmatprep.subr.mxu0 0.0
        %792 = vmatpush1.xpose.msra.mxu0 0.0
        %793 = vmatprep.subr.mxu0 0.0
        %794 = vmatpush1.xpose.msra.mxu0 0.0
        %795 = vmatprep.subr.mxu0 0.0
        %796 = vmatpush1.xpose.msra.mxu0 0.0
        %797 = vmatprep.subr.mxu0 0.0
        %798 = vmatpush1.xpose.msra.mxu0 0.0
        %799 = vmatprep.subr.mxu0 0.0
        %800 = vmatpush1.xpose.msra.mxu0 0.0
        %801 = vmatprep.subr.mxu0 0.0
        %802 = vmatpush1.xpose.msra.mxu0 0.0
        %803 = vmatprep.subr.mxu0 0.0
        %804 = vmatpush1.xpose.msra.mxu0 0.0
        %805 = vmatprep.subr.mxu0 0.0
        %806 = vmatpush1.xpose.msra.mxu0 0.0
        %807 = vmatprep.subr.mxu0 0.0
        %808 = vmatpush1.xpose.msra.mxu0 0.0
        %809 = vmatprep.subr.mxu0 0.0
        %810 = vmatpush1.xpose.msra.mxu0 0.0
        %811 = vmatprep.subr.mxu0 0.0
        %812 = vmatpush1.xpose.msra.mxu0 0.0
        %813 = vmatprep.subr.mxu0 0.0
        %814 = vmatpush1.xpose.msra.mxu0 0.0
        %815 = vmatprep.subr.mxu0 0.0
        %816 = vmatpush1.xpose.msra.mxu0 0.0
        %817 = vmatprep.subr.mxu0 0.0
        %818 = vmatpush1.xpose.msra.mxu0 0.0
        %819 = vmatprep.subr.mxu0 0.0
        %820 = vmatpush1.xpose.msra.mxu0 0.0
        %821 = vmatprep.mubr.f32.mxu0 0.0
        %822 = vmatmul.mubr.f32.gmra.mrb[0].mxu0 %v753
        %v823 = vpop.f32.mrb[0].mxu0
        %v824 = vadd.f32 0.0, %v823
        %v825 = vpop.f32.mrb[0].mxu0
        %826 = vdwg.mxu0
        %828 = vrot.lane.b32.xlu0 %v712, 96
        %v829 = vpop.permute.xlu0 %828
        %v830 = vsel %vm752, %v712, 0
        %v832 = vsel %vm752, %v829, 0
        %834 = vmatprep.subr.mxu0 0.0
        %835 = vmatpush1.xpose.msra.mxu0 %v832
        %836 = vmatprep.subr.mxu0 0.0
        %837 = vmatpush1.xpose.msra.mxu0 0.0
        %838 = vmatprep.subr.mxu0 0.0
        %839 = vmatpush1.xpose.msra.mxu0 0.0
        %840 = vmatprep.subr.mxu0 0.0
        %841 = vmatpush1.xpose.msra.mxu0 0.0
        %842 = vmatprep.subr.mxu0 0.0
        %843 = vmatpush1.xpose.msra.mxu0 0.0
        %844 = vmatprep.subr.mxu0 0.0
        %845 = vmatpush1.xpose.msra.mxu0 0.0
        %846 = vmatprep.subr.mxu0 0.0
        %847 = vmatpush1.xpose.msra.mxu0 0.0
        %848 = vmatprep.subr.mxu0 0.0
        %849 = vmatpush1.xpose.msra.mxu0 0.0
        %850 = vmatprep.subr.mxu0 0.0
        %851 = vmatpush1.xpose.msra.mxu0 0.0
        %852 = vmatprep.subr.mxu0 0.0
        %853 = vmatpush1.xpose.msra.mxu0 0.0
        %854 = vmatprep.subr.mxu0 0.0
        %855 = vmatpush1.xpose.msra.mxu0 0.0
        %856 = vmatprep.subr.mxu0 0.0
        %857 = vmatpush1.xpose.msra.mxu0 0.0
        %858 = vmatprep.subr.mxu0 0.0
        %859 = vmatpush1.xpose.msra.mxu0 0.0
        %860 = vmatprep.subr.mxu0 0.0
        %861 = vmatpush1.xpose.msra.mxu0 0.0
        %862 = vmatprep.subr.mxu0 0.0
        %863 = vmatpush1.xpose.msra.mxu0 0.0
        %864 = vmatprep.subr.mxu0 0.0
        %865 = vmatpush1.xpose.msra.mxu0 0.0
        %866 = vmatprep.subr.mxu0 0.0
        %867 = vmatpush1.xpose.msra.mxu0 0.0
        %868 = vmatprep.subr.mxu0 0.0
        %869 = vmatpush1.xpose.msra.mxu0 0.0
        %870 = vmatprep.subr.mxu0 0.0
        %871 = vmatpush1.xpose.msra.mxu0 0.0
        %872 = vmatprep.subr.mxu0 0.0
        %873 = vmatpush1.xpose.msra.mxu0 0.0
        %874 = vmatprep.subr.mxu0 0.0
        %875 = vmatpush1.xpose.msra.mxu0 0.0
        %876 = vmatprep.subr.mxu0 0.0
        %877 = vmatpush1.xpose.msra.mxu0 0.0
        %878 = vmatprep.subr.mxu0 0.0
        %879 = vmatpush1.xpose.msra.mxu0 0.0
        %880 = vmatprep.subr.mxu0 0.0
        %881 = vmatpush1.xpose.msra.mxu0 0.0
        %882 = vmatprep.subr.mxu0 0.0
        %883 = vmatpush1.xpose.msra.mxu0 0.0
        %884 = vmatprep.subr.mxu0 0.0
        %885 = vmatpush1.xpose.msra.mxu0 0.0
        %886 = vmatprep.subr.mxu0 0.0
        %887 = vmatpush1.xpose.msra.mxu0 0.0
        %888 = vmatprep.subr.mxu0 0.0
        %889 = vmatpush1.xpose.msra.mxu0 0.0
        %890 = vmatprep.subr.mxu0 0.0
        %891 = vmatpush1.xpose.msra.mxu0 0.0
        %892 = vmatprep.subr.mxu0 0.0
        %893 = vmatpush1.xpose.msra.mxu0 0.0
        %894 = vmatprep.subr.mxu0 0.0
        %895 = vmatpush1.xpose.msra.mxu0 0.0
        %896 = vmatprep.subr.mxu0 0.0
        %897 = vmatpush1.xpose.msra.mxu0 0.0
        %898 = vmatprep.mubr.f32.mxu0 0.0
        %899 = vmatmul.mubr.f32.gmra.mrb[0].mxu0 %v830
        %v900 = vpop.f32.mrb[0].mxu0
        %v901 = vadd.f32 0.0, %v900
        %v902 = vpop.f32.mrb[0].mxu0
        %903 = vdwg.mxu0
        %905 = vrot.lane.b32.xlu0 %v717, 96
        %v906 = vpop.permute.xlu0 %905
        %v907 = vsel %vm752, %v717, 0
        %v909 = vsel %vm752, %v906, 0
        %911 = vmatprep.subr.mxu0 0.0
        %912 = vmatpush1.xpose.msra.mxu0 %v909
        %913 = vmatprep.subr.mxu0 0.0
        %914 = vmatpush1.xpose.msra.mxu0 0.0
        %915 = vmatprep.subr.mxu0 0.0
        %916 = vmatpush1.xpose.msra.mxu0 0.0
        %917 = vmatprep.subr.mxu0 0.0
        %918 = vmatpush1.xpose.msra.mxu0 0.0
        %919 = vmatprep.subr.mxu0 0.0
        %920 = vmatpush1.xpose.msra.mxu0 0.0
        %921 = vmatprep.subr.mxu0 0.0
        %922 = vmatpush1.xpose.msra.mxu0 0.0
        %923 = vmatprep.subr.mxu0 0.0
        %924 = vmatpush1.xpose.msra.mxu0 0.0
        %925 = vmatprep.subr.mxu0 0.0
        %926 = vmatpush1.xpose.msra.mxu0 0.0
        %927 = vmatprep.subr.mxu0 0.0
        %928 = vmatpush1.xpose.msra.mxu0 0.0
        %929 = vmatprep.subr.mxu0 0.0
        %930 = vmatpush1.xpose.msra.mxu0 0.0
        %931 = vmatprep.subr.mxu0 0.0
        %932 = vmatpush1.xpose.msra.mxu0 0.0
        %933 = vmatprep.subr.mxu0 0.0
        %934 = vmatpush1.xpose.msra.mxu0 0.0
        %935 = vmatprep.subr.mxu0 0.0
        %936 = vmatpush1.xpose.msra.mxu0 0.0
        %937 = vmatprep.subr.mxu0 0.0
        %938 = vmatpush1.xpose.msra.mxu0 0.0
        %939 = vmatprep.subr.mxu0 0.0
        %940 = vmatpush1.xpose.msra.mxu0 0.0
        %941 = vmatprep.subr.mxu0 0.0
        %942 = vmatpush1.xpose.msra.mxu0 0.0
        %943 = vmatprep.subr.mxu0 0.0
        %944 = vmatpush1.xpose.msra.mxu0 0.0
        %945 = vmatprep.subr.mxu0 0.0
        %946 = vmatpush1.xpose.msra.mxu0 0.0
        %947 = vmatprep.subr.mxu0 0.0
        %948 = vmatpush1.xpose.msra.mxu0 0.0
        %949 = vmatprep.subr.mxu0 0.0
        %950 = vmatpush1.xpose.msra.mxu0 0.0
        %951 = vmatprep.subr.mxu0 0.0
        %952 = vmatpush1.xpose.msra.mxu0 0.0
        %953 = vmatprep.subr.mxu0 0.0
        %954 = vmatpush1.xpose.msra.mxu0 0.0
        %955 = vmatprep.subr.mxu0 0.0
        %956 = vmatpush1.xpose.msra.mxu0 0.0
        %957 = vmatprep.subr.mxu0 0.0
        %958 = vmatpush1.xpose.msra.mxu0 0.0
        %959 = vmatprep.subr.mxu0 0.0
        %960 = vmatpush1.xpose.msra.mxu0 0.0
        %961 = vmatprep.subr.mxu0 0.0
        %962 = vmatpush1.xpose.msra.mxu0 0.0
        %963 = vmatprep.subr.mxu0 0.0
        %964 = vmatpush1.xpose.msra.mxu0 0.0
        %965 = vmatprep.subr.mxu0 0.0
        %966 = vmatpush1.xpose.msra.mxu0 0.0
        %967 = vmatprep.subr.mxu0 0.0
        %968 = vmatpush1.xpose.msra.mxu0 0.0
        %969 = vmatprep.subr.mxu0 0.0
        %970 = vmatpush1.xpose.msra.mxu0 0.0
        %971 = vmatprep.subr.mxu0 0.0
        %972 = vmatpush1.xpose.msra.mxu0 0.0
        %973 = vmatprep.subr.mxu0 0.0
        %974 = vmatpush1.xpose.msra.mxu0 0.0
        %975 = vmatprep.mubr.f32.mxu0 0.0
        %976 = vmatmul.mubr.f32.gmra.mrb[0].mxu0 %v907
        %v977 = vpop.f32.mrb[0].mxu0
        %v978 = vadd.f32 0.0, %v977
        %v979 = vpop.f32.mrb[0].mxu0
        %980 = vdwg.mxu0
        %982 = vrot.lane.b32.xlu0 %v722, 96
        %v983 = vpop.permute.xlu0 %982
        %v984 = vsel %vm752, %v722, 0
        %v986 = vsel %vm752, %v983, 0
        %988 = vmatprep.subr.mxu0 0.0
        %989 = vmatpush1.xpose.msra.mxu0 %v986
        %990 = vmatprep.subr.mxu0 0.0
        %991 = vmatpush1.xpose.msra.mxu0 0.0
        %992 = vmatprep.subr.mxu0 0.0
        %993 = vmatpush1.xpose.msra.mxu0 0.0
        %994 = vmatprep.subr.mxu0 0.0
        %995 = vmatpush1.xpose.msra.mxu0 0.0
        %996 = vmatprep.subr.mxu0 0.0
        %997 = vmatpush1.xpose.msra.mxu0 0.0
        %998 = vmatprep.subr.mxu0 0.0
        %999 = vmatpush1.xpose.msra.mxu0 0.0
        %1000 = vmatprep.subr.mxu0 0.0
        %1001 = vmatpush1.xpose.msra.mxu0 0.0
        %1002 = vmatprep.subr.mxu0 0.0
        %1003 = vmatpush1.xpose.msra.mxu0 0.0
        %1004 = vmatprep.subr.mxu0 0.0
        %1005 = vmatpush1.xpose.msra.mxu0 0.0
        %1006 = vmatprep.subr.mxu0 0.0
        %1007 = vmatpush1.xpose.msra.mxu0 0.0
        %1008 = vmatprep.subr.mxu0 0.0
        %1009 = vmatpush1.xpose.msra.mxu0 0.0
        %1010 = vmatprep.subr.mxu0 0.0
        %1011 = vmatpush1.xpose.msra.mxu0 0.0
        %1012 = vmatprep.subr.mxu0 0.0
        %1013 = vmatpush1.xpose.msra.mxu0 0.0
        %1014 = vmatprep.subr.mxu0 0.0
        %1015 = vmatpush1.xpose.msra.mxu0 0.0
        %1016 = vmatprep.subr.mxu0 0.0
        %1017 = vmatpush1.xpose.msra.mxu0 0.0
        %1018 = vmatprep.subr.mxu0 0.0
        %1019 = vmatpush1.xpose.msra.mxu0 0.0
        %1020 = vmatprep.subr.mxu0 0.0
        %1021 = vmatpush1.xpose.msra.mxu0 0.0
        %1022 = vmatprep.subr.mxu0 0.0
        %1023 = vmatpush1.xpose.msra.mxu0 0.0
        %1024 = vmatprep.subr.mxu0 0.0
        %1025 = vmatpush1.xpose.msra.mxu0 0.0
        %1026 = vmatprep.subr.mxu0 0.0
        %1027 = vmatpush1.xpose.msra.mxu0 0.0
        %1028 = vmatprep.subr.mxu0 0.0
        %1029 = vmatpush1.xpose.msra.mxu0 0.0
        %1030 = vmatprep.subr.mxu0 0.0
        %1031 = vmatpush1.xpose.msra.mxu0 0.0
        %1032 = vmatprep.subr.mxu0 0.0
        %1033 = vmatpush1.xpose.msra.mxu0 0.0
        %1034 = vmatprep.subr.mxu0 0.0
        %1035 = vmatpush1.xpose.msra.mxu0 0.0
        %1036 = vmatprep.subr.mxu0 0.0
        %1037 = vmatpush1.xpose.msra.mxu0 0.0
        %1038 = vmatprep.subr.mxu0 0.0
        %1039 = vmatpush1.xpose.msra.mxu0 0.0
        %1040 = vmatprep.subr.mxu0 0.0
        %1041 = vmatpush1.xpose.msra.mxu0 0.0
        %1042 = vmatprep.subr.mxu0 0.0
        %1043 = vmatpush1.xpose.msra.mxu0 0.0
        %1044 = vmatprep.subr.mxu0 0.0
        %1045 = vmatpush1.xpose.msra.mxu0 0.0
        %1046 = vmatprep.subr.mxu0 0.0
        %1047 = vmatpush1.xpose.msra.mxu0 0.0
        %1048 = vmatprep.subr.mxu0 0.0
        %1049 = vmatpush1.xpose.msra.mxu0 0.0
        %1050 = vmatprep.subr.mxu0 0.0
        %1051 = vmatpush1.xpose.msra.mxu0 0.0
        %1052 = vmatprep.mubr.f32.mxu0 0.0
        %1053 = vmatmul.mubr.f32.gmra.mrb[0].mxu0 %v984
        %v1054 = vpop.f32.mrb[0].mxu0
        %v1055 = vadd.f32 0.0, %v1054
        %v1056 = vpop.f32.mrb[0].mxu0
        %1057 = vdwg.mxu0
        %1059 = vrot.lane.b32.xlu0 %v727, 96
        %v1060 = vpop.permute.xlu0 %1059
        %v1061 = vsel %vm752, %v727, 0
        %v1063 = vsel %vm752, %v1060, 0
        %1065 = vmatprep.subr.mxu0 0.0
        %1066 = vmatpush1.xpose.msra.mxu0 %v1063
        %1067 = vmatprep.subr.mxu0 0.0
        %1068 = vmatpush1.xpose.msra.mxu0 0.0
        %1069 = vmatprep.subr.mxu0 0.0
        %1070 = vmatpush1.xpose.msra.mxu0 0.0
        %1071 = vmatprep.subr.mxu0 0.0
        %1072 = vmatpush1.xpose.msra.mxu0 0.0
        %1073 = vmatprep.subr.mxu0 0.0
        %1074 = vmatpush1.xpose.msra.mxu0 0.0
        %1075 = vmatprep.subr.mxu0 0.0
        %1076 = vmatpush1.xpose.msra.mxu0 0.0
        %1077 = vmatprep.subr.mxu0 0.0
        %1078 = vmatpush1.xpose.msra.mxu0 0.0
        %1079 = vmatprep.subr.mxu0 0.0
        %1080 = vmatpush1.xpose.msra.mxu0 0.0
        %1081 = vmatprep.subr.mxu0 0.0
        %1082 = vmatpush1.xpose.msra.mxu0 0.0
        %1083 = vmatprep.subr.mxu0 0.0
        %1084 = vmatpush1.xpose.msra.mxu0 0.0
        %1085 = vmatprep.subr.mxu0 0.0
        %1086 = vmatpush1.xpose.msra.mxu0 0.0
        %1087 = vmatprep.subr.mxu0 0.0
        %1088 = vmatpush1.xpose.msra.mxu0 0.0
        %1089 = vmatprep.subr.mxu0 0.0
        %1090 = vmatpush1.xpose.msra.mxu0 0.0
        %1091 = vmatprep.subr.mxu0 0.0
        %1092 = vmatpush1.xpose.msra.mxu0 0.0
        %1093 = vmatprep.subr.mxu0 0.0
        %1094 = vmatpush1.xpose.msra.mxu0 0.0
        %1095 = vmatprep.subr.mxu0 0.0
        %1096 = vmatpush1.xpose.msra.mxu0 0.0
        %1097 = vmatprep.subr.mxu0 0.0
        %1098 = vmatpush1.xpose.msra.mxu0 0.0
        %1099 = vmatprep.subr.mxu0 0.0
        %1100 = vmatpush1.xpose.msra.mxu0 0.0
        %1101 = vmatprep.subr.mxu0 0.0
        %1102 = vmatpush1.xpose.msra.mxu0 0.0
        %1103 = vmatprep.subr.mxu0 0.0
        %1104 = vmatpush1.xpose.msra.mxu0 0.0
        %1105 = vmatprep.subr.mxu0 0.0
        %1106 = vmatpush1.xpose.msra.mxu0 0.0
        %1107 = vmatprep.subr.mxu0 0.0
        %1108 = vmatpush1.xpose.msra.mxu0 0.0
        %1109 = vmatprep.subr.mxu0 0.0
        %1110 = vmatpush1.xpose.msra.mxu0 0.0
        %1111 = vmatprep.subr.mxu0 0.0
        %1112 = vmatpush1.xpose.msra.mxu0 0.0
        %1113 = vmatprep.subr.mxu0 0.0
        %1114 = vmatpush1.xpose.msra.mxu0 0.0
        %1115 = vmatprep.subr.mxu0 0.0
        %1116 = vmatpush1.xpose.msra.mxu0 0.0
        %1117 = vmatprep.subr.mxu0 0.0
        %1118 = vmatpush1.xpose.msra.mxu0 0.0
        %1119 = vmatprep.subr.mxu0 0.0
        %1120 = vmatpush1.xpose.msra.mxu0 0.0
        %1121 = vmatprep.subr.mxu0 0.0
        %1122 = vmatpush1.xpose.msra.mxu0 0.0
        %1123 = vmatprep.subr.mxu0 0.0
        %1124 = vmatpush1.xpose.msra.mxu0 0.0
        %1125 = vmatprep.subr.mxu0 0.0
        %1126 = vmatpush1.xpose.msra.mxu0 0.0
        %1127 = vmatprep.subr.mxu0 0.0
        %1128 = vmatpush1.xpose.msra.mxu0 0.0
        %1129 = vmatprep.mubr.f32.mxu0 0.0
        %1130 = vmatmul.mubr.f32.gmra.mrb[0].mxu0 %v1061
        %v1131 = vpop.f32.mrb[0].mxu0
        %v1132 = vadd.f32 0.0, %v1131
        %v1133 = vpop.f32.mrb[0].mxu0
        %1134 = vdwg.mxu0
        %1136 = vrot.lane.b32.xlu0 %v732, 96
        %v1137 = vpop.permute.xlu0 %1136
        %v1138 = vsel %vm752, %v732, 0
        %v1140 = vsel %vm752, %v1137, 0
        %1142 = vmatprep.subr.mxu0 0.0
        %1143 = vmatpush1.xpose.msra.mxu0 %v1140
        %1144 = vmatprep.subr.mxu0 0.0
        %1145 = vmatpush1.xpose.msra.mxu0 0.0
        %1146 = vmatprep.subr.mxu0 0.0
        %1147 = vmatpush1.xpose.msra.mxu0 0.0
        %1148 = vmatprep.subr.mxu0 0.0
        %1149 = vmatpush1.xpose.msra.mxu0 0.0
        %1150 = vmatprep.subr.mxu0 0.0
        %1151 = vmatpush1.xpose.msra.mxu0 0.0
        %1152 = vmatprep.subr.mxu0 0.0
        %1153 = vmatpush1.xpose.msra.mxu0 0.0
        %1154 = vmatprep.subr.mxu0 0.0
        %1155 = vmatpush1.xpose.msra.mxu0 0.0
        %1156 = vmatprep.subr.mxu0 0.0
        %1157 = vmatpush1.xpose.msra.mxu0 0.0
        %1158 = vmatprep.subr.mxu0 0.0
        %1159 = vmatpush1.xpose.msra.mxu0 0.0
        %1160 = vmatprep.subr.mxu0 0.0
        %1161 = vmatpush1.xpose.msra.mxu0 0.0
        %1162 = vmatprep.subr.mxu0 0.0
        %1163 = vmatpush1.xpose.msra.mxu0 0.0
        %1164 = vmatprep.subr.mxu0 0.0
        %1165 = vmatpush1.xpose.msra.mxu0 0.0
        %1166 = vmatprep.subr.mxu0 0.0
        %1167 = vmatpush1.xpose.msra.mxu0 0.0
        %1168 = vmatprep.subr.mxu0 0.0
        %1169 = vmatpush1.xpose.msra.mxu0 0.0
        %1170 = vmatprep.subr.mxu0 0.0
        %1171 = vmatpush1.xpose.msra.mxu0 0.0
        %1172 = vmatprep.subr.mxu0 0.0
        %1173 = vmatpush1.xpose.msra.mxu0 0.0
        %1174 = vmatprep.subr.mxu0 0.0
        %1175 = vmatpush1.xpose.msra.mxu0 0.0
        %1176 = vmatprep.subr.mxu0 0.0
        %1177 = vmatpush1.xpose.msra.mxu0 0.0
        %1178 = vmatprep.subr.mxu0 0.0
        %1179 = vmatpush1.xpose.msra.mxu0 0.0
        %1180 = vmatprep.subr.mxu0 0.0
        %1181 = vmatpush1.xpose.msra.mxu0 0.0
        %1182 = vmatprep.subr.mxu0 0.0
        %1183 = vmatpush1.xpose.msra.mxu0 0.0
        %1184 = vmatprep.subr.mxu0 0.0
        %1185 = vmatpush1.xpose.msra.mxu0 0.0
        %1186 = vmatprep.subr.mxu0 0.0
        %1187 = vmatpush1.xpose.msra.mxu0 0.0
        %1188 = vmatprep.subr.mxu0 0.0
        %1189 = vmatpush1.xpose.msra.mxu0 0.0
        %1190 = vmatprep.subr.mxu0 0.0
        %1191 = vmatpush1.xpose.msra.mxu0 0.0
        %1192 = vmatprep.subr.mxu0 0.0
        %1193 = vmatpush1.xpose.msra.mxu0 0.0
        %1194 = vmatprep.subr.mxu0 0.0
        %1195 = vmatpush1.xpose.msra.mxu0 0.0
        %1196 = vmatprep.subr.mxu0 0.0
        %1197 = vmatpush1.xpose.msra.mxu0 0.0
        %1198 = vmatprep.subr.mxu0 0.0
        %1199 = vmatpush1.xpose.msra.mxu0 0.0
        %1200 = vmatprep.subr.mxu0 0.0
        %1201 = vmatpush1.xpose.msra.mxu0 0.0
        %1202 = vmatprep.subr.mxu0 0.0
        %1203 = vmatpush1.xpose.msra.mxu0 0.0
        %1204 = vmatprep.subr.mxu0 0.0
        %1205 = vmatpush1.xpose.msra.mxu0 0.0
        %1206 = vmatprep.mubr.f32.mxu0 0.0
        %1207 = vmatmul.mubr.f32.gmra.mrb[0].mxu0 %v1138
        %v1208 = vpop.f32.mrb[0].mxu0
        %v1209 = vadd.f32 0.0, %v1208
        %v1210 = vpop.f32.mrb[0].mxu0
        %1211 = vdwg.mxu0
        %1213 = vrot.lane.b32.xlu0 %v737, 96
        %v1214 = vpop.permute.xlu0 %1213
        %v1215 = vsel %vm752, %v737, 0
        %v1217 = vsel %vm752, %v1214, 0
        %1219 = vmatprep.subr.mxu0 0.0
        %1220 = vmatpush1.xpose.msra.mxu0 %v1217
        %1221 = vmatprep.subr.mxu0 0.0
        %1222 = vmatpush1.xpose.msra.mxu0 0.0
        %1223 = vmatprep.subr.mxu0 0.0
        %1224 = vmatpush1.xpose.msra.mxu0 0.0
        %1225 = vmatprep.subr.mxu0 0.0
        %1226 = vmatpush1.xpose.msra.mxu0 0.0
        %1227 = vmatprep.subr.mxu0 0.0
        %1228 = vmatpush1.xpose.msra.mxu0 0.0
        %1229 = vmatprep.subr.mxu0 0.0
        %1230 = vmatpush1.xpose.msra.mxu0 0.0
        %1231 = vmatprep.subr.mxu0 0.0
        %1232 = vmatpush1.xpose.msra.mxu0 0.0
        %1233 = vmatprep.subr.mxu0 0.0
        %1234 = vmatpush1.xpose.msra.mxu0 0.0
        %1235 = vmatprep.subr.mxu0 0.0
        %1236 = vmatpush1.xpose.msra.mxu0 0.0
        %1237 = vmatprep.subr.mxu0 0.0
        %1238 = vmatpush1.xpose.msra.mxu0 0.0
        %1239 = vmatprep.subr.mxu0 0.0
        %1240 = vmatpush1.xpose.msra.mxu0 0.0
        %1241 = vmatprep.subr.mxu0 0.0
        %1242 = vmatpush1.xpose.msra.mxu0 0.0
        %1243 = vmatprep.subr.mxu0 0.0
        %1244 = vmatpush1.xpose.msra.mxu0 0.0
        %1245 = vmatprep.subr.mxu0 0.0
        %1246 = vmatpush1.xpose.msra.mxu0 0.0
        %1247 = vmatprep.subr.mxu0 0.0
        %1248 = vmatpush1.xpose.msra.mxu0 0.0
        %1249 = vmatprep.subr.mxu0 0.0
        %1250 = vmatpush1.xpose.msra.mxu0 0.0
        %1251 = vmatprep.subr.mxu0 0.0
        %1252 = vmatpush1.xpose.msra.mxu0 0.0
        %1253 = vmatprep.subr.mxu0 0.0
        %1254 = vmatpush1.xpose.msra.mxu0 0.0
        %1255 = vmatprep.subr.mxu0 0.0
        %1256 = vmatpush1.xpose.msra.mxu0 0.0
        %1257 = vmatprep.subr.mxu0 0.0
        %1258 = vmatpush1.xpose.msra.mxu0 0.0
        %1259 = vmatprep.subr.mxu0 0.0
        %1260 = vmatpush1.xpose.msra.mxu0 0.0
        %1261 = vmatprep.subr.mxu0 0.0
        %1262 = vmatpush1.xpose.msra.mxu0 0.0
        %1263 = vmatprep.subr.mxu0 0.0
        %1264 = vmatpush1.xpose.msra.mxu0 0.0
        %1265 = vmatprep.subr.mxu0 0.0
        %1266 = vmatpush1.xpose.msra.mxu0 0.0
        %1267 = vmatprep.subr.mxu0 0.0
        %1268 = vmatpush1.xpose.msra.mxu0 0.0
        %1269 = vmatprep.subr.mxu0 0.0
        %1270 = vmatpush1.xpose.msra.mxu0 0.0
        %1271 = vmatprep.subr.mxu0 0.0
        %1272 = vmatpush1.xpose.msra.mxu0 0.0
        %1273 = vmatprep.subr.mxu0 0.0
        %1274 = vmatpush1.xpose.msra.mxu0 0.0
        %1275 = vmatprep.subr.mxu0 0.0
        %1276 = vmatpush1.xpose.msra.mxu0 0.0
        %1277 = vmatprep.subr.mxu0 0.0
        %1278 = vmatpush1.xpose.msra.mxu0 0.0
        %1279 = vmatprep.subr.mxu0 0.0
        %1280 = vmatpush1.xpose.msra.mxu0 0.0
        %1281 = vmatprep.subr.mxu0 0.0
        %1282 = vmatpush1.xpose.msra.mxu0 0.0
        %1283 = vmatprep.mubr.f32.mxu0 0.0
        %1284 = vmatmul.mubr.f32.gmra.mrb[0].mxu0 %v1215
        %v1285 = vpop.f32.mrb[0].mxu0
        %v1286 = vadd.f32 0.0, %v1285
        %v1287 = vpop.f32.mrb[0].mxu0
        %1288 = vdwg.mxu0
        %1290 = vrot.lane.b32.xlu0 %v742, 96
        %v1291 = vpop.permute.xlu0 %1290
        %v1292 = vsel %vm752, %v742, 0
        %v1294 = vsel %vm752, %v1291, 0
        %1296 = vmatprep.subr.mxu0 0.0
        %1297 = vmatpush1.xpose.msra.mxu0 %v1294
        %1298 = vmatprep.subr.mxu0 0.0
        %1299 = vmatpush1.xpose.msra.mxu0 0.0
        %1300 = vmatprep.subr.mxu0 0.0
        %1301 = vmatpush1.xpose.msra.mxu0 0.0
        %1302 = vmatprep.subr.mxu0 0.0
        %1303 = vmatpush1.xpose.msra.mxu0 0.0
        %1304 = vmatprep.subr.mxu0 0.0
        %1305 = vmatpush1.xpose.msra.mxu0 0.0
        %1306 = vmatprep.subr.mxu0 0.0
        %1307 = vmatpush1.xpose.msra.mxu0 0.0
        %1308 = vmatprep.subr.mxu0 0.0
        %1309 = vmatpush1.xpose.msra.mxu0 0.0
        %1310 = vmatprep.subr.mxu0 0.0
        %1311 = vmatpush1.xpose.msra.mxu0 0.0
        %1312 = vmatprep.subr.mxu0 0.0
        %1313 = vmatpush1.xpose.msra.mxu0 0.0
        %1314 = vmatprep.subr.mxu0 0.0
        %1315 = vmatpush1.xpose.msra.mxu0 0.0
        %1316 = vmatprep.subr.mxu0 0.0
        %1317 = vmatpush1.xpose.msra.mxu0 0.0
        %1318 = vmatprep.subr.mxu0 0.0
        %1319 = vmatpush1.xpose.msra.mxu0 0.0
        %1320 = vmatprep.subr.mxu0 0.0
        %1321 = vmatpush1.xpose.msra.mxu0 0.0
        %1322 = vmatprep.subr.mxu0 0.0
        %1323 = vmatpush1.xpose.msra.mxu0 0.0
        %1324 = vmatprep.subr.mxu0 0.0
        %1325 = vmatpush1.xpose.msra.mxu0 0.0
        %1326 = vmatprep.subr.mxu0 0.0
        %1327 = vmatpush1.xpose.msra.mxu0 0.0
        %1328 = vmatprep.subr.mxu0 0.0
        %1329 = vmatpush1.xpose.msra.mxu0 0.0
        %1330 = vmatprep.subr.mxu0 0.0
        %1331 = vmatpush1.xpose.msra.mxu0 0.0
        %1332 = vmatprep.subr.mxu0 0.0
        %1333 = vmatpush1.xpose.msra.mxu0 0.0
        %1334 = vmatprep.subr.mxu0 0.0
        %1335 = vmatpush1.xpose.msra.mxu0 0.0
        %1336 = vmatprep.subr.mxu0 0.0
        %1337 = vmatpush1.xpose.msra.mxu0 0.0
        %1338 = vmatprep.subr.mxu0 0.0
        %1339 = vmatpush1.xpose.msra.mxu0 0.0
        %1340 = vmatprep.subr.mxu0 0.0
        %1341 = vmatpush1.xpose.msra.mxu0 0.0
        %1342 = vmatprep.subr.mxu0 0.0
        %1343 = vmatpush1.xpose.msra.mxu0 0.0
        %1344 = vmatprep.subr.mxu0 0.0
        %1345 = vmatpush1.xpose.msra.mxu0 0.0
        %1346 = vmatprep.subr.mxu0 0.0
        %1347 = vmatpush1.xpose.msra.mxu0 0.0
        %1348 = vmatprep.subr.mxu0 0.0
        %1349 = vmatpush1.xpose.msra.mxu0 0.0
        %1350 = vmatprep.subr.mxu0 0.0
        %1351 = vmatpush1.xpose.msra.mxu0 0.0
        %1352 = vmatprep.subr.mxu0 0.0
        %1353 = vmatpush1.xpose.msra.mxu0 0.0
        %1354 = vmatprep.subr.mxu0 0.0
        %1355 = vmatpush1.xpose.msra.mxu0 0.0
        %1356 = vmatprep.subr.mxu0 0.0
        %1357 = vmatpush1.xpose.msra.mxu0 0.0
        %1358 = vmatprep.subr.mxu0 0.0
        %1359 = vmatpush1.xpose.msra.mxu0 0.0
        %1360 = vmatprep.mubr.f32.mxu0 0.0
        %1361 = vmatmul.mubr.f32.gmra.mrb[0].mxu0 %v1292
        %v1362 = vpop.f32.mrb[0].mxu0
        %v1363 = vadd.f32 0.0, %v1362
        %v1364 = vpop.f32.mrb[0].mxu0
        %1365 = vdwg.mxu0
        %v1366 = vsel %vm752, %v824, -inf
        %1367 = vmax.xlane.f32.xlu0 %v1366
        %v1368 = vpop.xlane.xlu0 %1367
        %v1369 = vsel %vm752, %v901, -inf
        %1370 = vmax.xlane.f32.xlu0 %v1369
        %v1371 = vpop.xlane.xlu0 %1370
        %v1372 = vsel %vm752, %v978, -inf
        %1373 = vmax.xlane.f32.xlu0 %v1372
        %v1374 = vpop.xlane.xlu0 %1373
        %v1375 = vsel %vm752, %v1055, -inf
        %1376 = vmax.xlane.f32.xlu0 %v1375
        %v1377 = vpop.xlane.xlu0 %1376
        %v1378 = vsel %vm752, %v1132, -inf
        %1379 = vmax.xlane.f32.xlu0 %v1378
        %v1380 = vpop.xlane.xlu0 %1379
        %v1381 = vsel %vm752, %v1209, -inf
        %1382 = vmax.xlane.f32.xlu0 %v1381
        %v1383 = vpop.xlane.xlu0 %1382
        %v1384 = vsel %vm752, %v1286, -inf
        %1385 = vmax.xlane.f32.xlu0 %v1384
        %v1386 = vpop.xlane.xlu0 %1385
        %v1387 = vsel %vm752, %v1363, -inf
        %1388 = vmax.xlane.f32.xlu0 %v1387
        %v1389 = vpop.xlane.xlu0 %1388
        %v1390 = vsub.f32 %v824, %v1368
        %v1391 = vsub.f32 %v901, %v1371
        %v1392 = vsub.f32 %v978, %v1374
        %v1393 = vsub.f32 %v1055, %v1377
        %v1394 = vsub.f32 %v1132, %v1380
        %v1395 = vsub.f32 %v1209, %v1383
        %v1396 = vsub.f32 %v1286, %v1386
        %v1397 = vsub.f32 %v1363, %v1389
        %v1398 = vmul.f32 %v1390, 1.442695
        %v1399 = vpow.pop %v1398
        %v1400 = vmul.f32 %v1391, 1.442695
        %v1401 = vpow.pop %v1400
        %v1402 = vmul.f32 %v1392, 1.442695
        %v1403 = vpow.pop %v1402
        %v1404 = vmul.f32 %v1393, 1.442695
        %v1405 = vpow.pop %v1404
        %v1406 = vmul.f32 %v1394, 1.442695
        %v1407 = vpow.pop %v1406
        %v1408 = vmul.f32 %v1395, 1.442695
        %v1409 = vpow.pop %v1408
        %v1410 = vmul.f32 %v1396, 1.442695
        %v1411 = vpow.pop %v1410
        %v1412 = vmul.f32 %v1397, 1.442695
        %v1413 = vpow.pop %v1412
        %v1414 = vsel %vm752, %v1399, 0.0
        %1415 = vadd.xlane.f32.xlu0 %v1414
        %v1416 = vpop.xlane.xlu0 %1415
        %v1417 = vsel %vm752, %v1401, 0.0
        %1418 = vadd.xlane.f32.xlu0 %v1417
        %v1419 = vpop.xlane.xlu0 %1418
        %v1420 = vsel %vm752, %v1403, 0.0
        %1421 = vadd.xlane.f32.xlu0 %v1420
        %v1422 = vpop.xlane.xlu0 %1421
        %v1423 = vsel %vm752, %v1405, 0.0
        %1424 = vadd.xlane.f32.xlu0 %v1423
        %v1425 = vpop.xlane.xlu0 %1424
        %v1426 = vsel %vm752, %v1407, 0.0
        %1427 = vadd.xlane.f32.xlu0 %v1426
        %v1428 = vpop.xlane.xlu0 %1427
        %v1429 = vsel %vm752, %v1409, 0.0
        %1430 = vadd.xlane.f32.xlu0 %v1429
        %v1431 = vpop.xlane.xlu0 %1430
        %v1432 = vsel %vm752, %v1411, 0.0
        %1433 = vadd.xlane.f32.xlu0 %v1432
        %v1434 = vpop.xlane.xlu0 %1433
        %v1435 = vsel %vm752, %v1413, 0.0
        %1436 = vadd.xlane.f32.xlu0 %v1435
        %v1437 = vpop.xlane.xlu0 %1436
        %v1438 = vrcp.pop %v1416
        %v1439 = vrcp.pop %v1419
        %v1440 = vrcp.pop %v1422
        %v1441 = vrcp.pop %v1425
        %v1442 = vrcp.pop %v1428
        %v1443 = vrcp.pop %v1431
        %v1444 = vrcp.pop %v1434
        %v1445 = vrcp.pop %v1437
        %v1446 = vmul.f32 %v1399, %v1438
        %v1447 = vmul.f32 %v1401, %v1439
        %v1448 = vmul.f32 %v1403, %v1440
        %v1449 = vmul.f32 %v1405, %v1441
        %v1450 = vmul.f32 %v1407, %v1442
        %v1451 = vmul.f32 %v1409, %v1443
        %v1452 = vmul.f32 %v1411, %v1444
        %v1453 = vmul.f32 %v1413, %v1445
        %1454 = vrot.lane.b32.xlu0 %v707, 64
        %v1455 = vpop.permute.xlu0 %1454
        %v1458 = vsel %vm752, %v1446, 0
        %1460 = vmatprep.subr.mxu0 0.0
        %1461 = vmatpush1.msra.mxu0 %v1455
        %1462 = vmatprep.subr.mxu0 0.0
        %1463 = vmatpush1.msra.mxu0 0.0
        %1464 = vmatprep.subr.mxu0 0.0
        %1465 = vmatpush1.msra.mxu0 0.0
        %1466 = vmatprep.subr.mxu0 0.0
        %1467 = vmatpush1.msra.mxu0 0.0
        %1468 = vmatprep.subr.mxu0 0.0
        %1469 = vmatpush1.msra.mxu0 0.0
        %1470 = vmatprep.subr.mxu0 0.0
        %1471 = vmatpush1.msra.mxu0 0.0
        %1472 = vmatprep.subr.mxu0 0.0
        %1473 = vmatpush1.msra.mxu0 0.0
        %1474 = vmatprep.subr.mxu0 0.0
        %1475 = vmatpush1.msra.mxu0 0.0
        %1476 = vmatprep.subr.mxu0 0.0
        %1477 = vmatpush1.msra.mxu0 0.0
        %1478 = vmatprep.subr.mxu0 0.0
        %1479 = vmatpush1.msra.mxu0 0.0
        %1480 = vmatprep.subr.mxu0 0.0
        %1481 = vmatpush1.msra.mxu0 0.0
        %1482 = vmatprep.subr.mxu0 0.0
        %1483 = vmatpush1.msra.mxu0 0.0
        %1484 = vmatprep.subr.mxu0 0.0
        %1485 = vmatpush1.msra.mxu0 0.0
        %1486 = vmatprep.subr.mxu0 0.0
        %1487 = vmatpush1.msra.mxu0 0.0
        %1488 = vmatprep.subr.mxu0 0.0
        %1489 = vmatpush1.msra.mxu0 0.0
        %1490 = vmatprep.subr.mxu0 0.0
        %1491 = vmatpush1.msra.mxu0 0.0
        %1492 = vmatprep.subr.mxu0 0.0
        %1493 = vmatpush1.msra.mxu0 0.0
        %1494 = vmatprep.subr.mxu0 0.0
        %1495 = vmatpush1.msra.mxu0 0.0
        %1496 = vmatprep.subr.mxu0 0.0
        %1497 = vmatpush1.msra.mxu0 0.0
        %1498 = vmatprep.subr.mxu0 0.0
        %1499 = vmatpush1.msra.mxu0 0.0
        %1500 = vmatprep.subr.mxu0 0.0
        %1501 = vmatpush1.msra.mxu0 0.0
        %1502 = vmatprep.subr.mxu0 0.0
        %1503 = vmatpush1.msra.mxu0 0.0
        %1504 = vmatprep.subr.mxu0 0.0
        %1505 = vmatpush1.msra.mxu0 0.0
        %1506 = vmatprep.subr.mxu0 0.0
        %1507 = vmatpush1.msra.mxu0 0.0
        %1508 = vmatprep.subr.mxu0 0.0
        %1509 = vmatpush1.msra.mxu0 0.0
        %1510 = vmatprep.subr.mxu0 0.0
        %1511 = vmatpush1.msra.mxu0 0.0
        %1512 = vmatprep.subr.mxu0 0.0
        %1513 = vmatpush1.msra.mxu0 0.0
        %1514 = vmatprep.subr.mxu0 0.0
        %1515 = vmatpush1.msra.mxu0 0.0
        %1516 = vmatprep.subr.mxu0 0.0
        %1517 = vmatpush1.msra.mxu0 0.0
        %1518 = vmatprep.subr.mxu0 0.0
        %1519 = vmatpush1.msra.mxu0 0.0
        %1520 = vmatprep.subr.mxu0 0.0
        %1521 = vmatpush1.msra.mxu0 0.0
        %1522 = vmatprep.subr.mxu0 0.0
        %1523 = vmatpush1.msra.mxu0 0.0
        %1524 = vmatprep.mubr.f32.mxu0 0.0
        %1525 = vmatmul.mubr.f32.gmra.mrb[0].mxu0 %v1458
        %v1526 = vpop.f32.mrb[0].mxu0
        %v1527 = vadd.f32 0.0, %v1526
        %v1528 = vpop.f32.mrb[0].mxu0
        %1529 = vdwg.mxu0
        %1530 = vrot.lane.b32.xlu0 %v712, 64
        %v1531 = vpop.permute.xlu0 %1530
        %v1534 = vsel %vm752, %v1447, 0
        %1536 = vmatprep.subr.mxu0 0.0
        %1537 = vmatpush1.msra.mxu0 %v1531
        %1538 = vmatprep.subr.mxu0 0.0
        %1539 = vmatpush1.msra.mxu0 0.0
        %1540 = vmatprep.subr.mxu0 0.0
        %1541 = vmatpush1.msra.mxu0 0.0
        %1542 = vmatprep.subr.mxu0 0.0
        %1543 = vmatpush1.msra.mxu0 0.0
        %1544 = vmatprep.subr.mxu0 0.0
        %1545 = vmatpush1.msra.mxu0 0.0
        %1546 = vmatprep.subr.mxu0 0.0
        %1547 = vmatpush1.msra.mxu0 0.0
        %1548 = vmatprep.subr.mxu0 0.0
        %1549 = vmatpush1.msra.mxu0 0.0
        %1550 = vmatprep.subr.mxu0 0.0
        %1551 = vmatpush1.msra.mxu0 0.0
        %1552 = vmatprep.subr.mxu0 0.0
        %1553 = vmatpush1.msra.mxu0 0.0
        %1554 = vmatprep.subr.mxu0 0.0
        %1555 = vmatpush1.msra.mxu0 0.0
        %1556 = vmatprep.subr.mxu0 0.0
        %1557 = vmatpush1.msra.mxu0 0.0
        %1558 = vmatprep.subr.mxu0 0.0
        %1559 = vmatpush1.msra.mxu0 0.0
        %1560 = vmatprep.subr.mxu0 0.0
        %1561 = vmatpush1.msra.mxu0 0.0
        %1562 = vmatprep.subr.mxu0 0.0
        %1563 = vmatpush1.msra.mxu0 0.0
        %1564 = vmatprep.subr.mxu0 0.0
        %1565 = vmatpush1.msra.mxu0 0.0
        %1566 = vmatprep.subr.mxu0 0.0
        %1567 = vmatpush1.msra.mxu0 0.0
        %1568 = vmatprep.subr.mxu0 0.0
        %1569 = vmatpush1.msra.mxu0 0.0
        %1570 = vmatprep.subr.mxu0 0.0
        %1571 = vmatpush1.msra.mxu0 0.0
        %1572 = vmatprep.subr.mxu0 0.0
        %1573 = vmatpush1.msra.mxu0 0.0
        %1574 = vmatprep.subr.mxu0 0.0
        %1575 = vmatpush1.msra.mxu0 0.0
        %1576 = vmatprep.subr.mxu0 0.0
        %1577 = vmatpush1.msra.mxu0 0.0
        %1578 = vmatprep.subr.mxu0 0.0
        %1579 = vmatpush1.msra.mxu0 0.0
        %1580 = vmatprep.subr.mxu0 0.0
        %1581 = vmatpush1.msra.mxu0 0.0
        %1582 = vmatprep.subr.mxu0 0.0
        %1583 = vmatpush1.msra.mxu0 0.0
        %1584 = vmatprep.subr.mxu0 0.0
        %1585 = vmatpush1.msra.mxu0 0.0
        %1586 = vmatprep.subr.mxu0 0.0
        %1587 = vmatpush1.msra.mxu0 0.0
        %1588 = vmatprep.subr.mxu0 0.0
        %1589 = vmatpush1.msra.mxu0 0.0
        %1590 = vmatprep.subr.mxu0 0.0
        %1591 = vmatpush1.msra.mxu0 0.0
        %1592 = vmatprep.subr.mxu0 0.0
        %1593 = vmatpush1.msra.mxu0 0.0
        %1594 = vmatprep.subr.mxu0 0.0
        %1595 = vmatpush1.msra.mxu0 0.0
        %1596 = vmatprep.subr.mxu0 0.0
        %1597 = vmatpush1.msra.mxu0 0.0
        %1598 = vmatprep.subr.mxu0 0.0
        %1599 = vmatpush1.msra.mxu0 0.0
        %1600 = vmatprep.mubr.f32.mxu0 0.0
        %1601 = vmatmul.mubr.f32.gmra.mrb[0].mxu0 %v1534
        %v1602 = vpop.f32.mrb[0].mxu0
        %v1603 = vadd.f32 0.0, %v1602
        %v1604 = vpop.f32.mrb[0].mxu0
        %1605 = vdwg.mxu0
        %1606 = vrot.lane.b32.xlu0 %v717, 64
        %v1607 = vpop.permute.xlu0 %1606
        %v1610 = vsel %vm752, %v1448, 0
        %1612 = vmatprep.subr.mxu0 0.0
        %1613 = vmatpush1.msra.mxu0 %v1607
        %1614 = vmatprep.subr.mxu0 0.0
        %1615 = vmatpush1.msra.mxu0 0.0
        %1616 = vmatprep.subr.mxu0 0.0
        %1617 = vmatpush1.msra.mxu0 0.0
        %1618 = vmatprep.subr.mxu0 0.0
        %1619 = vmatpush1.msra.mxu0 0.0
        %1620 = vmatprep.subr.mxu0 0.0
        %1621 = vmatpush1.msra.mxu0 0.0
        %1622 = vmatprep.subr.mxu0 0.0
        %1623 = vmatpush1.msra.mxu0 0.0
        %1624 = vmatprep.subr.mxu0 0.0
        %1625 = vmatpush1.msra.mxu0 0.0
        %1626 = vmatprep.subr.mxu0 0.0
        %1627 = vmatpush1.msra.mxu0 0.0
        %1628 = vmatprep.subr.mxu0 0.0
        %1629 = vmatpush1.msra.mxu0 0.0
        %1630 = vmatprep.subr.mxu0 0.0
        %1631 = vmatpush1.msra.mxu0 0.0
        %1632 = vmatprep.subr.mxu0 0.0
        %1633 = vmatpush1.msra.mxu0 0.0
        %1634 = vmatprep.subr.mxu0 0.0
        %1635 = vmatpush1.msra.mxu0 0.0
        %1636 = vmatprep.subr.mxu0 0.0
        %1637 = vmatpush1.msra.mxu0 0.0
        %1638 = vmatprep.subr.mxu0 0.0
        %1639 = vmatpush1.msra.mxu0 0.0
        %1640 = vmatprep.subr.mxu0 0.0
        %1641 = vmatpush1.msra.mxu0 0.0
        %1642 = vmatprep.subr.mxu0 0.0
        %1643 = vmatpush1.msra.mxu0 0.0
        %1644 = vmatprep.subr.mxu0 0.0
        %1645 = vmatpush1.msra.mxu0 0.0
        %1646 = vmatprep.subr.mxu0 0.0
        %1647 = vmatpush1.msra.mxu0 0.0
        %1648 = vmatprep.subr.mxu0 0.0
        %1649 = vmatpush1.msra.mxu0 0.0
        %1650 = vmatprep.subr.mxu0 0.0
        %1651 = vmatpush1.msra.mxu0 0.0
        %1652 = vmatprep.subr.mxu0 0.0
        %1653 = vmatpush1.msra.mxu0 0.0
        %1654 = vmatprep.subr.mxu0 0.0
        %1655 = vmatpush1.msra.mxu0 0.0
        %1656 = vmatprep.subr.mxu0 0.0
        %1657 = vmatpush1.msra.mxu0 0.0
        %1658 = vmatprep.subr.mxu0 0.0
        %1659 = vmatpush1.msra.mxu0 0.0
        %1660 = vmatprep.subr.mxu0 0.0
        %1661 = vmatpush1.msra.mxu0 0.0
        %1662 = vmatprep.subr.mxu0 0.0
        %1663 = vmatpush1.msra.mxu0 0.0
        %1664 = vmatprep.subr.mxu0 0.0
        %1665 = vmatpush1.msra.mxu0 0.0
        %1666 = vmatprep.subr.mxu0 0.0
        %1667 = vmatpush1.msra.mxu0 0.0
        %1668 = vmatprep.subr.mxu0 0.0
        %1669 = vmatpush1.msra.mxu0 0.0
        %1670 = vmatprep.subr.mxu0 0.0
        %1671 = vmatpush1.msra.mxu0 0.0
        %1672 = vmatprep.subr.mxu0 0.0
        %1673 = vmatpush1.msra.mxu0 0.0
        %1674 = vmatprep.subr.mxu0 0.0
        %1675 = vmatpush1.msra.mxu0 0.0
        %1676 = vmatprep.mubr.f32.mxu0 0.0
        %1677 = vmatmul.mubr.f32.gmra.mrb[0].mxu0 %v1610
        %v1678 = vpop.f32.mrb[0].mxu0
        %v1679 = vadd.f32 0.0, %v1678
        %v1680 = vpop.f32.mrb[0].mxu0
        %1681 = vdwg.mxu0
        %1682 = vrot.lane.b32.xlu0 %v722, 64
        %v1683 = vpop.permute.xlu0 %1682
        %v1686 = vsel %vm752, %v1449, 0
        %1688 = vmatprep.subr.mxu0 0.0
        %1689 = vmatpush1.msra.mxu0 %v1683
        %1690 = vmatprep.subr.mxu0 0.0
        %1691 = vmatpush1.msra.mxu0 0.0
        %1692 = vmatprep.subr.mxu0 0.0
        %1693 = vmatpush1.msra.mxu0 0.0
        %1694 = vmatprep.subr.mxu0 0.0
        %1695 = vmatpush1.msra.mxu0 0.0
        %1696 = vmatprep.subr.mxu0 0.0
        %1697 = vmatpush1.msra.mxu0 0.0
        %1698 = vmatprep.subr.mxu0 0.0
        %1699 = vmatpush1.msra.mxu0 0.0
        %1700 = vmatprep.subr.mxu0 0.0
        %1701 = vmatpush1.msra.mxu0 0.0
        %1702 = vmatprep.subr.mxu0 0.0
        %1703 = vmatpush1.msra.mxu0 0.0
        %1704 = vmatprep.subr.mxu0 0.0
        %1705 = vmatpush1.msra.mxu0 0.0
        %1706 = vmatprep.subr.mxu0 0.0
        %1707 = vmatpush1.msra.mxu0 0.0
        %1708 = vmatprep.subr.mxu0 0.0
        %1709 = vmatpush1.msra.mxu0 0.0
        %1710 = vmatprep.subr.mxu0 0.0
        %1711 = vmatpush1.msra.mxu0 0.0
        %1712 = vmatprep.subr.mxu0 0.0
        %1713 = vmatpush1.msra.mxu0 0.0
        %1714 = vmatprep.subr.mxu0 0.0
        %1715 = vmatpush1.msra.mxu0 0.0
        %1716 = vmatprep.subr.mxu0 0.0
        %1717 = vmatpush1.msra.mxu0 0.0
        %1718 = vmatprep.subr.mxu0 0.0
        %1719 = vmatpush1.msra.mxu0 0.0
        %1720 = vmatprep.subr.mxu0 0.0
        %1721 = vmatpush1.msra.mxu0 0.0
        %1722 = vmatprep.subr.mxu0 0.0
        %1723 = vmatpush1.msra.mxu0 0.0
        %1724 = vmatprep.subr.mxu0 0.0
        %1725 = vmatpush1.msra.mxu0 0.0
        %1726 = vmatprep.subr.mxu0 0.0
        %1727 = vmatpush1.msra.mxu0 0.0
        %1728 = vmatprep.subr.mxu0 0.0
        %1729 = vmatpush1.msra.mxu0 0.0
        %1730 = vmatprep.subr.mxu0 0.0
        %1731 = vmatpush1.msra.mxu0 0.0
        %1732 = vmatprep.subr.mxu0 0.0
        %1733 = vmatpush1.msra.mxu0 0.0
        %1734 = vmatprep.subr.mxu0 0.0
        %1735 = vmatpush1.msra.mxu0 0.0
        %1736 = vmatprep.subr.mxu0 0.0
        %1737 = vmatpush1.msra.mxu0 0.0
        %1738 = vmatprep.subr.mxu0 0.0
        %1739 = vmatpush1.msra.mxu0 0.0
        %1740 = vmatprep.subr.mxu0 0.0
        %1741 = vmatpush1.msra.mxu0 0.0
        %1742 = vmatprep.subr.mxu0 0.0
        %1743 = vmatpush1.msra.mxu0 0.0
        %1744 = vmatprep.subr.mxu0 0.0
        %1745 = vmatpush1.msra.mxu0 0.0
        %1746 = vmatprep.subr.mxu0 0.0
        %1747 = vmatpush1.msra.mxu0 0.0
        %1748 = vmatprep.subr.mxu0 0.0
        %1749 = vmatpush1.msra.mxu0 0.0
        %1750 = vmatprep.subr.mxu0 0.0
        %1751 = vmatpush1.msra.mxu0 0.0
        %1752 = vmatprep.mubr.f32.mxu0 0.0
        %1753 = vmatmul.mubr.f32.gmra.mrb[0].mxu0 %v1686
        %v1754 = vpop.f32.mrb[0].mxu0
        %v1755 = vadd.f32 0.0, %v1754
        %v1756 = vpop.f32.mrb[0].mxu0
        %1757 = vdwg.mxu0
        %1758 = vrot.lane.b32.xlu0 %v727, 64
        %v1759 = vpop.permute.xlu0 %1758
        %v1762 = vsel %vm752, %v1450, 0
        %1764 = vmatprep.subr.mxu0 0.0
        %1765 = vmatpush1.msra.mxu0 %v1759
        %1766 = vmatprep.subr.mxu0 0.0
        %1767 = vmatpush1.msra.mxu0 0.0
        %1768 = vmatprep.subr.mxu0 0.0
        %1769 = vmatpush1.msra.mxu0 0.0
        %1770 = vmatprep.subr.mxu0 0.0
        %1771 = vmatpush1.msra.mxu0 0.0
        %1772 = vmatprep.subr.mxu0 0.0
        %1773 = vmatpush1.msra.mxu0 0.0
        %1774 = vmatprep.subr.mxu0 0.0
        %1775 = vmatpush1.msra.mxu0 0.0
        %1776 = vmatprep.subr.mxu0 0.0
        %1777 = vmatpush1.msra.mxu0 0.0
        %1778 = vmatprep.subr.mxu0 0.0
        %1779 = vmatpush1.msra.mxu0 0.0
        %1780 = vmatprep.subr.mxu0 0.0
        %1781 = vmatpush1.msra.mxu0 0.0
        %1782 = vmatprep.subr.mxu0 0.0
        %1783 = vmatpush1.msra.mxu0 0.0
        %1784 = vmatprep.subr.mxu0 0.0
        %1785 = vmatpush1.msra.mxu0 0.0
        %1786 = vmatprep.subr.mxu0 0.0
        %1787 = vmatpush1.msra.mxu0 0.0
        %1788 = vmatprep.subr.mxu0 0.0
        %1789 = vmatpush1.msra.mxu0 0.0
        %1790 = vmatprep.subr.mxu0 0.0
        %1791 = vmatpush1.msra.mxu0 0.0
        %1792 = vmatprep.subr.mxu0 0.0
        %1793 = vmatpush1.msra.mxu0 0.0
        %1794 = vmatprep.subr.mxu0 0.0
        %1795 = vmatpush1.msra.mxu0 0.0
        %1796 = vmatprep.subr.mxu0 0.0
        %1797 = vmatpush1.msra.mxu0 0.0
        %1798 = vmatprep.subr.mxu0 0.0
        %1799 = vmatpush1.msra.mxu0 0.0
        %1800 = vmatprep.subr.mxu0 0.0
        %1801 = vmatpush1.msra.mxu0 0.0
        %1802 = vmatprep.subr.mxu0 0.0
        %1803 = vmatpush1.msra.mxu0 0.0
        %1804 = vmatprep.subr.mxu0 0.0
        %1805 = vmatpush1.msra.mxu0 0.0
        %1806 = vmatprep.subr.mxu0 0.0
        %1807 = vmatpush1.msra.mxu0 0.0
        %1808 = vmatprep.subr.mxu0 0.0
        %1809 = vmatpush1.msra.mxu0 0.0
        %1810 = vmatprep.subr.mxu0 0.0
        %1811 = vmatpush1.msra.mxu0 0.0
        %1812 = vmatprep.subr.mxu0 0.0
        %1813 = vmatpush1.msra.mxu0 0.0
        %1814 = vmatprep.subr.mxu0 0.0
        %1815 = vmatpush1.msra.mxu0 0.0
        %1816 = vmatprep.subr.mxu0 0.0
        %1817 = vmatpush1.msra.mxu0 0.0
        %1818 = vmatprep.subr.mxu0 0.0
        %1819 = vmatpush1.msra.mxu0 0.0
        %1820 = vmatprep.subr.mxu0 0.0
        %1821 = vmatpush1.msra.mxu0 0.0
        %1822 = vmatprep.subr.mxu0 0.0
        %1823 = vmatpush1.msra.mxu0 0.0
        %1824 = vmatprep.subr.mxu0 0.0
        %1825 = vmatpush1.msra.mxu0 0.0
        %1826 = vmatprep.subr.mxu0 0.0
        %1827 = vmatpush1.msra.mxu0 0.0
        %1828 = vmatprep.mubr.f32.mxu0 0.0
        %1829 = vmatmul.mubr.f32.gmra.mrb[0].mxu0 %v1762
        %v1830 = vpop.f32.mrb[0].mxu0
        %v1831 = vadd.f32 0.0, %v1830
        %v1832 = vpop.f32.mrb[0].mxu0
        %1833 = vdwg.mxu0
        %1834 = vrot.lane.b32.xlu0 %v732, 64
        %v1835 = vpop.permute.xlu0 %1834
        %v1838 = vsel %vm752, %v1451, 0
        %1840 = vmatprep.subr.mxu0 0.0
        %1841 = vmatpush1.msra.mxu0 %v1835
        %1842 = vmatprep.subr.mxu0 0.0
        %1843 = vmatpush1.msra.mxu0 0.0
        %1844 = vmatprep.subr.mxu0 0.0
        %1845 = vmatpush1.msra.mxu0 0.0
        %1846 = vmatprep.subr.mxu0 0.0
        %1847 = vmatpush1.msra.mxu0 0.0
        %1848 = vmatprep.subr.mxu0 0.0
        %1849 = vmatpush1.msra.mxu0 0.0
        %1850 = vmatprep.subr.mxu0 0.0
        %1851 = vmatpush1.msra.mxu0 0.0
        %1852 = vmatprep.subr.mxu0 0.0
        %1853 = vmatpush1.msra.mxu0 0.0
        %1854 = vmatprep.subr.mxu0 0.0
        %1855 = vmatpush1.msra.mxu0 0.0
        %1856 = vmatprep.subr.mxu0 0.0
        %1857 = vmatpush1.msra.mxu0 0.0
        %1858 = vmatprep.subr.mxu0 0.0
        %1859 = vmatpush1.msra.mxu0 0.0
        %1860 = vmatprep.subr.mxu0 0.0
        %1861 = vmatpush1.msra.mxu0 0.0
        %1862 = vmatprep.subr.mxu0 0.0
        %1863 = vmatpush1.msra.mxu0 0.0
        %1864 = vmatprep.subr.mxu0 0.0
        %1865 = vmatpush1.msra.mxu0 0.0
        %1866 = vmatprep.subr.mxu0 0.0
        %1867 = vmatpush1.msra.mxu0 0.0
        %1868 = vmatprep.subr.mxu0 0.0
        %1869 = vmatpush1.msra.mxu0 0.0
        %1870 = vmatprep.subr.mxu0 0.0
        %1871 = vmatpush1.msra.mxu0 0.0
        %1872 = vmatprep.subr.mxu0 0.0
        %1873 = vmatpush1.msra.mxu0 0.0
        %1874 = vmatprep.subr.mxu0 0.0
        %1875 = vmatpush1.msra.mxu0 0.0
        %1876 = vmatprep.subr.mxu0 0.0
        %1877 = vmatpush1.msra.mxu0 0.0
        %1878 = vmatprep.subr.mxu0 0.0
        %1879 = vmatpush1.msra.mxu0 0.0
        %1880 = vmatprep.subr.mxu0 0.0
        %1881 = vmatpush1.msra.mxu0 0.0
        %1882 = vmatprep.subr.mxu0 0.0
        %1883 = vmatpush1.msra.mxu0 0.0
        %1884 = vmatprep.subr.mxu0 0.0
        %1885 = vmatpush1.msra.mxu0 0.0
        %1886 = vmatprep.subr.mxu0 0.0
        %1887 = vmatpush1.msra.mxu0 0.0
        %1888 = vmatprep.subr.mxu0 0.0
        %1889 = vmatpush1.msra.mxu0 0.0
        %1890 = vmatprep.subr.mxu0 0.0
        %1891 = vmatpush1.msra.mxu0 0.0
        %1892 = vmatprep.subr.mxu0 0.0
        %1893 = vmatpush1.msra.mxu0 0.0
        %1894 = vmatprep.subr.mxu0 0.0
        %1895 = vmatpush1.msra.mxu0 0.0
        %1896 = vmatprep.subr.mxu0 0.0
        %1897 = vmatpush1.msra.mxu0 0.0
        %1898 = vmatprep.subr.mxu0 0.0
        %1899 = vmatpush1.msra.mxu0 0.0
        %1900 = vmatprep.subr.mxu0 0.0
        %1901 = vmatpush1.msra.mxu0 0.0
        %1902 = vmatprep.subr.mxu0 0.0
        %1903 = vmatpush1.msra.mxu0 0.0
        %1904 = vmatprep.mubr.f32.mxu0 0.0
        %1905 = vmatmul.mubr.f32.gmra.mrb[0].mxu0 %v1838
        %v1906 = vpop.f32.mrb[0].mxu0
        %v1907 = vadd.f32 0.0, %v1906
        %v1908 = vpop.f32.mrb[0].mxu0
        %1909 = vdwg.mxu0
        %1910 = vrot.lane.b32.xlu0 %v737, 64
        %v1911 = vpop.permute.xlu0 %1910
        %v1914 = vsel %vm752, %v1452, 0
        %1916 = vmatprep.subr.mxu0 0.0
        %1917 = vmatpush1.msra.mxu0 %v1911
        %1918 = vmatprep.subr.mxu0 0.0
        %1919 = vmatpush1.msra.mxu0 0.0
        %1920 = vmatprep.subr.mxu0 0.0
        %1921 = vmatpush1.msra.mxu0 0.0
        %1922 = vmatprep.subr.mxu0 0.0
        %1923 = vmatpush1.msra.mxu0 0.0
        %1924 = vmatprep.subr.mxu0 0.0
        %1925 = vmatpush1.msra.mxu0 0.0
        %1926 = vmatprep.subr.mxu0 0.0
        %1927 = vmatpush1.msra.mxu0 0.0
        %1928 = vmatprep.subr.mxu0 0.0
        %1929 = vmatpush1.msra.mxu0 0.0
        %1930 = vmatprep.subr.mxu0 0.0
        %1931 = vmatpush1.msra.mxu0 0.0
        %1932 = vmatprep.subr.mxu0 0.0
        %1933 = vmatpush1.msra.mxu0 0.0
        %1934 = vmatprep.subr.mxu0 0.0
        %1935 = vmatpush1.msra.mxu0 0.0
        %1936 = vmatprep.subr.mxu0 0.0
        %1937 = vmatpush1.msra.mxu0 0.0
        %1938 = vmatprep.subr.mxu0 0.0
        %1939 = vmatpush1.msra.mxu0 0.0
        %1940 = vmatprep.subr.mxu0 0.0
        %1941 = vmatpush1.msra.mxu0 0.0
        %1942 = vmatprep.subr.mxu0 0.0
        %1943 = vmatpush1.msra.mxu0 0.0
        %1944 = vmatprep.subr.mxu0 0.0
        %1945 = vmatpush1.msra.mxu0 0.0
        %1946 = vmatprep.subr.mxu0 0.0
        %1947 = vmatpush1.msra.mxu0 0.0
        %1948 = vmatprep.subr.mxu0 0.0
        %1949 = vmatpush1.msra.mxu0 0.0
        %1950 = vmatprep.subr.mxu0 0.0
        %1951 = vmatpush1.msra.mxu0 0.0
        %1952 = vmatprep.subr.mxu0 0.0
        %1953 = vmatpush1.msra.mxu0 0.0
        %1954 = vmatprep.subr.mxu0 0.0
        %1955 = vmatpush1.msra.mxu0 0.0
        %1956 = vmatprep.subr.mxu0 0.0
        %1957 = vmatpush1.msra.mxu0 0.0
        %1958 = vmatprep.subr.mxu0 0.0
        %1959 = vmatpush1.msra.mxu0 0.0
        %1960 = vmatprep.subr.mxu0 0.0
        %1961 = vmatpush1.msra.mxu0 0.0
        %1962 = vmatprep.subr.mxu0 0.0
        %1963 = vmatpush1.msra.mxu0 0.0
        %1964 = vmatprep.subr.mxu0 0.0
        %1965 = vmatpush1.msra.mxu0 0.0
        %1966 = vmatprep.subr.mxu0 0.0
        %1967 = vmatpush1.msra.mxu0 0.0
        %1968 = vmatprep.subr.mxu0 0.0
        %1969 = vmatpush1.msra.mxu0 0.0
        %1970 = vmatprep.subr.mxu0 0.0
        %1971 = vmatpush1.msra.mxu0 0.0
        %1972 = vmatprep.subr.mxu0 0.0
        %1973 = vmatpush1.msra.mxu0 0.0
        %1974 = vmatprep.subr.mxu0 0.0
        %1975 = vmatpush1.msra.mxu0 0.0
        %1976 = vmatprep.subr.mxu0 0.0
        %1977 = vmatpush1.msra.mxu0 0.0
        %1978 = vmatprep.subr.mxu0 0.0
        %1979 = vmatpush1.msra.mxu0 0.0
        %1980 = vmatprep.mubr.f32.mxu0 0.0
        %1981 = vmatmul.mubr.f32.gmra.mrb[0].mxu0 %v1914
        %v1982 = vpop.f32.mrb[0].mxu0
        %v1983 = vadd.f32 0.0, %v1982
        %v1984 = vpop.f32.mrb[0].mxu0
        %1985 = vdwg.mxu0
        %1986 = vrot.lane.b32.xlu0 %v742, 64
        %v1987 = vpop.permute.xlu0 %1986
        %v1990 = vsel %vm752, %v1453, 0
        %1992 = vmatprep.subr.mxu0 0.0
        %1993 = vmatpush1.msra.mxu0 %v1987
        %1994 = vmatprep.subr.mxu0 0.0
        %1995 = vmatpush1.msra.mxu0 0.0
        %1996 = vmatprep.subr.mxu0 0.0
        %1997 = vmatpush1.msra.mxu0 0.0
        %1998 = vmatprep.subr.mxu0 0.0
        %1999 = vmatpush1.msra.mxu0 0.0
        %2000 = vmatprep.subr.mxu0 0.0
        %2001 = vmatpush1.msra.mxu0 0.0
        %2002 = vmatprep.subr.mxu0 0.0
        %2003 = vmatpush1.msra.mxu0 0.0
        %2004 = vmatprep.subr.mxu0 0.0
        %2005 = vmatpush1.msra.mxu0 0.0
        %2006 = vmatprep.subr.mxu0 0.0
        %2007 = vmatpush1.msra.mxu0 0.0
        %2008 = vmatprep.subr.mxu0 0.0
        %2009 = vmatpush1.msra.mxu0 0.0
        %2010 = vmatprep.subr.mxu0 0.0
        %2011 = vmatpush1.msra.mxu0 0.0
        %2012 = vmatprep.subr.mxu0 0.0
        %2013 = vmatpush1.msra.mxu0 0.0
        %2014 = vmatprep.subr.mxu0 0.0
        %2015 = vmatpush1.msra.mxu0 0.0
        %2016 = vmatprep.subr.mxu0 0.0
        %2017 = vmatpush1.msra.mxu0 0.0
        %2018 = vmatprep.subr.mxu0 0.0
        %2019 = vmatpush1.msra.mxu0 0.0
        %2020 = vmatprep.subr.mxu0 0.0
        %2021 = vmatpush1.msra.mxu0 0.0
        %2022 = vmatprep.subr.mxu0 0.0
        %2023 = vmatpush1.msra.mxu0 0.0
        %2024 = vmatprep.subr.mxu0 0.0
        %2025 = vmatpush1.msra.mxu0 0.0
        %2026 = vmatprep.subr.mxu0 0.0
        %2027 = vmatpush1.msra.mxu0 0.0
        %2028 = vmatprep.subr.mxu0 0.0
        %2029 = vmatpush1.msra.mxu0 0.0
        %2030 = vmatprep.subr.mxu0 0.0
        %2031 = vmatpush1.msra.mxu0 0.0
        %2032 = vmatprep.subr.mxu0 0.0
        %2033 = vmatpush1.msra.mxu0 0.0
        %2034 = vmatprep.subr.mxu0 0.0
        %2035 = vmatpush1.msra.mxu0 0.0
        %2036 = vmatprep.subr.mxu0 0.0
        %2037 = vmatpush1.msra.mxu0 0.0
        %2038 = vmatprep.subr.mxu0 0.0
        %2039 = vmatpush1.msra.mxu0 0.0
        %2040 = vmatprep.subr.mxu0 0.0
        %2041 = vmatpush1.msra.mxu0 0.0
        %2042 = vmatprep.subr.mxu0 0.0
        %2043 = vmatpush1.msra.mxu0 0.0
        %2044 = vmatprep.subr.mxu0 0.0
        %2045 = vmatpush1.msra.mxu0 0.0
        %2046 = vmatprep.subr.mxu0 0.0
        %2047 = vmatpush1.msra.mxu0 0.0
        %2048 = vmatprep.subr.mxu0 0.0
        %2049 = vmatpush1.msra.mxu0 0.0
        %2050 = vmatprep.subr.mxu0 0.0
        %2051 = vmatpush1.msra.mxu0 0.0
        %2052 = vmatprep.subr.mxu0 0.0
        %2053 = vmatpush1.msra.mxu0 0.0
        %2054 = vmatprep.subr.mxu0 0.0
        %2055 = vmatpush1.msra.mxu0 0.0
        %2056 = vmatprep.mubr.f32.mxu0 0.0
        %2057 = vmatmul.mubr.f32.gmra.mrb[0].mxu0 %v1990
        %v2058 = vpop.f32.mrb[0].mxu0
        %v2059 = vadd.f32 0.0, %v2058
        %v2060 = vpop.f32.mrb[0].mxu0
        %2061 = vdwg.mxu0
        %2062 = vrot.lane.b32.xlu0 %v707, 120
        %v2063 = vpop.permute.xlu0 %2062
        %2064 = vrot.lane.b32.xlu0 %v707, 88
        %v2065 = vpop.permute.xlu0 %2064
        %v2066 = vsel %vm752, %v2063, 0
        %v2068 = vsel %vm752, %v2065, 0
        %2070 = vmatprep.subr.mxu0 0.0
        %2071 = vmatpush1.xpose.msra.mxu0 %v2068
        %2072 = vmatprep.subr.mxu0 0.0
        %2073 = vmatpush1.xpose.msra.mxu0 0.0
        %2074 = vmatprep.subr.mxu0 0.0
        %2075 = vmatpush1.xpose.msra.mxu0 0.0
        %2076 = vmatprep.subr.mxu0 0.0
        %2077 = vmatpush1.xpose.msra.mxu0 0.0
        %2078 = vmatprep.subr.mxu0 0.0
        %2079 = vmatpush1.xpose.msra.mxu0 0.0
        %2080 = vmatprep.subr.mxu0 0.0
        %2081 = vmatpush1.xpose.msra.mxu0 0.0
        %2082 = vmatprep.subr.mxu0 0.0
        %2083 = vmatpush1.xpose.msra.mxu0 0.0
        %2084 = vmatprep.subr.mxu0 0.0
        %2085 = vmatpush1.xpose.msra.mxu0 0.0
        %2086 = vmatprep.subr.mxu0 0.0
        %2087 = vmatpush1.xpose.msra.mxu0 0.0
        %2088 = vmatprep.subr.mxu0 0.0
        %2089 = vmatpush1.xpose.msra.mxu0 0.0
        %2090 = vmatprep.subr.mxu0 0.0
        %2091 = vmatpush1.xpose.msra.mxu0 0.0
        %2092 = vmatprep.subr.mxu0 0.0
        %2093 = vmatpush1.xpose.msra.mxu0 0.0
        %2094 = vmatprep.subr.mxu0 0.0
        %2095 = vmatpush1.xpose.msra.mxu0 0.0
        %2096 = vmatprep.subr.mxu0 0.0
        %2097 = vmatpush1.xpose.msra.mxu0 0.0
        %2098 = vmatprep.subr.mxu0 0.0
        %2099 = vmatpush1.xpose.msra.mxu0 0.0
        %2100 = vmatprep.subr.mxu0 0.0
        %2101 = vmatpush1.xpose.msra.mxu0 0.0
        %2102 = vmatprep.subr.mxu0 0.0
        %2103 = vmatpush1.xpose.msra.mxu0 0.0
        %2104 = vmatprep.subr.mxu0 0.0
        %2105 = vmatpush1.xpose.msra.mxu0 0.0
        %2106 = vmatprep.subr.mxu0 0.0
        %2107 = vmatpush1.xpose.msra.mxu0 0.0
        %2108 = vmatprep.subr.mxu0 0.0
        %2109 = vmatpush1.xpose.msra.mxu0 0.0
        %2110 = vmatprep.subr.mxu0 0.0
        %2111 = vmatpush1.xpose.msra.mxu0 0.0
        %2112 = vmatprep.subr.mxu0 0.0
        %2113 = vmatpush1.xpose.msra.mxu0 0.0
        %2114 = vmatprep.subr.mxu0 0.0
        %2115 = vmatpush1.xpose.msra.mxu0 0.0
        %2116 = vmatprep.subr.mxu0 0.0
        %2117 = vmatpush1.xpose.msra.mxu0 0.0
        %2118 = vmatprep.subr.mxu0 0.0
        %2119 = vmatpush1.xpose.msra.mxu0 0.0
        %2120 = vmatprep.subr.mxu0 0.0
        %2121 = vmatpush1.xpose.msra.mxu0 0.0
        %2122 = vmatprep.subr.mxu0 0.0
        %2123 = vmatpush1.xpose.msra.mxu0 0.0
        %2124 = vmatprep.subr.mxu0 0.0
        %2125 = vmatpush1.xpose.msra.mxu0 0.0
        %2126 = vmatprep.subr.mxu0 0.0
        %2127 = vmatpush1.xpose.msra.mxu0 0.0
        %2128 = vmatprep.subr.mxu0 0.0
        %2129 = vmatpush1.xpose.msra.mxu0 0.0
        %2130 = vmatprep.subr.mxu0 0.0
        %2131 = vmatpush1.xpose.msra.mxu0 0.0
        %2132 = vmatprep.subr.mxu0 0.0
        %2133 = vmatpush1.xpose.msra.mxu0 0.0
        %2134 = vmatprep.mubr.f32.mxu0 0.0
        %2135 = vmatmul.mubr.f32.gmra.mrb[0].mxu0 %v2066
        %v2136 = vpop.f32.mrb[0].mxu0
        %v2137 = vadd.f32 0.0, %v2136
        %v2138 = vpop.f32.mrb[0].mxu0
        %2139 = vdwg.mxu0
        %2140 = vrot.lane.b32.xlu0 %v712, 120
        %v2141 = vpop.permute.xlu0 %2140
        %2142 = vrot.lane.b32.xlu0 %v712, 88
        %v2143 = vpop.permute.xlu0 %2142
        %v2144 = vsel %vm752, %v2141, 0
        %v2146 = vsel %vm752, %v2143, 0
        %2148 = vmatprep.subr.mxu0 0.0
        %2149 = vmatpush1.xpose.msra.mxu0 %v2146
        %2150 = vmatprep.subr.mxu0 0.0
        %2151 = vmatpush1.xpose.msra.mxu0 0.0
        %2152 = vmatprep.subr.mxu0 0.0
        %2153 = vmatpush1.xpose.msra.mxu0 0.0
        %2154 = vmatprep.subr.mxu0 0.0
        %2155 = vmatpush1.xpose.msra.mxu0 0.0
        %2156 = vmatprep.subr.mxu0 0.0
        %2157 = vmatpush1.xpose.msra.mxu0 0.0
        %2158 = vmatprep.subr.mxu0 0.0
        %2159 = vmatpush1.xpose.msra.mxu0 0.0
        %2160 = vmatprep.subr.mxu0 0.0
        %2161 = vmatpush1.xpose.msra.mxu0 0.0
        %2162 = vmatprep.subr.mxu0 0.0
        %2163 = vmatpush1.xpose.msra.mxu0 0.0
        %2164 = vmatprep.subr.mxu0 0.0
        %2165 = vmatpush1.xpose.msra.mxu0 0.0
        %2166 = vmatprep.subr.mxu0 0.0
        %2167 = vmatpush1.xpose.msra.mxu0 0.0
        %2168 = vmatprep.subr.mxu0 0.0
        %2169 = vmatpush1.xpose.msra.mxu0 0.0
        %2170 = vmatprep.subr.mxu0 0.0
        %2171 = vmatpush1.xpose.msra.mxu0 0.0
        %2172 = vmatprep.subr.mxu0 0.0
        %2173 = vmatpush1.xpose.msra.mxu0 0.0
        %2174 = vmatprep.subr.mxu0 0.0
        %2175 = vmatpush1.xpose.msra.mxu0 0.0
        %2176 = vmatprep.subr.mxu0 0.0
        %2177 = vmatpush1.xpose.msra.mxu0 0.0
        %2178 = vmatprep.subr.mxu0 0.0
        %2179 = vmatpush1.xpose.msra.mxu0 0.0
        %2180 = vmatprep.subr.mxu0 0.0
        %2181 = vmatpush1.xpose.msra.mxu0 0.0
        %2182 = vmatprep.subr.mxu0 0.0
        %2183 = vmatpush1.xpose.msra.mxu0 0.0
        %2184 = vmatprep.subr.mxu0 0.0
        %2185 = vmatpush1.xpose.msra.mxu0 0.0
        %2186 = vmatprep.subr.mxu0 0.0
        %2187 = vmatpush1.xpose.msra.mxu0 0.0
        %2188 = vmatprep.subr.mxu0 0.0
        %2189 = vmatpush1.xpose.msra.mxu0 0.0
        %2190 = vmatprep.subr.mxu0 0.0
        %2191 = vmatpush1.xpose.msra.mxu0 0.0
        %2192 = vmatprep.subr.mxu0 0.0
        %2193 = vmatpush1.xpose.msra.mxu0 0.0
        %2194 = vmatprep.subr.mxu0 0.0
        %2195 = vmatpush1.xpose.msra.mxu0 0.0
        %2196 = vmatprep.subr.mxu0 0.0
        %2197 = vmatpush1.xpose.msra.mxu0 0.0
        %2198 = vmatprep.subr.mxu0 0.0
        %2199 = vmatpush1.xpose.msra.mxu0 0.0
        %2200 = vmatprep.subr.mxu0 0.0
        %2201 = vmatpush1.xpose.msra.mxu0 0.0
        %2202 = vmatprep.subr.mxu0 0.0
        %2203 = vmatpush1.xpose.msra.mxu0 0.0
        %2204 = vmatprep.subr.mxu0 0.0
        %2205 = vmatpush1.xpose.msra.mxu0 0.0
        %2206 = vmatprep.subr.mxu0 0.0
        %2207 = vmatpush1.xpose.msra.mxu0 0.0
        %2208 = vmatprep.subr.mxu0 0.0
        %2209 = vmatpush1.xpose.msra.mxu0 0.0
        %2210 = vmatprep.subr.mxu0 0.0
        %2211 = vmatpush1.xpose.msra.mxu0 0.0
        %2212 = vmatprep.mubr.f32.mxu0 0.0
        %2213 = vmatmul.mubr.f32.gmra.mrb[0].mxu0 %v2144
        %v2214 = vpop.f32.mrb[0].mxu0
        %v2215 = vadd.f32 0.0, %v2214
        %v2216 = vpop.f32.mrb[0].mxu0
        %2217 = vdwg.mxu0
        %2218 = vrot.lane.b32.xlu0 %v717, 120
        %v2219 = vpop.permute.xlu0 %2218
        %2220 = vrot.lane.b32.xlu0 %v717, 88
        %v2221 = vpop.permute.xlu0 %2220
        %v2222 = vsel %vm752, %v2219, 0
        %v2224 = vsel %vm752, %v2221, 0
        %2226 = vmatprep.subr.mxu0 0.0
        %2227 = vmatpush1.xpose.msra.mxu0 %v2224
        %2228 = vmatprep.subr.mxu0 0.0
        %2229 = vmatpush1.xpose.msra.mxu0 0.0
        %2230 = vmatprep.subr.mxu0 0.0
        %2231 = vmatpush1.xpose.msra.mxu0 0.0
        %2232 = vmatprep.subr.mxu0 0.0
        %2233 = vmatpush1.xpose.msra.mxu0 0.0
        %2234 = vmatprep.subr.mxu0 0.0
        %2235 = vmatpush1.xpose.msra.mxu0 0.0
        %2236 = vmatprep.subr.mxu0 0.0
        %2237 = vmatpush1.xpose.msra.mxu0 0.0
        %2238 = vmatprep.subr.mxu0 0.0
        %2239 = vmatpush1.xpose.msra.mxu0 0.0
        %2240 = vmatprep.subr.mxu0 0.0
        %2241 = vmatpush1.xpose.msra.mxu0 0.0
        %2242 = vmatprep.subr.mxu0 0.0
        %2243 = vmatpush1.xpose.msra.mxu0 0.0
        %2244 = vmatprep.subr.mxu0 0.0
        %2245 = vmatpush1.xpose.msra.mxu0 0.0
        %2246 = vmatprep.subr.mxu0 0.0
        %2247 = vmatpush1.xpose.msra.mxu0 0.0
        %2248 = vmatprep.subr.mxu0 0.0
        %2249 = vmatpush1.xpose.msra.mxu0 0.0
        %2250 = vmatprep.subr.mxu0 0.0
        %2251 = vmatpush1.xpose.msra.mxu0 0.0
        %2252 = vmatprep.subr.mxu0 0.0
        %2253 = vmatpush1.xpose.msra.mxu0 0.0
        %2254 = vmatprep.subr.mxu0 0.0
        %2255 = vmatpush1.xpose.msra.mxu0 0.0
        %2256 = vmatprep.subr.mxu0 0.0
        %2257 = vmatpush1.xpose.msra.mxu0 0.0
        %2258 = vmatprep.subr.mxu0 0.0
        %2259 = vmatpush1.xpose.msra.mxu0 0.0
        %2260 = vmatprep.subr.mxu0 0.0
        %2261 = vmatpush1.xpose.msra.mxu0 0.0
        %2262 = vmatprep.subr.mxu0 0.0
        %2263 = vmatpush1.xpose.msra.mxu0 0.0
        %2264 = vmatprep.subr.mxu0 0.0
        %2265 = vmatpush1.xpose.msra.mxu0 0.0
        %2266 = vmatprep.subr.mxu0 0.0
        %2267 = vmatpush1.xpose.msra.mxu0 0.0
        %2268 = vmatprep.subr.mxu0 0.0
        %2269 = vmatpush1.xpose.msra.mxu0 0.0
        %2270 = vmatprep.subr.mxu0 0.0
        %2271 = vmatpush1.xpose.msra.mxu0 0.0
        %2272 = vmatprep.subr.mxu0 0.0
        %2273 = vmatpush1.xpose.msra.mxu0 0.0
        %2274 = vmatprep.subr.mxu0 0.0
        %2275 = vmatpush1.xpose.msra.mxu0 0.0
        %2276 = vmatprep.subr.mxu0 0.0
        %2277 = vmatpush1.xpose.msra.mxu0 0.0
        %2278 = vmatprep.subr.mxu0 0.0
        %2279 = vmatpush1.xpose.msra.mxu0 0.0
        %2280 = vmatprep.subr.mxu0 0.0
        %2281 = vmatpush1.xpose.msra.mxu0 0.0
        %2282 = vmatprep.subr.mxu0 0.0
        %2283 = vmatpush1.xpose.msra.mxu0 0.0
        %2284 = vmatprep.subr.mxu0 0.0
        %2285 = vmatpush1.xpose.msra.mxu0 0.0
        %2286 = vmatprep.subr.mxu0 0.0
        %2287 = vmatpush1.xpose.msra.mxu0 0.0
        %2288 = vmatprep.subr.mxu0 0.0
        %2289 = vmatpush1.xpose.msra.mxu0 0.0
        %2290 = vmatprep.mubr.f32.mxu0 0.0
        %2291 = vmatmul.mubr.f32.gmra.mrb[0].mxu0 %v2222
        %v2292 = vpop.f32.mrb[0].mxu0
        %v2293 = vadd.f32 0.0, %v2292
        %v2294 = vpop.f32.mrb[0].mxu0
        %2295 = vdwg.mxu0
        %2296 = vrot.lane.b32.xlu0 %v722, 120
        %v2297 = vpop.permute.xlu0 %2296
        %2298 = vrot.lane.b32.xlu0 %v722, 88
        %v2299 = vpop.permute.xlu0 %2298
        %v2300 = vsel %vm752, %v2297, 0
        %v2302 = vsel %vm752, %v2299, 0
        %2304 = vmatprep.subr.mxu0 0.0
        %2305 = vmatpush1.xpose.msra.mxu0 %v2302
        %2306 = vmatprep.subr.mxu0 0.0
        %2307 = vmatpush1.xpose.msra.mxu0 0.0
        %2308 = vmatprep.subr.mxu0 0.0
        %2309 = vmatpush1.xpose.msra.mxu0 0.0
        %2310 = vmatprep.subr.mxu0 0.0
        %2311 = vmatpush1.xpose.msra.mxu0 0.0
        %2312 = vmatprep.subr.mxu0 0.0
        %2313 = vmatpush1.xpose.msra.mxu0 0.0
        %2314 = vmatprep.subr.mxu0 0.0
        %2315 = vmatpush1.xpose.msra.mxu0 0.0
        %2316 = vmatprep.subr.mxu0 0.0
        %2317 = vmatpush1.xpose.msra.mxu0 0.0
        %2318 = vmatprep.subr.mxu0 0.0
        %2319 = vmatpush1.xpose.msra.mxu0 0.0
        %2320 = vmatprep.subr.mxu0 0.0
        %2321 = vmatpush1.xpose.msra.mxu0 0.0
        %2322 = vmatprep.subr.mxu0 0.0
        %2323 = vmatpush1.xpose.msra.mxu0 0.0
        %2324 = vmatprep.subr.mxu0 0.0
        %2325 = vmatpush1.xpose.msra.mxu0 0.0
        %2326 = vmatprep.subr.mxu0 0.0
        %2327 = vmatpush1.xpose.msra.mxu0 0.0
        %2328 = vmatprep.subr.mxu0 0.0
        %2329 = vmatpush1.xpose.msra.mxu0 0.0
        %2330 = vmatprep.subr.mxu0 0.0
        %2331 = vmatpush1.xpose.msra.mxu0 0.0
        %2332 = vmatprep.subr.mxu0 0.0
        %2333 = vmatpush1.xpose.msra.mxu0 0.0
        %2334 = vmatprep.subr.mxu0 0.0
        %2335 = vmatpush1.xpose.msra.mxu0 0.0
        %2336 = vmatprep.subr.mxu0 0.0
        %2337 = vmatpush1.xpose.msra.mxu0 0.0
        %2338 = vmatprep.subr.mxu0 0.0
        %2339 = vmatpush1.xpose.msra.mxu0 0.0
        %2340 = vmatprep.subr.mxu0 0.0
        %2341 = vmatpush1.xpose.msra.mxu0 0.0
        %2342 = vmatprep.subr.mxu0 0.0
        %2343 = vmatpush1.xpose.msra.mxu0 0.0
        %2344 = vmatprep.subr.mxu0 0.0
        %2345 = vmatpush1.xpose.msra.mxu0 0.0
        %2346 = vmatprep.subr.mxu0 0.0
        %2347 = vmatpush1.xpose.msra.mxu0 0.0
        %2348 = vmatprep.subr.mxu0 0.0
        %2349 = vmatpush1.xpose.msra.mxu0 0.0
        %2350 = vmatprep.subr.mxu0 0.0
        %2351 = vmatpush1.xpose.msra.mxu0 0.0
        %2352 = vmatprep.subr.mxu0 0.0
        %2353 = vmatpush1.xpose.msra.mxu0 0.0
        %2354 = vmatprep.subr.mxu0 0.0
        %2355 = vmatpush1.xpose.msra.mxu0 0.0
        %2356 = vmatprep.subr.mxu0 0.0
        %2357 = vmatpush1.xpose.msra.mxu0 0.0
        %2358 = vmatprep.subr.mxu0 0.0
        %2359 = vmatpush1.xpose.msra.mxu0 0.0
        %2360 = vmatprep.subr.mxu0 0.0
        %2361 = vmatpush1.xpose.msra.mxu0 0.0
        %2362 = vmatprep.subr.mxu0 0.0
        %2363 = vmatpush1.xpose.msra.mxu0 0.0
        %2364 = vmatprep.subr.mxu0 0.0
        %2365 = vmatpush1.xpose.msra.mxu0 0.0
        %2366 = vmatprep.subr.mxu0 0.0
        %2367 = vmatpush1.xpose.msra.mxu0 0.0
        %2368 = vmatprep.mubr.f32.mxu0 0.0
        %2369 = vmatmul.mubr.f32.gmra.mrb[0].mxu0 %v2300
        %v2370 = vpop.f32.mrb[0].mxu0
        %v2371 = vadd.f32 0.0, %v2370
        %v2372 = vpop.f32.mrb[0].mxu0
        %2373 = vdwg.mxu0
        %2374 = vrot.lane.b32.xlu0 %v727, 120
        %v2375 = vpop.permute.xlu0 %2374
        %2376 = vrot.lane.b32.xlu0 %v727, 88
        %v2377 = vpop.permute.xlu0 %2376
        %v2378 = vsel %vm752, %v2375, 0
        %v2380 = vsel %vm752, %v2377, 0
        %2382 = vmatprep.subr.mxu0 0.0
        %2383 = vmatpush1.xpose.msra.mxu0 %v2380
        %2384 = vmatprep.subr.mxu0 0.0
        %2385 = vmatpush1.xpose.msra.mxu0 0.0
        %2386 = vmatprep.subr.mxu0 0.0
        %2387 = vmatpush1.xpose.msra.mxu0 0.0
        %2388 = vmatprep.subr.mxu0 0.0
        %2389 = vmatpush1.xpose.msra.mxu0 0.0
        %2390 = vmatprep.subr.mxu0 0.0
        %2391 = vmatpush1.xpose.msra.mxu0 0.0
        %2392 = vmatprep.subr.mxu0 0.0
        %2393 = vmatpush1.xpose.msra.mxu0 0.0
        %2394 = vmatprep.subr.mxu0 0.0
        %2395 = vmatpush1.xpose.msra.mxu0 0.0
        %2396 = vmatprep.subr.mxu0 0.0
        %2397 = vmatpush1.xpose.msra.mxu0 0.0
        %2398 = vmatprep.subr.mxu0 0.0
        %2399 = vmatpush1.xpose.msra.mxu0 0.0
        %2400 = vmatprep.subr.mxu0 0.0
        %2401 = vmatpush1.xpose.msra.mxu0 0.0
        %2402 = vmatprep.subr.mxu0 0.0
        %2403 = vmatpush1.xpose.msra.mxu0 0.0
        %2404 = vmatprep.subr.mxu0 0.0
        %2405 = vmatpush1.xpose.msra.mxu0 0.0
        %2406 = vmatprep.subr.mxu0 0.0
        %2407 = vmatpush1.xpose.msra.mxu0 0.0
        %2408 = vmatprep.subr.mxu0 0.0
        %2409 = vmatpush1.xpose.msra.mxu0 0.0
        %2410 = vmatprep.subr.mxu0 0.0
        %2411 = vmatpush1.xpose.msra.mxu0 0.0
        %2412 = vmatprep.subr.mxu0 0.0
        %2413 = vmatpush1.xpose.msra.mxu0 0.0
        %2414 = vmatprep.subr.mxu0 0.0
        %2415 = vmatpush1.xpose.msra.mxu0 0.0
        %2416 = vmatprep.subr.mxu0 0.0
        %2417 = vmatpush1.xpose.msra.mxu0 0.0
        %2418 = vmatprep.subr.mxu0 0.0
        %2419 = vmatpush1.xpose.msra.mxu0 0.0
        %2420 = vmatprep.subr.mxu0 0.0
        %2421 = vmatpush1.xpose.msra.mxu0 0.0
        %2422 = vmatprep.subr.mxu0 0.0
        %2423 = vmatpush1.xpose.msra.mxu0 0.0
        %2424 = vmatprep.subr.mxu0 0.0
        %2425 = vmatpush1.xpose.msra.mxu0 0.0
        %2426 = vmatprep.subr.mxu0 0.0
        %2427 = vmatpush1.xpose.msra.mxu0 0.0
        %2428 = vmatprep.subr.mxu0 0.0
        %2429 = vmatpush1.xpose.msra.mxu0 0.0
        %2430 = vmatprep.subr.mxu0 0.0
        %2431 = vmatpush1.xpose.msra.mxu0 0.0
        %2432 = vmatprep.subr.mxu0 0.0
        %2433 = vmatpush1.xpose.msra.mxu0 0.0
        %2434 = vmatprep.subr.mxu0 0.0
        %2435 = vmatpush1.xpose.msra.mxu0 0.0
        %2436 = vmatprep.subr.mxu0 0.0
        %2437 = vmatpush1.xpose.msra.mxu0 0.0
        %2438 = vmatprep.subr.mxu0 0.0
        %2439 = vmatpush1.xpose.msra.mxu0 0.0
        %2440 = vmatprep.subr.mxu0 0.0
        %2441 = vmatpush1.xpose.msra.mxu0 0.0
        %2442 = vmatprep.subr.mxu0 0.0
        %2443 = vmatpush1.xpose.msra.mxu0 0.0
        %2444 = vmatprep.subr.mxu0 0.0
        %2445 = vmatpush1.xpose.msra.mxu0 0.0
        %2446 = vmatprep.mubr.f32.mxu0 0.0
        %2447 = vmatmul.mubr.f32.gmra.mrb[0].mxu0 %v2378
        %v2448 = vpop.f32.mrb[0].mxu0
        %v2449 = vadd.f32 0.0, %v2448
        %v2450 = vpop.f32.mrb[0].mxu0
        %2451 = vdwg.mxu0
        %2452 = vrot.lane.b32.xlu0 %v732, 120
        %v2453 = vpop.permute.xlu0 %2452
        %2454 = vrot.lane.b32.xlu0 %v732, 88
        %v2455 = vpop.permute.xlu0 %2454
        %v2456 = vsel %vm752, %v2453, 0
        %v2458 = vsel %vm752, %v2455, 0
        %2460 = vmatprep.subr.mxu0 0.0
        %2461 = vmatpush1.xpose.msra.mxu0 %v2458
        %2462 = vmatprep.subr.mxu0 0.0
        %2463 = vmatpush1.xpose.msra.mxu0 0.0
        %2464 = vmatprep.subr.mxu0 0.0
        %2465 = vmatpush1.xpose.msra.mxu0 0.0
        %2466 = vmatprep.subr.mxu0 0.0
        %2467 = vmatpush1.xpose.msra.mxu0 0.0
        %2468 = vmatprep.subr.mxu0 0.0
        %2469 = vmatpush1.xpose.msra.mxu0 0.0
        %2470 = vmatprep.subr.mxu0 0.0
        %2471 = vmatpush1.xpose.msra.mxu0 0.0
        %2472 = vmatprep.subr.mxu0 0.0
        %2473 = vmatpush1.xpose.msra.mxu0 0.0
        %2474 = vmatprep.subr.mxu0 0.0
        %2475 = vmatpush1.xpose.msra.mxu0 0.0
        %2476 = vmatprep.subr.mxu0 0.0
        %2477 = vmatpush1.xpose.msra.mxu0 0.0
        %2478 = vmatprep.subr.mxu0 0.0
        %2479 = vmatpush1.xpose.msra.mxu0 0.0
        %2480 = vmatprep.subr.mxu0 0.0
        %2481 = vmatpush1.xpose.msra.mxu0 0.0
        %2482 = vmatprep.subr.mxu0 0.0
        %2483 = vmatpush1.xpose.msra.mxu0 0.0
        %2484 = vmatprep.subr.mxu0 0.0
        %2485 = vmatpush1.xpose.msra.mxu0 0.0
        %2486 = vmatprep.subr.mxu0 0.0
        %2487 = vmatpush1.xpose.msra.mxu0 0.0
        %2488 = vmatprep.subr.mxu0 0.0
        %2489 = vmatpush1.xpose.msra.mxu0 0.0
        %2490 = vmatprep.subr.mxu0 0.0
        %2491 = vmatpush1.xpose.msra.mxu0 0.0
        %2492 = vmatprep.subr.mxu0 0.0
        %2493 = vmatpush1.xpose.msra.mxu0 0.0
        %2494 = vmatprep.subr.mxu0 0.0
        %2495 = vmatpush1.xpose.msra.mxu0 0.0
        %2496 = vmatprep.subr.mxu0 0.0
        %2497 = vmatpush1.xpose.msra.mxu0 0.0
        %2498 = vmatprep.subr.mxu0 0.0
        %2499 = vmatpush1.xpose.msra.mxu0 0.0
        %2500 = vmatprep.subr.mxu0 0.0
        %2501 = vmatpush1.xpose.msra.mxu0 0.0
        %2502 = vmatprep.subr.mxu0 0.0
        %2503 = vmatpush1.xpose.msra.mxu0 0.0
        %2504 = vmatprep.subr.mxu0 0.0
        %2505 = vmatpush1.xpose.msra.mxu0 0.0
        %2506 = vmatprep.subr.mxu0 0.0
        %2507 = vmatpush1.xpose.msra.mxu0 0.0
        %2508 = vmatprep.subr.mxu0 0.0
        %2509 = vmatpush1.xpose.msra.mxu0 0.0
        %2510 = vmatprep.subr.mxu0 0.0
        %2511 = vmatpush1.xpose.msra.mxu0 0.0
        %2512 = vmatprep.subr.mxu0 0.0
        %2513 = vmatpush1.xpose.msra.mxu0 0.0
        %2514 = vmatprep.subr.mxu0 0.0
        %2515 = vmatpush1.xpose.msra.mxu0 0.0
        %2516 = vmatprep.subr.mxu0 0.0
        %2517 = vmatpush1.xpose.msra.mxu0 0.0
        %2518 = vmatprep.subr.mxu0 0.0
        %2519 = vmatpush1.xpose.msra.mxu0 0.0
        %2520 = vmatprep.subr.mxu0 0.0
        %2521 = vmatpush1.xpose.msra.mxu0 0.0
        %2522 = vmatprep.subr.mxu0 0.0
        %2523 = vmatpush1.xpose.msra.mxu0 0.0
        %2524 = vmatprep.mubr.f32.mxu0 0.0
        %2525 = vmatmul.mubr.f32.gmra.mrb[0].mxu0 %v2456
        %v2526 = vpop.f32.mrb[0].mxu0
        %v2527 = vadd.f32 0.0, %v2526
        %v2528 = vpop.f32.mrb[0].mxu0
        %2529 = vdwg.mxu0
        %2530 = vrot.lane.b32.xlu0 %v737, 120
        %v2531 = vpop.permute.xlu0 %2530
        %2532 = vrot.lane.b32.xlu0 %v737, 88
        %v2533 = vpop.permute.xlu0 %2532
        %v2534 = vsel %vm752, %v2531, 0
        %v2536 = vsel %vm752, %v2533, 0
        %2538 = vmatprep.subr.mxu0 0.0
        %2539 = vmatpush1.xpose.msra.mxu0 %v2536
        %2540 = vmatprep.subr.mxu0 0.0
        %2541 = vmatpush1.xpose.msra.mxu0 0.0
        %2542 = vmatprep.subr.mxu0 0.0
        %2543 = vmatpush1.xpose.msra.mxu0 0.0
        %2544 = vmatprep.subr.mxu0 0.0
        %2545 = vmatpush1.xpose.msra.mxu0 0.0
        %2546 = vmatprep.subr.mxu0 0.0
        %2547 = vmatpush1.xpose.msra.mxu0 0.0
        %2548 = vmatprep.subr.mxu0 0.0
        %2549 = vmatpush1.xpose.msra.mxu0 0.0
        %2550 = vmatprep.subr.mxu0 0.0
        %2551 = vmatpush1.xpose.msra.mxu0 0.0
        %2552 = vmatprep.subr.mxu0 0.0
        %2553 = vmatpush1.xpose.msra.mxu0 0.0
        %2554 = vmatprep.subr.mxu0 0.0
        %2555 = vmatpush1.xpose.msra.mxu0 0.0
        %2556 = vmatprep.subr.mxu0 0.0
        %2557 = vmatpush1.xpose.msra.mxu0 0.0
        %2558 = vmatprep.subr.mxu0 0.0
        %2559 = vmatpush1.xpose.msra.mxu0 0.0
        %2560 = vmatprep.subr.mxu0 0.0
        %2561 = vmatpush1.xpose.msra.mxu0 0.0
        %2562 = vmatprep.subr.mxu0 0.0
        %2563 = vmatpush1.xpose.msra.mxu0 0.0
        %2564 = vmatprep.subr.mxu0 0.0
        %2565 = vmatpush1.xpose.msra.mxu0 0.0
        %2566 = vmatprep.subr.mxu0 0.0
        %2567 = vmatpush1.xpose.msra.mxu0 0.0
        %2568 = vmatprep.subr.mxu0 0.0
        %2569 = vmatpush1.xpose.msra.mxu0 0.0
        %2570 = vmatprep.subr.mxu0 0.0
        %2571 = vmatpush1.xpose.msra.mxu0 0.0
        %2572 = vmatprep.subr.mxu0 0.0
        %2573 = vmatpush1.xpose.msra.mxu0 0.0
        %2574 = vmatprep.subr.mxu0 0.0
        %2575 = vmatpush1.xpose.msra.mxu0 0.0
        %2576 = vmatprep.subr.mxu0 0.0
        %2577 = vmatpush1.xpose.msra.mxu0 0.0
        %2578 = vmatprep.subr.mxu0 0.0
        %2579 = vmatpush1.xpose.msra.mxu0 0.0
        %2580 = vmatprep.subr.mxu0 0.0
        %2581 = vmatpush1.xpose.msra.mxu0 0.0
        %2582 = vmatprep.subr.mxu0 0.0
        %2583 = vmatpush1.xpose.msra.mxu0 0.0
        %2584 = vmatprep.subr.mxu0 0.0
        %2585 = vmatpush1.xpose.msra.mxu0 0.0
        %2586 = vmatprep.subr.mxu0 0.0
        %2587 = vmatpush1.xpose.msra.mxu0 0.0
        %2588 = vmatprep.subr.mxu0 0.0
        %2589 = vmatpush1.xpose.msra.mxu0 0.0
        %2590 = vmatprep.subr.mxu0 0.0
        %2591 = vmatpush1.xpose.msra.mxu0 0.0
        %2592 = vmatprep.subr.mxu0 0.0
        %2593 = vmatpush1.xpose.msra.mxu0 0.0
        %2594 = vmatprep.subr.mxu0 0.0
        %2595 = vmatpush1.xpose.msra.mxu0 0.0
        %2596 = vmatprep.subr.mxu0 0.0
        %2597 = vmatpush1.xpose.msra.mxu0 0.0
        %2598 = vmatprep.subr.mxu0 0.0
        %2599 = vmatpush1.xpose.msra.mxu0 0.0
        %2600 = vmatprep.subr.mxu0 0.0
        %2601 = vmatpush1.xpose.msra.mxu0 0.0
        %2602 = vmatprep.mubr.f32.mxu0 0.0
        %2603 = vmatmul.mubr.f32.gmra.mrb[0].mxu0 %v2534
        %v2604 = vpop.f32.mrb[0].mxu0
        %v2605 = vadd.f32 0.0, %v2604
        %v2606 = vpop.f32.mrb[0].mxu0
        %2607 = vdwg.mxu0
        %2608 = vrot.lane.b32.xlu0 %v742, 120
        %v2609 = vpop.permute.xlu0 %2608
        %2610 = vrot.lane.b32.xlu0 %v742, 88
        %v2611 = vpop.permute.xlu0 %2610
        %v2612 = vsel %vm752, %v2609, 0
        %v2614 = vsel %vm752, %v2611, 0
        %2616 = vmatprep.subr.mxu0 0.0
        %2617 = vmatpush1.xpose.msra.mxu0 %v2614
        %2618 = vmatprep.subr.mxu0 0.0
        %2619 = vmatpush1.xpose.msra.mxu0 0.0
        %2620 = vmatprep.subr.mxu0 0.0
        %2621 = vmatpush1.xpose.msra.mxu0 0.0
        %2622 = vmatprep.subr.mxu0 0.0
        %2623 = vmatpush1.xpose.msra.mxu0 0.0
        %2624 = vmatprep.subr.mxu0 0.0
        %2625 = vmatpush1.xpose.msra.mxu0 0.0
        %2626 = vmatprep.subr.mxu0 0.0
        %2627 = vmatpush1.xpose.msra.mxu0 0.0
        %2628 = vmatprep.subr.mxu0 0.0
        %2629 = vmatpush1.xpose.msra.mxu0 0.0
        %2630 = vmatprep.subr.mxu0 0.0
        %2631 = vmatpush1.xpose.msra.mxu0 0.0
        %2632 = vmatprep.subr.mxu0 0.0
        %2633 = vmatpush1.xpose.msra.mxu0 0.0
        %2634 = vmatprep.subr.mxu0 0.0
        %2635 = vmatpush1.xpose.msra.mxu0 0.0
        %2636 = vmatprep.subr.mxu0 0.0
        %2637 = vmatpush1.xpose.msra.mxu0 0.0
        %2638 = vmatprep.subr.mxu0 0.0
        %2639 = vmatpush1.xpose.msra.mxu0 0.0
        %2640 = vmatprep.subr.mxu0 0.0
        %2641 = vmatpush1.xpose.msra.mxu0 0.0
        %2642 = vmatprep.subr.mxu0 0.0
        %2643 = vmatpush1.xpose.msra.mxu0 0.0
        %2644 = vmatprep.subr.mxu0 0.0
        %2645 = vmatpush1.xpose.msra.mxu0 0.0
        %2646 = vmatprep.subr.mxu0 0.0
        %2647 = vmatpush1.xpose.msra.mxu0 0.0
        %2648 = vmatprep.subr.mxu0 0.0
        %2649 = vmatpush1.xpose.msra.mxu0 0.0
        %2650 = vmatprep.subr.mxu0 0.0
        %2651 = vmatpush1.xpose.msra.mxu0 0.0
        %2652 = vmatprep.subr.mxu0 0.0
        %2653 = vmatpush1.xpose.msra.mxu0 0.0
        %2654 = vmatprep.subr.mxu0 0.0
        %2655 = vmatpush1.xpose.msra.mxu0 0.0
        %2656 = vmatprep.subr.mxu0 0.0
        %2657 = vmatpush1.xpose.msra.mxu0 0.0
        %2658 = vmatprep.subr.mxu0 0.0
        %2659 = vmatpush1.xpose.msra.mxu0 0.0
        %2660 = vmatprep.subr.mxu0 0.0
        %2661 = vmatpush1.xpose.msra.mxu0 0.0
        %2662 = vmatprep.subr.mxu0 0.0
        %2663 = vmatpush1.xpose.msra.mxu0 0.0
        %2664 = vmatprep.subr.mxu0 0.0
        %2665 = vmatpush1.xpose.msra.mxu0 0.0
        %2666 = vmatprep.subr.mxu0 0.0
        %2667 = vmatpush1.xpose.msra.mxu0 0.0
        %2668 = vmatprep.subr.mxu0 0.0
        %2669 = vmatpush1.xpose.msra.mxu0 0.0
        %2670 = vmatprep.subr.mxu0 0.0
        %2671 = vmatpush1.xpose.msra.mxu0 0.0
        %2672 = vmatprep.subr.mxu0 0.0
        %2673 = vmatpush1.xpose.msra.mxu0 0.0
        %2674 = vmatprep.subr.mxu0 0.0
        %2675 = vmatpush1.xpose.msra.mxu0 0.0
        %2676 = vmatprep.subr.mxu0 0.0
        %2677 = vmatpush1.xpose.msra.mxu0 0.0
        %2678 = vmatprep.subr.mxu0 0.0
        %2679 = vmatpush1.xpose.msra.mxu0 0.0
        %2680 = vmatprep.mubr.f32.mxu0 0.0
        %2681 = vmatmul.mubr.f32.gmra.mrb[0].mxu0 %v2612
        %v2682 = vpop.f32.mrb[0].mxu0
        %v2683 = vadd.f32 0.0, %v2682
        %v2684 = vpop.f32.mrb[0].mxu0
        %2685 = vdwg.mxu0
        %v2686 = vsel %vm752, %v2137, -inf
        %2687 = vmax.xlane.f32.xlu0 %v2686
        %v2688 = vpop.xlane.xlu0 %2687
        %v2689 = vsel %vm752, %v2215, -inf
        %2690 = vmax.xlane.f32.xlu0 %v2689
        %v2691 = vpop.xlane.xlu0 %2690
        %v2692 = vsel %vm752, %v2293, -inf
        %2693 = vmax.xlane.f32.xlu0 %v2692
        %v2694 = vpop.xlane.xlu0 %2693
        %v2695 = vsel %vm752, %v2371, -inf
        %2696 = vmax.xlane.f32.xlu0 %v2695
        %v2697 = vpop.xlane.xlu0 %2696
        %v2698 = vsel %vm752, %v2449, -inf
        %2699 = vmax.xlane.f32.xlu0 %v2698
        %v2700 = vpop.xlane.xlu0 %2699
        %v2701 = vsel %vm752, %v2527, -inf
        %2702 = vmax.xlane.f32.xlu0 %v2701
        %v2703 = vpop.xlane.xlu0 %2702
        %v2704 = vsel %vm752, %v2605, -inf
        %2705 = vmax.xlane.f32.xlu0 %v2704
        %v2706 = vpop.xlane.xlu0 %2705
        %v2707 = vsel %vm752, %v2683, -inf
        %2708 = vmax.xlane.f32.xlu0 %v2707
        %v2709 = vpop.xlane.xlu0 %2708
        %v2710 = vsub.f32 %v2137, %v2688
        %v2711 = vsub.f32 %v2215, %v2691
        %v2712 = vsub.f32 %v2293, %v2694
        %v2713 = vsub.f32 %v2371, %v2697
        %v2714 = vsub.f32 %v2449, %v2700
        %v2715 = vsub.f32 %v2527, %v2703
        %v2716 = vsub.f32 %v2605, %v2706
        %v2717 = vsub.f32 %v2683, %v2709
        %v2718 = vmul.f32 %v2710, 1.442695
        %v2719 = vpow.pop %v2718
        %v2720 = vmul.f32 %v2711, 1.442695
        %v2721 = vpow.pop %v2720
        %v2722 = vmul.f32 %v2712, 1.442695
        %v2723 = vpow.pop %v2722
        %v2724 = vmul.f32 %v2713, 1.442695
        %v2725 = vpow.pop %v2724
        %v2726 = vmul.f32 %v2714, 1.442695
        %v2727 = vpow.pop %v2726
        %v2728 = vmul.f32 %v2715, 1.442695
        %v2729 = vpow.pop %v2728
        %v2730 = vmul.f32 %v2716, 1.442695
        %v2731 = vpow.pop %v2730
        %v2732 = vmul.f32 %v2717, 1.442695
        %v2733 = vpow.pop %v2732
        %v2734 = vsel %vm752, %v2719, 0.0
        %2735 = vadd.xlane.f32.xlu0 %v2734
        %v2736 = vpop.xlane.xlu0 %2735
        %v2737 = vsel %vm752, %v2721, 0.0
        %2738 = vadd.xlane.f32.xlu0 %v2737
        %v2739 = vpop.xlane.xlu0 %2738
        %v2740 = vsel %vm752, %v2723, 0.0
        %2741 = vadd.xlane.f32.xlu0 %v2740
        %v2742 = vpop.xlane.xlu0 %2741
        %v2743 = vsel %vm752, %v2725, 0.0
        %2744 = vadd.xlane.f32.xlu0 %v2743
        %v2745 = vpop.xlane.xlu0 %2744
        %v2746 = vsel %vm752, %v2727, 0.0
        %2747 = vadd.xlane.f32.xlu0 %v2746
        %v2748 = vpop.xlane.xlu0 %2747
        %v2749 = vsel %vm752, %v2729, 0.0
        %2750 = vadd.xlane.f32.xlu0 %v2749
        %v2751 = vpop.xlane.xlu0 %2750
        %v2752 = vsel %vm752, %v2731, 0.0
        %2753 = vadd.xlane.f32.xlu0 %v2752
        %v2754 = vpop.xlane.xlu0 %2753
        %v2755 = vsel %vm752, %v2733, 0.0
        %2756 = vadd.xlane.f32.xlu0 %v2755
        %v2757 = vpop.xlane.xlu0 %2756
        %v2758 = vrcp.pop %v2736
        %v2759 = vrcp.pop %v2739
        %v2760 = vrcp.pop %v2742
        %v2761 = vrcp.pop %v2745
        %v2762 = vrcp.pop %v2748
        %v2763 = vrcp.pop %v2751
        %v2764 = vrcp.pop %v2754
        %v2765 = vrcp.pop %v2757
        %v2766 = vmul.f32 %v2719, %v2758
        %v2767 = vmul.f32 %v2721, %v2759
        %v2768 = vmul.f32 %v2723, %v2760
        %v2769 = vmul.f32 %v2725, %v2761
        %v2770 = vmul.f32 %v2727, %v2762
        %v2771 = vmul.f32 %v2729, %v2763
        %v2772 = vmul.f32 %v2731, %v2764
        %v2773 = vmul.f32 %v2733, %v2765
        %2774 = vrot.lane.b32.xlu0 %v707, 56
        %v2775 = vpop.permute.xlu0 %2774
        %v2778 = vsel %vm752, %v2766, 0
        %2780 = vmatprep.subr.mxu0 0.0
        %2781 = vmatpush1.msra.mxu0 %v2775
        %2782 = vmatprep.subr.mxu0 0.0
        %2783 = vmatpush1.msra.mxu0 0.0
        %2784 = vmatprep.subr.mxu0 0.0
        %2785 = vmatpush1.msra.mxu0 0.0
        %2786 = vmatprep.subr.mxu0 0.0
        %2787 = vmatpush1.msra.mxu0 0.0
        %2788 = vmatprep.subr.mxu0 0.0
        %2789 = vmatpush1.msra.mxu0 0.0
        %2790 = vmatprep.subr.mxu0 0.0
        %2791 = vmatpush1.msra.mxu0 0.0
        %2792 = vmatprep.subr.mxu0 0.0
        %2793 = vmatpush1.msra.mxu0 0.0
        %2794 = vmatprep.subr.mxu0 0.0
        %2795 = vmatpush1.msra.mxu0 0.0
        %2796 = vmatprep.subr.mxu0 0.0
        %2797 = vmatpush1.msra.mxu0 0.0
        %2798 = vmatprep.subr.mxu0 0.0
        %2799 = vmatpush1.msra.mxu0 0.0
        %2800 = vmatprep.subr.mxu0 0.0
        %2801 = vmatpush1.msra.mxu0 0.0
        %2802 = vmatprep.subr.mxu0 0.0
        %2803 = vmatpush1.msra.mxu0 0.0
        %2804 = vmatprep.subr.mxu0 0.0
        %2805 = vmatpush1.msra.mxu0 0.0
        %2806 = vmatprep.subr.mxu0 0.0
        %2807 = vmatpush1.msra.mxu0 0.0
        %2808 = vmatprep.subr.mxu0 0.0
        %2809 = vmatpush1.msra.mxu0 0.0
        %2810 = vmatprep.subr.mxu0 0.0
        %2811 = vmatpush1.msra.mxu0 0.0
        %2812 = vmatprep.subr.mxu0 0.0
        %2813 = vmatpush1.msra.mxu0 0.0
        %2814 = vmatprep.subr.mxu0 0.0
        %2815 = vmatpush1.msra.mxu0 0.0
        %2816 = vmatprep.subr.mxu0 0.0
        %2817 = vmatpush1.msra.mxu0 0.0
        %2818 = vmatprep.subr.mxu0 0.0
        %2819 = vmatpush1.msra.mxu0 0.0
        %2820 = vmatprep.subr.mxu0 0.0
        %2821 = vmatpush1.msra.mxu0 0.0
        %2822 = vmatprep.subr.mxu0 0.0
        %2823 = vmatpush1.msra.mxu0 0.0
        %2824 = vmatprep.subr.mxu0 0.0
        %2825 = vmatpush1.msra.mxu0 0.0
        %2826 = vmatprep.subr.mxu0 0.0
        %2827 = vmatpush1.msra.mxu0 0.0
        %2828 = vmatprep.subr.mxu0 0.0
        %2829 = vmatpush1.msra.mxu0 0.0
        %2830 = vmatprep.subr.mxu0 0.0
        %2831 = vmatpush1.msra.mxu0 0.0
        %2832 = vmatprep.subr.mxu0 0.0
        %2833 = vmatpush1.msra.mxu0 0.0
        %2834 = vmatprep.subr.mxu0 0.0
        %2835 = vmatpush1.msra.mxu0 0.0
        %2836 = vmatprep.subr.mxu0 0.0
        %2837 = vmatpush1.msra.mxu0 0.0
        %2838 = vmatprep.subr.mxu0 0.0
        %2839 = vmatpush1.msra.mxu0 0.0
        %2840 = vmatprep.subr.mxu0 0.0
        %2841 = vmatpush1.msra.mxu0 0.0
        %2842 = vmatprep.subr.mxu0 0.0
        %2843 = vmatpush1.msra.mxu0 0.0
        %2844 = vmatprep.mubr.f32.mxu0 0.0
        %2845 = vmatmul.mubr.f32.gmra.mrb[0].mxu0 %v2778
        %v2846 = vpop.f32.mrb[0].mxu0
        %v2847 = vadd.f32 0.0, %v2846
        %v2848 = vpop.f32.mrb[0].mxu0
        %2849 = vdwg.mxu0
        %2850 = vrot.lane.b32.xlu0 %v712, 56
        %v2851 = vpop.permute.xlu0 %2850
        %v2854 = vsel %vm752, %v2767, 0
        %2856 = vmatprep.subr.mxu0 0.0
        %2857 = vmatpush1.msra.mxu0 %v2851
        %2858 = vmatprep.subr.mxu0 0.0
        %2859 = vmatpush1.msra.mxu0 0.0
        %2860 = vmatprep.subr.mxu0 0.0
        %2861 = vmatpush1.msra.mxu0 0.0
        %2862 = vmatprep.subr.mxu0 0.0
        %2863 = vmatpush1.msra.mxu0 0.0
        %2864 = vmatprep.subr.mxu0 0.0
        %2865 = vmatpush1.msra.mxu0 0.0
        %2866 = vmatprep.subr.mxu0 0.0
        %2867 = vmatpush1.msra.mxu0 0.0
        %2868 = vmatprep.subr.mxu0 0.0
        %2869 = vmatpush1.msra.mxu0 0.0
        %2870 = vmatprep.subr.mxu0 0.0
        %2871 = vmatpush1.msra.mxu0 0.0
        %2872 = vmatprep.subr.mxu0 0.0
        %2873 = vmatpush1.msra.mxu0 0.0
        %2874 = vmatprep.subr.mxu0 0.0
        %2875 = vmatpush1.msra.mxu0 0.0
        %2876 = vmatprep.subr.mxu0 0.0
        %2877 = vmatpush1.msra.mxu0 0.0
        %2878 = vmatprep.subr.mxu0 0.0
        %2879 = vmatpush1.msra.mxu0 0.0
        %2880 = vmatprep.subr.mxu0 0.0
        %2881 = vmatpush1.msra.mxu0 0.0
        %2882 = vmatprep.subr.mxu0 0.0
        %2883 = vmatpush1.msra.mxu0 0.0
        %2884 = vmatprep.subr.mxu0 0.0
        %2885 = vmatpush1.msra.mxu0 0.0
        %2886 = vmatprep.subr.mxu0 0.0
        %2887 = vmatpush1.msra.mxu0 0.0
        %2888 = vmatprep.subr.mxu0 0.0
        %2889 = vmatpush1.msra.mxu0 0.0
        %2890 = vmatprep.subr.mxu0 0.0
        %2891 = vmatpush1.msra.mxu0 0.0
        %2892 = vmatprep.subr.mxu0 0.0
        %2893 = vmatpush1.msra.mxu0 0.0
        %2894 = vmatprep.subr.mxu0 0.0
        %2895 = vmatpush1.msra.mxu0 0.0
        %2896 = vmatprep.subr.mxu0 0.0
        %2897 = vmatpush1.msra.mxu0 0.0
        %2898 = vmatprep.subr.mxu0 0.0
        %2899 = vmatpush1.msra.mxu0 0.0
        %2900 = vmatprep.subr.mxu0 0.0
        %2901 = vmatpush1.msra.mxu0 0.0
        %2902 = vmatprep.subr.mxu0 0.0
        %2903 = vmatpush1.msra.mxu0 0.0
        %2904 = vmatprep.subr.mxu0 0.0
        %2905 = vmatpush1.msra.mxu0 0.0
        %2906 = vmatprep.subr.mxu0 0.0
        %2907 = vmatpush1.msra.mxu0 0.0
        %2908 = vmatprep.subr.mxu0 0.0
        %2909 = vmatpush1.msra.mxu0 0.0
        %2910 = vmatprep.subr.mxu0 0.0
        %2911 = vmatpush1.msra.mxu0 0.0
        %2912 = vmatprep.subr.mxu0 0.0
        %2913 = vmatpush1.msra.mxu0 0.0
        %2914 = vmatprep.subr.mxu0 0.0
        %2915 = vmatpush1.msra.mxu0 0.0
        %2916 = vmatprep.subr.mxu0 0.0
        %2917 = vmatpush1.msra.mxu0 0.0
        %2918 = vmatprep.subr.mxu0 0.0
        %2919 = vmatpush1.msra.mxu0 0.0
        %2920 = vmatprep.mubr.f32.mxu0 0.0
        %2921 = vmatmul.mubr.f32.gmra.mrb[0].mxu0 %v2854
        %v2922 = vpop.f32.mrb[0].mxu0
        %v2923 = vadd.f32 0.0, %v2922
        %v2924 = vpop.f32.mrb[0].mxu0
        %2925 = vdwg.mxu0
        %2926 = vrot.lane.b32.xlu0 %v717, 56
        %v2927 = vpop.permute.xlu0 %2926
        %v2930 = vsel %vm752, %v2768, 0
        %2932 = vmatprep.subr.mxu0 0.0
        %2933 = vmatpush1.msra.mxu0 %v2927
        %2934 = vmatprep.subr.mxu0 0.0
        %2935 = vmatpush1.msra.mxu0 0.0
        %2936 = vmatprep.subr.mxu0 0.0
        %2937 = vmatpush1.msra.mxu0 0.0
        %2938 = vmatprep.subr.mxu0 0.0
        %2939 = vmatpush1.msra.mxu0 0.0
        %2940 = vmatprep.subr.mxu0 0.0
        %2941 = vmatpush1.msra.mxu0 0.0
        %2942 = vmatprep.subr.mxu0 0.0
        %2943 = vmatpush1.msra.mxu0 0.0
        %2944 = vmatprep.subr.mxu0 0.0
        %2945 = vmatpush1.msra.mxu0 0.0
        %2946 = vmatprep.subr.mxu0 0.0
        %2947 = vmatpush1.msra.mxu0 0.0
        %2948 = vmatprep.subr.mxu0 0.0
        %2949 = vmatpush1.msra.mxu0 0.0
        %2950 = vmatprep.subr.mxu0 0.0
        %2951 = vmatpush1.msra.mxu0 0.0
        %2952 = vmatprep.subr.mxu0 0.0
        %2953 = vmatpush1.msra.mxu0 0.0
        %2954 = vmatprep.subr.mxu0 0.0
        %2955 = vmatpush1.msra.mxu0 0.0
        %2956 = vmatprep.subr.mxu0 0.0
        %2957 = vmatpush1.msra.mxu0 0.0
        %2958 = vmatprep.subr.mxu0 0.0
        %2959 = vmatpush1.msra.mxu0 0.0
        %2960 = vmatprep.subr.mxu0 0.0
        %2961 = vmatpush1.msra.mxu0 0.0
        %2962 = vmatprep.subr.mxu0 0.0
        %2963 = vmatpush1.msra.mxu0 0.0
        %2964 = vmatprep.subr.mxu0 0.0
        %2965 = vmatpush1.msra.mxu0 0.0
        %2966 = vmatprep.subr.mxu0 0.0
        %2967 = vmatpush1.msra.mxu0 0.0
        %2968 = vmatprep.subr.mxu0 0.0
        %2969 = vmatpush1.msra.mxu0 0.0
        %2970 = vmatprep.subr.mxu0 0.0
        %2971 = vmatpush1.msra.mxu0 0.0
        %2972 = vmatprep.subr.mxu0 0.0
        %2973 = vmatpush1.msra.mxu0 0.0
        %2974 = vmatprep.subr.mxu0 0.0
        %2975 = vmatpush1.msra.mxu0 0.0
        %2976 = vmatprep.subr.mxu0 0.0
        %2977 = vmatpush1.msra.mxu0 0.0
        %2978 = vmatprep.subr.mxu0 0.0
        %2979 = vmatpush1.msra.mxu0 0.0
        %2980 = vmatprep.subr.mxu0 0.0
        %2981 = vmatpush1.msra.mxu0 0.0
        %2982 = vmatprep.subr.mxu0 0.0
        %2983 = vmatpush1.msra.mxu0 0.0
        %2984 = vmatprep.subr.mxu0 0.0
        %2985 = vmatpush1.msra.mxu0 0.0
        %2986 = vmatprep.subr.mxu0 0.0
        %2987 = vmatpush1.msra.mxu0 0.0
        %2988 = vmatprep.subr.mxu0 0.0
        %2989 = vmatpush1.msra.mxu0 0.0
        %2990 = vmatprep.subr.mxu0 0.0
        %2991 = vmatpush1.msra.mxu0 0.0
        %2992 = vmatprep.subr.mxu0 0.0
        %2993 = vmatpush1.msra.mxu0 0.0
        %2994 = vmatprep.subr.mxu0 0.0
        %2995 = vmatpush1.msra.mxu0 0.0
        %2996 = vmatprep.mubr.f32.mxu0 0.0
        %2997 = vmatmul.mubr.f32.gmra.mrb[0].mxu0 %v2930
        %v2998 = vpop.f32.mrb[0].mxu0
        %v2999 = vadd.f32 0.0, %v2998
        %v3000 = vpop.f32.mrb[0].mxu0
        %3001 = vdwg.mxu0
        %3002 = vrot.lane.b32.xlu0 %v722, 56
        %v3003 = vpop.permute.xlu0 %3002
        %v3006 = vsel %vm752, %v2769, 0
        %3008 = vmatprep.subr.mxu0 0.0
        %3009 = vmatpush1.msra.mxu0 %v3003
        %3010 = vmatprep.subr.mxu0 0.0
        %3011 = vmatpush1.msra.mxu0 0.0
        %3012 = vmatprep.subr.mxu0 0.0
        %3013 = vmatpush1.msra.mxu0 0.0
        %3014 = vmatprep.subr.mxu0 0.0
        %3015 = vmatpush1.msra.mxu0 0.0
        %3016 = vmatprep.subr.mxu0 0.0
        %3017 = vmatpush1.msra.mxu0 0.0
        %3018 = vmatprep.subr.mxu0 0.0
        %3019 = vmatpush1.msra.mxu0 0.0
        %3020 = vmatprep.subr.mxu0 0.0
        %3021 = vmatpush1.msra.mxu0 0.0
        %3022 = vmatprep.subr.mxu0 0.0
        %3023 = vmatpush1.msra.mxu0 0.0
        %3024 = vmatprep.subr.mxu0 0.0
        %3025 = vmatpush1.msra.mxu0 0.0
        %3026 = vmatprep.subr.mxu0 0.0
        %3027 = vmatpush1.msra.mxu0 0.0
        %3028 = vmatprep.subr.mxu0 0.0
        %3029 = vmatpush1.msra.mxu0 0.0
        %3030 = vmatprep.subr.mxu0 0.0
        %3031 = vmatpush1.msra.mxu0 0.0
        %3032 = vmatprep.subr.mxu0 0.0
        %3033 = vmatpush1.msra.mxu0 0.0
        %3034 = vmatprep.subr.mxu0 0.0
        %3035 = vmatpush1.msra.mxu0 0.0
        %3036 = vmatprep.subr.mxu0 0.0
        %3037 = vmatpush1.msra.mxu0 0.0
        %3038 = vmatprep.subr.mxu0 0.0
        %3039 = vmatpush1.msra.mxu0 0.0
        %3040 = vmatprep.subr.mxu0 0.0
        %3041 = vmatpush1.msra.mxu0 0.0
        %3042 = vmatprep.subr.mxu0 0.0
        %3043 = vmatpush1.msra.mxu0 0.0
        %3044 = vmatprep.subr.mxu0 0.0
        %3045 = vmatpush1.msra.mxu0 0.0
        %3046 = vmatprep.subr.mxu0 0.0
        %3047 = vmatpush1.msra.mxu0 0.0
        %3048 = vmatprep.subr.mxu0 0.0
        %3049 = vmatpush1.msra.mxu0 0.0
        %3050 = vmatprep.subr.mxu0 0.0
        %3051 = vmatpush1.msra.mxu0 0.0
        %3052 = vmatprep.subr.mxu0 0.0
        %3053 = vmatpush1.msra.mxu0 0.0
        %3054 = vmatprep.subr.mxu0 0.0
        %3055 = vmatpush1.msra.mxu0 0.0
        %3056 = vmatprep.subr.mxu0 0.0
        %3057 = vmatpush1.msra.mxu0 0.0
        %3058 = vmatprep.subr.mxu0 0.0
        %3059 = vmatpush1.msra.mxu0 0.0
        %3060 = vmatprep.subr.mxu0 0.0
        %3061 = vmatpush1.msra.mxu0 0.0
        %3062 = vmatprep.subr.mxu0 0.0
        %3063 = vmatpush1.msra.mxu0 0.0
        %3064 = vmatprep.subr.mxu0 0.0
        %3065 = vmatpush1.msra.mxu0 0.0
        %3066 = vmatprep.subr.mxu0 0.0
        %3067 = vmatpush1.msra.mxu0 0.0
        %3068 = vmatprep.subr.mxu0 0.0
        %3069 = vmatpush1.msra.mxu0 0.0
        %3070 = vmatprep.subr.mxu0 0.0
        %3071 = vmatpush1.msra.mxu0 0.0
        %3072 = vmatprep.mubr.f32.mxu0 0.0
        %3073 = vmatmul.mubr.f32.gmra.mrb[0].mxu0 %v3006
        %v3074 = vpop.f32.mrb[0].mxu0
        %v3075 = vadd.f32 0.0, %v3074
        %v3076 = vpop.f32.mrb[0].mxu0
        %3077 = vdwg.mxu0
        %3078 = vrot.lane.b32.xlu0 %v727, 56
        %v3079 = vpop.permute.xlu0 %3078
        %v3082 = vsel %vm752, %v2770, 0
        %3084 = vmatprep.subr.mxu0 0.0
        %3085 = vmatpush1.msra.mxu0 %v3079
        %3086 = vmatprep.subr.mxu0 0.0
        %3087 = vmatpush1.msra.mxu0 0.0
        %3088 = vmatprep.subr.mxu0 0.0
        %3089 = vmatpush1.msra.mxu0 0.0
        %3090 = vmatprep.subr.mxu0 0.0
        %3091 = vmatpush1.msra.mxu0 0.0
        %3092 = vmatprep.subr.mxu0 0.0
        %3093 = vmatpush1.msra.mxu0 0.0
        %3094 = vmatprep.subr.mxu0 0.0
        %3095 = vmatpush1.msra.mxu0 0.0
        %3096 = vmatprep.subr.mxu0 0.0
        %3097 = vmatpush1.msra.mxu0 0.0
        %3098 = vmatprep.subr.mxu0 0.0
        %3099 = vmatpush1.msra.mxu0 0.0
        %3100 = vmatprep.subr.mxu0 0.0
        %3101 = vmatpush1.msra.mxu0 0.0
        %3102 = vmatprep.subr.mxu0 0.0
        %3103 = vmatpush1.msra.mxu0 0.0
        %3104 = vmatprep.subr.mxu0 0.0
        %3105 = vmatpush1.msra.mxu0 0.0
        %3106 = vmatprep.subr.mxu0 0.0
        %3107 = vmatpush1.msra.mxu0 0.0
        %3108 = vmatprep.subr.mxu0 0.0
        %3109 = vmatpush1.msra.mxu0 0.0
        %3110 = vmatprep.subr.mxu0 0.0
        %3111 = vmatpush1.msra.mxu0 0.0
        %3112 = vmatprep.subr.mxu0 0.0
        %3113 = vmatpush1.msra.mxu0 0.0
        %3114 = vmatprep.subr.mxu0 0.0
        %3115 = vmatpush1.msra.mxu0 0.0
        %3116 = vmatprep.subr.mxu0 0.0
        %3117 = vmatpush1.msra.mxu0 0.0
        %3118 = vmatprep.subr.mxu0 0.0
        %3119 = vmatpush1.msra.mxu0 0.0
        %3120 = vmatprep.subr.mxu0 0.0
        %3121 = vmatpush1.msra.mxu0 0.0
        %3122 = vmatprep.subr.mxu0 0.0
        %3123 = vmatpush1.msra.mxu0 0.0
        %3124 = vmatprep.subr.mxu0 0.0
        %3125 = vmatpush1.msra.mxu0 0.0
        %3126 = vmatprep.subr.mxu0 0.0
        %3127 = vmatpush1.msra.mxu0 0.0
        %3128 = vmatprep.subr.mxu0 0.0
        %3129 = vmatpush1.msra.mxu0 0.0
        %3130 = vmatprep.subr.mxu0 0.0
        %3131 = vmatpush1.msra.mxu0 0.0
        %3132 = vmatprep.subr.mxu0 0.0
        %3133 = vmatpush1.msra.mxu0 0.0
        %3134 = vmatprep.subr.mxu0 0.0
        %3135 = vmatpush1.msra.mxu0 0.0
        %3136 = vmatprep.subr.mxu0 0.0
        %3137 = vmatpush1.msra.mxu0 0.0
        %3138 = vmatprep.subr.mxu0 0.0
        %3139 = vmatpush1.msra.mxu0 0.0
        %3140 = vmatprep.subr.mxu0 0.0
        %3141 = vmatpush1.msra.mxu0 0.0
        %3142 = vmatprep.subr.mxu0 0.0
        %3143 = vmatpush1.msra.mxu0 0.0
        %3144 = vmatprep.subr.mxu0 0.0
        %3145 = vmatpush1.msra.mxu0 0.0
        %3146 = vmatprep.subr.mxu0 0.0
        %3147 = vmatpush1.msra.mxu0 0.0
        %3148 = vmatprep.mubr.f32.mxu0 0.0
        %3149 = vmatmul.mubr.f32.gmra.mrb[0].mxu0 %v3082
        %v3150 = vpop.f32.mrb[0].mxu0
        %v3151 = vadd.f32 0.0, %v3150
        %v3152 = vpop.f32.mrb[0].mxu0
        %3153 = vdwg.mxu0
        %3154 = vrot.lane.b32.xlu0 %v732, 56
        %v3155 = vpop.permute.xlu0 %3154
        %v3158 = vsel %vm752, %v2771, 0
        %3160 = vmatprep.subr.mxu0 0.0
        %3161 = vmatpush1.msra.mxu0 %v3155
        %3162 = vmatprep.subr.mxu0 0.0
        %3163 = vmatpush1.msra.mxu0 0.0
        %3164 = vmatprep.subr.mxu0 0.0
        %3165 = vmatpush1.msra.mxu0 0.0
        %3166 = vmatprep.subr.mxu0 0.0
        %3167 = vmatpush1.msra.mxu0 0.0
        %3168 = vmatprep.subr.mxu0 0.0
        %3169 = vmatpush1.msra.mxu0 0.0
        %3170 = vmatprep.subr.mxu0 0.0
        %3171 = vmatpush1.msra.mxu0 0.0
        %3172 = vmatprep.subr.mxu0 0.0
        %3173 = vmatpush1.msra.mxu0 0.0
        %3174 = vmatprep.subr.mxu0 0.0
        %3175 = vmatpush1.msra.mxu0 0.0
        %3176 = vmatprep.subr.mxu0 0.0
        %3177 = vmatpush1.msra.mxu0 0.0
        %3178 = vmatprep.subr.mxu0 0.0
        %3179 = vmatpush1.msra.mxu0 0.0
        %3180 = vmatprep.subr.mxu0 0.0
        %3181 = vmatpush1.msra.mxu0 0.0
        %3182 = vmatprep.subr.mxu0 0.0
        %3183 = vmatpush1.msra.mxu0 0.0
        %3184 = vmatprep.subr.mxu0 0.0
        %3185 = vmatpush1.msra.mxu0 0.0
        %3186 = vmatprep.subr.mxu0 0.0
        %3187 = vmatpush1.msra.mxu0 0.0
        %3188 = vmatprep.subr.mxu0 0.0
        %3189 = vmatpush1.msra.mxu0 0.0
        %3190 = vmatprep.subr.mxu0 0.0
        %3191 = vmatpush1.msra.mxu0 0.0
        %3192 = vmatprep.subr.mxu0 0.0
        %3193 = vmatpush1.msra.mxu0 0.0
        %3194 = vmatprep.subr.mxu0 0.0
        %3195 = vmatpush1.msra.mxu0 0.0
        %3196 = vmatprep.subr.mxu0 0.0
        %3197 = vmatpush1.msra.mxu0 0.0
        %3198 = vmatprep.subr.mxu0 0.0
        %3199 = vmatpush1.msra.mxu0 0.0
        %3200 = vmatprep.subr.mxu0 0.0
        %3201 = vmatpush1.msra.mxu0 0.0
        %3202 = vmatprep.subr.mxu0 0.0
        %3203 = vmatpush1.msra.mxu0 0.0
        %3204 = vmatprep.subr.mxu0 0.0
        %3205 = vmatpush1.msra.mxu0 0.0
        %3206 = vmatprep.subr.mxu0 0.0
        %3207 = vmatpush1.msra.mxu0 0.0
        %3208 = vmatprep.subr.mxu0 0.0
        %3209 = vmatpush1.msra.mxu0 0.0
        %3210 = vmatprep.subr.mxu0 0.0
        %3211 = vmatpush1.msra.mxu0 0.0
        %3212 = vmatprep.subr.mxu0 0.0
        %3213 = vmatpush1.msra.mxu0 0.0
        %3214 = vmatprep.subr.mxu0 0.0
        %3215 = vmatpush1.msra.mxu0 0.0
        %3216 = vmatprep.subr.mxu0 0.0
        %3217 = vmatpush1.msra.mxu0 0.0
        %3218 = vmatprep.subr.mxu0 0.0
        %3219 = vmatpush1.msra.mxu0 0.0
        %3220 = vmatprep.subr.mxu0 0.0
        %3221 = vmatpush1.msra.mxu0 0.0
        %3222 = vmatprep.subr.mxu0 0.0
        %3223 = vmatpush1.msra.mxu0 0.0
        %3224 = vmatprep.mubr.f32.mxu0 0.0
        %3225 = vmatmul.mubr.f32.gmra.mrb[0].mxu0 %v3158
        %v3226 = vpop.f32.mrb[0].mxu0
        %v3227 = vadd.f32 0.0, %v3226
        %v3228 = vpop.f32.mrb[0].mxu0
        %3229 = vdwg.mxu0
        %3230 = vrot.lane.b32.xlu0 %v737, 56
        %v3231 = vpop.permute.xlu0 %3230
        %v3234 = vsel %vm752, %v2772, 0
        %3236 = vmatprep.subr.mxu0 0.0
        %3237 = vmatpush1.msra.mxu0 %v3231
        %3238 = vmatprep.subr.mxu0 0.0
        %3239 = vmatpush1.msra.mxu0 0.0
        %3240 = vmatprep.subr.mxu0 0.0
        %3241 = vmatpush1.msra.mxu0 0.0
        %3242 = vmatprep.subr.mxu0 0.0
        %3243 = vmatpush1.msra.mxu0 0.0
        %3244 = vmatprep.subr.mxu0 0.0
        %3245 = vmatpush1.msra.mxu0 0.0
        %3246 = vmatprep.subr.mxu0 0.0
        %3247 = vmatpush1.msra.mxu0 0.0
        %3248 = vmatprep.subr.mxu0 0.0
        %3249 = vmatpush1.msra.mxu0 0.0
        %3250 = vmatprep.subr.mxu0 0.0
        %3251 = vmatpush1.msra.mxu0 0.0
        %3252 = vmatprep.subr.mxu0 0.0
        %3253 = vmatpush1.msra.mxu0 0.0
        %3254 = vmatprep.subr.mxu0 0.0
        %3255 = vmatpush1.msra.mxu0 0.0
        %3256 = vmatprep.subr.mxu0 0.0
        %3257 = vmatpush1.msra.mxu0 0.0
        %3258 = vmatprep.subr.mxu0 0.0
        %3259 = vmatpush1.msra.mxu0 0.0
        %3260 = vmatprep.subr.mxu0 0.0
        %3261 = vmatpush1.msra.mxu0 0.0
        %3262 = vmatprep.subr.mxu0 0.0
        %3263 = vmatpush1.msra.mxu0 0.0
        %3264 = vmatprep.subr.mxu0 0.0
        %3265 = vmatpush1.msra.mxu0 0.0
        %3266 = vmatprep.subr.mxu0 0.0
        %3267 = vmatpush1.msra.mxu0 0.0
        %3268 = vmatprep.subr.mxu0 0.0
        %3269 = vmatpush1.msra.mxu0 0.0
        %3270 = vmatprep.subr.mxu0 0.0
        %3271 = vmatpush1.msra.mxu0 0.0
        %3272 = vmatprep.subr.mxu0 0.0
        %3273 = vmatpush1.msra.mxu0 0.0
        %3274 = vmatprep.subr.mxu0 0.0
        %3275 = vmatpush1.msra.mxu0 0.0
        %3276 = vmatprep.subr.mxu0 0.0
        %3277 = vmatpush1.msra.mxu0 0.0
        %3278 = vmatprep.subr.mxu0 0.0
        %3279 = vmatpush1.msra.mxu0 0.0
        %3280 = vmatprep.subr.mxu0 0.0
        %3281 = vmatpush1.msra.mxu0 0.0
        %3282 = vmatprep.subr.mxu0 0.0
        %3283 = vmatpush1.msra.mxu0 0.0
        %3284 = vmatprep.subr.mxu0 0.0
        %3285 = vmatpush1.msra.mxu0 0.0
        %3286 = vmatprep.subr.mxu0 0.0
        %3287 = vmatpush1.msra.mxu0 0.0
        %3288 = vmatprep.subr.mxu0 0.0
        %3289 = vmatpush1.msra.mxu0 0.0
        %3290 = vmatprep.subr.mxu0 0.0
        %3291 = vmatpush1.msra.mxu0 0.0
        %3292 = vmatprep.subr.mxu0 0.0
        %3293 = vmatpush1.msra.mxu0 0.0
        %3294 = vmatprep.subr.mxu0 0.0
        %3295 = vmatpush1.msra.mxu0 0.0
        %3296 = vmatprep.subr.mxu0 0.0
        %3297 = vmatpush1.msra.mxu0 0.0
        %3298 = vmatprep.subr.mxu0 0.0
        %3299 = vmatpush1.msra.mxu0 0.0
        %3300 = vmatprep.mubr.f32.mxu0 0.0
        %3301 = vmatmul.mubr.f32.gmra.mrb[0].mxu0 %v3234
        %v3302 = vpop.f32.mrb[0].mxu0
        %v3303 = vadd.f32 0.0, %v3302
        %v3304 = vpop.f32.mrb[0].mxu0
        %3305 = vdwg.mxu0
        %3306 = vrot.lane.b32.xlu0 %v742, 56
        %v3307 = vpop.permute.xlu0 %3306
        %v3310 = vsel %vm752, %v2773, 0
        %3312 = vmatprep.subr.mxu0 0.0
        %3313 = vmatpush1.msra.mxu0 %v3307
        %3314 = vmatprep.subr.mxu0 0.0
        %3315 = vmatpush1.msra.mxu0 0.0
        %3316 = vmatprep.subr.mxu0 0.0
        %3317 = vmatpush1.msra.mxu0 0.0
        %3318 = vmatprep.subr.mxu0 0.0
        %3319 = vmatpush1.msra.mxu0 0.0
        %3320 = vmatprep.subr.mxu0 0.0
        %3321 = vmatpush1.msra.mxu0 0.0
        %3322 = vmatprep.subr.mxu0 0.0
        %3323 = vmatpush1.msra.mxu0 0.0
        %3324 = vmatprep.subr.mxu0 0.0
        %3325 = vmatpush1.msra.mxu0 0.0
        %3326 = vmatprep.subr.mxu0 0.0
        %3327 = vmatpush1.msra.mxu0 0.0
        %3328 = vmatprep.subr.mxu0 0.0
        %3329 = vmatpush1.msra.mxu0 0.0
        %3330 = vmatprep.subr.mxu0 0.0
        %3331 = vmatpush1.msra.mxu0 0.0
        %3332 = vmatprep.subr.mxu0 0.0
        %3333 = vmatpush1.msra.mxu0 0.0
        %3334 = vmatprep.subr.mxu0 0.0
        %3335 = vmatpush1.msra.mxu0 0.0
        %3336 = vmatprep.subr.mxu0 0.0
        %3337 = vmatpush1.msra.mxu0 0.0
        %3338 = vmatprep.subr.mxu0 0.0
        %3339 = vmatpush1.msra.mxu0 0.0
        %3340 = vmatprep.subr.mxu0 0.0
        %3341 = vmatpush1.msra.mxu0 0.0
        %3342 = vmatprep.subr.mxu0 0.0
        %3343 = vmatpush1.msra.mxu0 0.0
        %3344 = vmatprep.subr.mxu0 0.0
        %3345 = vmatpush1.msra.mxu0 0.0
        %3346 = vmatprep.subr.mxu0 0.0
        %3347 = vmatpush1.msra.mxu0 0.0
        %3348 = vmatprep.subr.mxu0 0.0
        %3349 = vmatpush1.msra.mxu0 0.0
        %3350 = vmatprep.subr.mxu0 0.0
        %3351 = vmatpush1.msra.mxu0 0.0
        %3352 = vmatprep.subr.mxu0 0.0
        %3353 = vmatpush1.msra.mxu0 0.0
        %3354 = vmatprep.subr.mxu0 0.0
        %3355 = vmatpush1.msra.mxu0 0.0
        %3356 = vmatprep.subr.mxu0 0.0
        %3357 = vmatpush1.msra.mxu0 0.0
        %3358 = vmatprep.subr.mxu0 0.0
        %3359 = vmatpush1.msra.mxu0 0.0
        %3360 = vmatprep.subr.mxu0 0.0
        %3361 = vmatpush1.msra.mxu0 0.0
        %3362 = vmatprep.subr.mxu0 0.0
        %3363 = vmatpush1.msra.mxu0 0.0
        %3364 = vmatprep.subr.mxu0 0.0
        %3365 = vmatpush1.msra.mxu0 0.0
        %3366 = vmatprep.subr.mxu0 0.0
        %3367 = vmatpush1.msra.mxu0 0.0
        %3368 = vmatprep.subr.mxu0 0.0
        %3369 = vmatpush1.msra.mxu0 0.0
        %3370 = vmatprep.subr.mxu0 0.0
        %3371 = vmatpush1.msra.mxu0 0.0
        %3372 = vmatprep.subr.mxu0 0.0
        %3373 = vmatpush1.msra.mxu0 0.0
        %3374 = vmatprep.subr.mxu0 0.0
        %3375 = vmatpush1.msra.mxu0 0.0
        %3376 = vmatprep.mubr.f32.mxu0 0.0
        %3377 = vmatmul.mubr.f32.gmra.mrb[0].mxu0 %v3310
        %v3378 = vpop.f32.mrb[0].mxu0
        %v3379 = vadd.f32 0.0, %v3378
        %v3380 = vpop.f32.mrb[0].mxu0
        %3381 = vdwg.mxu0
        %v3383 = vsel %vm752, %v2847, 0
        %v3386 = vsel %vm752, %v2923, 0
        %v3389 = vsel %vm752, %v2999, 0
        %v3392 = vsel %vm752, %v3075, 0
        %v3395 = vsel %vm752, %v3151, 0
        %v3398 = vsel %vm752, %v3227, 0
        %v3401 = vsel %vm752, %v3303, 0
        %v3404 = vsel %vm752, %v3379, 0
        %3406 = vmatprep.subr.mxu0 0.0
        %3407 = vmatpush1.msra.mxu0 %v746
        %3408 = vmatprep.subr.mxu0 0.0
        %3409 = vmatpush1.msra.mxu0 0.0
        %3410 = vmatprep.subr.mxu0 0.0
        %3411 = vmatpush1.msra.mxu0 0.0
        %3412 = vmatprep.subr.mxu0 0.0
        %3413 = vmatpush1.msra.mxu0 0.0
        %3414 = vmatprep.subr.mxu0 0.0
        %3415 = vmatpush1.msra.mxu0 0.0
        %3416 = vmatprep.subr.mxu0 0.0
        %3417 = vmatpush1.msra.mxu0 0.0
        %3418 = vmatprep.subr.mxu0 0.0
        %3419 = vmatpush1.msra.mxu0 0.0
        %3420 = vmatprep.subr.mxu0 0.0
        %3421 = vmatpush1.msra.mxu0 0.0
        %3422 = vmatprep.subr.mxu0 0.0
        %3423 = vmatpush1.msra.mxu0 0.0
        %3424 = vmatprep.subr.mxu0 0.0
        %3425 = vmatpush1.msra.mxu0 0.0
        %3426 = vmatprep.subr.mxu0 0.0
        %3427 = vmatpush1.msra.mxu0 0.0
        %3428 = vmatprep.subr.mxu0 0.0
        %3429 = vmatpush1.msra.mxu0 0.0
        %3430 = vmatprep.subr.mxu0 0.0
        %3431 = vmatpush1.msra.mxu0 0.0
        %3432 = vmatprep.subr.mxu0 0.0
        %3433 = vmatpush1.msra.mxu0 0.0
        %3434 = vmatprep.subr.mxu0 0.0
        %3435 = vmatpush1.msra.mxu0 0.0
        %3436 = vmatprep.subr.mxu0 0.0
        %3437 = vmatpush1.msra.mxu0 0.0
        %3438 = vmatprep.subr.mxu0 0.0
        %3439 = vmatpush1.msra.mxu0 0.0
        %3440 = vmatprep.subr.mxu0 0.0
        %3441 = vmatpush1.msra.mxu0 0.0
        %3442 = vmatprep.subr.mxu0 0.0
        %3443 = vmatpush1.msra.mxu0 0.0
        %3444 = vmatprep.subr.mxu0 0.0
        %3445 = vmatpush1.msra.mxu0 0.0
        %3446 = vmatprep.subr.mxu0 0.0
        %3447 = vmatpush1.msra.mxu0 0.0
        %3448 = vmatprep.subr.mxu0 0.0
        %3449 = vmatpush1.msra.mxu0 0.0
        %3450 = vmatprep.subr.mxu0 0.0
        %3451 = vmatpush1.msra.mxu0 0.0
        %3452 = vmatprep.subr.mxu0 0.0
        %3453 = vmatpush1.msra.mxu0 0.0
        %3454 = vmatprep.subr.mxu0 0.0
        %3455 = vmatpush1.msra.mxu0 0.0
        %3456 = vmatprep.subr.mxu0 0.0
        %3457 = vmatpush1.msra.mxu0 0.0
        %3458 = vmatprep.subr.mxu0 0.0
        %3459 = vmatpush1.msra.mxu0 0.0
        %3460 = vmatprep.subr.mxu0 0.0
        %3461 = vmatpush1.msra.mxu0 0.0
        %3462 = vmatprep.subr.mxu0 0.0
        %3463 = vmatpush1.msra.mxu0 0.0
        %3464 = vmatprep.subr.mxu0 0.0
        %3465 = vmatpush1.msra.mxu0 0.0
        %3466 = vmatprep.subr.mxu0 0.0
        %3467 = vmatpush1.msra.mxu0 0.0
        %3468 = vmatprep.subr.mxu0 0.0
        %3469 = vmatpush1.msra.mxu0 0.0
        %3470 = vmatprep.mubr.f32.mxu0 0.0
        %3471 = vmatmul.mubr.f32.gmra.mrb[0].mxu0 %v3383
        %v3472 = vpop.f32.mrb[0].mxu0
        %v3473 = vadd.f32 0.0, %v3472
        %v3474 = vpop.f32.mrb[0].mxu0
        %3475 = vmatprep.mubr.f32.mxu0 0.0
        %3476 = vmatmul.mubr.f32.gmra.mrb[0].mxu0 %v3386
        %v3477 = vpop.f32.mrb[0].mxu0
        %v3478 = vadd.f32 0.0, %v3477
        %v3479 = vpop.f32.mrb[0].mxu0
        %3480 = vmatprep.mubr.f32.mxu0 0.0
        %3481 = vmatmul.mubr.f32.gmra.mrb[0].mxu0 %v3389
        %v3482 = vpop.f32.mrb[0].mxu0
        %v3483 = vadd.f32 0.0, %v3482
        %v3484 = vpop.f32.mrb[0].mxu0
        %3485 = vmatprep.mubr.f32.mxu0 0.0
        %3486 = vmatmul.mubr.f32.gmra.mrb[0].mxu0 %v3392
        %v3487 = vpop.f32.mrb[0].mxu0
        %v3488 = vadd.f32 0.0, %v3487
        %v3489 = vpop.f32.mrb[0].mxu0
        %3490 = vmatprep.mubr.f32.mxu0 0.0
        %3491 = vmatmul.mubr.f32.gmra.mrb[0].mxu0 %v3395
        %v3492 = vpop.f32.mrb[0].mxu0
        %v3493 = vadd.f32 0.0, %v3492
        %v3494 = vpop.f32.mrb[0].mxu0
        %3495 = vmatprep.mubr.f32.mxu0 0.0
        %3496 = vmatmul.mubr.f32.gmra.mrb[0].mxu0 %v3398
        %v3497 = vpop.f32.mrb[0].mxu0
        %v3498 = vadd.f32 0.0, %v3497
        %v3499 = vpop.f32.mrb[0].mxu0
        %3500 = vmatprep.mubr.f32.mxu0 0.0
        %3501 = vmatmul.mubr.f32.gmra.mrb[0].mxu0 %v3401
        %v3502 = vpop.f32.mrb[0].mxu0
        %v3503 = vadd.f32 0.0, %v3502
        %v3504 = vpop.f32.mrb[0].mxu0
        %3505 = vmatprep.mubr.f32.mxu0 0.0
        %3506 = vmatmul.mubr.f32.gmra.mrb[0].mxu0 %v3404
        %v3507 = vpop.f32.mrb[0].mxu0
        %v3508 = vadd.f32 0.0, %v3507
        %v3509 = vpop.f32.mrb[0].mxu0
        %3510 = vdwg.mxu0
        %v3512 = vsel %vm752, %v1527, 0
        %v3515 = vsel %vm752, %v1603, 0
        %v3518 = vsel %vm752, %v1679, 0
        %v3521 = vsel %vm752, %v1755, 0
        %v3524 = vsel %vm752, %v1831, 0
        %v3527 = vsel %vm752, %v1907, 0
        %v3530 = vsel %vm752, %v1983, 0
        %v3533 = vsel %vm752, %v2059, 0
        %3535 = vmatprep.subr.mxu0 0.0
        %3536 = vmatpush1.msra.mxu0 %v745
        %3537 = vmatprep.subr.mxu0 0.0
        %3538 = vmatpush1.msra.mxu0 0.0
        %3539 = vmatprep.subr.mxu0 0.0
        %3540 = vmatpush1.msra.mxu0 0.0
        %3541 = vmatprep.subr.mxu0 0.0
        %3542 = vmatpush1.msra.mxu0 0.0
        %3543 = vmatprep.subr.mxu0 0.0
        %3544 = vmatpush1.msra.mxu0 0.0
        %3545 = vmatprep.subr.mxu0 0.0
        %3546 = vmatpush1.msra.mxu0 0.0
        %3547 = vmatprep.subr.mxu0 0.0
        %3548 = vmatpush1.msra.mxu0 0.0
        %3549 = vmatprep.subr.mxu0 0.0
        %3550 = vmatpush1.msra.mxu0 0.0
        %3551 = vmatprep.subr.mxu0 0.0
        %3552 = vmatpush1.msra.mxu0 0.0
        %3553 = vmatprep.subr.mxu0 0.0
        %3554 = vmatpush1.msra.mxu0 0.0
        %3555 = vmatprep.subr.mxu0 0.0
        %3556 = vmatpush1.msra.mxu0 0.0
        %3557 = vmatprep.subr.mxu0 0.0
        %3558 = vmatpush1.msra.mxu0 0.0
        %3559 = vmatprep.subr.mxu0 0.0
        %3560 = vmatpush1.msra.mxu0 0.0
        %3561 = vmatprep.subr.mxu0 0.0
        %3562 = vmatpush1.msra.mxu0 0.0
        %3563 = vmatprep.subr.mxu0 0.0
        %3564 = vmatpush1.msra.mxu0 0.0
        %3565 = vmatprep.subr.mxu0 0.0
        %3566 = vmatpush1.msra.mxu0 0.0
        %3567 = vmatprep.subr.mxu0 0.0
        %3568 = vmatpush1.msra.mxu0 0.0
        %3569 = vmatprep.subr.mxu0 0.0
        %3570 = vmatpush1.msra.mxu0 0.0
        %3571 = vmatprep.subr.mxu0 0.0
        %3572 = vmatpush1.msra.mxu0 0.0
        %3573 = vmatprep.subr.mxu0 0.0
        %3574 = vmatpush1.msra.mxu0 0.0
        %3575 = vmatprep.subr.mxu0 0.0
        %3576 = vmatpush1.msra.mxu0 0.0
        %3577 = vmatprep.subr.mxu0 0.0
        %3578 = vmatpush1.msra.mxu0 0.0
        %3579 = vmatprep.subr.mxu0 0.0
        %3580 = vmatpush1.msra.mxu0 0.0
        %3581 = vmatprep.subr.mxu0 0.0
        %3582 = vmatpush1.msra.mxu0 0.0
        %3583 = vmatprep.subr.mxu0 0.0
        %3584 = vmatpush1.msra.mxu0 0.0
        %3585 = vmatprep.subr.mxu0 0.0
        %3586 = vmatpush1.msra.mxu0 0.0
        %3587 = vmatprep.subr.mxu0 0.0
        %3588 = vmatpush1.msra.mxu0 0.0
        %3589 = vmatprep.subr.mxu0 0.0
        %3590 = vmatpush1.msra.mxu0 0.0
        %3591 = vmatprep.subr.mxu0 0.0
        %3592 = vmatpush1.msra.mxu0 0.0
        %3593 = vmatprep.subr.mxu0 0.0
        %3594 = vmatpush1.msra.mxu0 0.0
        %3595 = vmatprep.subr.mxu0 0.0
        %3596 = vmatpush1.msra.mxu0 0.0
        %3597 = vmatprep.subr.mxu0 0.0
        %3598 = vmatpush1.msra.mxu0 0.0
        %3599 = vmatprep.mubr.f32.mxu0 0.0
        %3600 = vmatmul.mubr.f32.gmra.mrb[0].mxu0 %v3512
        %v3601 = vpop.f32.mrb[0].mxu0
        %v3602 = vadd.f32 %v3473, %v3601
        %v3603 = vpop.f32.mrb[0].mxu0
        %3604 = vmatprep.mubr.f32.mxu0 0.0
        %3605 = vmatmul.mubr.f32.gmra.mrb[0].mxu0 %v3515
        %v3606 = vpop.f32.mrb[0].mxu0
        %v3607 = vadd.f32 %v3478, %v3606
        %v3608 = vpop.f32.mrb[0].mxu0
        %3609 = vmatprep.mubr.f32.mxu0 0.0
        %3610 = vmatmul.mubr.f32.gmra.mrb[0].mxu0 %v3518
        %v3611 = vpop.f32.mrb[0].mxu0
        %v3612 = vadd.f32 %v3483, %v3611
        %v3613 = vpop.f32.mrb[0].mxu0
        %3614 = vmatprep.mubr.f32.mxu0 0.0
        %3615 = vmatmul.mubr.f32.gmra.mrb[0].mxu0 %v3521
        %v3616 = vpop.f32.mrb[0].mxu0
        %v3617 = vadd.f32 %v3488, %v3616
        %v3618 = vpop.f32.mrb[0].mxu0
        %3619 = vmatprep.mubr.f32.mxu0 0.0
        %3620 = vmatmul.mubr.f32.gmra.mrb[0].mxu0 %v3524
        %v3621 = vpop.f32.mrb[0].mxu0
        %v3622 = vadd.f32 %v3493, %v3621
        %v3623 = vpop.f32.mrb[0].mxu0
        %3624 = vmatprep.mubr.f32.mxu0 0.0
        %3625 = vmatmul.mubr.f32.gmra.mrb[0].mxu0 %v3527
        %v3626 = vpop.f32.mrb[0].mxu0
        %v3627 = vadd.f32 %v3498, %v3626
        %v3628 = vpop.f32.mrb[0].mxu0
        %3629 = vmatprep.mubr.f32.mxu0 0.0
        %3630 = vmatmul.mubr.f32.gmra.mrb[0].mxu0 %v3530
        %v3631 = vpop.f32.mrb[0].mxu0
        %v3632 = vadd.f32 %v3503, %v3631
        %v3633 = vpop.f32.mrb[0].mxu0
        %3634 = vmatprep.mubr.f32.mxu0 0.0
        %3635 = vmatmul.mubr.f32.gmra.mrb[0].mxu0 %v3533
        %v3636 = vpop.f32.mrb[0].mxu0
        %v3637 = vadd.f32 %v3508, %v3636
        %v3638 = vpop.f32.mrb[0].mxu0
        %3639 = vdwg.mxu0
        %3640 = vrot.lane.b32.xlu0 %v707, 112
        %v3641 = vpop.permute.xlu0 %3640
        %3642 = vrot.lane.b32.xlu0 %v707, 80
        %v3643 = vpop.permute.xlu0 %3642
        %v3644 = vsel %vm752, %v3641, 0
        %v3646 = vsel %vm752, %v3643, 0
        %3648 = vmatprep.subr.mxu0 0.0
        %3649 = vmatpush1.xpose.msra.mxu0 %v3646
        %3650 = vmatprep.subr.mxu0 0.0
        %3651 = vmatpush1.xpose.msra.mxu0 0.0
        %3652 = vmatprep.subr.mxu0 0.0
        %3653 = vmatpush1.xpose.msra.mxu0 0.0
        %3654 = vmatprep.subr.mxu0 0.0
        %3655 = vmatpush1.xpose.msra.mxu0 0.0
        %3656 = vmatprep.subr.mxu0 0.0
        %3657 = vmatpush1.xpose.msra.mxu0 0.0
        %3658 = vmatprep.subr.mxu0 0.0
        %3659 = vmatpush1.xpose.msra.mxu0 0.0
        %3660 = vmatprep.subr.mxu0 0.0
        %3661 = vmatpush1.xpose.msra.mxu0 0.0
        %3662 = vmatprep.subr.mxu0 0.0
        %3663 = vmatpush1.xpose.msra.mxu0 0.0
        %3664 = vmatprep.subr.mxu0 0.0
        %3665 = vmatpush1.xpose.msra.mxu0 0.0
        %3666 = vmatprep.subr.mxu0 0.0
        %3667 = vmatpush1.xpose.msra.mxu0 0.0
        %3668 = vmatprep.subr.mxu0 0.0
        %3669 = vmatpush1.xpose.msra.mxu0 0.0
        %3670 = vmatprep.subr.mxu0 0.0
        %3671 = vmatpush1.xpose.msra.mxu0 0.0
        %3672 = vmatprep.subr.mxu0 0.0
        %3673 = vmatpush1.xpose.msra.mxu0 0.0
        %3674 = vmatprep.subr.mxu0 0.0
        %3675 = vmatpush1.xpose.msra.mxu0 0.0
        %3676 = vmatprep.subr.mxu0 0.0
        %3677 = vmatpush1.xpose.msra.mxu0 0.0
        %3678 = vmatprep.subr.mxu0 0.0
        %3679 = vmatpush1.xpose.msra.mxu0 0.0
        %3680 = vmatprep.subr.mxu0 0.0
        %3681 = vmatpush1.xpose.msra.mxu0 0.0
        %3682 = vmatprep.subr.mxu0 0.0
        %3683 = vmatpush1.xpose.msra.mxu0 0.0
        %3684 = vmatprep.subr.mxu0 0.0
        %3685 = vmatpush1.xpose.msra.mxu0 0.0
        %3686 = vmatprep.subr.mxu0 0.0
        %3687 = vmatpush1.xpose.msra.mxu0 0.0
        %3688 = vmatprep.subr.mxu0 0.0
        %3689 = vmatpush1.xpose.msra.mxu0 0.0
        %3690 = vmatprep.subr.mxu0 0.0
        %3691 = vmatpush1.xpose.msra.mxu0 0.0
        %3692 = vmatprep.subr.mxu0 0.0
        %3693 = vmatpush1.xpose.msra.mxu0 0.0
        %3694 = vmatprep.subr.mxu0 0.0
        %3695 = vmatpush1.xpose.msra.mxu0 0.0
        %3696 = vmatprep.subr.mxu0 0.0
        %3697 = vmatpush1.xpose.msra.mxu0 0.0
        %3698 = vmatprep.subr.mxu0 0.0
        %3699 = vmatpush1.xpose.msra.mxu0 0.0
        %3700 = vmatprep.subr.mxu0 0.0
        %3701 = vmatpush1.xpose.msra.mxu0 0.0
        %3702 = vmatprep.subr.mxu0 0.0
        %3703 = vmatpush1.xpose.msra.mxu0 0.0
        %3704 = vmatprep.subr.mxu0 0.0
        %3705 = vmatpush1.xpose.msra.mxu0 0.0
        %3706 = vmatprep.subr.mxu0 0.0
        %3707 = vmatpush1.xpose.msra.mxu0 0.0
        %3708 = vmatprep.subr.mxu0 0.0
        %3709 = vmatpush1.xpose.msra.mxu0 0.0
        %3710 = vmatprep.subr.mxu0 0.0
        %3711 = vmatpush1.xpose.msra.mxu0 0.0
        %3712 = vmatprep.mubr.f32.mxu0 0.0
        %3713 = vmatmul.mubr.f32.gmra.mrb[0].mxu0 %v3644
        %v3714 = vpop.f32.mrb[0].mxu0
        %v3715 = vadd.f32 0.0, %v3714
        %v3716 = vpop.f32.mrb[0].mxu0
        %3717 = vdwg.mxu0
        %3718 = vrot.lane.b32.xlu0 %v712, 112
        %v3719 = vpop.permute.xlu0 %3718
        %3720 = vrot.lane.b32.xlu0 %v712, 80
        %v3721 = vpop.permute.xlu0 %3720
        %v3722 = vsel %vm752, %v3719, 0
        %v3724 = vsel %vm752, %v3721, 0
        %3726 = vmatprep.subr.mxu0 0.0
        %3727 = vmatpush1.xpose.msra.mxu0 %v3724
        %3728 = vmatprep.subr.mxu0 0.0
        %3729 = vmatpush1.xpose.msra.mxu0 0.0
        %3730 = vmatprep.subr.mxu0 0.0
        %3731 = vmatpush1.xpose.msra.mxu0 0.0
        %3732 = vmatprep.subr.mxu0 0.0
        %3733 = vmatpush1.xpose.msra.mxu0 0.0
        %3734 = vmatprep.subr.mxu0 0.0
        %3735 = vmatpush1.xpose.msra.mxu0 0.0
        %3736 = vmatprep.subr.mxu0 0.0
        %3737 = vmatpush1.xpose.msra.mxu0 0.0
        %3738 = vmatprep.subr.mxu0 0.0
        %3739 = vmatpush1.xpose.msra.mxu0 0.0
        %3740 = vmatprep.subr.mxu0 0.0
        %3741 = vmatpush1.xpose.msra.mxu0 0.0
        %3742 = vmatprep.subr.mxu0 0.0
        %3743 = vmatpush1.xpose.msra.mxu0 0.0
        %3744 = vmatprep.subr.mxu0 0.0
        %3745 = vmatpush1.xpose.msra.mxu0 0.0
        %3746 = vmatprep.subr.mxu0 0.0
        %3747 = vmatpush1.xpose.msra.mxu0 0.0
        %3748 = vmatprep.subr.mxu0 0.0
        %3749 = vmatpush1.xpose.msra.mxu0 0.0
        %3750 = vmatprep.subr.mxu0 0.0
        %3751 = vmatpush1.xpose.msra.mxu0 0.0
        %3752 = vmatprep.subr.mxu0 0.0
        %3753 = vmatpush1.xpose.msra.mxu0 0.0
        %3754 = vmatprep.subr.mxu0 0.0
        %3755 = vmatpush1.xpose.msra.mxu0 0.0
        %3756 = vmatprep.subr.mxu0 0.0
        %3757 = vmatpush1.xpose.msra.mxu0 0.0
        %3758 = vmatprep.subr.mxu0 0.0
        %3759 = vmatpush1.xpose.msra.mxu0 0.0
        %3760 = vmatprep.subr.mxu0 0.0
        %3761 = vmatpush1.xpose.msra.mxu0 0.0
        %3762 = vmatprep.subr.mxu0 0.0
        %3763 = vmatpush1.xpose.msra.mxu0 0.0
        %3764 = vmatprep.subr.mxu0 0.0
        %3765 = vmatpush1.xpose.msra.mxu0 0.0
        %3766 = vmatprep.subr.mxu0 0.0
        %3767 = vmatpush1.xpose.msra.mxu0 0.0
        %3768 = vmatprep.subr.mxu0 0.0
        %3769 = vmatpush1.xpose.msra.mxu0 0.0
        %3770 = vmatprep.subr.mxu0 0.0
        %3771 = vmatpush1.xpose.msra.mxu0 0.0
        %3772 = vmatprep.subr.mxu0 0.0
        %3773 = vmatpush1.xpose.msra.mxu0 0.0
        %3774 = vmatprep.subr.mxu0 0.0
        %3775 = vmatpush1.xpose.msra.mxu0 0.0
        %3776 = vmatprep.subr.mxu0 0.0
        %3777 = vmatpush1.xpose.msra.mxu0 0.0
        %3778 = vmatprep.subr.mxu0 0.0
        %3779 = vmatpush1.xpose.msra.mxu0 0.0
        %3780 = vmatprep.subr.mxu0 0.0
        %3781 = vmatpush1.xpose.msra.mxu0 0.0
        %3782 = vmatprep.subr.mxu0 0.0
        %3783 = vmatpush1.xpose.msra.mxu0 0.0
        %3784 = vmatprep.subr.mxu0 0.0
        %3785 = vmatpush1.xpose.msra.mxu0 0.0
        %3786 = vmatprep.subr.mxu0 0.0
        %3787 = vmatpush1.xpose.msra.mxu0 0.0
        %3788 = vmatprep.subr.mxu0 0.0
        %3789 = vmatpush1.xpose.msra.mxu0 0.0
        %3790 = vmatprep.mubr.f32.mxu0 0.0
        %3791 = vmatmul.mubr.f32.gmra.mrb[0].mxu0 %v3722
        %v3792 = vpop.f32.mrb[0].mxu0
        %v3793 = vadd.f32 0.0, %v3792
        %v3794 = vpop.f32.mrb[0].mxu0
        %3795 = vdwg.mxu0
        %3796 = vrot.lane.b32.xlu0 %v717, 112
        %v3797 = vpop.permute.xlu0 %3796
        %3798 = vrot.lane.b32.xlu0 %v717, 80
        %v3799 = vpop.permute.xlu0 %3798
        %v3800 = vsel %vm752, %v3797, 0
        %v3802 = vsel %vm752, %v3799, 0
        %3804 = vmatprep.subr.mxu0 0.0
        %3805 = vmatpush1.xpose.msra.mxu0 %v3802
        %3806 = vmatprep.subr.mxu0 0.0
        %3807 = vmatpush1.xpose.msra.mxu0 0.0
        %3808 = vmatprep.subr.mxu0 0.0
        %3809 = vmatpush1.xpose.msra.mxu0 0.0
        %3810 = vmatprep.subr.mxu0 0.0
        %3811 = vmatpush1.xpose.msra.mxu0 0.0
        %3812 = vmatprep.subr.mxu0 0.0
        %3813 = vmatpush1.xpose.msra.mxu0 0.0
        %3814 = vmatprep.subr.mxu0 0.0
        %3815 = vmatpush1.xpose.msra.mxu0 0.0
        %3816 = vmatprep.subr.mxu0 0.0
        %3817 = vmatpush1.xpose.msra.mxu0 0.0
        %3818 = vmatprep.subr.mxu0 0.0
        %3819 = vmatpush1.xpose.msra.mxu0 0.0
        %3820 = vmatprep.subr.mxu0 0.0
        %3821 = vmatpush1.xpose.msra.mxu0 0.0
        %3822 = vmatprep.subr.mxu0 0.0
        %3823 = vmatpush1.xpose.msra.mxu0 0.0
        %3824 = vmatprep.subr.mxu0 0.0
        %3825 = vmatpush1.xpose.msra.mxu0 0.0
        %3826 = vmatprep.subr.mxu0 0.0
        %3827 = vmatpush1.xpose.msra.mxu0 0.0
        %3828 = vmatprep.subr.mxu0 0.0
        %3829 = vmatpush1.xpose.msra.mxu0 0.0
        %3830 = vmatprep.subr.mxu0 0.0
        %3831 = vmatpush1.xpose.msra.mxu0 0.0
        %3832 = vmatprep.subr.mxu0 0.0
        %3833 = vmatpush1.xpose.msra.mxu0 0.0
        %3834 = vmatprep.subr.mxu0 0.0
        %3835 = vmatpush1.xpose.msra.mxu0 0.0
        %3836 = vmatprep.subr.mxu0 0.0
        %3837 = vmatpush1.xpose.msra.mxu0 0.0
        %3838 = vmatprep.subr.mxu0 0.0
        %3839 = vmatpush1.xpose.msra.mxu0 0.0
        %3840 = vmatprep.subr.mxu0 0.0
        %3841 = vmatpush1.xpose.msra.mxu0 0.0
        %3842 = vmatprep.subr.mxu0 0.0
        %3843 = vmatpush1.xpose.msra.mxu0 0.0
        %3844 = vmatprep.subr.mxu0 0.0
        %3845 = vmatpush1.xpose.msra.mxu0 0.0
        %3846 = vmatprep.subr.mxu0 0.0
        %3847 = vmatpush1.xpose.msra.mxu0 0.0
        %3848 = vmatprep.subr.mxu0 0.0
        %3849 = vmatpush1.xpose.msra.mxu0 0.0
        %3850 = vmatprep.subr.mxu0 0.0
        %3851 = vmatpush1.xpose.msra.mxu0 0.0
        %3852 = vmatprep.subr.mxu0 0.0
        %3853 = vmatpush1.xpose.msra.mxu0 0.0
        %3854 = vmatprep.subr.mxu0 0.0
        %3855 = vmatpush1.xpose.msra.mxu0 0.0
        %3856 = vmatprep.subr.mxu0 0.0
        %3857 = vmatpush1.xpose.msra.mxu0 0.0
        %3858 = vmatprep.subr.mxu0 0.0
        %3859 = vmatpush1.xpose.msra.mxu0 0.0
        %3860 = vmatprep.subr.mxu0 0.0
        %3861 = vmatpush1.xpose.msra.mxu0 0.0
        %3862 = vmatprep.subr.mxu0 0.0
        %3863 = vmatpush1.xpose.msra.mxu0 0.0
        %3864 = vmatprep.subr.mxu0 0.0
        %3865 = vmatpush1.xpose.msra.mxu0 0.0
        %3866 = vmatprep.subr.mxu0 0.0
        %3867 = vmatpush1.xpose.msra.mxu0 0.0
        %3868 = vmatprep.mubr.f32.mxu0 0.0
        %3869 = vmatmul.mubr.f32.gmra.mrb[0].mxu0 %v3800
        %v3870 = vpop.f32.mrb[0].mxu0
        %v3871 = vadd.f32 0.0, %v3870
        %v3872 = vpop.f32.mrb[0].mxu0
        %3873 = vdwg.mxu0
        %3874 = vrot.lane.b32.xlu0 %v722, 112
        %v3875 = vpop.permute.xlu0 %3874
        %3876 = vrot.lane.b32.xlu0 %v722, 80
        %v3877 = vpop.permute.xlu0 %3876
        %v3878 = vsel %vm752, %v3875, 0
        %v3880 = vsel %vm752, %v3877, 0
        %3882 = vmatprep.subr.mxu0 0.0
        %3883 = vmatpush1.xpose.msra.mxu0 %v3880
        %3884 = vmatprep.subr.mxu0 0.0
        %3885 = vmatpush1.xpose.msra.mxu0 0.0
        %3886 = vmatprep.subr.mxu0 0.0
        %3887 = vmatpush1.xpose.msra.mxu0 0.0
        %3888 = vmatprep.subr.mxu0 0.0
        %3889 = vmatpush1.xpose.msra.mxu0 0.0
        %3890 = vmatprep.subr.mxu0 0.0
        %3891 = vmatpush1.xpose.msra.mxu0 0.0
        %3892 = vmatprep.subr.mxu0 0.0
        %3893 = vmatpush1.xpose.msra.mxu0 0.0
        %3894 = vmatprep.subr.mxu0 0.0
        %3895 = vmatpush1.xpose.msra.mxu0 0.0
        %3896 = vmatprep.subr.mxu0 0.0
        %3897 = vmatpush1.xpose.msra.mxu0 0.0
        %3898 = vmatprep.subr.mxu0 0.0
        %3899 = vmatpush1.xpose.msra.mxu0 0.0
        %3900 = vmatprep.subr.mxu0 0.0
        %3901 = vmatpush1.xpose.msra.mxu0 0.0
        %3902 = vmatprep.subr.mxu0 0.0
        %3903 = vmatpush1.xpose.msra.mxu0 0.0
        %3904 = vmatprep.subr.mxu0 0.0
        %3905 = vmatpush1.xpose.msra.mxu0 0.0
        %3906 = vmatprep.subr.mxu0 0.0
        %3907 = vmatpush1.xpose.msra.mxu0 0.0
        %3908 = vmatprep.subr.mxu0 0.0
        %3909 = vmatpush1.xpose.msra.mxu0 0.0
        %3910 = vmatprep.subr.mxu0 0.0
        %3911 = vmatpush1.xpose.msra.mxu0 0.0
        %3912 = vmatprep.subr.mxu0 0.0
        %3913 = vmatpush1.xpose.msra.mxu0 0.0
        %3914 = vmatprep.subr.mxu0 0.0
        %3915 = vmatpush1.xpose.msra.mxu0 0.0
        %3916 = vmatprep.subr.mxu0 0.0
        %3917 = vmatpush1.xpose.msra.mxu0 0.0
        %3918 = vmatprep.subr.mxu0 0.0
        %3919 = vmatpush1.xpose.msra.mxu0 0.0
        %3920 = vmatprep.subr.mxu0 0.0
        %3921 = vmatpush1.xpose.msra.mxu0 0.0
        %3922 = vmatprep.subr.mxu0 0.0
        %3923 = vmatpush1.xpose.msra.mxu0 0.0
        %3924 = vmatprep.subr.mxu0 0.0
        %3925 = vmatpush1.xpose.msra.mxu0 0.0
        %3926 = vmatprep.subr.mxu0 0.0
        %3927 = vmatpush1.xpose.msra.mxu0 0.0
        %3928 = vmatprep.subr.mxu0 0.0
        %3929 = vmatpush1.xpose.msra.mxu0 0.0
        %3930 = vmatprep.subr.mxu0 0.0
        %3931 = vmatpush1.xpose.msra.mxu0 0.0
        %3932 = vmatprep.subr.mxu0 0.0
        %3933 = vmatpush1.xpose.msra.mxu0 0.0
        %3934 = vmatprep.subr.mxu0 0.0
        %3935 = vmatpush1.xpose.msra.mxu0 0.0
        %3936 = vmatprep.subr.mxu0 0.0
        %3937 = vmatpush1.xpose.msra.mxu0 0.0
        %3938 = vmatprep.subr.mxu0 0.0
        %3939 = vmatpush1.xpose.msra.mxu0 0.0
        %3940 = vmatprep.subr.mxu0 0.0
        %3941 = vmatpush1.xpose.msra.mxu0 0.0
        %3942 = vmatprep.subr.mxu0 0.0
        %3943 = vmatpush1.xpose.msra.mxu0 0.0
        %3944 = vmatprep.subr.mxu0 0.0
        %3945 = vmatpush1.xpose.msra.mxu0 0.0
        %3946 = vmatprep.mubr.f32.mxu0 0.0
        %3947 = vmatmul.mubr.f32.gmra.mrb[0].mxu0 %v3878
        %v3948 = vpop.f32.mrb[0].mxu0
        %v3949 = vadd.f32 0.0, %v3948
        %v3950 = vpop.f32.mrb[0].mxu0
        %3951 = vdwg.mxu0
        %3952 = vrot.lane.b32.xlu0 %v727, 112
        %v3953 = vpop.permute.xlu0 %3952
        %3954 = vrot.lane.b32.xlu0 %v727, 80
        %v3955 = vpop.permute.xlu0 %3954
        %v3956 = vsel %vm752, %v3953, 0
        %v3958 = vsel %vm752, %v3955, 0
        %3960 = vmatprep.subr.mxu0 0.0
        %3961 = vmatpush1.xpose.msra.mxu0 %v3958
        %3962 = vmatprep.subr.mxu0 0.0
        %3963 = vmatpush1.xpose.msra.mxu0 0.0
        %3964 = vmatprep.subr.mxu0 0.0
        %3965 = vmatpush1.xpose.msra.mxu0 0.0
        %3966 = vmatprep.subr.mxu0 0.0
        %3967 = vmatpush1.xpose.msra.mxu0 0.0
        %3968 = vmatprep.subr.mxu0 0.0
        %3969 = vmatpush1.xpose.msra.mxu0 0.0
        %3970 = vmatprep.subr.mxu0 0.0
        %3971 = vmatpush1.xpose.msra.mxu0 0.0
        %3972 = vmatprep.subr.mxu0 0.0
        %3973 = vmatpush1.xpose.msra.mxu0 0.0
        %3974 = vmatprep.subr.mxu0 0.0
        %3975 = vmatpush1.xpose.msra.mxu0 0.0
        %3976 = vmatprep.subr.mxu0 0.0
        %3977 = vmatpush1.xpose.msra.mxu0 0.0
        %3978 = vmatprep.subr.mxu0 0.0
        %3979 = vmatpush1.xpose.msra.mxu0 0.0
        %3980 = vmatprep.subr.mxu0 0.0
        %3981 = vmatpush1.xpose.msra.mxu0 0.0
        %3982 = vmatprep.subr.mxu0 0.0
        %3983 = vmatpush1.xpose.msra.mxu0 0.0
        %3984 = vmatprep.subr.mxu0 0.0
        %3985 = vmatpush1.xpose.msra.mxu0 0.0
        %3986 = vmatprep.subr.mxu0 0.0
        %3987 = vmatpush1.xpose.msra.mxu0 0.0
        %3988 = vmatprep.subr.mxu0 0.0
        %3989 = vmatpush1.xpose.msra.mxu0 0.0
        %3990 = vmatprep.subr.mxu0 0.0
        %3991 = vmatpush1.xpose.msra.mxu0 0.0
        %3992 = vmatprep.subr.mxu0 0.0
        %3993 = vmatpush1.xpose.msra.mxu0 0.0
        %3994 = vmatprep.subr.mxu0 0.0
        %3995 = vmatpush1.xpose.msra.mxu0 0.0
        %3996 = vmatprep.subr.mxu0 0.0
        %3997 = vmatpush1.xpose.msra.mxu0 0.0
        %3998 = vmatprep.subr.mxu0 0.0
        %3999 = vmatpush1.xpose.msra.mxu0 0.0
        %4000 = vmatprep.subr.mxu0 0.0
        %4001 = vmatpush1.xpose.msra.mxu0 0.0
        %4002 = vmatprep.subr.mxu0 0.0
        %4003 = vmatpush1.xpose.msra.mxu0 0.0
        %4004 = vmatprep.subr.mxu0 0.0
        %4005 = vmatpush1.xpose.msra.mxu0 0.0
        %4006 = vmatprep.subr.mxu0 0.0
        %4007 = vmatpush1.xpose.msra.mxu0 0.0
        %4008 = vmatprep.subr.mxu0 0.0
        %4009 = vmatpush1.xpose.msra.mxu0 0.0
        %4010 = vmatprep.subr.mxu0 0.0
        %4011 = vmatpush1.xpose.msra.mxu0 0.0
        %4012 = vmatprep.subr.mxu0 0.0
        %4013 = vmatpush1.xpose.msra.mxu0 0.0
        %4014 = vmatprep.subr.mxu0 0.0
        %4015 = vmatpush1.xpose.msra.mxu0 0.0
        %4016 = vmatprep.subr.mxu0 0.0
        %4017 = vmatpush1.xpose.msra.mxu0 0.0
        %4018 = vmatprep.subr.mxu0 0.0
        %4019 = vmatpush1.xpose.msra.mxu0 0.0
        %4020 = vmatprep.subr.mxu0 0.0
        %4021 = vmatpush1.xpose.msra.mxu0 0.0
        %4022 = vmatprep.subr.mxu0 0.0
        %4023 = vmatpush1.xpose.msra.mxu0 0.0
        %4024 = vmatprep.mubr.f32.mxu0 0.0
        %4025 = vmatmul.mubr.f32.gmra.mrb[0].mxu0 %v3956
        %v4026 = vpop.f32.mrb[0].mxu0
        %v4027 = vadd.f32 0.0, %v4026
        %v4028 = vpop.f32.mrb[0].mxu0
        %4029 = vdwg.mxu0
        %4030 = vrot.lane.b32.xlu0 %v732, 112
        %v4031 = vpop.permute.xlu0 %4030
        %4032 = vrot.lane.b32.xlu0 %v732, 80
        %v4033 = vpop.permute.xlu0 %4032
        %v4034 = vsel %vm752, %v4031, 0
        %v4036 = vsel %vm752, %v4033, 0
        %4038 = vmatprep.subr.mxu0 0.0
        %4039 = vmatpush1.xpose.msra.mxu0 %v4036
        %4040 = vmatprep.subr.mxu0 0.0
        %4041 = vmatpush1.xpose.msra.mxu0 0.0
        %4042 = vmatprep.subr.mxu0 0.0
        %4043 = vmatpush1.xpose.msra.mxu0 0.0
        %4044 = vmatprep.subr.mxu0 0.0
        %4045 = vmatpush1.xpose.msra.mxu0 0.0
        %4046 = vmatprep.subr.mxu0 0.0
        %4047 = vmatpush1.xpose.msra.mxu0 0.0
        %4048 = vmatprep.subr.mxu0 0.0
        %4049 = vmatpush1.xpose.msra.mxu0 0.0
        %4050 = vmatprep.subr.mxu0 0.0
        %4051 = vmatpush1.xpose.msra.mxu0 0.0
        %4052 = vmatprep.subr.mxu0 0.0
        %4053 = vmatpush1.xpose.msra.mxu0 0.0
        %4054 = vmatprep.subr.mxu0 0.0
        %4055 = vmatpush1.xpose.msra.mxu0 0.0
        %4056 = vmatprep.subr.mxu0 0.0
        %4057 = vmatpush1.xpose.msra.mxu0 0.0
        %4058 = vmatprep.subr.mxu0 0.0
        %4059 = vmatpush1.xpose.msra.mxu0 0.0
        %4060 = vmatprep.subr.mxu0 0.0
        %4061 = vmatpush1.xpose.msra.mxu0 0.0
        %4062 = vmatprep.subr.mxu0 0.0
        %4063 = vmatpush1.xpose.msra.mxu0 0.0
        %4064 = vmatprep.subr.mxu0 0.0
        %4065 = vmatpush1.xpose.msra.mxu0 0.0
        %4066 = vmatprep.subr.mxu0 0.0
        %4067 = vmatpush1.xpose.msra.mxu0 0.0
        %4068 = vmatprep.subr.mxu0 0.0
        %4069 = vmatpush1.xpose.msra.mxu0 0.0
        %4070 = vmatprep.subr.mxu0 0.0
        %4071 = vmatpush1.xpose.msra.mxu0 0.0
        %4072 = vmatprep.subr.mxu0 0.0
        %4073 = vmatpush1.xpose.msra.mxu0 0.0
        %4074 = vmatprep.subr.mxu0 0.0
        %4075 = vmatpush1.xpose.msra.mxu0 0.0
        %4076 = vmatprep.subr.mxu0 0.0
        %4077 = vmatpush1.xpose.msra.mxu0 0.0
        %4078 = vmatprep.subr.mxu0 0.0
        %4079 = vmatpush1.xpose.msra.mxu0 0.0
        %4080 = vmatprep.subr.mxu0 0.0
        %4081 = vmatpush1.xpose.msra.mxu0 0.0
        %4082 = vmatprep.subr.mxu0 0.0
        %4083 = vmatpush1.xpose.msra.mxu0 0.0
        %4084 = vmatprep.subr.mxu0 0.0
        %4085 = vmatpush1.xpose.msra.mxu0 0.0
        %4086 = vmatprep.subr.mxu0 0.0
        %4087 = vmatpush1.xpose.msra.mxu0 0.0
        %4088 = vmatprep.subr.mxu0 0.0
        %4089 = vmatpush1.xpose.msra.mxu0 0.0
        %4090 = vmatprep.subr.mxu0 0.0
        %4091 = vmatpush1.xpose.msra.mxu0 0.0
        %4092 = vmatprep.subr.mxu0 0.0
        %4093 = vmatpush1.xpose.msra.mxu0 0.0
        %4094 = vmatprep.subr.mxu0 0.0
        %4095 = vmatpush1.xpose.msra.mxu0 0.0
        %4096 = vmatprep.subr.mxu0 0.0
        %4097 = vmatpush1.xpose.msra.mxu0 0.0
        %4098 = vmatprep.subr.mxu0 0.0
        %4099 = vmatpush1.xpose.msra.mxu0 0.0
        %4100 = vmatprep.subr.mxu0 0.0
        %4101 = vmatpush1.xpose.msra.mxu0 0.0
        %4102 = vmatprep.mubr.f32.mxu0 0.0
        %4103 = vmatmul.mubr.f32.gmra.mrb[0].mxu0 %v4034
        %v4104 = vpop.f32.mrb[0].mxu0
        %v4105 = vadd.f32 0.0, %v4104
        %v4106 = vpop.f32.mrb[0].mxu0
        %4107 = vdwg.mxu0
        %4108 = vrot.lane.b32.xlu0 %v737, 112
        %v4109 = vpop.permute.xlu0 %4108
        %4110 = vrot.lane.b32.xlu0 %v737, 80
        %v4111 = vpop.permute.xlu0 %4110
        %v4112 = vsel %vm752, %v4109, 0
        %v4114 = vsel %vm752, %v4111, 0
        %4116 = vmatprep.subr.mxu0 0.0
        %4117 = vmatpush1.xpose.msra.mxu0 %v4114
        %4118 = vmatprep.subr.mxu0 0.0
        %4119 = vmatpush1.xpose.msra.mxu0 0.0
        %4120 = vmatprep.subr.mxu0 0.0
        %4121 = vmatpush1.xpose.msra.mxu0 0.0
        %4122 = vmatprep.subr.mxu0 0.0
        %4123 = vmatpush1.xpose.msra.mxu0 0.0
        %4124 = vmatprep.subr.mxu0 0.0
        %4125 = vmatpush1.xpose.msra.mxu0 0.0
        %4126 = vmatprep.subr.mxu0 0.0
        %4127 = vmatpush1.xpose.msra.mxu0 0.0
        %4128 = vmatprep.subr.mxu0 0.0
        %4129 = vmatpush1.xpose.msra.mxu0 0.0
        %4130 = vmatprep.subr.mxu0 0.0
        %4131 = vmatpush1.xpose.msra.mxu0 0.0
        %4132 = vmatprep.subr.mxu0 0.0
        %4133 = vmatpush1.xpose.msra.mxu0 0.0
        %4134 = vmatprep.subr.mxu0 0.0
        %4135 = vmatpush1.xpose.msra.mxu0 0.0
        %4136 = vmatprep.subr.mxu0 0.0
        %4137 = vmatpush1.xpose.msra.mxu0 0.0
        %4138 = vmatprep.subr.mxu0 0.0
        %4139 = vmatpush1.xpose.msra.mxu0 0.0
        %4140 = vmatprep.subr.mxu0 0.0
        %4141 = vmatpush1.xpose.msra.mxu0 0.0
        %4142 = vmatprep.subr.mxu0 0.0
        %4143 = vmatpush1.xpose.msra.mxu0 0.0
        %4144 = vmatprep.subr.mxu0 0.0
        %4145 = vmatpush1.xpose.msra.mxu0 0.0
        %4146 = vmatprep.subr.mxu0 0.0
        %4147 = vmatpush1.xpose.msra.mxu0 0.0
        %4148 = vmatprep.subr.mxu0 0.0
        %4149 = vmatpush1.xpose.msra.mxu0 0.0
        %4150 = vmatprep.subr.mxu0 0.0
        %4151 = vmatpush1.xpose.msra.mxu0 0.0
        %4152 = vmatprep.subr.mxu0 0.0
        %4153 = vmatpush1.xpose.msra.mxu0 0.0
        %4154 = vmatprep.subr.mxu0 0.0
        %4155 = vmatpush1.xpose.msra.mxu0 0.0
        %4156 = vmatprep.subr.mxu0 0.0
        %4157 = vmatpush1.xpose.msra.mxu0 0.0
        %4158 = vmatprep.subr.mxu0 0.0
        %4159 = vmatpush1.xpose.msra.mxu0 0.0
        %4160 = vmatprep.subr.mxu0 0.0
        %4161 = vmatpush1.xpose.msra.mxu0 0.0
        %4162 = vmatprep.subr.mxu0 0.0
        %4163 = vmatpush1.xpose.msra.mxu0 0.0
        %4164 = vmatprep.subr.mxu0 0.0
        %4165 = vmatpush1.xpose.msra.mxu0 0.0
        %4166 = vmatprep.subr.mxu0 0.0
        %4167 = vmatpush1.xpose.msra.mxu0 0.0
        %4168 = vmatprep.subr.mxu0 0.0
        %4169 = vmatpush1.xpose.msra.mxu0 0.0
        %4170 = vmatprep.subr.mxu0 0.0
        %4171 = vmatpush1.xpose.msra.mxu0 0.0
        %4172 = vmatprep.subr.mxu0 0.0
        %4173 = vmatpush1.xpose.msra.mxu0 0.0
        %4174 = vmatprep.subr.mxu0 0.0
        %4175 = vmatpush1.xpose.msra.mxu0 0.0
        %4176 = vmatprep.subr.mxu0 0.0
        %4177 = vmatpush1.xpose.msra.mxu0 0.0
        %4178 = vmatprep.subr.mxu0 0.0
        %4179 = vmatpush1.xpose.msra.mxu0 0.0
        %4180 = vmatprep.mubr.f32.mxu0 0.0
        %4181 = vmatmul.mubr.f32.gmra.mrb[0].mxu0 %v4112
        %v4182 = vpop.f32.mrb[0].mxu0
        %v4183 = vadd.f32 0.0, %v4182
        %v4184 = vpop.f32.mrb[0].mxu0
        %4185 = vdwg.mxu0
        %4186 = vrot.lane.b32.xlu0 %v742, 112
        %v4187 = vpop.permute.xlu0 %4186
        %4188 = vrot.lane.b32.xlu0 %v742, 80
        %v4189 = vpop.permute.xlu0 %4188
        %v4190 = vsel %vm752, %v4187, 0
        %v4192 = vsel %vm752, %v4189, 0
        %4194 = vmatprep.subr.mxu0 0.0
        %4195 = vmatpush1.xpose.msra.mxu0 %v4192
        %4196 = vmatprep.subr.mxu0 0.0
        %4197 = vmatpush1.xpose.msra.mxu0 0.0
        %4198 = vmatprep.subr.mxu0 0.0
        %4199 = vmatpush1.xpose.msra.mxu0 0.0
        %4200 = vmatprep.subr.mxu0 0.0
        %4201 = vmatpush1.xpose.msra.mxu0 0.0
        %4202 = vmatprep.subr.mxu0 0.0
        %4203 = vmatpush1.xpose.msra.mxu0 0.0
        %4204 = vmatprep.subr.mxu0 0.0
        %4205 = vmatpush1.xpose.msra.mxu0 0.0
        %4206 = vmatprep.subr.mxu0 0.0
        %4207 = vmatpush1.xpose.msra.mxu0 0.0
        %4208 = vmatprep.subr.mxu0 0.0
        %4209 = vmatpush1.xpose.msra.mxu0 0.0
        %4210 = vmatprep.subr.mxu0 0.0
        %4211 = vmatpush1.xpose.msra.mxu0 0.0
        %4212 = vmatprep.subr.mxu0 0.0
        %4213 = vmatpush1.xpose.msra.mxu0 0.0
        %4214 = vmatprep.subr.mxu0 0.0
        %4215 = vmatpush1.xpose.msra.mxu0 0.0
        %4216 = vmatprep.subr.mxu0 0.0
        %4217 = vmatpush1.xpose.msra.mxu0 0.0
        %4218 = vmatprep.subr.mxu0 0.0
        %4219 = vmatpush1.xpose.msra.mxu0 0.0
        %4220 = vmatprep.subr.mxu0 0.0
        %4221 = vmatpush1.xpose.msra.mxu0 0.0
        %4222 = vmatprep.subr.mxu0 0.0
        %4223 = vmatpush1.xpose.msra.mxu0 0.0
        %4224 = vmatprep.subr.mxu0 0.0
        %4225 = vmatpush1.xpose.msra.mxu0 0.0
        %4226 = vmatprep.subr.mxu0 0.0
        %4227 = vmatpush1.xpose.msra.mxu0 0.0
        %4228 = vmatprep.subr.mxu0 0.0
        %4229 = vmatpush1.xpose.msra.mxu0 0.0
        %4230 = vmatprep.subr.mxu0 0.0
        %4231 = vmatpush1.xpose.msra.mxu0 0.0
        %4232 = vmatprep.subr.mxu0 0.0
        %4233 = vmatpush1.xpose.msra.mxu0 0.0
        %4234 = vmatprep.subr.mxu0 0.0
        %4235 = vmatpush1.xpose.msra.mxu0 0.0
        %4236 = vmatprep.subr.mxu0 0.0
        %4237 = vmatpush1.xpose.msra.mxu0 0.0
        %4238 = vmatprep.subr.mxu0 0.0
        %4239 = vmatpush1.xpose.msra.mxu0 0.0
        %4240 = vmatprep.subr.mxu0 0.0
        %4241 = vmatpush1.xpose.msra.mxu0 0.0
        %4242 = vmatprep.subr.mxu0 0.0
        %4243 = vmatpush1.xpose.msra.mxu0 0.0
        %4244 = vmatprep.subr.mxu0 0.0
        %4245 = vmatpush1.xpose.msra.mxu0 0.0
        %4246 = vmatprep.subr.mxu0 0.0
        %4247 = vmatpush1.xpose.msra.mxu0 0.0
        %4248 = vmatprep.subr.mxu0 0.0
        %4249 = vmatpush1.xpose.msra.mxu0 0.0
        %4250 = vmatprep.subr.mxu0 0.0
        %4251 = vmatpush1.xpose.msra.mxu0 0.0
        %4252 = vmatprep.subr.mxu0 0.0
        %4253 = vmatpush1.xpose.msra.mxu0 0.0
        %4254 = vmatprep.subr.mxu0 0.0
        %4255 = vmatpush1.xpose.msra.mxu0 0.0
        %4256 = vmatprep.subr.mxu0 0.0
        %4257 = vmatpush1.xpose.msra.mxu0 0.0
        %4258 = vmatprep.mubr.f32.mxu0 0.0
        %4259 = vmatmul.mubr.f32.gmra.mrb[0].mxu0 %v4190
        %v4260 = vpop.f32.mrb[0].mxu0
        %v4261 = vadd.f32 0.0, %v4260
        %v4262 = vpop.f32.mrb[0].mxu0
        %4263 = vdwg.mxu0
        %v4264 = vsel %vm752, %v3715, -inf
        %4265 = vmax.xlane.f32.xlu0 %v4264
        %v4266 = vpop.xlane.xlu0 %4265
        %v4267 = vsel %vm752, %v3793, -inf
        %4268 = vmax.xlane.f32.xlu0 %v4267
        %v4269 = vpop.xlane.xlu0 %4268
        %v4270 = vsel %vm752, %v3871, -inf
        %4271 = vmax.xlane.f32.xlu0 %v4270
        %v4272 = vpop.xlane.xlu0 %4271
        %v4273 = vsel %vm752, %v3949, -inf
        %4274 = vmax.xlane.f32.xlu0 %v4273
        %v4275 = vpop.xlane.xlu0 %4274
        %v4276 = vsel %vm752, %v4027, -inf
        %4277 = vmax.xlane.f32.xlu0 %v4276
        %v4278 = vpop.xlane.xlu0 %4277
        %v4279 = vsel %vm752, %v4105, -inf
        %4280 = vmax.xlane.f32.xlu0 %v4279
        %v4281 = vpop.xlane.xlu0 %4280
        %v4282 = vsel %vm752, %v4183, -inf
        %4283 = vmax.xlane.f32.xlu0 %v4282
        %v4284 = vpop.xlane.xlu0 %4283
        %v4285 = vsel %vm752, %v4261, -inf
        %4286 = vmax.xlane.f32.xlu0 %v4285
        %v4287 = vpop.xlane.xlu0 %4286
        %v4288 = vsub.f32 %v3715, %v4266
        %v4289 = vsub.f32 %v3793, %v4269
        %v4290 = vsub.f32 %v3871, %v4272
        %v4291 = vsub.f32 %v3949, %v4275
        %v4292 = vsub.f32 %v4027, %v4278
        %v4293 = vsub.f32 %v4105, %v4281
        %v4294 = vsub.f32 %v4183, %v4284
        %v4295 = vsub.f32 %v4261, %v4287
        %v4296 = vmul.f32 %v4288, 1.442695
        %v4297 = vpow.pop %v4296
        %v4298 = vmul.f32 %v4289, 1.442695
        %v4299 = vpow.pop %v4298
        %v4300 = vmul.f32 %v4290, 1.442695
        %v4301 = vpow.pop %v4300
        %v4302 = vmul.f32 %v4291, 1.442695
        %v4303 = vpow.pop %v4302
        %v4304 = vmul.f32 %v4292, 1.442695
        %v4305 = vpow.pop %v4304
        %v4306 = vmul.f32 %v4293, 1.442695
        %v4307 = vpow.pop %v4306
        %v4308 = vmul.f32 %v4294, 1.442695
        %v4309 = vpow.pop %v4308
        %v4310 = vmul.f32 %v4295, 1.442695
        %v4311 = vpow.pop %v4310
        %v4312 = vsel %vm752, %v4297, 0.0
        %4313 = vadd.xlane.f32.xlu0 %v4312
        %v4314 = vpop.xlane.xlu0 %4313
        %v4315 = vsel %vm752, %v4299, 0.0
        %4316 = vadd.xlane.f32.xlu0 %v4315
        %v4317 = vpop.xlane.xlu0 %4316
        %v4318 = vsel %vm752, %v4301, 0.0
        %4319 = vadd.xlane.f32.xlu0 %v4318
        %v4320 = vpop.xlane.xlu0 %4319
        %v4321 = vsel %vm752, %v4303, 0.0
        %4322 = vadd.xlane.f32.xlu0 %v4321
        %v4323 = vpop.xlane.xlu0 %4322
        %v4324 = vsel %vm752, %v4305, 0.0
        %4325 = vadd.xlane.f32.xlu0 %v4324
        %v4326 = vpop.xlane.xlu0 %4325
        %v4327 = vsel %vm752, %v4307, 0.0
        %4328 = vadd.xlane.f32.xlu0 %v4327
        %v4329 = vpop.xlane.xlu0 %4328
        %v4330 = vsel %vm752, %v4309, 0.0
        %4331 = vadd.xlane.f32.xlu0 %v4330
        %v4332 = vpop.xlane.xlu0 %4331
        %v4333 = vsel %vm752, %v4311, 0.0
        %4334 = vadd.xlane.f32.xlu0 %v4333
        %v4335 = vpop.xlane.xlu0 %4334
        %v4336 = vrcp.pop %v4314
        %v4337 = vrcp.pop %v4317
        %v4338 = vrcp.pop %v4320
        %v4339 = vrcp.pop %v4323
        %v4340 = vrcp.pop %v4326
        %v4341 = vrcp.pop %v4329
        %v4342 = vrcp.pop %v4332
        %v4343 = vrcp.pop %v4335
        %v4344 = vmul.f32 %v4297, %v4336
        %v4345 = vmul.f32 %v4299, %v4337
        %v4346 = vmul.f32 %v4301, %v4338
        %v4347 = vmul.f32 %v4303, %v4339
        %v4348 = vmul.f32 %v4305, %v4340
        %v4349 = vmul.f32 %v4307, %v4341
        %v4350 = vmul.f32 %v4309, %v4342
        %v4351 = vmul.f32 %v4311, %v4343
        %4352 = vrot.lane.b32.xlu0 %v707, 48
        %v4353 = vpop.permute.xlu0 %4352
        %v4356 = vsel %vm752, %v4344, 0
        %4358 = vmatprep.subr.mxu0 0.0
        %4359 = vmatpush1.msra.mxu0 %v4353
        %4360 = vmatprep.subr.mxu0 0.0
        %4361 = vmatpush1.msra.mxu0 0.0
        %4362 = vmatprep.subr.mxu0 0.0
        %4363 = vmatpush1.msra.mxu0 0.0
        %4364 = vmatprep.subr.mxu0 0.0
        %4365 = vmatpush1.msra.mxu0 0.0
        %4366 = vmatprep.subr.mxu0 0.0
        %4367 = vmatpush1.msra.mxu0 0.0
        %4368 = vmatprep.subr.mxu0 0.0
        %4369 = vmatpush1.msra.mxu0 0.0
        %4370 = vmatprep.subr.mxu0 0.0
        %4371 = vmatpush1.msra.mxu0 0.0
        %4372 = vmatprep.subr.mxu0 0.0
        %4373 = vmatpush1.msra.mxu0 0.0
        %4374 = vmatprep.subr.mxu0 0.0
        %4375 = vmatpush1.msra.mxu0 0.0
        %4376 = vmatprep.subr.mxu0 0.0
        %4377 = vmatpush1.msra.mxu0 0.0
        %4378 = vmatprep.subr.mxu0 0.0
        %4379 = vmatpush1.msra.mxu0 0.0
        %4380 = vmatprep.subr.mxu0 0.0
        %4381 = vmatpush1.msra.mxu0 0.0
        %4382 = vmatprep.subr.mxu0 0.0
        %4383 = vmatpush1.msra.mxu0 0.0
        %4384 = vmatprep.subr.mxu0 0.0
        %4385 = vmatpush1.msra.mxu0 0.0
        %4386 = vmatprep.subr.mxu0 0.0
        %4387 = vmatpush1.msra.mxu0 0.0
        %4388 = vmatprep.subr.mxu0 0.0
        %4389 = vmatpush1.msra.mxu0 0.0
        %4390 = vmatprep.subr.mxu0 0.0
        %4391 = vmatpush1.msra.mxu0 0.0
        %4392 = vmatprep.subr.mxu0 0.0
        %4393 = vmatpush1.msra.mxu0 0.0
        %4394 = vmatprep.subr.mxu0 0.0
        %4395 = vmatpush1.msra.mxu0 0.0
        %4396 = vmatprep.subr.mxu0 0.0
        %4397 = vmatpush1.msra.mxu0 0.0
        %4398 = vmatprep.subr.mxu0 0.0
        %4399 = vmatpush1.msra.mxu0 0.0
        %4400 = vmatprep.subr.mxu0 0.0
        %4401 = vmatpush1.msra.mxu0 0.0
        %4402 = vmatprep.subr.mxu0 0.0
        %4403 = vmatpush1.msra.mxu0 0.0
        %4404 = vmatprep.subr.mxu0 0.0
        %4405 = vmatpush1.msra.mxu0 0.0
        %4406 = vmatprep.subr.mxu0 0.0
        %4407 = vmatpush1.msra.mxu0 0.0
        %4408 = vmatprep.subr.mxu0 0.0
        %4409 = vmatpush1.msra.mxu0 0.0
        %4410 = vmatprep.subr.mxu0 0.0
        %4411 = vmatpush1.msra.mxu0 0.0
        %4412 = vmatprep.subr.mxu0 0.0
        %4413 = vmatpush1.msra.mxu0 0.0
        %4414 = vmatprep.subr.mxu0 0.0
        %4415 = vmatpush1.msra.mxu0 0.0
        %4416 = vmatprep.subr.mxu0 0.0
        %4417 = vmatpush1.msra.mxu0 0.0
        %4418 = vmatprep.subr.mxu0 0.0
        %4419 = vmatpush1.msra.mxu0 0.0
        %4420 = vmatprep.subr.mxu0 0.0
        %4421 = vmatpush1.msra.mxu0 0.0
        %4422 = vmatprep.mubr.f32.mxu0 0.0
        %4423 = vmatmul.mubr.f32.gmra.mrb[0].mxu0 %v4356
        %v4424 = vpop.f32.mrb[0].mxu0
        %v4425 = vadd.f32 0.0, %v4424
        %v4426 = vpop.f32.mrb[0].mxu0
        %4427 = vdwg.mxu0
        %4428 = vrot.lane.b32.xlu0 %v712, 48
        %v4429 = vpop.permute.xlu0 %4428
        %v4432 = vsel %vm752, %v4345, 0
        %4434 = vmatprep.subr.mxu0 0.0
        %4435 = vmatpush1.msra.mxu0 %v4429
        %4436 = vmatprep.subr.mxu0 0.0
        %4437 = vmatpush1.msra.mxu0 0.0
        %4438 = vmatprep.subr.mxu0 0.0
        %4439 = vmatpush1.msra.mxu0 0.0
        %4440 = vmatprep.subr.mxu0 0.0
        %4441 = vmatpush1.msra.mxu0 0.0
        %4442 = vmatprep.subr.mxu0 0.0
        %4443 = vmatpush1.msra.mxu0 0.0
        %4444 = vmatprep.subr.mxu0 0.0
        %4445 = vmatpush1.msra.mxu0 0.0
        %4446 = vmatprep.subr.mxu0 0.0
        %4447 = vmatpush1.msra.mxu0 0.0
        %4448 = vmatprep.subr.mxu0 0.0
        %4449 = vmatpush1.msra.mxu0 0.0
        %4450 = vmatprep.subr.mxu0 0.0
        %4451 = vmatpush1.msra.mxu0 0.0
        %4452 = vmatprep.subr.mxu0 0.0
        %4453 = vmatpush1.msra.mxu0 0.0
        %4454 = vmatprep.subr.mxu0 0.0
        %4455 = vmatpush1.msra.mxu0 0.0
        %4456 = vmatprep.subr.mxu0 0.0
        %4457 = vmatpush1.msra.mxu0 0.0
        %4458 = vmatprep.subr.mxu0 0.0
        %4459 = vmatpush1.msra.mxu0 0.0
        %4460 = vmatprep.subr.mxu0 0.0
        %4461 = vmatpush1.msra.mxu0 0.0
        %4462 = vmatprep.subr.mxu0 0.0
        %4463 = vmatpush1.msra.mxu0 0.0
        %4464 = vmatprep.subr.mxu0 0.0
        %4465 = vmatpush1.msra.mxu0 0.0
        %4466 = vmatprep.subr.mxu0 0.0
        %4467 = vmatpush1.msra.mxu0 0.0
        %4468 = vmatprep.subr.mxu0 0.0
        %4469 = vmatpush1.msra.mxu0 0.0
        %4470 = vmatprep.subr.mxu0 0.0
        %4471 = vmatpush1.msra.mxu0 0.0
        %4472 = vmatprep.subr.mxu0 0.0
        %4473 = vmatpush1.msra.mxu0 0.0
        %4474 = vmatprep.subr.mxu0 0.0
        %4475 = vmatpush1.msra.mxu0 0.0
        %4476 = vmatprep.subr.mxu0 0.0
        %4477 = vmatpush1.msra.mxu0 0.0
        %4478 = vmatprep.subr.mxu0 0.0
        %4479 = vmatpush1.msra.mxu0 0.0
        %4480 = vmatprep.subr.mxu0 0.0
        %4481 = vmatpush1.msra.mxu0 0.0
        %4482 = vmatprep.subr.mxu0 0.0
        %4483 = vmatpush1.msra.mxu0 0.0
        %4484 = vmatprep.subr.mxu0 0.0
        %4485 = vmatpush1.msra.mxu0 0.0
        %4486 = vmatprep.subr.mxu0 0.0
        %4487 = vmatpush1.msra.mxu0 0.0
        %4488 = vmatprep.subr.mxu0 0.0
        %4489 = vmatpush1.msra.mxu0 0.0
        %4490 = vmatprep.subr.mxu0 0.0
        %4491 = vmatpush1.msra.mxu0 0.0
        %4492 = vmatprep.subr.mxu0 0.0
        %4493 = vmatpush1.msra.mxu0 0.0
        %4494 = vmatprep.subr.mxu0 0.0
        %4495 = vmatpush1.msra.mxu0 0.0
        %4496 = vmatprep.subr.mxu0 0.0
        %4497 = vmatpush1.msra.mxu0 0.0
        %4498 = vmatprep.mubr.f32.mxu0 0.0
        %4499 = vmatmul.mubr.f32.gmra.mrb[0].mxu0 %v4432
        %v4500 = vpop.f32.mrb[0].mxu0
        %v4501 = vadd.f32 0.0, %v4500
        %v4502 = vpop.f32.mrb[0].mxu0
        %4503 = vdwg.mxu0
        %4504 = vrot.lane.b32.xlu0 %v717, 48
        %v4505 = vpop.permute.xlu0 %4504
        %v4508 = vsel %vm752, %v4346, 0
        %4510 = vmatprep.subr.mxu0 0.0
        %4511 = vmatpush1.msra.mxu0 %v4505
        %4512 = vmatprep.subr.mxu0 0.0
        %4513 = vmatpush1.msra.mxu0 0.0
        %4514 = vmatprep.subr.mxu0 0.0
        %4515 = vmatpush1.msra.mxu0 0.0
        %4516 = vmatprep.subr.mxu0 0.0
        %4517 = vmatpush1.msra.mxu0 0.0
        %4518 = vmatprep.subr.mxu0 0.0
        %4519 = vmatpush1.msra.mxu0 0.0
        %4520 = vmatprep.subr.mxu0 0.0
        %4521 = vmatpush1.msra.mxu0 0.0
        %4522 = vmatprep.subr.mxu0 0.0
        %4523 = vmatpush1.msra.mxu0 0.0
        %4524 = vmatprep.subr.mxu0 0.0
        %4525 = vmatpush1.msra.mxu0 0.0
        %4526 = vmatprep.subr.mxu0 0.0
        %4527 = vmatpush1.msra.mxu0 0.0
        %4528 = vmatprep.subr.mxu0 0.0
        %4529 = vmatpush1.msra.mxu0 0.0
        %4530 = vmatprep.subr.mxu0 0.0
        %4531 = vmatpush1.msra.mxu0 0.0
        %4532 = vmatprep.subr.mxu0 0.0
        %4533 = vmatpush1.msra.mxu0 0.0
        %4534 = vmatprep.subr.mxu0 0.0
        %4535 = vmatpush1.msra.mxu0 0.0
        %4536 = vmatprep.subr.mxu0 0.0
        %4537 = vmatpush1.msra.mxu0 0.0
        %4538 = vmatprep.subr.mxu0 0.0
        %4539 = vmatpush1.msra.mxu0 0.0
        %4540 = vmatprep.subr.mxu0 0.0
        %4541 = vmatpush1.msra.mxu0 0.0
        %4542 = vmatprep.subr.mxu0 0.0
        %4543 = vmatpush1.msra.mxu0 0.0
        %4544 = vmatprep.subr.mxu0 0.0
        %4545 = vmatpush1.msra.mxu0 0.0
        %4546 = vmatprep.subr.mxu0 0.0
        %4547 = vmatpush1.msra.mxu0 0.0
        %4548 = vmatprep.subr.mxu0 0.0
        %4549 = vmatpush1.msra.mxu0 0.0
        %4550 = vmatprep.subr.mxu0 0.0
        %4551 = vmatpush1.msra.mxu0 0.0
        %4552 = vmatprep.subr.mxu0 0.0
        %4553 = vmatpush1.msra.mxu0 0.0
        %4554 = vmatprep.subr.mxu0 0.0
        %4555 = vmatpush1.msra.mxu0 0.0
        %4556 = vmatprep.subr.mxu0 0.0
        %4557 = vmatpush1.msra.mxu0 0.0
        %4558 = vmatprep.subr.mxu0 0.0
        %4559 = vmatpush1.msra.mxu0 0.0
        %4560 = vmatprep.subr.mxu0 0.0
        %4561 = vmatpush1.msra.mxu0 0.0
        %4562 = vmatprep.subr.mxu0 0.0
        %4563 = vmatpush1.msra.mxu0 0.0
        %4564 = vmatprep.subr.mxu0 0.0
        %4565 = vmatpush1.msra.mxu0 0.0
        %4566 = vmatprep.subr.mxu0 0.0
        %4567 = vmatpush1.msra.mxu0 0.0
        %4568 = vmatprep.subr.mxu0 0.0
        %4569 = vmatpush1.msra.mxu0 0.0
        %4570 = vmatprep.subr.mxu0 0.0
        %4571 = vmatpush1.msra.mxu0 0.0
        %4572 = vmatprep.subr.mxu0 0.0
        %4573 = vmatpush1.msra.mxu0 0.0
        %4574 = vmatprep.mubr.f32.mxu0 0.0
        %4575 = vmatmul.mubr.f32.gmra.mrb[0].mxu0 %v4508
        %v4576 = vpop.f32.mrb[0].mxu0
        %v4577 = vadd.f32 0.0, %v4576
        %v4578 = vpop.f32.mrb[0].mxu0
        %4579 = vdwg.mxu0
        %4580 = vrot.lane.b32.xlu0 %v722, 48
        %v4581 = vpop.permute.xlu0 %4580
        %v4584 = vsel %vm752, %v4347, 0
        %4586 = vmatprep.subr.mxu0 0.0
        %4587 = vmatpush1.msra.mxu0 %v4581
        %4588 = vmatprep.subr.mxu0 0.0
        %4589 = vmatpush1.msra.mxu0 0.0
        %4590 = vmatprep.subr.mxu0 0.0
        %4591 = vmatpush1.msra.mxu0 0.0
        %4592 = vmatprep.subr.mxu0 0.0
        %4593 = vmatpush1.msra.mxu0 0.0
        %4594 = vmatprep.subr.mxu0 0.0
        %4595 = vmatpush1.msra.mxu0 0.0
        %4596 = vmatprep.subr.mxu0 0.0
        %4597 = vmatpush1.msra.mxu0 0.0
        %4598 = vmatprep.subr.mxu0 0.0
        %4599 = vmatpush1.msra.mxu0 0.0
        %4600 = vmatprep.subr.mxu0 0.0
        %4601 = vmatpush1.msra.mxu0 0.0
        %4602 = vmatprep.subr.mxu0 0.0
        %4603 = vmatpush1.msra.mxu0 0.0
        %4604 = vmatprep.subr.mxu0 0.0
        %4605 = vmatpush1.msra.mxu0 0.0
        %4606 = vmatprep.subr.mxu0 0.0
        %4607 = vmatpush1.msra.mxu0 0.0
        %4608 = vmatprep.subr.mxu0 0.0
        %4609 = vmatpush1.msra.mxu0 0.0
        %4610 = vmatprep.subr.mxu0 0.0
        %4611 = vmatpush1.msra.mxu0 0.0
        %4612 = vmatprep.subr.mxu0 0.0
        %4613 = vmatpush1.msra.mxu0 0.0
        %4614 = vmatprep.subr.mxu0 0.0
        %4615 = vmatpush1.msra.mxu0 0.0
        %4616 = vmatprep.subr.mxu0 0.0
        %4617 = vmatpush1.msra.mxu0 0.0
        %4618 = vmatprep.subr.mxu0 0.0
        %4619 = vmatpush1.msra.mxu0 0.0
        %4620 = vmatprep.subr.mxu0 0.0
        %4621 = vmatpush1.msra.mxu0 0.0
        %4622 = vmatprep.subr.mxu0 0.0
        %4623 = vmatpush1.msra.mxu0 0.0
        %4624 = vmatprep.subr.mxu0 0.0
        %4625 = vmatpush1.msra.mxu0 0.0
        %4626 = vmatprep.subr.mxu0 0.0
        %4627 = vmatpush1.msra.mxu0 0.0
        %4628 = vmatprep.subr.mxu0 0.0
        %4629 = vmatpush1.msra.mxu0 0.0
        %4630 = vmatprep.subr.mxu0 0.0
        %4631 = vmatpush1.msra.mxu0 0.0
        %4632 = vmatprep.subr.mxu0 0.0
        %4633 = vmatpush1.msra.mxu0 0.0
        %4634 = vmatprep.subr.mxu0 0.0
        %4635 = vmatpush1.msra.mxu0 0.0
        %4636 = vmatprep.subr.mxu0 0.0
        %4637 = vmatpush1.msra.mxu0 0.0
        %4638 = vmatprep.subr.mxu0 0.0
        %4639 = vmatpush1.msra.mxu0 0.0
        %4640 = vmatprep.subr.mxu0 0.0
        %4641 = vmatpush1.msra.mxu0 0.0
        %4642 = vmatprep.subr.mxu0 0.0
        %4643 = vmatpush1.msra.mxu0 0.0
        %4644 = vmatprep.subr.mxu0 0.0
        %4645 = vmatpush1.msra.mxu0 0.0
        %4646 = vmatprep.subr.mxu0 0.0
        %4647 = vmatpush1.msra.mxu0 0.0
        %4648 = vmatprep.subr.mxu0 0.0
        %4649 = vmatpush1.msra.mxu0 0.0
        %4650 = vmatprep.mubr.f32.mxu0 0.0
        %4651 = vmatmul.mubr.f32.gmra.mrb[0].mxu0 %v4584
        %v4652 = vpop.f32.mrb[0].mxu0
        %v4653 = vadd.f32 0.0, %v4652
        %v4654 = vpop.f32.mrb[0].mxu0
        %4655 = vdwg.mxu0
        %4656 = vrot.lane.b32.xlu0 %v727, 48
        %v4657 = vpop.permute.xlu0 %4656
        %v4660 = vsel %vm752, %v4348, 0
        %4662 = vmatprep.subr.mxu0 0.0
        %4663 = vmatpush1.msra.mxu0 %v4657
        %4664 = vmatprep.subr.mxu0 0.0
        %4665 = vmatpush1.msra.mxu0 0.0
        %4666 = vmatprep.subr.mxu0 0.0
        %4667 = vmatpush1.msra.mxu0 0.0
        %4668 = vmatprep.subr.mxu0 0.0
        %4669 = vmatpush1.msra.mxu0 0.0
        %4670 = vmatprep.subr.mxu0 0.0
        %4671 = vmatpush1.msra.mxu0 0.0
        %4672 = vmatprep.subr.mxu0 0.0
        %4673 = vmatpush1.msra.mxu0 0.0
        %4674 = vmatprep.subr.mxu0 0.0
        %4675 = vmatpush1.msra.mxu0 0.0
        %4676 = vmatprep.subr.mxu0 0.0
        %4677 = vmatpush1.msra.mxu0 0.0
        %4678 = vmatprep.subr.mxu0 0.0
        %4679 = vmatpush1.msra.mxu0 0.0
        %4680 = vmatprep.subr.mxu0 0.0
        %4681 = vmatpush1.msra.mxu0 0.0
        %4682 = vmatprep.subr.mxu0 0.0
        %4683 = vmatpush1.msra.mxu0 0.0
        %4684 = vmatprep.subr.mxu0 0.0
        %4685 = vmatpush1.msra.mxu0 0.0
        %4686 = vmatprep.subr.mxu0 0.0
        %4687 = vmatpush1.msra.mxu0 0.0
        %4688 = vmatprep.subr.mxu0 0.0
        %4689 = vmatpush1.msra.mxu0 0.0
        %4690 = vmatprep.subr.mxu0 0.0
        %4691 = vmatpush1.msra.mxu0 0.0
        %4692 = vmatprep.subr.mxu0 0.0
        %4693 = vmatpush1.msra.mxu0 0.0
        %4694 = vmatprep.subr.mxu0 0.0
        %4695 = vmatpush1.msra.mxu0 0.0
        %4696 = vmatprep.subr.mxu0 0.0
        %4697 = vmatpush1.msra.mxu0 0.0
        %4698 = vmatprep.subr.mxu0 0.0
        %4699 = vmatpush1.msra.mxu0 0.0
        %4700 = vmatprep.subr.mxu0 0.0
        %4701 = vmatpush1.msra.mxu0 0.0
        %4702 = vmatprep.subr.mxu0 0.0
        %4703 = vmatpush1.msra.mxu0 0.0
        %4704 = vmatprep.subr.mxu0 0.0
        %4705 = vmatpush1.msra.mxu0 0.0
        %4706 = vmatprep.subr.mxu0 0.0
        %4707 = vmatpush1.msra.mxu0 0.0
        %4708 = vmatprep.subr.mxu0 0.0
        %4709 = vmatpush1.msra.mxu0 0.0
        %4710 = vmatprep.subr.mxu0 0.0
        %4711 = vmatpush1.msra.mxu0 0.0
        %4712 = vmatprep.subr.mxu0 0.0
        %4713 = vmatpush1.msra.mxu0 0.0
        %4714 = vmatprep.subr.mxu0 0.0
        %4715 = vmatpush1.msra.mxu0 0.0
        %4716 = vmatprep.subr.mxu0 0.0
        %4717 = vmatpush1.msra.mxu0 0.0
        %4718 = vmatprep.subr.mxu0 0.0
        %4719 = vmatpush1.msra.mxu0 0.0
        %4720 = vmatprep.subr.mxu0 0.0
        %4721 = vmatpush1.msra.mxu0 0.0
        %4722 = vmatprep.subr.mxu0 0.0
        %4723 = vmatpush1.msra.mxu0 0.0
        %4724 = vmatprep.subr.mxu0 0.0
        %4725 = vmatpush1.msra.mxu0 0.0
        %4726 = vmatprep.mubr.f32.mxu0 0.0
        %4727 = vmatmul.mubr.f32.gmra.mrb[0].mxu0 %v4660
        %v4728 = vpop.f32.mrb[0].mxu0
        %v4729 = vadd.f32 0.0, %v4728
        %v4730 = vpop.f32.mrb[0].mxu0
        %4731 = vdwg.mxu0
        %4732 = vrot.lane.b32.xlu0 %v732, 48
        %v4733 = vpop.permute.xlu0 %4732
        %v4736 = vsel %vm752, %v4349, 0
        %4738 = vmatprep.subr.mxu0 0.0
        %4739 = vmatpush1.msra.mxu0 %v4733
        %4740 = vmatprep.subr.mxu0 0.0
        %4741 = vmatpush1.msra.mxu0 0.0
        %4742 = vmatprep.subr.mxu0 0.0
        %4743 = vmatpush1.msra.mxu0 0.0
        %4744 = vmatprep.subr.mxu0 0.0
        %4745 = vmatpush1.msra.mxu0 0.0
        %4746 = vmatprep.subr.mxu0 0.0
        %4747 = vmatpush1.msra.mxu0 0.0
        %4748 = vmatprep.subr.mxu0 0.0
        %4749 = vmatpush1.msra.mxu0 0.0
        %4750 = vmatprep.subr.mxu0 0.0
        %4751 = vmatpush1.msra.mxu0 0.0
        %4752 = vmatprep.subr.mxu0 0.0
        %4753 = vmatpush1.msra.mxu0 0.0
        %4754 = vmatprep.subr.mxu0 0.0
        %4755 = vmatpush1.msra.mxu0 0.0
        %4756 = vmatprep.subr.mxu0 0.0
        %4757 = vmatpush1.msra.mxu0 0.0
        %4758 = vmatprep.subr.mxu0 0.0
        %4759 = vmatpush1.msra.mxu0 0.0
        %4760 = vmatprep.subr.mxu0 0.0
        %4761 = vmatpush1.msra.mxu0 0.0
        %4762 = vmatprep.subr.mxu0 0.0
        %4763 = vmatpush1.msra.mxu0 0.0
        %4764 = vmatprep.subr.mxu0 0.0
        %4765 = vmatpush1.msra.mxu0 0.0
        %4766 = vmatprep.subr.mxu0 0.0
        %4767 = vmatpush1.msra.mxu0 0.0
        %4768 = vmatprep.subr.mxu0 0.0
        %4769 = vmatpush1.msra.mxu0 0.0
        %4770 = vmatprep.subr.mxu0 0.0
        %4771 = vmatpush1.msra.mxu0 0.0
        %4772 = vmatprep.subr.mxu0 0.0
        %4773 = vmatpush1.msra.mxu0 0.0
        %4774 = vmatprep.subr.mxu0 0.0
        %4775 = vmatpush1.msra.mxu0 0.0
        %4776 = vmatprep.subr.mxu0 0.0
        %4777 = vmatpush1.msra.mxu0 0.0
        %4778 = vmatprep.subr.mxu0 0.0
        %4779 = vmatpush1.msra.mxu0 0.0
        %4780 = vmatprep.subr.mxu0 0.0
        %4781 = vmatpush1.msra.mxu0 0.0
        %4782 = vmatprep.subr.mxu0 0.0
        %4783 = vmatpush1.msra.mxu0 0.0
        %4784 = vmatprep.subr.mxu0 0.0
        %4785 = vmatpush1.msra.mxu0 0.0
        %4786 = vmatprep.subr.mxu0 0.0
        %4787 = vmatpush1.msra.mxu0 0.0
        %4788 = vmatprep.subr.mxu0 0.0
        %4789 = vmatpush1.msra.mxu0 0.0
        %4790 = vmatprep.subr.mxu0 0.0
        %4791 = vmatpush1.msra.mxu0 0.0
        %4792 = vmatprep.subr.mxu0 0.0
        %4793 = vmatpush1.msra.mxu0 0.0
        %4794 = vmatprep.subr.mxu0 0.0
        %4795 = vmatpush1.msra.mxu0 0.0
        %4796 = vmatprep.subr.mxu0 0.0
        %4797 = vmatpush1.msra.mxu0 0.0
        %4798 = vmatprep.subr.mxu0 0.0
        %4799 = vmatpush1.msra.mxu0 0.0
        %4800 = vmatprep.subr.mxu0 0.0
        %4801 = vmatpush1.msra.mxu0 0.0
        %4802 = vmatprep.mubr.f32.mxu0 0.0
        %4803 = vmatmul.mubr.f32.gmra.mrb[0].mxu0 %v4736
        %v4804 = vpop.f32.mrb[0].mxu0
        %v4805 = vadd.f32 0.0, %v4804
        %v4806 = vpop.f32.mrb[0].mxu0
        %4807 = vdwg.mxu0
        %4808 = vrot.lane.b32.xlu0 %v737, 48
        %v4809 = vpop.permute.xlu0 %4808
        %v4812 = vsel %vm752, %v4350, 0
        %4814 = vmatprep.subr.mxu0 0.0
        %4815 = vmatpush1.msra.mxu0 %v4809
        %4816 = vmatprep.subr.mxu0 0.0
        %4817 = vmatpush1.msra.mxu0 0.0
        %4818 = vmatprep.subr.mxu0 0.0
        %4819 = vmatpush1.msra.mxu0 0.0
        %4820 = vmatprep.subr.mxu0 0.0
        %4821 = vmatpush1.msra.mxu0 0.0
        %4822 = vmatprep.subr.mxu0 0.0
        %4823 = vmatpush1.msra.mxu0 0.0
        %4824 = vmatprep.subr.mxu0 0.0
        %4825 = vmatpush1.msra.mxu0 0.0
        %4826 = vmatprep.subr.mxu0 0.0
        %4827 = vmatpush1.msra.mxu0 0.0
        %4828 = vmatprep.subr.mxu0 0.0
        %4829 = vmatpush1.msra.mxu0 0.0
        %4830 = vmatprep.subr.mxu0 0.0
        %4831 = vmatpush1.msra.mxu0 0.0
        %4832 = vmatprep.subr.mxu0 0.0
        %4833 = vmatpush1.msra.mxu0 0.0
        %4834 = vmatprep.subr.mxu0 0.0
        %4835 = vmatpush1.msra.mxu0 0.0
        %4836 = vmatprep.subr.mxu0 0.0
        %4837 = vmatpush1.msra.mxu0 0.0
        %4838 = vmatprep.subr.mxu0 0.0
        %4839 = vmatpush1.msra.mxu0 0.0
        %4840 = vmatprep.subr.mxu0 0.0
        %4841 = vmatpush1.msra.mxu0 0.0
        %4842 = vmatprep.subr.mxu0 0.0
        %4843 = vmatpush1.msra.mxu0 0.0
        %4844 = vmatprep.subr.mxu0 0.0
        %4845 = vmatpush1.msra.mxu0 0.0
        %4846 = vmatprep.subr.mxu0 0.0
        %4847 = vmatpush1.msra.mxu0 0.0
        %4848 = vmatprep.subr.mxu0 0.0
        %4849 = vmatpush1.msra.mxu0 0.0
        %4850 = vmatprep.subr.mxu0 0.0
        %4851 = vmatpush1.msra.mxu0 0.0
        %4852 = vmatprep.subr.mxu0 0.0
        %4853 = vmatpush1.msra.mxu0 0.0
        %4854 = vmatprep.subr.mxu0 0.0
        %4855 = vmatpush1.msra.mxu0 0.0
        %4856 = vmatprep.subr.mxu0 0.0
        %4857 = vmatpush1.msra.mxu0 0.0
        %4858 = vmatprep.subr.mxu0 0.0
        %4859 = vmatpush1.msra.mxu0 0.0
        %4860 = vmatprep.subr.mxu0 0.0
        %4861 = vmatpush1.msra.mxu0 0.0
        %4862 = vmatprep.subr.mxu0 0.0
        %4863 = vmatpush1.msra.mxu0 0.0
        %4864 = vmatprep.subr.mxu0 0.0
        %4865 = vmatpush1.msra.mxu0 0.0
        %4866 = vmatprep.subr.mxu0 0.0
        %4867 = vmatpush1.msra.mxu0 0.0
        %4868 = vmatprep.subr.mxu0 0.0
        %4869 = vmatpush1.msra.mxu0 0.0
        %4870 = vmatprep.subr.mxu0 0.0
        %4871 = vmatpush1.msra.mxu0 0.0
        %4872 = vmatprep.subr.mxu0 0.0
        %4873 = vmatpush1.msra.mxu0 0.0
        %4874 = vmatprep.subr.mxu0 0.0
        %4875 = vmatpush1.msra.mxu0 0.0
        %4876 = vmatprep.subr.mxu0 0.0
        %4877 = vmatpush1.msra.mxu0 0.0
        %4878 = vmatprep.mubr.f32.mxu0 0.0
        %4879 = vmatmul.mubr.f32.gmra.mrb[0].mxu0 %v4812
        %v4880 = vpop.f32.mrb[0].mxu0
        %v4881 = vadd.f32 0.0, %v4880
        %v4882 = vpop.f32.mrb[0].mxu0
        %4883 = vdwg.mxu0
        %4884 = vrot.lane.b32.xlu0 %v742, 48
        %v4885 = vpop.permute.xlu0 %4884
        %v4888 = vsel %vm752, %v4351, 0
        %4890 = vmatprep.subr.mxu0 0.0
        %4891 = vmatpush1.msra.mxu0 %v4885
        %4892 = vmatprep.subr.mxu0 0.0
        %4893 = vmatpush1.msra.mxu0 0.0
        %4894 = vmatprep.subr.mxu0 0.0
        %4895 = vmatpush1.msra.mxu0 0.0
        %4896 = vmatprep.subr.mxu0 0.0
        %4897 = vmatpush1.msra.mxu0 0.0
        %4898 = vmatprep.subr.mxu0 0.0
        %4899 = vmatpush1.msra.mxu0 0.0
        %4900 = vmatprep.subr.mxu0 0.0
        %4901 = vmatpush1.msra.mxu0 0.0
        %4902 = vmatprep.subr.mxu0 0.0
        %4903 = vmatpush1.msra.mxu0 0.0
        %4904 = vmatprep.subr.mxu0 0.0
        %4905 = vmatpush1.msra.mxu0 0.0
        %4906 = vmatprep.subr.mxu0 0.0
        %4907 = vmatpush1.msra.mxu0 0.0
        %4908 = vmatprep.subr.mxu0 0.0
        %4909 = vmatpush1.msra.mxu0 0.0
        %4910 = vmatprep.subr.mxu0 0.0
        %4911 = vmatpush1.msra.mxu0 0.0
        %4912 = vmatprep.subr.mxu0 0.0
        %4913 = vmatpush1.msra.mxu0 0.0
        %4914 = vmatprep.subr.mxu0 0.0
        %4915 = vmatpush1.msra.mxu0 0.0
        %4916 = vmatprep.subr.mxu0 0.0
        %4917 = vmatpush1.msra.mxu0 0.0
        %4918 = vmatprep.subr.mxu0 0.0
        %4919 = vmatpush1.msra.mxu0 0.0
        %4920 = vmatprep.subr.mxu0 0.0
        %4921 = vmatpush1.msra.mxu0 0.0
        %4922 = vmatprep.subr.mxu0 0.0
        %4923 = vmatpush1.msra.mxu0 0.0
        %4924 = vmatprep.subr.mxu0 0.0
        %4925 = vmatpush1.msra.mxu0 0.0
        %4926 = vmatprep.subr.mxu0 0.0
        %4927 = vmatpush1.msra.mxu0 0.0
        %4928 = vmatprep.subr.mxu0 0.0
        %4929 = vmatpush1.msra.mxu0 0.0
        %4930 = vmatprep.subr.mxu0 0.0
        %4931 = vmatpush1.msra.mxu0 0.0
        %4932 = vmatprep.subr.mxu0 0.0
        %4933 = vmatpush1.msra.mxu0 0.0
        %4934 = vmatprep.subr.mxu0 0.0
        %4935 = vmatpush1.msra.mxu0 0.0
        %4936 = vmatprep.subr.mxu0 0.0
        %4937 = vmatpush1.msra.mxu0 0.0
        %4938 = vmatprep.subr.mxu0 0.0
        %4939 = vmatpush1.msra.mxu0 0.0
        %4940 = vmatprep.subr.mxu0 0.0
        %4941 = vmatpush1.msra.mxu0 0.0
        %4942 = vmatprep.subr.mxu0 0.0
        %4943 = vmatpush1.msra.mxu0 0.0
        %4944 = vmatprep.subr.mxu0 0.0
        %4945 = vmatpush1.msra.mxu0 0.0
        %4946 = vmatprep.subr.mxu0 0.0
        %4947 = vmatpush1.msra.mxu0 0.0
        %4948 = vmatprep.subr.mxu0 0.0
        %4949 = vmatpush1.msra.mxu0 0.0
        %4950 = vmatprep.subr.mxu0 0.0
        %4951 = vmatpush1.msra.mxu0 0.0
        %4952 = vmatprep.subr.mxu0 0.0
        %4953 = vmatpush1.msra.mxu0 0.0
        %4954 = vmatprep.mubr.f32.mxu0 0.0
        %4955 = vmatmul.mubr.f32.gmra.mrb[0].mxu0 %v4888
        %v4956 = vpop.f32.mrb[0].mxu0
        %v4957 = vadd.f32 0.0, %v4956
        %v4958 = vpop.f32.mrb[0].mxu0
        %4959 = vdwg.mxu0
        %v4961 = vsel %vm752, %v4425, 0
        %v4964 = vsel %vm752, %v4501, 0
        %v4967 = vsel %vm752, %v4577, 0
        %v4970 = vsel %vm752, %v4653, 0
        %v4973 = vsel %vm752, %v4729, 0
        %v4976 = vsel %vm752, %v4805, 0
        %v4979 = vsel %vm752, %v4881, 0
        %v4982 = vsel %vm752, %v4957, 0
        %4984 = vmatprep.subr.mxu0 0.0
        %4985 = vmatpush1.msra.mxu0 %v747
        %4986 = vmatprep.subr.mxu0 0.0
        %4987 = vmatpush1.msra.mxu0 0.0
        %4988 = vmatprep.subr.mxu0 0.0
        %4989 = vmatpush1.msra.mxu0 0.0
        %4990 = vmatprep.subr.mxu0 0.0
        %4991 = vmatpush1.msra.mxu0 0.0
        %4992 = vmatprep.subr.mxu0 0.0
        %4993 = vmatpush1.msra.mxu0 0.0
        %4994 = vmatprep.subr.mxu0 0.0
        %4995 = vmatpush1.msra.mxu0 0.0
        %4996 = vmatprep.subr.mxu0 0.0
        %4997 = vmatpush1.msra.mxu0 0.0
        %4998 = vmatprep.subr.mxu0 0.0
        %4999 = vmatpush1.msra.mxu0 0.0
        %5000 = vmatprep.subr.mxu0 0.0
        %5001 = vmatpush1.msra.mxu0 0.0
        %5002 = vmatprep.subr.mxu0 0.0
        %5003 = vmatpush1.msra.mxu0 0.0
        %5004 = vmatprep.subr.mxu0 0.0
        %5005 = vmatpush1.msra.mxu0 0.0
        %5006 = vmatprep.subr.mxu0 0.0
        %5007 = vmatpush1.msra.mxu0 0.0
        %5008 = vmatprep.subr.mxu0 0.0
        %5009 = vmatpush1.msra.mxu0 0.0
        %5010 = vmatprep.subr.mxu0 0.0
        %5011 = vmatpush1.msra.mxu0 0.0
        %5012 = vmatprep.subr.mxu0 0.0
        %5013 = vmatpush1.msra.mxu0 0.0
        %5014 = vmatprep.subr.mxu0 0.0
        %5015 = vmatpush1.msra.mxu0 0.0
        %5016 = vmatprep.subr.mxu0 0.0
        %5017 = vmatpush1.msra.mxu0 0.0
        %5018 = vmatprep.subr.mxu0 0.0
        %5019 = vmatpush1.msra.mxu0 0.0
        %5020 = vmatprep.subr.mxu0 0.0
        %5021 = vmatpush1.msra.mxu0 0.0
        %5022 = vmatprep.subr.mxu0 0.0
        %5023 = vmatpush1.msra.mxu0 0.0
        %5024 = vmatprep.subr.mxu0 0.0
        %5025 = vmatpush1.msra.mxu0 0.0
        %5026 = vmatprep.subr.mxu0 0.0
        %5027 = vmatpush1.msra.mxu0 0.0
        %5028 = vmatprep.subr.mxu0 0.0
        %5029 = vmatpush1.msra.mxu0 0.0
        %5030 = vmatprep.subr.mxu0 0.0
        %5031 = vmatpush1.msra.mxu0 0.0
        %5032 = vmatprep.subr.mxu0 0.0
        %5033 = vmatpush1.msra.mxu0 0.0
        %5034 = vmatprep.subr.mxu0 0.0
        %5035 = vmatpush1.msra.mxu0 0.0
        %5036 = vmatprep.subr.mxu0 0.0
        %5037 = vmatpush1.msra.mxu0 0.0
        %5038 = vmatprep.subr.mxu0 0.0
        %5039 = vmatpush1.msra.mxu0 0.0
        %5040 = vmatprep.subr.mxu0 0.0
        %5041 = vmatpush1.msra.mxu0 0.0
        %5042 = vmatprep.subr.mxu0 0.0
        %5043 = vmatpush1.msra.mxu0 0.0
        %5044 = vmatprep.subr.mxu0 0.0
        %5045 = vmatpush1.msra.mxu0 0.0
        %5046 = vmatprep.subr.mxu0 0.0
        %5047 = vmatpush1.msra.mxu0 0.0
        %5048 = vmatprep.mubr.f32.mxu0 0.0
        %5049 = vmatmul.mubr.f32.gmra.mrb[0].mxu0 %v4961
        %v5050 = vpop.f32.mrb[0].mxu0
        %v5051 = vadd.f32 0.0, %v5050
        %v5052 = vpop.f32.mrb[0].mxu0
        %5053 = vmatprep.mubr.f32.mxu0 0.0
        %5054 = vmatmul.mubr.f32.gmra.mrb[0].mxu0 %v4964
        %v5055 = vpop.f32.mrb[0].mxu0
        %v5056 = vadd.f32 0.0, %v5055
        %v5057 = vpop.f32.mrb[0].mxu0
        %5058 = vmatprep.mubr.f32.mxu0 0.0
        %5059 = vmatmul.mubr.f32.gmra.mrb[0].mxu0 %v4967
        %v5060 = vpop.f32.mrb[0].mxu0
        %v5061 = vadd.f32 0.0, %v5060
        %v5062 = vpop.f32.mrb[0].mxu0
        %5063 = vmatprep.mubr.f32.mxu0 0.0
        %5064 = vmatmul.mubr.f32.gmra.mrb[0].mxu0 %v4970
        %v5065 = vpop.f32.mrb[0].mxu0
        %v5066 = vadd.f32 0.0, %v5065
        %v5067 = vpop.f32.mrb[0].mxu0
        %5068 = vmatprep.mubr.f32.mxu0 0.0
        %5069 = vmatmul.mubr.f32.gmra.mrb[0].mxu0 %v4973
        %v5070 = vpop.f32.mrb[0].mxu0
        %v5071 = vadd.f32 0.0, %v5070
        %v5072 = vpop.f32.mrb[0].mxu0
        %5073 = vmatprep.mubr.f32.mxu0 0.0
        %5074 = vmatmul.mubr.f32.gmra.mrb[0].mxu0 %v4976
        %v5075 = vpop.f32.mrb[0].mxu0
        %v5076 = vadd.f32 0.0, %v5075
        %v5077 = vpop.f32.mrb[0].mxu0
        %5078 = vmatprep.mubr.f32.mxu0 0.0
        %5079 = vmatmul.mubr.f32.gmra.mrb[0].mxu0 %v4979
        %v5080 = vpop.f32.mrb[0].mxu0
        %v5081 = vadd.f32 0.0, %v5080
        %v5082 = vpop.f32.mrb[0].mxu0
        %5083 = vmatprep.mubr.f32.mxu0 0.0
        %5084 = vmatmul.mubr.f32.gmra.mrb[0].mxu0 %v4982
        %v5085 = vpop.f32.mrb[0].mxu0
        %v5086 = vadd.f32 0.0, %v5085
        %v5087 = vpop.f32.mrb[0].mxu0
        %5088 = vdwg.mxu0
        %v5089 = vadd.f32 %v3602, %v5051
        %v5090 = vadd.f32 %v3607, %v5056
        %v5091 = vadd.f32 %v3612, %v5061
        %v5092 = vadd.f32 %v3617, %v5066
        %v5093 = vadd.f32 %v3622, %v5071
        %v5094 = vadd.f32 %v3627, %v5076
        %v5095 = vadd.f32 %v3632, %v5081
        %v5096 = vadd.f32 %v3637, %v5086
        %5097 = vrot.lane.b32.xlu0 %v707, 104
        %v5098 = vpop.permute.xlu0 %5097
        %5099 = vrot.lane.b32.xlu0 %v707, 72
        %v5100 = vpop.permute.xlu0 %5099
        %v5101 = vsel %vm752, %v5098, 0
        %v5103 = vsel %vm752, %v5100, 0
        %5105 = vmatprep.subr.mxu0 0.0
        %5106 = vmatpush1.xpose.msra.mxu0 %v5103
        %5107 = vmatprep.subr.mxu0 0.0
        %5108 = vmatpush1.xpose.msra.mxu0 0.0
        %5109 = vmatprep.subr.mxu0 0.0
        %5110 = vmatpush1.xpose.msra.mxu0 0.0
        %5111 = vmatprep.subr.mxu0 0.0
        %5112 = vmatpush1.xpose.msra.mxu0 0.0
        %5113 = vmatprep.subr.mxu0 0.0
        %5114 = vmatpush1.xpose.msra.mxu0 0.0
        %5115 = vmatprep.subr.mxu0 0.0
        %5116 = vmatpush1.xpose.msra.mxu0 0.0
        %5117 = vmatprep.subr.mxu0 0.0
        %5118 = vmatpush1.xpose.msra.mxu0 0.0
        %5119 = vmatprep.subr.mxu0 0.0
        %5120 = vmatpush1.xpose.msra.mxu0 0.0
        %5121 = vmatprep.subr.mxu0 0.0
        %5122 = vmatpush1.xpose.msra.mxu0 0.0
        %5123 = vmatprep.subr.mxu0 0.0
        %5124 = vmatpush1.xpose.msra.mxu0 0.0
        %5125 = vmatprep.subr.mxu0 0.0
        %5126 = vmatpush1.xpose.msra.mxu0 0.0
        %5127 = vmatprep.subr.mxu0 0.0
        %5128 = vmatpush1.xpose.msra.mxu0 0.0
        %5129 = vmatprep.subr.mxu0 0.0
        %5130 = vmatpush1.xpose.msra.mxu0 0.0
        %5131 = vmatprep.subr.mxu0 0.0
        %5132 = vmatpush1.xpose.msra.mxu0 0.0
        %5133 = vmatprep.subr.mxu0 0.0
        %5134 = vmatpush1.xpose.msra.mxu0 0.0
        %5135 = vmatprep.subr.mxu0 0.0
        %5136 = vmatpush1.xpose.msra.mxu0 0.0
        %5137 = vmatprep.subr.mxu0 0.0
        %5138 = vmatpush1.xpose.msra.mxu0 0.0
        %5139 = vmatprep.subr.mxu0 0.0
        %5140 = vmatpush1.xpose.msra.mxu0 0.0
        %5141 = vmatprep.subr.mxu0 0.0
        %5142 = vmatpush1.xpose.msra.mxu0 0.0
        %5143 = vmatprep.subr.mxu0 0.0
        %5144 = vmatpush1.xpose.msra.mxu0 0.0
        %5145 = vmatprep.subr.mxu0 0.0
        %5146 = vmatpush1.xpose.msra.mxu0 0.0
        %5147 = vmatprep.subr.mxu0 0.0
        %5148 = vmatpush1.xpose.msra.mxu0 0.0
        %5149 = vmatprep.subr.mxu0 0.0
        %5150 = vmatpush1.xpose.msra.mxu0 0.0
        %5151 = vmatprep.subr.mxu0 0.0
        %5152 = vmatpush1.xpose.msra.mxu0 0.0
        %5153 = vmatprep.subr.mxu0 0.0
        %5154 = vmatpush1.xpose.msra.mxu0 0.0
        %5155 = vmatprep.subr.mxu0 0.0
        %5156 = vmatpush1.xpose.msra.mxu0 0.0
        %5157 = vmatprep.subr.mxu0 0.0
        %5158 = vmatpush1.xpose.msra.mxu0 0.0
        %5159 = vmatprep.subr.mxu0 0.0
        %5160 = vmatpush1.xpose.msra.mxu0 0.0
        %5161 = vmatprep.subr.mxu0 0.0
        %5162 = vmatpush1.xpose.msra.mxu0 0.0
        %5163 = vmatprep.subr.mxu0 0.0
        %5164 = vmatpush1.xpose.msra.mxu0 0.0
        %5165 = vmatprep.subr.mxu0 0.0
        %5166 = vmatpush1.xpose.msra.mxu0 0.0
        %5167 = vmatprep.subr.mxu0 0.0
        %5168 = vmatpush1.xpose.msra.mxu0 0.0
        %5169 = vmatprep.mubr.f32.mxu0 0.0
        %5170 = vmatmul.mubr.f32.gmra.mrb[0].mxu0 %v5101
        %v5171 = vpop.f32.mrb[0].mxu0
        %v5172 = vadd.f32 0.0, %v5171
        %v5173 = vpop.f32.mrb[0].mxu0
        %5174 = vdwg.mxu0
        %5175 = vrot.lane.b32.xlu0 %v712, 104
        %v5176 = vpop.permute.xlu0 %5175
        %5177 = vrot.lane.b32.xlu0 %v712, 72
        %v5178 = vpop.permute.xlu0 %5177
        %v5179 = vsel %vm752, %v5176, 0
        %v5181 = vsel %vm752, %v5178, 0
        %5183 = vmatprep.subr.mxu0 0.0
        %5184 = vmatpush1.xpose.msra.mxu0 %v5181
        %5185 = vmatprep.subr.mxu0 0.0
        %5186 = vmatpush1.xpose.msra.mxu0 0.0
        %5187 = vmatprep.subr.mxu0 0.0
        %5188 = vmatpush1.xpose.msra.mxu0 0.0
        %5189 = vmatprep.subr.mxu0 0.0
        %5190 = vmatpush1.xpose.msra.mxu0 0.0
        %5191 = vmatprep.subr.mxu0 0.0
        %5192 = vmatpush1.xpose.msra.mxu0 0.0
        %5193 = vmatprep.subr.mxu0 0.0
        %5194 = vmatpush1.xpose.msra.mxu0 0.0
        %5195 = vmatprep.subr.mxu0 0.0
        %5196 = vmatpush1.xpose.msra.mxu0 0.0
        %5197 = vmatprep.subr.mxu0 0.0
        %5198 = vmatpush1.xpose.msra.mxu0 0.0
        %5199 = vmatprep.subr.mxu0 0.0
        %5200 = vmatpush1.xpose.msra.mxu0 0.0
        %5201 = vmatprep.subr.mxu0 0.0
        %5202 = vmatpush1.xpose.msra.mxu0 0.0
        %5203 = vmatprep.subr.mxu0 0.0
        %5204 = vmatpush1.xpose.msra.mxu0 0.0
        %5205 = vmatprep.subr.mxu0 0.0
        %5206 = vmatpush1.xpose.msra.mxu0 0.0
        %5207 = vmatprep.subr.mxu0 0.0
        %5208 = vmatpush1.xpose.msra.mxu0 0.0
        %5209 = vmatprep.subr.mxu0 0.0
        %5210 = vmatpush1.xpose.msra.mxu0 0.0
        %5211 = vmatprep.subr.mxu0 0.0
        %5212 = vmatpush1.xpose.msra.mxu0 0.0
        %5213 = vmatprep.subr.mxu0 0.0
        %5214 = vmatpush1.xpose.msra.mxu0 0.0
        %5215 = vmatprep.subr.mxu0 0.0
        %5216 = vmatpush1.xpose.msra.mxu0 0.0
        %5217 = vmatprep.subr.mxu0 0.0
        %5218 = vmatpush1.xpose.msra.mxu0 0.0
        %5219 = vmatprep.subr.mxu0 0.0
        %5220 = vmatpush1.xpose.msra.mxu0 0.0
        %5221 = vmatprep.subr.mxu0 0.0
        %5222 = vmatpush1.xpose.msra.mxu0 0.0
        %5223 = vmatprep.subr.mxu0 0.0
        %5224 = vmatpush1.xpose.msra.mxu0 0.0
        %5225 = vmatprep.subr.mxu0 0.0
        %5226 = vmatpush1.xpose.msra.mxu0 0.0
        %5227 = vmatprep.subr.mxu0 0.0
        %5228 = vmatpush1.xpose.msra.mxu0 0.0
        %5229 = vmatprep.subr.mxu0 0.0
        %5230 = vmatpush1.xpose.msra.mxu0 0.0
        %5231 = vmatprep.subr.mxu0 0.0
        %5232 = vmatpush1.xpose.msra.mxu0 0.0
        %5233 = vmatprep.subr.mxu0 0.0
        %5234 = vmatpush1.xpose.msra.mxu0 0.0
        %5235 = vmatprep.subr.mxu0 0.0
        %5236 = vmatpush1.xpose.msra.mxu0 0.0
        %5237 = vmatprep.subr.mxu0 0.0
        %5238 = vmatpush1.xpose.msra.mxu0 0.0
        %5239 = vmatprep.subr.mxu0 0.0
        %5240 = vmatpush1.xpose.msra.mxu0 0.0
        %5241 = vmatprep.subr.mxu0 0.0
        %5242 = vmatpush1.xpose.msra.mxu0 0.0
        %5243 = vmatprep.subr.mxu0 0.0
        %5244 = vmatpush1.xpose.msra.mxu0 0.0
        %5245 = vmatprep.subr.mxu0 0.0
        %5246 = vmatpush1.xpose.msra.mxu0 0.0
        %5247 = vmatprep.mubr.f32.mxu0 0.0
        %5248 = vmatmul.mubr.f32.gmra.mrb[0].mxu0 %v5179
        %v5249 = vpop.f32.mrb[0].mxu0
        %v5250 = vadd.f32 0.0, %v5249
        %v5251 = vpop.f32.mrb[0].mxu0
        %5252 = vdwg.mxu0
        %5253 = vrot.lane.b32.xlu0 %v717, 104
        %v5254 = vpop.permute.xlu0 %5253
        %5255 = vrot.lane.b32.xlu0 %v717, 72
        %v5256 = vpop.permute.xlu0 %5255
        %v5257 = vsel %vm752, %v5254, 0
        %v5259 = vsel %vm752, %v5256, 0
        %5261 = vmatprep.subr.mxu0 0.0
        %5262 = vmatpush1.xpose.msra.mxu0 %v5259
        %5263 = vmatprep.subr.mxu0 0.0
        %5264 = vmatpush1.xpose.msra.mxu0 0.0
        %5265 = vmatprep.subr.mxu0 0.0
        %5266 = vmatpush1.xpose.msra.mxu0 0.0
        %5267 = vmatprep.subr.mxu0 0.0
        %5268 = vmatpush1.xpose.msra.mxu0 0.0
        %5269 = vmatprep.subr.mxu0 0.0
        %5270 = vmatpush1.xpose.msra.mxu0 0.0
        %5271 = vmatprep.subr.mxu0 0.0
        %5272 = vmatpush1.xpose.msra.mxu0 0.0
        %5273 = vmatprep.subr.mxu0 0.0
        %5274 = vmatpush1.xpose.msra.mxu0 0.0
        %5275 = vmatprep.subr.mxu0 0.0
        %5276 = vmatpush1.xpose.msra.mxu0 0.0
        %5277 = vmatprep.subr.mxu0 0.0
        %5278 = vmatpush1.xpose.msra.mxu0 0.0
        %5279 = vmatprep.subr.mxu0 0.0
        %5280 = vmatpush1.xpose.msra.mxu0 0.0
        %5281 = vmatprep.subr.mxu0 0.0
        %5282 = vmatpush1.xpose.msra.mxu0 0.0
        %5283 = vmatprep.subr.mxu0 0.0
        %5284 = vmatpush1.xpose.msra.mxu0 0.0
        %5285 = vmatprep.subr.mxu0 0.0
        %5286 = vmatpush1.xpose.msra.mxu0 0.0
        %5287 = vmatprep.subr.mxu0 0.0
        %5288 = vmatpush1.xpose.msra.mxu0 0.0
        %5289 = vmatprep.subr.mxu0 0.0
        %5290 = vmatpush1.xpose.msra.mxu0 0.0
        %5291 = vmatprep.subr.mxu0 0.0
        %5292 = vmatpush1.xpose.msra.mxu0 0.0
        %5293 = vmatprep.subr.mxu0 0.0
        %5294 = vmatpush1.xpose.msra.mxu0 0.0
        %5295 = vmatprep.subr.mxu0 0.0
        %5296 = vmatpush1.xpose.msra.mxu0 0.0
        %5297 = vmatprep.subr.mxu0 0.0
        %5298 = vmatpush1.xpose.msra.mxu0 0.0
        %5299 = vmatprep.subr.mxu0 0.0
        %5300 = vmatpush1.xpose.msra.mxu0 0.0
        %5301 = vmatprep.subr.mxu0 0.0
        %5302 = vmatpush1.xpose.msra.mxu0 0.0
        %5303 = vmatprep.subr.mxu0 0.0
        %5304 = vmatpush1.xpose.msra.mxu0 0.0
        %5305 = vmatprep.subr.mxu0 0.0
        %5306 = vmatpush1.xpose.msra.mxu0 0.0
        %5307 = vmatprep.subr.mxu0 0.0
        %5308 = vmatpush1.xpose.msra.mxu0 0.0
        %5309 = vmatprep.subr.mxu0 0.0
        %5310 = vmatpush1.xpose.msra.mxu0 0.0
        %5311 = vmatprep.subr.mxu0 0.0
        %5312 = vmatpush1.xpose.msra.mxu0 0.0
        %5313 = vmatprep.subr.mxu0 0.0
        %5314 = vmatpush1.xpose.msra.mxu0 0.0
        %5315 = vmatprep.subr.mxu0 0.0
        %5316 = vmatpush1.xpose.msra.mxu0 0.0
        %5317 = vmatprep.subr.mxu0 0.0
        %5318 = vmatpush1.xpose.msra.mxu0 0.0
        %5319 = vmatprep.subr.mxu0 0.0
        %5320 = vmatpush1.xpose.msra.mxu0 0.0
        %5321 = vmatprep.subr.mxu0 0.0
        %5322 = vmatpush1.xpose.msra.mxu0 0.0
        %5323 = vmatprep.subr.mxu0 0.0
        %5324 = vmatpush1.xpose.msra.mxu0 0.0
        %5325 = vmatprep.mubr.f32.mxu0 0.0
        %5326 = vmatmul.mubr.f32.gmra.mrb[0].mxu0 %v5257
        %v5327 = vpop.f32.mrb[0].mxu0
        %v5328 = vadd.f32 0.0, %v5327
        %v5329 = vpop.f32.mrb[0].mxu0
        %5330 = vdwg.mxu0
        %5331 = vrot.lane.b32.xlu0 %v722, 104
        %v5332 = vpop.permute.xlu0 %5331
        %5333 = vrot.lane.b32.xlu0 %v722, 72
        %v5334 = vpop.permute.xlu0 %5333
        %v5335 = vsel %vm752, %v5332, 0
        %v5337 = vsel %vm752, %v5334, 0
        %5339 = vmatprep.subr.mxu0 0.0
        %5340 = vmatpush1.xpose.msra.mxu0 %v5337
        %5341 = vmatprep.subr.mxu0 0.0
        %5342 = vmatpush1.xpose.msra.mxu0 0.0
        %5343 = vmatprep.subr.mxu0 0.0
        %5344 = vmatpush1.xpose.msra.mxu0 0.0
        %5345 = vmatprep.subr.mxu0 0.0
        %5346 = vmatpush1.xpose.msra.mxu0 0.0
        %5347 = vmatprep.subr.mxu0 0.0
        %5348 = vmatpush1.xpose.msra.mxu0 0.0
        %5349 = vmatprep.subr.mxu0 0.0
        %5350 = vmatpush1.xpose.msra.mxu0 0.0
        %5351 = vmatprep.subr.mxu0 0.0
        %5352 = vmatpush1.xpose.msra.mxu0 0.0
        %5353 = vmatprep.subr.mxu0 0.0
        %5354 = vmatpush1.xpose.msra.mxu0 0.0
        %5355 = vmatprep.subr.mxu0 0.0
        %5356 = vmatpush1.xpose.msra.mxu0 0.0
        %5357 = vmatprep.subr.mxu0 0.0
        %5358 = vmatpush1.xpose.msra.mxu0 0.0
        %5359 = vmatprep.subr.mxu0 0.0
        %5360 = vmatpush1.xpose.msra.mxu0 0.0
        %5361 = vmatprep.subr.mxu0 0.0
        %5362 = vmatpush1.xpose.msra.mxu0 0.0
        %5363 = vmatprep.subr.mxu0 0.0
        %5364 = vmatpush1.xpose.msra.mxu0 0.0
        %5365 = vmatprep.subr.mxu0 0.0
        %5366 = vmatpush1.xpose.msra.mxu0 0.0
        %5367 = vmatprep.subr.mxu0 0.0
        %5368 = vmatpush1.xpose.msra.mxu0 0.0
        %5369 = vmatprep.subr.mxu0 0.0
        %5370 = vmatpush1.xpose.msra.mxu0 0.0
        %5371 = vmatprep.subr.mxu0 0.0
        %5372 = vmatpush1.xpose.msra.mxu0 0.0
        %5373 = vmatprep.subr.mxu0 0.0
        %5374 = vmatpush1.xpose.msra.mxu0 0.0
        %5375 = vmatprep.subr.mxu0 0.0
        %5376 = vmatpush1.xpose.msra.mxu0 0.0
        %5377 = vmatprep.subr.mxu0 0.0
        %5378 = vmatpush1.xpose.msra.mxu0 0.0
        %5379 = vmatprep.subr.mxu0 0.0
        %5380 = vmatpush1.xpose.msra.mxu0 0.0
        %5381 = vmatprep.subr.mxu0 0.0
        %5382 = vmatpush1.xpose.msra.mxu0 0.0
        %5383 = vmatprep.subr.mxu0 0.0
        %5384 = vmatpush1.xpose.msra.mxu0 0.0
        %5385 = vmatprep.subr.mxu0 0.0
        %5386 = vmatpush1.xpose.msra.mxu0 0.0
        %5387 = vmatprep.subr.mxu0 0.0
        %5388 = vmatpush1.xpose.msra.mxu0 0.0
        %5389 = vmatprep.subr.mxu0 0.0
        %5390 = vmatpush1.xpose.msra.mxu0 0.0
        %5391 = vmatprep.subr.mxu0 0.0
        %5392 = vmatpush1.xpose.msra.mxu0 0.0
        %5393 = vmatprep.subr.mxu0 0.0
        %5394 = vmatpush1.xpose.msra.mxu0 0.0
        %5395 = vmatprep.subr.mxu0 0.0
        %5396 = vmatpush1.xpose.msra.mxu0 0.0
        %5397 = vmatprep.subr.mxu0 0.0
        %5398 = vmatpush1.xpose.msra.mxu0 0.0
        %5399 = vmatprep.subr.mxu0 0.0
        %5400 = vmatpush1.xpose.msra.mxu0 0.0
        %5401 = vmatprep.subr.mxu0 0.0
        %5402 = vmatpush1.xpose.msra.mxu0 0.0
        %5403 = vmatprep.mubr.f32.mxu0 0.0
        %5404 = vmatmul.mubr.f32.gmra.mrb[0].mxu0 %v5335
        %v5405 = vpop.f32.mrb[0].mxu0
        %v5406 = vadd.f32 0.0, %v5405
        %v5407 = vpop.f32.mrb[0].mxu0
        %5408 = vdwg.mxu0
        %5409 = vrot.lane.b32.xlu0 %v727, 104
        %v5410 = vpop.permute.xlu0 %5409
        %5411 = vrot.lane.b32.xlu0 %v727, 72
        %v5412 = vpop.permute.xlu0 %5411
        %v5413 = vsel %vm752, %v5410, 0
        %v5415 = vsel %vm752, %v5412, 0
        %5417 = vmatprep.subr.mxu0 0.0
        %5418 = vmatpush1.xpose.msra.mxu0 %v5415
        %5419 = vmatprep.subr.mxu0 0.0
        %5420 = vmatpush1.xpose.msra.mxu0 0.0
        %5421 = vmatprep.subr.mxu0 0.0
        %5422 = vmatpush1.xpose.msra.mxu0 0.0
        %5423 = vmatprep.subr.mxu0 0.0
        %5424 = vmatpush1.xpose.msra.mxu0 0.0
        %5425 = vmatprep.subr.mxu0 0.0
        %5426 = vmatpush1.xpose.msra.mxu0 0.0
        %5427 = vmatprep.subr.mxu0 0.0
        %5428 = vmatpush1.xpose.msra.mxu0 0.0
        %5429 = vmatprep.subr.mxu0 0.0
        %5430 = vmatpush1.xpose.msra.mxu0 0.0
        %5431 = vmatprep.subr.mxu0 0.0
        %5432 = vmatpush1.xpose.msra.mxu0 0.0
        %5433 = vmatprep.subr.mxu0 0.0
        %5434 = vmatpush1.xpose.msra.mxu0 0.0
        %5435 = vmatprep.subr.mxu0 0.0
        %5436 = vmatpush1.xpose.msra.mxu0 0.0
        %5437 = vmatprep.subr.mxu0 0.0
        %5438 = vmatpush1.xpose.msra.mxu0 0.0
        %5439 = vmatprep.subr.mxu0 0.0
        %5440 = vmatpush1.xpose.msra.mxu0 0.0
        %5441 = vmatprep.subr.mxu0 0.0
        %5442 = vmatpush1.xpose.msra.mxu0 0.0
        %5443 = vmatprep.subr.mxu0 0.0
        %5444 = vmatpush1.xpose.msra.mxu0 0.0
        %5445 = vmatprep.subr.mxu0 0.0
        %5446 = vmatpush1.xpose.msra.mxu0 0.0
        %5447 = vmatprep.subr.mxu0 0.0
        %5448 = vmatpush1.xpose.msra.mxu0 0.0
        %5449 = vmatprep.subr.mxu0 0.0
        %5450 = vmatpush1.xpose.msra.mxu0 0.0
        %5451 = vmatprep.subr.mxu0 0.0
        %5452 = vmatpush1.xpose.msra.mxu0 0.0
        %5453 = vmatprep.subr.mxu0 0.0
        %5454 = vmatpush1.xpose.msra.mxu0 0.0
        %5455 = vmatprep.subr.mxu0 0.0
        %5456 = vmatpush1.xpose.msra.mxu0 0.0
        %5457 = vmatprep.subr.mxu0 0.0
        %5458 = vmatpush1.xpose.msra.mxu0 0.0
        %5459 = vmatprep.subr.mxu0 0.0
        %5460 = vmatpush1.xpose.msra.mxu0 0.0
        %5461 = vmatprep.subr.mxu0 0.0
        %5462 = vmatpush1.xpose.msra.mxu0 0.0
        %5463 = vmatprep.subr.mxu0 0.0
        %5464 = vmatpush1.xpose.msra.mxu0 0.0
        %5465 = vmatprep.subr.mxu0 0.0
        %5466 = vmatpush1.xpose.msra.mxu0 0.0
        %5467 = vmatprep.subr.mxu0 0.0
        %5468 = vmatpush1.xpose.msra.mxu0 0.0
        %5469 = vmatprep.subr.mxu0 0.0
        %5470 = vmatpush1.xpose.msra.mxu0 0.0
        %5471 = vmatprep.subr.mxu0 0.0
        %5472 = vmatpush1.xpose.msra.mxu0 0.0
        %5473 = vmatprep.subr.mxu0 0.0
        %5474 = vmatpush1.xpose.msra.mxu0 0.0
        %5475 = vmatprep.subr.mxu0 0.0
        %5476 = vmatpush1.xpose.msra.mxu0 0.0
        %5477 = vmatprep.subr.mxu0 0.0
        %5478 = vmatpush1.xpose.msra.mxu0 0.0
        %5479 = vmatprep.subr.mxu0 0.0
        %5480 = vmatpush1.xpose.msra.mxu0 0.0
        %5481 = vmatprep.mubr.f32.mxu0 0.0
        %5482 = vmatmul.mubr.f32.gmra.mrb[0].mxu0 %v5413
        %v5483 = vpop.f32.mrb[0].mxu0
        %v5484 = vadd.f32 0.0, %v5483
        %v5485 = vpop.f32.mrb[0].mxu0
        %5486 = vdwg.mxu0
        %5487 = vrot.lane.b32.xlu0 %v732, 104
        %v5488 = vpop.permute.xlu0 %5487
        %5489 = vrot.lane.b32.xlu0 %v732, 72
        %v5490 = vpop.permute.xlu0 %5489
        %v5491 = vsel %vm752, %v5488, 0
        %v5493 = vsel %vm752, %v5490, 0
        %5495 = vmatprep.subr.mxu0 0.0
        %5496 = vmatpush1.xpose.msra.mxu0 %v5493
        %5497 = vmatprep.subr.mxu0 0.0
        %5498 = vmatpush1.xpose.msra.mxu0 0.0
        %5499 = vmatprep.subr.mxu0 0.0
        %5500 = vmatpush1.xpose.msra.mxu0 0.0
        %5501 = vmatprep.subr.mxu0 0.0
        %5502 = vmatpush1.xpose.msra.mxu0 0.0
        %5503 = vmatprep.subr.mxu0 0.0
        %5504 = vmatpush1.xpose.msra.mxu0 0.0
        %5505 = vmatprep.subr.mxu0 0.0
        %5506 = vmatpush1.xpose.msra.mxu0 0.0
        %5507 = vmatprep.subr.mxu0 0.0
        %5508 = vmatpush1.xpose.msra.mxu0 0.0
        %5509 = vmatprep.subr.mxu0 0.0
        %5510 = vmatpush1.xpose.msra.mxu0 0.0
        %5511 = vmatprep.subr.mxu0 0.0
        %5512 = vmatpush1.xpose.msra.mxu0 0.0
        %5513 = vmatprep.subr.mxu0 0.0
        %5514 = vmatpush1.xpose.msra.mxu0 0.0
        %5515 = vmatprep.subr.mxu0 0.0
        %5516 = vmatpush1.xpose.msra.mxu0 0.0
        %5517 = vmatprep.subr.mxu0 0.0
        %5518 = vmatpush1.xpose.msra.mxu0 0.0
        %5519 = vmatprep.subr.mxu0 0.0
        %5520 = vmatpush1.xpose.msra.mxu0 0.0
        %5521 = vmatprep.subr.mxu0 0.0
        %5522 = vmatpush1.xpose.msra.mxu0 0.0
        %5523 = vmatprep.subr.mxu0 0.0
        %5524 = vmatpush1.xpose.msra.mxu0 0.0
        %5525 = vmatprep.subr.mxu0 0.0
        %5526 = vmatpush1.xpose.msra.mxu0 0.0
        %5527 = vmatprep.subr.mxu0 0.0
        %5528 = vmatpush1.xpose.msra.mxu0 0.0
        %5529 = vmatprep.subr.mxu0 0.0
        %5530 = vmatpush1.xpose.msra.mxu0 0.0
        %5531 = vmatprep.subr.mxu0 0.0
        %5532 = vmatpush1.xpose.msra.mxu0 0.0
        %5533 = vmatprep.subr.mxu0 0.0
        %5534 = vmatpush1.xpose.msra.mxu0 0.0
        %5535 = vmatprep.subr.mxu0 0.0
        %5536 = vmatpush1.xpose.msra.mxu0 0.0
        %5537 = vmatprep.subr.mxu0 0.0
        %5538 = vmatpush1.xpose.msra.mxu0 0.0
        %5539 = vmatprep.subr.mxu0 0.0
        %5540 = vmatpush1.xpose.msra.mxu0 0.0
        %5541 = vmatprep.subr.mxu0 0.0
        %5542 = vmatpush1.xpose.msra.mxu0 0.0
        %5543 = vmatprep.subr.mxu0 0.0
        %5544 = vmatpush1.xpose.msra.mxu0 0.0
        %5545 = vmatprep.subr.mxu0 0.0
        %5546 = vmatpush1.xpose.msra.mxu0 0.0
        %5547 = vmatprep.subr.mxu0 0.0
        %5548 = vmatpush1.xpose.msra.mxu0 0.0
        %5549 = vmatprep.subr.mxu0 0.0
        %5550 = vmatpush1.xpose.msra.mxu0 0.0
        %5551 = vmatprep.subr.mxu0 0.0
        %5552 = vmatpush1.xpose.msra.mxu0 0.0
        %5553 = vmatprep.subr.mxu0 0.0
        %5554 = vmatpush1.xpose.msra.mxu0 0.0
        %5555 = vmatprep.subr.mxu0 0.0
        %5556 = vmatpush1.xpose.msra.mxu0 0.0
        %5557 = vmatprep.subr.mxu0 0.0
        %5558 = vmatpush1.xpose.msra.mxu0 0.0
        %5559 = vmatprep.mubr.f32.mxu0 0.0
        %5560 = vmatmul.mubr.f32.gmra.mrb[0].mxu0 %v5491
        %v5561 = vpop.f32.mrb[0].mxu0
        %v5562 = vadd.f32 0.0, %v5561
        %v5563 = vpop.f32.mrb[0].mxu0
        %5564 = vdwg.mxu0
        %5565 = vrot.lane.b32.xlu0 %v737, 104
        %v5566 = vpop.permute.xlu0 %5565
        %5567 = vrot.lane.b32.xlu0 %v737, 72
        %v5568 = vpop.permute.xlu0 %5567
        %v5569 = vsel %vm752, %v5566, 0
        %v5571 = vsel %vm752, %v5568, 0
        %5573 = vmatprep.subr.mxu0 0.0
        %5574 = vmatpush1.xpose.msra.mxu0 %v5571
        %5575 = vmatprep.subr.mxu0 0.0
        %5576 = vmatpush1.xpose.msra.mxu0 0.0
        %5577 = vmatprep.subr.mxu0 0.0
        %5578 = vmatpush1.xpose.msra.mxu0 0.0
        %5579 = vmatprep.subr.mxu0 0.0
        %5580 = vmatpush1.xpose.msra.mxu0 0.0
        %5581 = vmatprep.subr.mxu0 0.0
        %5582 = vmatpush1.xpose.msra.mxu0 0.0
        %5583 = vmatprep.subr.mxu0 0.0
        %5584 = vmatpush1.xpose.msra.mxu0 0.0
        %5585 = vmatprep.subr.mxu0 0.0
        %5586 = vmatpush1.xpose.msra.mxu0 0.0
        %5587 = vmatprep.subr.mxu0 0.0
        %5588 = vmatpush1.xpose.msra.mxu0 0.0
        %5589 = vmatprep.subr.mxu0 0.0
        %5590 = vmatpush1.xpose.msra.mxu0 0.0
        %5591 = vmatprep.subr.mxu0 0.0
        %5592 = vmatpush1.xpose.msra.mxu0 0.0
        %5593 = vmatprep.subr.mxu0 0.0
        %5594 = vmatpush1.xpose.msra.mxu0 0.0
        %5595 = vmatprep.subr.mxu0 0.0
        %5596 = vmatpush1.xpose.msra.mxu0 0.0
        %5597 = vmatprep.subr.mxu0 0.0
        %5598 = vmatpush1.xpose.msra.mxu0 0.0
        %5599 = vmatprep.subr.mxu0 0.0
        %5600 = vmatpush1.xpose.msra.mxu0 0.0
        %5601 = vmatprep.subr.mxu0 0.0
        %5602 = vmatpush1.xpose.msra.mxu0 0.0
        %5603 = vmatprep.subr.mxu0 0.0
        %5604 = vmatpush1.xpose.msra.mxu0 0.0
        %5605 = vmatprep.subr.mxu0 0.0
        %5606 = vmatpush1.xpose.msra.mxu0 0.0
        %5607 = vmatprep.subr.mxu0 0.0
        %5608 = vmatpush1.xpose.msra.mxu0 0.0
        %5609 = vmatprep.subr.mxu0 0.0
        %5610 = vmatpush1.xpose.msra.mxu0 0.0
        %5611 = vmatprep.subr.mxu0 0.0
        %5612 = vmatpush1.xpose.msra.mxu0 0.0
        %5613 = vmatprep.subr.mxu0 0.0
        %5614 = vmatpush1.xpose.msra.mxu0 0.0
        %5615 = vmatprep.subr.mxu0 0.0
        %5616 = vmatpush1.xpose.msra.mxu0 0.0
        %5617 = vmatprep.subr.mxu0 0.0
        %5618 = vmatpush1.xpose.msra.mxu0 0.0
        %5619 = vmatprep.subr.mxu0 0.0
        %5620 = vmatpush1.xpose.msra.mxu0 0.0
        %5621 = vmatprep.subr.mxu0 0.0
        %5622 = vmatpush1.xpose.msra.mxu0 0.0
        %5623 = vmatprep.subr.mxu0 0.0
        %5624 = vmatpush1.xpose.msra.mxu0 0.0
        %5625 = vmatprep.subr.mxu0 0.0
        %5626 = vmatpush1.xpose.msra.mxu0 0.0
        %5627 = vmatprep.subr.mxu0 0.0
        %5628 = vmatpush1.xpose.msra.mxu0 0.0
        %5629 = vmatprep.subr.mxu0 0.0
        %5630 = vmatpush1.xpose.msra.mxu0 0.0
        %5631 = vmatprep.subr.mxu0 0.0
        %5632 = vmatpush1.xpose.msra.mxu0 0.0
        %5633 = vmatprep.subr.mxu0 0.0
        %5634 = vmatpush1.xpose.msra.mxu0 0.0
        %5635 = vmatprep.subr.mxu0 0.0
        %5636 = vmatpush1.xpose.msra.mxu0 0.0
        %5637 = vmatprep.mubr.f32.mxu0 0.0
        %5638 = vmatmul.mubr.f32.gmra.mrb[0].mxu0 %v5569
        %v5639 = vpop.f32.mrb[0].mxu0
        %v5640 = vadd.f32 0.0, %v5639
        %v5641 = vpop.f32.mrb[0].mxu0
        %5642 = vdwg.mxu0
        %5643 = vrot.lane.b32.xlu0 %v742, 104
        %v5644 = vpop.permute.xlu0 %5643
        %5645 = vrot.lane.b32.xlu0 %v742, 72
        %v5646 = vpop.permute.xlu0 %5645
        %v5647 = vsel %vm752, %v5644, 0
        %v5649 = vsel %vm752, %v5646, 0
        %5651 = vmatprep.subr.mxu0 0.0
        %5652 = vmatpush1.xpose.msra.mxu0 %v5649
        %5653 = vmatprep.subr.mxu0 0.0
        %5654 = vmatpush1.xpose.msra.mxu0 0.0
        %5655 = vmatprep.subr.mxu0 0.0
        %5656 = vmatpush1.xpose.msra.mxu0 0.0
        %5657 = vmatprep.subr.mxu0 0.0
        %5658 = vmatpush1.xpose.msra.mxu0 0.0
        %5659 = vmatprep.subr.mxu0 0.0
        %5660 = vmatpush1.xpose.msra.mxu0 0.0
        %5661 = vmatprep.subr.mxu0 0.0
        %5662 = vmatpush1.xpose.msra.mxu0 0.0
        %5663 = vmatprep.subr.mxu0 0.0
        %5664 = vmatpush1.xpose.msra.mxu0 0.0
        %5665 = vmatprep.subr.mxu0 0.0
        %5666 = vmatpush1.xpose.msra.mxu0 0.0
        %5667 = vmatprep.subr.mxu0 0.0
        %5668 = vmatpush1.xpose.msra.mxu0 0.0
        %5669 = vmatprep.subr.mxu0 0.0
        %5670 = vmatpush1.xpose.msra.mxu0 0.0
        %5671 = vmatprep.subr.mxu0 0.0
        %5672 = vmatpush1.xpose.msra.mxu0 0.0
        %5673 = vmatprep.subr.mxu0 0.0
        %5674 = vmatpush1.xpose.msra.mxu0 0.0
        %5675 = vmatprep.subr.mxu0 0.0
        %5676 = vmatpush1.xpose.msra.mxu0 0.0
        %5677 = vmatprep.subr.mxu0 0.0
        %5678 = vmatpush1.xpose.msra.mxu0 0.0
        %5679 = vmatprep.subr.mxu0 0.0
        %5680 = vmatpush1.xpose.msra.mxu0 0.0
        %5681 = vmatprep.subr.mxu0 0.0
        %5682 = vmatpush1.xpose.msra.mxu0 0.0
        %5683 = vmatprep.subr.mxu0 0.0
        %5684 = vmatpush1.xpose.msra.mxu0 0.0
        %5685 = vmatprep.subr.mxu0 0.0
        %5686 = vmatpush1.xpose.msra.mxu0 0.0
        %5687 = vmatprep.subr.mxu0 0.0
        %5688 = vmatpush1.xpose.msra.mxu0 0.0
        %5689 = vmatprep.subr.mxu0 0.0
        %5690 = vmatpush1.xpose.msra.mxu0 0.0
        %5691 = vmatprep.subr.mxu0 0.0
        %5692 = vmatpush1.xpose.msra.mxu0 0.0
        %5693 = vmatprep.subr.mxu0 0.0
        %5694 = vmatpush1.xpose.msra.mxu0 0.0
        %5695 = vmatprep.subr.mxu0 0.0
        %5696 = vmatpush1.xpose.msra.mxu0 0.0
        %5697 = vmatprep.subr.mxu0 0.0
        %5698 = vmatpush1.xpose.msra.mxu0 0.0
        %5699 = vmatprep.subr.mxu0 0.0
        %5700 = vmatpush1.xpose.msra.mxu0 0.0
        %5701 = vmatprep.subr.mxu0 0.0
        %5702 = vmatpush1.xpose.msra.mxu0 0.0
        %5703 = vmatprep.subr.mxu0 0.0
        %5704 = vmatpush1.xpose.msra.mxu0 0.0
        %5705 = vmatprep.subr.mxu0 0.0
        %5706 = vmatpush1.xpose.msra.mxu0 0.0
        %5707 = vmatprep.subr.mxu0 0.0
        %5708 = vmatpush1.xpose.msra.mxu0 0.0
        %5709 = vmatprep.subr.mxu0 0.0
        %5710 = vmatpush1.xpose.msra.mxu0 0.0
        %5711 = vmatprep.subr.mxu0 0.0
        %5712 = vmatpush1.xpose.msra.mxu0 0.0
        %5713 = vmatprep.subr.mxu0 0.0
        %5714 = vmatpush1.xpose.msra.mxu0 0.0
        %5715 = vmatprep.mubr.f32.mxu0 0.0
        %5716 = vmatmul.mubr.f32.gmra.mrb[0].mxu0 %v5647
        %v5717 = vpop.f32.mrb[0].mxu0
        %v5718 = vadd.f32 0.0, %v5717
        %v5719 = vpop.f32.mrb[0].mxu0
        %5720 = vdwg.mxu0
        %v5721 = vsel %vm752, %v5172, -inf
        %5722 = vmax.xlane.f32.xlu0 %v5721
        %v5723 = vpop.xlane.xlu0 %5722
        %v5724 = vsel %vm752, %v5250, -inf
        %5725 = vmax.xlane.f32.xlu0 %v5724
        %v5726 = vpop.xlane.xlu0 %5725
        %v5727 = vsel %vm752, %v5328, -inf
        %5728 = vmax.xlane.f32.xlu0 %v5727
        %v5729 = vpop.xlane.xlu0 %5728
        %v5730 = vsel %vm752, %v5406, -inf
        %5731 = vmax.xlane.f32.xlu0 %v5730
        %v5732 = vpop.xlane.xlu0 %5731
        %v5733 = vsel %vm752, %v5484, -inf
        %5734 = vmax.xlane.f32.xlu0 %v5733
        %v5735 = vpop.xlane.xlu0 %5734
        %v5736 = vsel %vm752, %v5562, -inf
        %5737 = vmax.xlane.f32.xlu0 %v5736
        %v5738 = vpop.xlane.xlu0 %5737
        %v5739 = vsel %vm752, %v5640, -inf
        %5740 = vmax.xlane.f32.xlu0 %v5739
        %v5741 = vpop.xlane.xlu0 %5740
        %v5742 = vsel %vm752, %v5718, -inf
        %5743 = vmax.xlane.f32.xlu0 %v5742
        %v5744 = vpop.xlane.xlu0 %5743
        %v5745 = vsub.f32 %v5172, %v5723
        %v5746 = vsub.f32 %v5250, %v5726
        %v5747 = vsub.f32 %v5328, %v5729
        %v5748 = vsub.f32 %v5406, %v5732
        %v5749 = vsub.f32 %v5484, %v5735
        %v5750 = vsub.f32 %v5562, %v5738
        %v5751 = vsub.f32 %v5640, %v5741
        %v5752 = vsub.f32 %v5718, %v5744
        %v5753 = vmul.f32 %v5745, 1.442695
        %v5754 = vpow.pop %v5753
        %v5755 = vmul.f32 %v5746, 1.442695
        %v5756 = vpow.pop %v5755
        %v5757 = vmul.f32 %v5747, 1.442695
        %v5758 = vpow.pop %v5757
        %v5759 = vmul.f32 %v5748, 1.442695
        %v5760 = vpow.pop %v5759
        %v5761 = vmul.f32 %v5749, 1.442695
        %v5762 = vpow.pop %v5761
        %v5763 = vmul.f32 %v5750, 1.442695
        %v5764 = vpow.pop %v5763
        %v5765 = vmul.f32 %v5751, 1.442695
        %v5766 = vpow.pop %v5765
        %v5767 = vmul.f32 %v5752, 1.442695
        %v5768 = vpow.pop %v5767
        %v5769 = vsel %vm752, %v5754, 0.0
        %5770 = vadd.xlane.f32.xlu0 %v5769
        %v5771 = vpop.xlane.xlu0 %5770
        %v5772 = vsel %vm752, %v5756, 0.0
        %5773 = vadd.xlane.f32.xlu0 %v5772
        %v5774 = vpop.xlane.xlu0 %5773
        %v5775 = vsel %vm752, %v5758, 0.0
        %5776 = vadd.xlane.f32.xlu0 %v5775
        %v5777 = vpop.xlane.xlu0 %5776
        %v5778 = vsel %vm752, %v5760, 0.0
        %5779 = vadd.xlane.f32.xlu0 %v5778
        %v5780 = vpop.xlane.xlu0 %5779
        %v5781 = vsel %vm752, %v5762, 0.0
        %5782 = vadd.xlane.f32.xlu0 %v5781
        %v5783 = vpop.xlane.xlu0 %5782
        %v5784 = vsel %vm752, %v5764, 0.0
        %5785 = vadd.xlane.f32.xlu0 %v5784
        %v5786 = vpop.xlane.xlu0 %5785
        %v5787 = vsel %vm752, %v5766, 0.0
        %5788 = vadd.xlane.f32.xlu0 %v5787
        %v5789 = vpop.xlane.xlu0 %5788
        %v5790 = vsel %vm752, %v5768, 0.0
        %5791 = vadd.xlane.f32.xlu0 %v5790
        %v5792 = vpop.xlane.xlu0 %5791
        %v5793 = vrcp.pop %v5771
        %v5794 = vrcp.pop %v5774
        %v5795 = vrcp.pop %v5777
        %v5796 = vrcp.pop %v5780
        %v5797 = vrcp.pop %v5783
        %v5798 = vrcp.pop %v5786
        %v5799 = vrcp.pop %v5789
        %v5800 = vrcp.pop %v5792
        %v5801 = vmul.f32 %v5754, %v5793
        %v5802 = vmul.f32 %v5756, %v5794
        %v5803 = vmul.f32 %v5758, %v5795
        %v5804 = vmul.f32 %v5760, %v5796
        %v5805 = vmul.f32 %v5762, %v5797
        %v5806 = vmul.f32 %v5764, %v5798
        %v5807 = vmul.f32 %v5766, %v5799
        %v5808 = vmul.f32 %v5768, %v5800
        %5809 = vrot.lane.b32.xlu0 %v707, 40
        %v5810 = vpop.permute.xlu0 %5809
        %v5813 = vsel %vm752, %v5801, 0
        %5815 = vmatprep.subr.mxu0 0.0
        %5816 = vmatpush1.msra.mxu0 %v5810
        %5817 = vmatprep.subr.mxu0 0.0
        %5818 = vmatpush1.msra.mxu0 0.0
        %5819 = vmatprep.subr.mxu0 0.0
        %5820 = vmatpush1.msra.mxu0 0.0
        %5821 = vmatprep.subr.mxu0 0.0
        %5822 = vmatpush1.msra.mxu0 0.0
        %5823 = vmatprep.subr.mxu0 0.0
        %5824 = vmatpush1.msra.mxu0 0.0
        %5825 = vmatprep.subr.mxu0 0.0
        %5826 = vmatpush1.msra.mxu0 0.0
        %5827 = vmatprep.subr.mxu0 0.0
        %5828 = vmatpush1.msra.mxu0 0.0
        %5829 = vmatprep.subr.mxu0 0.0
        %5830 = vmatpush1.msra.mxu0 0.0
        %5831 = vmatprep.subr.mxu0 0.0
        %5832 = vmatpush1.msra.mxu0 0.0
        %5833 = vmatprep.subr.mxu0 0.0
        %5834 = vmatpush1.msra.mxu0 0.0
        %5835 = vmatprep.subr.mxu0 0.0
        %5836 = vmatpush1.msra.mxu0 0.0
        %5837 = vmatprep.subr.mxu0 0.0
        %5838 = vmatpush1.msra.mxu0 0.0
        %5839 = vmatprep.subr.mxu0 0.0
        %5840 = vmatpush1.msra.mxu0 0.0
        %5841 = vmatprep.subr.mxu0 0.0
        %5842 = vmatpush1.msra.mxu0 0.0
        %5843 = vmatprep.subr.mxu0 0.0
        %5844 = vmatpush1.msra.mxu0 0.0
        %5845 = vmatprep.subr.mxu0 0.0
        %5846 = vmatpush1.msra.mxu0 0.0
        %5847 = vmatprep.subr.mxu0 0.0
        %5848 = vmatpush1.msra.mxu0 0.0
        %5849 = vmatprep.subr.mxu0 0.0
        %5850 = vmatpush1.msra.mxu0 0.0
        %5851 = vmatprep.subr.mxu0 0.0
        %5852 = vmatpush1.msra.mxu0 0.0
        %5853 = vmatprep.subr.mxu0 0.0
        %5854 = vmatpush1.msra.mxu0 0.0
        %5855 = vmatprep.subr.mxu0 0.0
        %5856 = vmatpush1.msra.mxu0 0.0
        %5857 = vmatprep.subr.mxu0 0.0
        %5858 = vmatpush1.msra.mxu0 0.0
        %5859 = vmatprep.subr.mxu0 0.0
        %5860 = vmatpush1.msra.mxu0 0.0
        %5861 = vmatprep.subr.mxu0 0.0
        %5862 = vmatpush1.msra.mxu0 0.0
        %5863 = vmatprep.subr.mxu0 0.0
        %5864 = vmatpush1.msra.mxu0 0.0
        %5865 = vmatprep.subr.mxu0 0.0
        %5866 = vmatpush1.msra.mxu0 0.0
        %5867 = vmatprep.subr.mxu0 0.0
        %5868 = vmatpush1.msra.mxu0 0.0
        %5869 = vmatprep.subr.mxu0 0.0
        %5870 = vmatpush1.msra.mxu0 0.0
        %5871 = vmatprep.subr.mxu0 0.0
        %5872 = vmatpush1.msra.mxu0 0.0
        %5873 = vmatprep.subr.mxu0 0.0
        %5874 = vmatpush1.msra.mxu0 0.0
        %5875 = vmatprep.subr.mxu0 0.0
        %5876 = vmatpush1.msra.mxu0 0.0
        %5877 = vmatprep.subr.mxu0 0.0
        %5878 = vmatpush1.msra.mxu0 0.0
        %5879 = vmatprep.mubr.f32.mxu0 0.0
        %5880 = vmatmul.mubr.f32.gmra.mrb[0].mxu0 %v5813
        %v5881 = vpop.f32.mrb[0].mxu0
        %v5882 = vadd.f32 0.0, %v5881
        %v5883 = vpop.f32.mrb[0].mxu0
        %5884 = vdwg.mxu0
        %5885 = vrot.lane.b32.xlu0 %v712, 40
        %v5886 = vpop.permute.xlu0 %5885
        %v5889 = vsel %vm752, %v5802, 0
        %5891 = vmatprep.subr.mxu0 0.0
        %5892 = vmatpush1.msra.mxu0 %v5886
        %5893 = vmatprep.subr.mxu0 0.0
        %5894 = vmatpush1.msra.mxu0 0.0
        %5895 = vmatprep.subr.mxu0 0.0
        %5896 = vmatpush1.msra.mxu0 0.0
        %5897 = vmatprep.subr.mxu0 0.0
        %5898 = vmatpush1.msra.mxu0 0.0
        %5899 = vmatprep.subr.mxu0 0.0
        %5900 = vmatpush1.msra.mxu0 0.0
        %5901 = vmatprep.subr.mxu0 0.0
        %5902 = vmatpush1.msra.mxu0 0.0
        %5903 = vmatprep.subr.mxu0 0.0
        %5904 = vmatpush1.msra.mxu0 0.0
        %5905 = vmatprep.subr.mxu0 0.0
        %5906 = vmatpush1.msra.mxu0 0.0
        %5907 = vmatprep.subr.mxu0 0.0
        %5908 = vmatpush1.msra.mxu0 0.0
        %5909 = vmatprep.subr.mxu0 0.0
        %5910 = vmatpush1.msra.mxu0 0.0
        %5911 = vmatprep.subr.mxu0 0.0
        %5912 = vmatpush1.msra.mxu0 0.0
        %5913 = vmatprep.subr.mxu0 0.0
        %5914 = vmatpush1.msra.mxu0 0.0
        %5915 = vmatprep.subr.mxu0 0.0
        %5916 = vmatpush1.msra.mxu0 0.0
        %5917 = vmatprep.subr.mxu0 0.0
        %5918 = vmatpush1.msra.mxu0 0.0
        %5919 = vmatprep.subr.mxu0 0.0
        %5920 = vmatpush1.msra.mxu0 0.0
        %5921 = vmatprep.subr.mxu0 0.0
        %5922 = vmatpush1.msra.mxu0 0.0
        %5923 = vmatprep.subr.mxu0 0.0
        %5924 = vmatpush1.msra.mxu0 0.0
        %5925 = vmatprep.subr.mxu0 0.0
        %5926 = vmatpush1.msra.mxu0 0.0
        %5927 = vmatprep.subr.mxu0 0.0
        %5928 = vmatpush1.msra.mxu0 0.0
        %5929 = vmatprep.subr.mxu0 0.0
        %5930 = vmatpush1.msra.mxu0 0.0
        %5931 = vmatprep.subr.mxu0 0.0
        %5932 = vmatpush1.msra.mxu0 0.0
        %5933 = vmatprep.subr.mxu0 0.0
        %5934 = vmatpush1.msra.mxu0 0.0
        %5935 = vmatprep.subr.mxu0 0.0
        %5936 = vmatpush1.msra.mxu0 0.0
        %5937 = vmatprep.subr.mxu0 0.0
        %5938 = vmatpush1.msra.mxu0 0.0
        %5939 = vmatprep.subr.mxu0 0.0
        %5940 = vmatpush1.msra.mxu0 0.0
        %5941 = vmatprep.subr.mxu0 0.0
        %5942 = vmatpush1.msra.mxu0 0.0
        %5943 = vmatprep.subr.mxu0 0.0
        %5944 = vmatpush1.msra.mxu0 0.0
        %5945 = vmatprep.subr.mxu0 0.0
        %5946 = vmatpush1.msra.mxu0 0.0
        %5947 = vmatprep.subr.mxu0 0.0
        %5948 = vmatpush1.msra.mxu0 0.0
        %5949 = vmatprep.subr.mxu0 0.0
        %5950 = vmatpush1.msra.mxu0 0.0
        %5951 = vmatprep.subr.mxu0 0.0
        %5952 = vmatpush1.msra.mxu0 0.0
        %5953 = vmatprep.subr.mxu0 0.0
        %5954 = vmatpush1.msra.mxu0 0.0
        %5955 = vmatprep.mubr.f32.mxu0 0.0
        %5956 = vmatmul.mubr.f32.gmra.mrb[0].mxu0 %v5889
        %v5957 = vpop.f32.mrb[0].mxu0
        %v5958 = vadd.f32 0.0, %v5957
        %v5959 = vpop.f32.mrb[0].mxu0
        %5960 = vdwg.mxu0
        %5961 = vrot.lane.b32.xlu0 %v717, 40
        %v5962 = vpop.permute.xlu0 %5961
        %v5965 = vsel %vm752, %v5803, 0
        %5967 = vmatprep.subr.mxu0 0.0
        %5968 = vmatpush1.msra.mxu0 %v5962
        %5969 = vmatprep.subr.mxu0 0.0
        %5970 = vmatpush1.msra.mxu0 0.0
        %5971 = vmatprep.subr.mxu0 0.0
        %5972 = vmatpush1.msra.mxu0 0.0
        %5973 = vmatprep.subr.mxu0 0.0
        %5974 = vmatpush1.msra.mxu0 0.0
        %5975 = vmatprep.subr.mxu0 0.0
        %5976 = vmatpush1.msra.mxu0 0.0
        %5977 = vmatprep.subr.mxu0 0.0
        %5978 = vmatpush1.msra.mxu0 0.0
        %5979 = vmatprep.subr.mxu0 0.0
        %5980 = vmatpush1.msra.mxu0 0.0
        %5981 = vmatprep.subr.mxu0 0.0
        %5982 = vmatpush1.msra.mxu0 0.0
        %5983 = vmatprep.subr.mxu0 0.0
        %5984 = vmatpush1.msra.mxu0 0.0
        %5985 = vmatprep.subr.mxu0 0.0
        %5986 = vmatpush1.msra.mxu0 0.0
        %5987 = vmatprep.subr.mxu0 0.0
        %5988 = vmatpush1.msra.mxu0 0.0
        %5989 = vmatprep.subr.mxu0 0.0
        %5990 = vmatpush1.msra.mxu0 0.0
        %5991 = vmatprep.subr.mxu0 0.0
        %5992 = vmatpush1.msra.mxu0 0.0
        %5993 = vmatprep.subr.mxu0 0.0
        %5994 = vmatpush1.msra.mxu0 0.0
        %5995 = vmatprep.subr.mxu0 0.0
        %5996 = vmatpush1.msra.mxu0 0.0
        %5997 = vmatprep.subr.mxu0 0.0
        %5998 = vmatpush1.msra.mxu0 0.0
        %5999 = vmatprep.subr.mxu0 0.0
        %6000 = vmatpush1.msra.mxu0 0.0
        %6001 = vmatprep.subr.mxu0 0.0
        %6002 = vmatpush1.msra.mxu0 0.0
        %6003 = vmatprep.subr.mxu0 0.0
        %6004 = vmatpush1.msra.mxu0 0.0
        %6005 = vmatprep.subr.mxu0 0.0
        %6006 = vmatpush1.msra.mxu0 0.0
        %6007 = vmatprep.subr.mxu0 0.0
        %6008 = vmatpush1.msra.mxu0 0.0
        %6009 = vmatprep.subr.mxu0 0.0
        %6010 = vmatpush1.msra.mxu0 0.0
        %6011 = vmatprep.subr.mxu0 0.0
        %6012 = vmatpush1.msra.mxu0 0.0
        %6013 = vmatprep.subr.mxu0 0.0
        %6014 = vmatpush1.msra.mxu0 0.0
        %6015 = vmatprep.subr.mxu0 0.0
        %6016 = vmatpush1.msra.mxu0 0.0
        %6017 = vmatprep.subr.mxu0 0.0
        %6018 = vmatpush1.msra.mxu0 0.0
        %6019 = vmatprep.subr.mxu0 0.0
        %6020 = vmatpush1.msra.mxu0 0.0
        %6021 = vmatprep.subr.mxu0 0.0
        %6022 = vmatpush1.msra.mxu0 0.0
        %6023 = vmatprep.subr.mxu0 0.0
        %6024 = vmatpush1.msra.mxu0 0.0
        %6025 = vmatprep.subr.mxu0 0.0
        %6026 = vmatpush1.msra.mxu0 0.0
        %6027 = vmatprep.subr.mxu0 0.0
        %6028 = vmatpush1.msra.mxu0 0.0
        %6029 = vmatprep.subr.mxu0 0.0
        %6030 = vmatpush1.msra.mxu0 0.0
        %6031 = vmatprep.mubr.f32.mxu0 0.0
        %6032 = vmatmul.mubr.f32.gmra.mrb[0].mxu0 %v5965
        %v6033 = vpop.f32.mrb[0].mxu0
        %v6034 = vadd.f32 0.0, %v6033
        %v6035 = vpop.f32.mrb[0].mxu0
        %6036 = vdwg.mxu0
        %6037 = vrot.lane.b32.xlu0 %v722, 40
        %v6038 = vpop.permute.xlu0 %6037
        %v6041 = vsel %vm752, %v5804, 0
        %6043 = vmatprep.subr.mxu0 0.0
        %6044 = vmatpush1.msra.mxu0 %v6038
        %6045 = vmatprep.subr.mxu0 0.0
        %6046 = vmatpush1.msra.mxu0 0.0
        %6047 = vmatprep.subr.mxu0 0.0
        %6048 = vmatpush1.msra.mxu0 0.0
        %6049 = vmatprep.subr.mxu0 0.0
        %6050 = vmatpush1.msra.mxu0 0.0
        %6051 = vmatprep.subr.mxu0 0.0
        %6052 = vmatpush1.msra.mxu0 0.0
        %6053 = vmatprep.subr.mxu0 0.0
        %6054 = vmatpush1.msra.mxu0 0.0
        %6055 = vmatprep.subr.mxu0 0.0
        %6056 = vmatpush1.msra.mxu0 0.0
        %6057 = vmatprep.subr.mxu0 0.0
        %6058 = vmatpush1.msra.mxu0 0.0
        %6059 = vmatprep.subr.mxu0 0.0
        %6060 = vmatpush1.msra.mxu0 0.0
        %6061 = vmatprep.subr.mxu0 0.0
        %6062 = vmatpush1.msra.mxu0 0.0
        %6063 = vmatprep.subr.mxu0 0.0
        %6064 = vmatpush1.msra.mxu0 0.0
        %6065 = vmatprep.subr.mxu0 0.0
        %6066 = vmatpush1.msra.mxu0 0.0
        %6067 = vmatprep.subr.mxu0 0.0
        %6068 = vmatpush1.msra.mxu0 0.0
        %6069 = vmatprep.subr.mxu0 0.0
        %6070 = vmatpush1.msra.mxu0 0.0
        %6071 = vmatprep.subr.mxu0 0.0
        %6072 = vmatpush1.msra.mxu0 0.0
        %6073 = vmatprep.subr.mxu0 0.0
        %6074 = vmatpush1.msra.mxu0 0.0
        %6075 = vmatprep.subr.mxu0 0.0
        %6076 = vmatpush1.msra.mxu0 0.0
        %6077 = vmatprep.subr.mxu0 0.0
        %6078 = vmatpush1.msra.mxu0 0.0
        %6079 = vmatprep.subr.mxu0 0.0
        %6080 = vmatpush1.msra.mxu0 0.0
        %6081 = vmatprep.subr.mxu0 0.0
        %6082 = vmatpush1.msra.mxu0 0.0
        %6083 = vmatprep.subr.mxu0 0.0
        %6084 = vmatpush1.msra.mxu0 0.0
        %6085 = vmatprep.subr.mxu0 0.0
        %6086 = vmatpush1.msra.mxu0 0.0
        %6087 = vmatprep.subr.mxu0 0.0
        %6088 = vmatpush1.msra.mxu0 0.0
        %6089 = vmatprep.subr.mxu0 0.0
        %6090 = vmatpush1.msra.mxu0 0.0
        %6091 = vmatprep.subr.mxu0 0.0
        %6092 = vmatpush1.msra.mxu0 0.0
        %6093 = vmatprep.subr.mxu0 0.0
        %6094 = vmatpush1.msra.mxu0 0.0
        %6095 = vmatprep.subr.mxu0 0.0
        %6096 = vmatpush1.msra.mxu0 0.0
        %6097 = vmatprep.subr.mxu0 0.0
        %6098 = vmatpush1.msra.mxu0 0.0
        %6099 = vmatprep.subr.mxu0 0.0
        %6100 = vmatpush1.msra.mxu0 0.0
        %6101 = vmatprep.subr.mxu0 0.0
        %6102 = vmatpush1.msra.mxu0 0.0
        %6103 = vmatprep.subr.mxu0 0.0
        %6104 = vmatpush1.msra.mxu0 0.0
        %6105 = vmatprep.subr.mxu0 0.0
        %6106 = vmatpush1.msra.mxu0 0.0
        %6107 = vmatprep.mubr.f32.mxu0 0.0
        %6108 = vmatmul.mubr.f32.gmra.mrb[0].mxu0 %v6041
        %v6109 = vpop.f32.mrb[0].mxu0
        %v6110 = vadd.f32 0.0, %v6109
        %v6111 = vpop.f32.mrb[0].mxu0
        %6112 = vdwg.mxu0
        %6113 = vrot.lane.b32.xlu0 %v727, 40
        %v6114 = vpop.permute.xlu0 %6113
        %v6117 = vsel %vm752, %v5805, 0
        %6119 = vmatprep.subr.mxu0 0.0
        %6120 = vmatpush1.msra.mxu0 %v6114
        %6121 = vmatprep.subr.mxu0 0.0
        %6122 = vmatpush1.msra.mxu0 0.0
        %6123 = vmatprep.subr.mxu0 0.0
        %6124 = vmatpush1.msra.mxu0 0.0
        %6125 = vmatprep.subr.mxu0 0.0
        %6126 = vmatpush1.msra.mxu0 0.0
        %6127 = vmatprep.subr.mxu0 0.0
        %6128 = vmatpush1.msra.mxu0 0.0
        %6129 = vmatprep.subr.mxu0 0.0
        %6130 = vmatpush1.msra.mxu0 0.0
        %6131 = vmatprep.subr.mxu0 0.0
        %6132 = vmatpush1.msra.mxu0 0.0
        %6133 = vmatprep.subr.mxu0 0.0
        %6134 = vmatpush1.msra.mxu0 0.0
        %6135 = vmatprep.subr.mxu0 0.0
        %6136 = vmatpush1.msra.mxu0 0.0
        %6137 = vmatprep.subr.mxu0 0.0
        %6138 = vmatpush1.msra.mxu0 0.0
        %6139 = vmatprep.subr.mxu0 0.0
        %6140 = vmatpush1.msra.mxu0 0.0
        %6141 = vmatprep.subr.mxu0 0.0
        %6142 = vmatpush1.msra.mxu0 0.0
        %6143 = vmatprep.subr.mxu0 0.0
        %6144 = vmatpush1.msra.mxu0 0.0
        %6145 = vmatprep.subr.mxu0 0.0
        %6146 = vmatpush1.msra.mxu0 0.0
        %6147 = vmatprep.subr.mxu0 0.0
        %6148 = vmatpush1.msra.mxu0 0.0
        %6149 = vmatprep.subr.mxu0 0.0
        %6150 = vmatpush1.msra.mxu0 0.0
        %6151 = vmatprep.subr.mxu0 0.0
        %6152 = vmatpush1.msra.mxu0 0.0
        %6153 = vmatprep.subr.mxu0 0.0
        %6154 = vmatpush1.msra.mxu0 0.0
        %6155 = vmatprep.subr.mxu0 0.0
        %6156 = vmatpush1.msra.mxu0 0.0
        %6157 = vmatprep.subr.mxu0 0.0
        %6158 = vmatpush1.msra.mxu0 0.0
        %6159 = vmatprep.subr.mxu0 0.0
        %6160 = vmatpush1.msra.mxu0 0.0
        %6161 = vmatprep.subr.mxu0 0.0
        %6162 = vmatpush1.msra.mxu0 0.0
        %6163 = vmatprep.subr.mxu0 0.0
        %6164 = vmatpush1.msra.mxu0 0.0
        %6165 = vmatprep.subr.mxu0 0.0
        %6166 = vmatpush1.msra.mxu0 0.0
        %6167 = vmatprep.subr.mxu0 0.0
        %6168 = vmatpush1.msra.mxu0 0.0
        %6169 = vmatprep.subr.mxu0 0.0
        %6170 = vmatpush1.msra.mxu0 0.0
        %6171 = vmatprep.subr.mxu0 0.0
        %6172 = vmatpush1.msra.mxu0 0.0
        %6173 = vmatprep.subr.mxu0 0.0
        %6174 = vmatpush1.msra.mxu0 0.0
        %6175 = vmatprep.subr.mxu0 0.0
        %6176 = vmatpush1.msra.mxu0 0.0
        %6177 = vmatprep.subr.mxu0 0.0
        %6178 = vmatpush1.msra.mxu0 0.0
        %6179 = vmatprep.subr.mxu0 0.0
        %6180 = vmatpush1.msra.mxu0 0.0
        %6181 = vmatprep.subr.mxu0 0.0
        %6182 = vmatpush1.msra.mxu0 0.0
        %6183 = vmatprep.mubr.f32.mxu0 0.0
        %6184 = vmatmul.mubr.f32.gmra.mrb[0].mxu0 %v6117
        %v6185 = vpop.f32.mrb[0].mxu0
        %v6186 = vadd.f32 0.0, %v6185
        %v6187 = vpop.f32.mrb[0].mxu0
        %6188 = vdwg.mxu0
        %6189 = vrot.lane.b32.xlu0 %v732, 40
        %v6190 = vpop.permute.xlu0 %6189
        %v6193 = vsel %vm752, %v5806, 0
        %6195 = vmatprep.subr.mxu0 0.0
        %6196 = vmatpush1.msra.mxu0 %v6190
        %6197 = vmatprep.subr.mxu0 0.0
        %6198 = vmatpush1.msra.mxu0 0.0
        %6199 = vmatprep.subr.mxu0 0.0
        %6200 = vmatpush1.msra.mxu0 0.0
        %6201 = vmatprep.subr.mxu0 0.0
        %6202 = vmatpush1.msra.mxu0 0.0
        %6203 = vmatprep.subr.mxu0 0.0
        %6204 = vmatpush1.msra.mxu0 0.0
        %6205 = vmatprep.subr.mxu0 0.0
        %6206 = vmatpush1.msra.mxu0 0.0
        %6207 = vmatprep.subr.mxu0 0.0
        %6208 = vmatpush1.msra.mxu0 0.0
        %6209 = vmatprep.subr.mxu0 0.0
        %6210 = vmatpush1.msra.mxu0 0.0
        %6211 = vmatprep.subr.mxu0 0.0
        %6212 = vmatpush1.msra.mxu0 0.0
        %6213 = vmatprep.subr.mxu0 0.0
        %6214 = vmatpush1.msra.mxu0 0.0
        %6215 = vmatprep.subr.mxu0 0.0
        %6216 = vmatpush1.msra.mxu0 0.0
        %6217 = vmatprep.subr.mxu0 0.0
        %6218 = vmatpush1.msra.mxu0 0.0
        %6219 = vmatprep.subr.mxu0 0.0
        %6220 = vmatpush1.msra.mxu0 0.0
        %6221 = vmatprep.subr.mxu0 0.0
        %6222 = vmatpush1.msra.mxu0 0.0
        %6223 = vmatprep.subr.mxu0 0.0
        %6224 = vmatpush1.msra.mxu0 0.0
        %6225 = vmatprep.subr.mxu0 0.0
        %6226 = vmatpush1.msra.mxu0 0.0
        %6227 = vmatprep.subr.mxu0 0.0
        %6228 = vmatpush1.msra.mxu0 0.0
        %6229 = vmatprep.subr.mxu0 0.0
        %6230 = vmatpush1.msra.mxu0 0.0
        %6231 = vmatprep.subr.mxu0 0.0
        %6232 = vmatpush1.msra.mxu0 0.0
        %6233 = vmatprep.subr.mxu0 0.0
        %6234 = vmatpush1.msra.mxu0 0.0
        %6235 = vmatprep.subr.mxu0 0.0
        %6236 = vmatpush1.msra.mxu0 0.0
        %6237 = vmatprep.subr.mxu0 0.0
        %6238 = vmatpush1.msra.mxu0 0.0
        %6239 = vmatprep.subr.mxu0 0.0
        %6240 = vmatpush1.msra.mxu0 0.0
        %6241 = vmatprep.subr.mxu0 0.0
        %6242 = vmatpush1.msra.mxu0 0.0
        %6243 = vmatprep.subr.mxu0 0.0
        %6244 = vmatpush1.msra.mxu0 0.0
        %6245 = vmatprep.subr.mxu0 0.0
        %6246 = vmatpush1.msra.mxu0 0.0
        %6247 = vmatprep.subr.mxu0 0.0
        %6248 = vmatpush1.msra.mxu0 0.0
        %6249 = vmatprep.subr.mxu0 0.0
        %6250 = vmatpush1.msra.mxu0 0.0
        %6251 = vmatprep.subr.mxu0 0.0
        %6252 = vmatpush1.msra.mxu0 0.0
        %6253 = vmatprep.subr.mxu0 0.0
        %6254 = vmatpush1.msra.mxu0 0.0
        %6255 = vmatprep.subr.mxu0 0.0
        %6256 = vmatpush1.msra.mxu0 0.0
        %6257 = vmatprep.subr.mxu0 0.0
        %6258 = vmatpush1.msra.mxu0 0.0
        %6259 = vmatprep.mubr.f32.mxu0 0.0
        %6260 = vmatmul.mubr.f32.gmra.mrb[0].mxu0 %v6193
        %v6261 = vpop.f32.mrb[0].mxu0
        %v6262 = vadd.f32 0.0, %v6261
        %v6263 = vpop.f32.mrb[0].mxu0
        %6264 = vdwg.mxu0
        %6265 = vrot.lane.b32.xlu0 %v737, 40
        %v6266 = vpop.permute.xlu0 %6265
        %v6269 = vsel %vm752, %v5807, 0
        %6271 = vmatprep.subr.mxu0 0.0
        %6272 = vmatpush1.msra.mxu0 %v6266
        %6273 = vmatprep.subr.mxu0 0.0
        %6274 = vmatpush1.msra.mxu0 0.0
        %6275 = vmatprep.subr.mxu0 0.0
        %6276 = vmatpush1.msra.mxu0 0.0
        %6277 = vmatprep.subr.mxu0 0.0
        %6278 = vmatpush1.msra.mxu0 0.0
        %6279 = vmatprep.subr.mxu0 0.0
        %6280 = vmatpush1.msra.mxu0 0.0
        %6281 = vmatprep.subr.mxu0 0.0
        %6282 = vmatpush1.msra.mxu0 0.0
        %6283 = vmatprep.subr.mxu0 0.0
        %6284 = vmatpush1.msra.mxu0 0.0
        %6285 = vmatprep.subr.mxu0 0.0
        %6286 = vmatpush1.msra.mxu0 0.0
        %6287 = vmatprep.subr.mxu0 0.0
        %6288 = vmatpush1.msra.mxu0 0.0
        %6289 = vmatprep.subr.mxu0 0.0
        %6290 = vmatpush1.msra.mxu0 0.0
        %6291 = vmatprep.subr.mxu0 0.0
        %6292 = vmatpush1.msra.mxu0 0.0
        %6293 = vmatprep.subr.mxu0 0.0
        %6294 = vmatpush1.msra.mxu0 0.0
        %6295 = vmatprep.subr.mxu0 0.0
        %6296 = vmatpush1.msra.mxu0 0.0
        %6297 = vmatprep.subr.mxu0 0.0
        %6298 = vmatpush1.msra.mxu0 0.0
        %6299 = vmatprep.subr.mxu0 0.0
        %6300 = vmatpush1.msra.mxu0 0.0
        %6301 = vmatprep.subr.mxu0 0.0
        %6302 = vmatpush1.msra.mxu0 0.0
        %6303 = vmatprep.subr.mxu0 0.0
        %6304 = vmatpush1.msra.mxu0 0.0
        %6305 = vmatprep.subr.mxu0 0.0
        %6306 = vmatpush1.msra.mxu0 0.0
        %6307 = vmatprep.subr.mxu0 0.0
        %6308 = vmatpush1.msra.mxu0 0.0
        %6309 = vmatprep.subr.mxu0 0.0
        %6310 = vmatpush1.msra.mxu0 0.0
        %6311 = vmatprep.subr.mxu0 0.0
        %6312 = vmatpush1.msra.mxu0 0.0
        %6313 = vmatprep.subr.mxu0 0.0
        %6314 = vmatpush1.msra.mxu0 0.0
        %6315 = vmatprep.subr.mxu0 0.0
        %6316 = vmatpush1.msra.mxu0 0.0
        %6317 = vmatprep.subr.mxu0 0.0
        %6318 = vmatpush1.msra.mxu0 0.0
        %6319 = vmatprep.subr.mxu0 0.0
        %6320 = vmatpush1.msra.mxu0 0.0
        %6321 = vmatprep.subr.mxu0 0.0
        %6322 = vmatpush1.msra.mxu0 0.0
        %6323 = vmatprep.subr.mxu0 0.0
        %6324 = vmatpush1.msra.mxu0 0.0
        %6325 = vmatprep.subr.mxu0 0.0
        %6326 = vmatpush1.msra.mxu0 0.0
        %6327 = vmatprep.subr.mxu0 0.0
        %6328 = vmatpush1.msra.mxu0 0.0
        %6329 = vmatprep.subr.mxu0 0.0
        %6330 = vmatpush1.msra.mxu0 0.0
        %6331 = vmatprep.subr.mxu0 0.0
        %6332 = vmatpush1.msra.mxu0 0.0
        %6333 = vmatprep.subr.mxu0 0.0
        %6334 = vmatpush1.msra.mxu0 0.0
        %6335 = vmatprep.mubr.f32.mxu0 0.0
        %6336 = vmatmul.mubr.f32.gmra.mrb[0].mxu0 %v6269
        %v6337 = vpop.f32.mrb[0].mxu0
        %v6338 = vadd.f32 0.0, %v6337
        %v6339 = vpop.f32.mrb[0].mxu0
        %6340 = vdwg.mxu0
        %6341 = vrot.lane.b32.xlu0 %v742, 40
        %v6342 = vpop.permute.xlu0 %6341
        %v6345 = vsel %vm752, %v5808, 0
        %6347 = vmatprep.subr.mxu0 0.0
        %6348 = vmatpush1.msra.mxu0 %v6342
        %6349 = vmatprep.subr.mxu0 0.0
        %6350 = vmatpush1.msra.mxu0 0.0
        %6351 = vmatprep.subr.mxu0 0.0
        %6352 = vmatpush1.msra.mxu0 0.0
        %6353 = vmatprep.subr.mxu0 0.0
        %6354 = vmatpush1.msra.mxu0 0.0
        %6355 = vmatprep.subr.mxu0 0.0
        %6356 = vmatpush1.msra.mxu0 0.0
        %6357 = vmatprep.subr.mxu0 0.0
        %6358 = vmatpush1.msra.mxu0 0.0
        %6359 = vmatprep.subr.mxu0 0.0
        %6360 = vmatpush1.msra.mxu0 0.0
        %6361 = vmatprep.subr.mxu0 0.0
        %6362 = vmatpush1.msra.mxu0 0.0
        %6363 = vmatprep.subr.mxu0 0.0
        %6364 = vmatpush1.msra.mxu0 0.0
        %6365 = vmatprep.subr.mxu0 0.0
        %6366 = vmatpush1.msra.mxu0 0.0
        %6367 = vmatprep.subr.mxu0 0.0
        %6368 = vmatpush1.msra.mxu0 0.0
        %6369 = vmatprep.subr.mxu0 0.0
        %6370 = vmatpush1.msra.mxu0 0.0
        %6371 = vmatprep.subr.mxu0 0.0
        %6372 = vmatpush1.msra.mxu0 0.0
        %6373 = vmatprep.subr.mxu0 0.0
        %6374 = vmatpush1.msra.mxu0 0.0
        %6375 = vmatprep.subr.mxu0 0.0
        %6376 = vmatpush1.msra.mxu0 0.0
        %6377 = vmatprep.subr.mxu0 0.0
        %6378 = vmatpush1.msra.mxu0 0.0
        %6379 = vmatprep.subr.mxu0 0.0
        %6380 = vmatpush1.msra.mxu0 0.0
        %6381 = vmatprep.subr.mxu0 0.0
        %6382 = vmatpush1.msra.mxu0 0.0
        %6383 = vmatprep.subr.mxu0 0.0
        %6384 = vmatpush1.msra.mxu0 0.0
        %6385 = vmatprep.subr.mxu0 0.0
        %6386 = vmatpush1.msra.mxu0 0.0
        %6387 = vmatprep.subr.mxu0 0.0
        %6388 = vmatpush1.msra.mxu0 0.0
        %6389 = vmatprep.subr.mxu0 0.0
        %6390 = vmatpush1.msra.mxu0 0.0
        %6391 = vmatprep.subr.mxu0 0.0
        %6392 = vmatpush1.msra.mxu0 0.0
        %6393 = vmatprep.subr.mxu0 0.0
        %6394 = vmatpush1.msra.mxu0 0.0
        %6395 = vmatprep.subr.mxu0 0.0
        %6396 = vmatpush1.msra.mxu0 0.0
        %6397 = vmatprep.subr.mxu0 0.0
        %6398 = vmatpush1.msra.mxu0 0.0
        %6399 = vmatprep.subr.mxu0 0.0
        %6400 = vmatpush1.msra.mxu0 0.0
        %6401 = vmatprep.subr.mxu0 0.0
        %6402 = vmatpush1.msra.mxu0 0.0
        %6403 = vmatprep.subr.mxu0 0.0
        %6404 = vmatpush1.msra.mxu0 0.0
        %6405 = vmatprep.subr.mxu0 0.0
        %6406 = vmatpush1.msra.mxu0 0.0
        %6407 = vmatprep.subr.mxu0 0.0
        %6408 = vmatpush1.msra.mxu0 0.0
        %6409 = vmatprep.subr.mxu0 0.0
        %6410 = vmatpush1.msra.mxu0 0.0
        %6411 = vmatprep.mubr.f32.mxu0 0.0
        %6412 = vmatmul.mubr.f32.gmra.mrb[0].mxu0 %v6345
        %v6413 = vpop.f32.mrb[0].mxu0
        %v6414 = vadd.f32 0.0, %v6413
        %v6415 = vpop.f32.mrb[0].mxu0
        %6416 = vdwg.mxu0
        %v6418 = vsel %vm752, %v5882, 0
        %v6421 = vsel %vm752, %v5958, 0
        %v6424 = vsel %vm752, %v6034, 0
        %v6427 = vsel %vm752, %v6110, 0
        %v6430 = vsel %vm752, %v6186, 0
        %v6433 = vsel %vm752, %v6262, 0
        %v6436 = vsel %vm752, %v6338, 0
        %v6439 = vsel %vm752, %v6414, 0
        %6441 = vmatprep.subr.mxu0 0.0
        %6442 = vmatpush1.msra.mxu0 %v748
        %6443 = vmatprep.subr.mxu0 0.0
        %6444 = vmatpush1.msra.mxu0 0.0
        %6445 = vmatprep.subr.mxu0 0.0
        %6446 = vmatpush1.msra.mxu0 0.0
        %6447 = vmatprep.subr.mxu0 0.0
        %6448 = vmatpush1.msra.mxu0 0.0
        %6449 = vmatprep.subr.mxu0 0.0
        %6450 = vmatpush1.msra.mxu0 0.0
        %6451 = vmatprep.subr.mxu0 0.0
        %6452 = vmatpush1.msra.mxu0 0.0
        %6453 = vmatprep.subr.mxu0 0.0
        %6454 = vmatpush1.msra.mxu0 0.0
        %6455 = vmatprep.subr.mxu0 0.0
        %6456 = vmatpush1.msra.mxu0 0.0
        %6457 = vmatprep.subr.mxu0 0.0
        %6458 = vmatpush1.msra.mxu0 0.0
        %6459 = vmatprep.subr.mxu0 0.0
        %6460 = vmatpush1.msra.mxu0 0.0
        %6461 = vmatprep.subr.mxu0 0.0
        %6462 = vmatpush1.msra.mxu0 0.0
        %6463 = vmatprep.subr.mxu0 0.0
        %6464 = vmatpush1.msra.mxu0 0.0
        %6465 = vmatprep.subr.mxu0 0.0
        %6466 = vmatpush1.msra.mxu0 0.0
        %6467 = vmatprep.subr.mxu0 0.0
        %6468 = vmatpush1.msra.mxu0 0.0
        %6469 = vmatprep.subr.mxu0 0.0
        %6470 = vmatpush1.msra.mxu0 0.0
        %6471 = vmatprep.subr.mxu0 0.0
        %6472 = vmatpush1.msra.mxu0 0.0
        %6473 = vmatprep.subr.mxu0 0.0
        %6474 = vmatpush1.msra.mxu0 0.0
        %6475 = vmatprep.subr.mxu0 0.0
        %6476 = vmatpush1.msra.mxu0 0.0
        %6477 = vmatprep.subr.mxu0 0.0
        %6478 = vmatpush1.msra.mxu0 0.0
        %6479 = vmatprep.subr.mxu0 0.0
        %6480 = vmatpush1.msra.mxu0 0.0
        %6481 = vmatprep.subr.mxu0 0.0
        %6482 = vmatpush1.msra.mxu0 0.0
        %6483 = vmatprep.subr.mxu0 0.0
        %6484 = vmatpush1.msra.mxu0 0.0
        %6485 = vmatprep.subr.mxu0 0.0
        %6486 = vmatpush1.msra.mxu0 0.0
        %6487 = vmatprep.subr.mxu0 0.0
        %6488 = vmatpush1.msra.mxu0 0.0
        %6489 = vmatprep.subr.mxu0 0.0
        %6490 = vmatpush1.msra.mxu0 0.0
        %6491 = vmatprep.subr.mxu0 0.0
        %6492 = vmatpush1.msra.mxu0 0.0
        %6493 = vmatprep.subr.mxu0 0.0
        %6494 = vmatpush1.msra.mxu0 0.0
        %6495 = vmatprep.subr.mxu0 0.0
        %6496 = vmatpush1.msra.mxu0 0.0
        %6497 = vmatprep.subr.mxu0 0.0
        %6498 = vmatpush1.msra.mxu0 0.0
        %6499 = vmatprep.subr.mxu0 0.0
        %6500 = vmatpush1.msra.mxu0 0.0
        %6501 = vmatprep.subr.mxu0 0.0
        %6502 = vmatpush1.msra.mxu0 0.0
        %6503 = vmatprep.subr.mxu0 0.0
        %6504 = vmatpush1.msra.mxu0 0.0
        %6505 = vmatprep.mubr.f32.mxu0 0.0
        %6506 = vmatmul.mubr.f32.gmra.mrb[0].mxu0 %v6418
        %v6507 = vpop.f32.mrb[0].mxu0
        %v6508 = vadd.f32 0.0, %v6507
        %v6509 = vpop.f32.mrb[0].mxu0
        %6510 = vmatprep.mubr.f32.mxu0 0.0
        %6511 = vmatmul.mubr.f32.gmra.mrb[0].mxu0 %v6421
        %v6512 = vpop.f32.mrb[0].mxu0
        %v6513 = vadd.f32 0.0, %v6512
        %v6514 = vpop.f32.mrb[0].mxu0
        %6515 = vmatprep.mubr.f32.mxu0 0.0
        %6516 = vmatmul.mubr.f32.gmra.mrb[0].mxu0 %v6424
        %v6517 = vpop.f32.mrb[0].mxu0
        %v6518 = vadd.f32 0.0, %v6517
        %v6519 = vpop.f32.mrb[0].mxu0
        %6520 = vmatprep.mubr.f32.mxu0 0.0
        %6521 = vmatmul.mubr.f32.gmra.mrb[0].mxu0 %v6427
        %v6522 = vpop.f32.mrb[0].mxu0
        %v6523 = vadd.f32 0.0, %v6522
        %v6524 = vpop.f32.mrb[0].mxu0
        %6525 = vmatprep.mubr.f32.mxu0 0.0
        %6526 = vmatmul.mubr.f32.gmra.mrb[0].mxu0 %v6430
        %v6527 = vpop.f32.mrb[0].mxu0
        %v6528 = vadd.f32 0.0, %v6527
        %v6529 = vpop.f32.mrb[0].mxu0
        %6530 = vmatprep.mubr.f32.mxu0 0.0
        %6531 = vmatmul.mubr.f32.gmra.mrb[0].mxu0 %v6433
        %v6532 = vpop.f32.mrb[0].mxu0
        %v6533 = vadd.f32 0.0, %v6532
        %v6534 = vpop.f32.mrb[0].mxu0
        %6535 = vmatprep.mubr.f32.mxu0 0.0
        %6536 = vmatmul.mubr.f32.gmra.mrb[0].mxu0 %v6436
        %v6537 = vpop.f32.mrb[0].mxu0
        %v6538 = vadd.f32 0.0, %v6537
        %v6539 = vpop.f32.mrb[0].mxu0
        %6540 = vmatprep.mubr.f32.mxu0 0.0
        %6541 = vmatmul.mubr.f32.gmra.mrb[0].mxu0 %v6439
        %v6542 = vpop.f32.mrb[0].mxu0
        %v6543 = vadd.f32 0.0, %v6542
        %v6544 = vpop.f32.mrb[0].mxu0
        %6545 = vdwg.mxu0
        %v6546 = vadd.f32 %v5089, %v6508
        %v6547 = vadd.f32 %v5090, %v6513
        %v6548 = vadd.f32 %v5091, %v6518
        %v6549 = vadd.f32 %v5092, %v6523
        %v6550 = vadd.f32 %v5093, %v6528
        %v6551 = vadd.f32 %v5094, %v6533
        %v6552 = vadd.f32 %v5095, %v6538
        %v6553 = vadd.f32 %v5096, %v6543
        %v6554 = vld [vmem:[%s4] sm:$0x1]
        %v6556 = vlaneseq
        %v6557 = vshrl.u32 %v6556, 7
        %v6558 = vsub.s32 0, %v6557
        %v6559 = vrot.slane %v6554, %v6558
        %v6561 = vadd.f32 %v6546, %v6559
        %v6562 = vadd.f32 %v6547, %v6559
        %v6563 = vadd.f32 %v6548, %v6559
        %v6564 = vadd.f32 %v6549, %v6559
        %v6565 = vadd.f32 %v6550, %v6559
        %v6566 = vadd.f32 %v6551, %v6559
        %v6567 = vadd.f32 %v6552, %v6559
        %v6568 = vadd.f32 %v6553, %v6559
        %v6569 = vadd.f32 %v461, %v6561
        %v6570 = vadd.f32 %v462, %v6562
        %v6571 = vadd.f32 %v463, %v6563
        %v6572 = vadd.f32 %v464, %v6564
        %v6573 = vadd.f32 %v465, %v6565
        %v6574 = vadd.f32 %v466, %v6566
        %v6575 = vadd.f32 %v467, %v6567
        %v6576 = vadd.f32 %v468, %v6568
        %v6577 = vsel %vm469, %v6569, 0.0
        %6578 = vadd.xlane.f32.xlu0 %v6577
        %v6579 = vpop.xlane.xlu0 %6578
        %v6580 = vsel %vm469, %v6570, 0.0
        %6581 = vadd.xlane.f32.xlu0 %v6580
        %v6582 = vpop.xlane.xlu0 %6581
        %v6583 = vsel %vm469, %v6571, 0.0
        %6584 = vadd.xlane.f32.xlu0 %v6583
        %v6585 = vpop.xlane.xlu0 %6584
        %v6586 = vsel %vm469, %v6572, 0.0
        %6587 = vadd.xlane.f32.xlu0 %v6586
        %v6588 = vpop.xlane.xlu0 %6587
        %v6589 = vsel %vm469, %v6573, 0.0
        %6590 = vadd.xlane.f32.xlu0 %v6589
        %v6591 = vpop.xlane.xlu0 %6590
        %v6592 = vsel %vm469, %v6574, 0.0
        %6593 = vadd.xlane.f32.xlu0 %v6592
        %v6594 = vpop.xlane.xlu0 %6593
        %v6595 = vsel %vm469, %v6575, 0.0
        %6596 = vadd.xlane.f32.xlu0 %v6595
        %v6597 = vpop.xlane.xlu0 %6596
        %v6598 = vsel %vm469, %v6576, 0.0
        %6599 = vadd.xlane.f32.xlu0 %v6598
        %v6600 = vpop.xlane.xlu0 %6599
        %v6601 = vmul.f32 %v6579, %v494
        %v6602 = vmul.f32 %v6582, %v494
        %v6603 = vmul.f32 %v6585, %v494
        %v6604 = vmul.f32 %v6588, %v494
        %v6605 = vmul.f32 %v6591, %v494
        %v6606 = vmul.f32 %v6594, %v494
        %v6607 = vmul.f32 %v6597, %v494
        %v6608 = vmul.f32 %v6600, %v494
        %v6609 = vsub.f32 %v6569, %v6601
        %v6610 = vsub.f32 %v6570, %v6602
        %v6611 = vsub.f32 %v6571, %v6603
        %v6612 = vsub.f32 %v6572, %v6604
        %v6613 = vsub.f32 %v6573, %v6605
        %v6614 = vsub.f32 %v6574, %v6606
        %v6615 = vsub.f32 %v6575, %v6607
        %v6616 = vsub.f32 %v6576, %v6608
        %v6617 = vmul.f32 %v6609, %v6609
        %v6618 = vmul.f32 %v6610, %v6610
        %v6619 = vmul.f32 %v6611, %v6611
        %v6620 = vmul.f32 %v6612, %v6612
        %v6621 = vmul.f32 %v6613, %v6613
        %v6622 = vmul.f32 %v6614, %v6614
        %v6623 = vmul.f32 %v6615, %v6615
        %v6624 = vmul.f32 %v6616, %v6616
        %v6625 = vsel %vm469, %v6617, 0.0
        %6626 = vadd.xlane.f32.xlu0 %v6625
        %v6627 = vpop.xlane.xlu0 %6626
        %v6628 = vsel %vm469, %v6618, 0.0
        %6629 = vadd.xlane.f32.xlu0 %v6628
        %v6630 = vpop.xlane.xlu0 %6629
        %v6631 = vsel %vm469, %v6619, 0.0
        %6632 = vadd.xlane.f32.xlu0 %v6631
        %v6633 = vpop.xlane.xlu0 %6632
        %v6634 = vsel %vm469, %v6620, 0.0
        %6635 = vadd.xlane.f32.xlu0 %v6634
        %v6636 = vpop.xlane.xlu0 %6635
        %v6637 = vsel %vm469, %v6621, 0.0
        %6638 = vadd.xlane.f32.xlu0 %v6637
        %v6639 = vpop.xlane.xlu0 %6638
        %v6640 = vsel %vm469, %v6622, 0.0
        %6641 = vadd.xlane.f32.xlu0 %v6640
        %v6642 = vpop.xlane.xlu0 %6641
        %v6643 = vsel %vm469, %v6623, 0.0
        %6644 = vadd.xlane.f32.xlu0 %v6643
        %v6645 = vpop.xlane.xlu0 %6644
        %v6646 = vsel %vm469, %v6624, 0.0
        %6647 = vadd.xlane.f32.xlu0 %v6646
        %v6648 = vpop.xlane.xlu0 %6647
        %v6649 = vmul.f32 %v6627, %v494
        %v6650 = vmul.f32 %v6630, %v494
        %v6651 = vmul.f32 %v6633, %v494
        %v6652 = vmul.f32 %v6636, %v494
        %v6653 = vmul.f32 %v6639, %v494
        %v6654 = vmul.f32 %v6642, %v494
        %v6655 = vmul.f32 %v6645, %v494
        %v6656 = vmul.f32 %v6648, %v494
        %v6657 = vadd.f32 %v6649, 1e-05
        %v6658 = vadd.f32 %v6650, 1e-05
        %v6659 = vadd.f32 %v6651, 1e-05
        %v6660 = vadd.f32 %v6652, 1e-05
        %v6661 = vadd.f32 %v6653, 1e-05
        %v6662 = vadd.f32 %v6654, 1e-05
        %v6663 = vadd.f32 %v6655, 1e-05
        %v6664 = vadd.f32 %v6656, 1e-05
        %v6665 = vrsqrt.pop %v6657
        %v6666 = vrsqrt.pop %v6658
        %v6667 = vrsqrt.pop %v6659
        %v6668 = vrsqrt.pop %v6660
        %v6669 = vrsqrt.pop %v6661
        %v6670 = vrsqrt.pop %v6662
        %v6671 = vrsqrt.pop %v6663
        %v6672 = vrsqrt.pop %v6664
        %v6673 = vmul.f32 %v6609, %v6665
        %v6674 = vmul.f32 %v6610, %v6666
        %v6675 = vmul.f32 %v6611, %v6667
        %v6676 = vmul.f32 %v6612, %v6668
        %v6677 = vmul.f32 %v6613, %v6669
        %v6678 = vmul.f32 %v6614, %v6670
        %v6679 = vmul.f32 %v6615, %v6671
        %v6680 = vmul.f32 %v6616, %v6672
        %v6681 = vld [vmem:[%s7] sm:$0x1]
        %v6683 = vlaneseq
        %v6684 = vshrl.u32 %v6683, 7
        %v6685 = vsub.s32 0, %v6684
        %v6686 = vrot.slane %v6681, %v6685
        %v6688 = vmul.f32 %v6673, %v6686
        %v6689 = vmul.f32 %v6674, %v6686
        %v6690 = vmul.f32 %v6675, %v6686
        %v6691 = vmul.f32 %v6676, %v6686
        %v6692 = vmul.f32 %v6677, %v6686
        %v6693 = vmul.f32 %v6678, %v6686
        %v6694 = vmul.f32 %v6679, %v6686
        %v6695 = vmul.f32 %v6680, %v6686
        %v6696 = vld [vmem:[%s8] sm:$0x1]
        %v6698 = vlaneseq
        %v6699 = vshrl.u32 %v6698, 7
        %v6700 = vsub.s32 0, %v6699
        %v6701 = vrot.slane %v6696, %v6700
        %v6703 = vadd.f32 %v6688, %v6701
        %v6704 = vadd.f32 %v6689, %v6701
        %v6705 = vadd.f32 %v6690, %v6701
        %v6706 = vadd.f32 %v6691, %v6701
        %v6707 = vadd.f32 %v6692, %v6701
        %v6708 = vadd.f32 %v6693, %v6701
        %v6709 = vadd.f32 %v6694, %v6701
        %v6710 = vadd.f32 %v6695, %v6701
        %v6711 = vld [vmem:[%s9] sm:$0xff]
        %v6712 = vld [vmem:[%s9 + $0x8] sm:$0xff]
        %v6713 = vld [vmem:[%s9 + $0x10] sm:$0xff]
        %v6714 = vld [vmem:[%s9 + $0x18] sm:$0xff]
        %v6715 = vld [vmem:[%s10] sm:$0x1]
        %v6717 = vlaneseq
        %v6718 = vshrl.u32 %v6717, 7
        %v6719 = vsub.s32 0, %v6718
        %v6720 = vrot.slane %v6715, %v6719
        %v6723 = vsel %vm469, %v6703, 0
        %v6726 = vsel %vm469, %v6704, 0
        %v6729 = vsel %vm469, %v6705, 0
        %v6732 = vsel %vm469, %v6706, 0
        %v6735 = vsel %vm469, %v6707, 0
        %v6738 = vsel %vm469, %v6708, 0
        %v6741 = vsel %vm469, %v6709, 0
        %v6744 = vsel %vm469, %v6710, 0
        %6746 = vmatprep.subr.mxu0 0.0
        %6747 = vmatpush1.msra.mxu0 %v6711
        %6748 = vmatprep.subr.mxu0 0.0
        %6749 = vmatpush1.msra.mxu0 %v6712
        %6750 = vmatprep.subr.mxu0 0.0
        %6751 = vmatpush1.msra.mxu0 %v6713
        %6752 = vmatprep.subr.mxu0 0.0
        %6753 = vmatpush1.msra.mxu0 %v6714
        %6754 = vmatprep.subr.mxu0 0.0
        %6755 = vmatpush1.msra.mxu0 0.0
        %6756 = vmatprep.subr.mxu0 0.0
        %6757 = vmatpush1.msra.mxu0 0.0
        %6758 = vmatprep.subr.mxu0 0.0
        %6759 = vmatpush1.msra.mxu0 0.0
        %6760 = vmatprep.subr.mxu0 0.0
        %6761 = vmatpush1.msra.mxu0 0.0
        %6762 = vmatprep.subr.mxu0 0.0
        %6763 = vmatpush1.msra.mxu0 0.0
        %6764 = vmatprep.subr.mxu0 0.0
        %6765 = vmatpush1.msra.mxu0 0.0
        %6766 = vmatprep.subr.mxu0 0.0
        %6767 = vmatpush1.msra.mxu0 0.0
        %6768 = vmatprep.subr.mxu0 0.0
        %6769 = vmatpush1.msra.mxu0 0.0
        %6770 = vmatprep.subr.mxu0 0.0
        %6771 = vmatpush1.msra.mxu0 0.0
        %6772 = vmatprep.subr.mxu0 0.0
        %6773 = vmatpush1.msra.mxu0 0.0
        %6774 = vmatprep.subr.mxu0 0.0
        %6775 = vmatpush1.msra.mxu0 0.0
        %6776 = vmatprep.subr.mxu0 0.0
        %6777 = vmatpush1.msra.mxu0 0.0
        %6778 = vmatprep.subr.mxu0 0.0
        %6779 = vmatpush1.msra.mxu0 0.0
        %6780 = vmatprep.subr.mxu0 0.0
        %6781 = vmatpush1.msra.mxu0 0.0
        %6782 = vmatprep.subr.mxu0 0.0
        %6783 = vmatpush1.msra.mxu0 0.0
        %6784 = vmatprep.subr.mxu0 0.0
        %6785 = vmatpush1.msra.mxu0 0.0
        %6786 = vmatprep.subr.mxu0 0.0
        %6787 = vmatpush1.msra.mxu0 0.0
        %6788 = vmatprep.subr.mxu0 0.0
        %6789 = vmatpush1.msra.mxu0 0.0
        %6790 = vmatprep.subr.mxu0 0.0
        %6791 = vmatpush1.msra.mxu0 0.0
        %6792 = vmatprep.subr.mxu0 0.0
        %6793 = vmatpush1.msra.mxu0 0.0
        %6794 = vmatprep.subr.mxu0 0.0
        %6795 = vmatpush1.msra.mxu0 0.0
        %6796 = vmatprep.subr.mxu0 0.0
        %6797 = vmatpush1.msra.mxu0 0.0
        %6798 = vmatprep.subr.mxu0 0.0
        %6799 = vmatpush1.msra.mxu0 0.0
        %6800 = vmatprep.subr.mxu0 0.0
        %6801 = vmatpush1.msra.mxu0 0.0
        %6802 = vmatprep.subr.mxu0 0.0
        %6803 = vmatpush1.msra.mxu0 0.0
        %6804 = vmatprep.subr.mxu0 0.0
        %6805 = vmatpush1.msra.mxu0 0.0
        %6806 = vmatprep.subr.mxu0 0.0
        %6807 = vmatpush1.msra.mxu0 0.0
        %6808 = vmatprep.subr.mxu0 0.0
        %6809 = vmatpush1.msra.mxu0 0.0
        %6810 = vmatprep.mubr.f32.mxu0 0.0
        %6811 = vmatmul.mubr.f32.gmra.mrb[0].mxu0 %v6723
        %v6812 = vpop.f32.mrb[0].mxu0
        %v6813 = vadd.f32 %v6720, %v6812
        %v6814 = vpop.f32.mrb[0].mxu0
        %6815 = vmatprep.mubr.f32.mxu0 0.0
        %6816 = vmatmul.mubr.f32.gmra.mrb[0].mxu0 %v6726
        %v6817 = vpop.f32.mrb[0].mxu0
        %v6818 = vadd.f32 %v6720, %v6817
        %v6819 = vpop.f32.mrb[0].mxu0
        %6820 = vmatprep.mubr.f32.mxu0 0.0
        %6821 = vmatmul.mubr.f32.gmra.mrb[0].mxu0 %v6729
        %v6822 = vpop.f32.mrb[0].mxu0
        %v6823 = vadd.f32 %v6720, %v6822
        %v6824 = vpop.f32.mrb[0].mxu0
        %6825 = vmatprep.mubr.f32.mxu0 0.0
        %6826 = vmatmul.mubr.f32.gmra.mrb[0].mxu0 %v6732
        %v6827 = vpop.f32.mrb[0].mxu0
        %v6828 = vadd.f32 %v6720, %v6827
        %v6829 = vpop.f32.mrb[0].mxu0
        %6830 = vmatprep.mubr.f32.mxu0 0.0
        %6831 = vmatmul.mubr.f32.gmra.mrb[0].mxu0 %v6735
        %v6832 = vpop.f32.mrb[0].mxu0
        %v6833 = vadd.f32 %v6720, %v6832
        %v6834 = vpop.f32.mrb[0].mxu0
        %6835 = vmatprep.mubr.f32.mxu0 0.0
        %6836 = vmatmul.mubr.f32.gmra.mrb[0].mxu0 %v6738
        %v6837 = vpop.f32.mrb[0].mxu0
        %v6838 = vadd.f32 %v6720, %v6837
        %v6839 = vpop.f32.mrb[0].mxu0
        %6840 = vmatprep.mubr.f32.mxu0 0.0
        %6841 = vmatmul.mubr.f32.gmra.mrb[0].mxu0 %v6741
        %v6842 = vpop.f32.mrb[0].mxu0
        %v6843 = vadd.f32 %v6720, %v6842
        %v6844 = vpop.f32.mrb[0].mxu0
        %6845 = vmatprep.mubr.f32.mxu0 0.0
        %6846 = vmatmul.mubr.f32.gmra.mrb[0].mxu0 %v6744
        %v6847 = vpop.f32.mrb[0].mxu0
        %v6848 = vadd.f32 %v6720, %v6847
        %v6849 = vpop.f32.mrb[0].mxu0
        %6850 = vdwg.mxu0
        %v6851 = vmul.f32 %v6813, 0.5
        %v6852 = vmul.f32 %v6818, 0.5
        %v6853 = vmul.f32 %v6823, 0.5
        %v6854 = vmul.f32 %v6828, 0.5
        %v6855 = vmul.f32 %v6833, 0.5
        %v6856 = vmul.f32 %v6838, 0.5
        %v6857 = vmul.f32 %v6843, 0.5
        %v6858 = vmul.f32 %v6848, 0.5
        %v6859 = vmul.f32 %v6813, 0.70710677
        %v6860 = vmul.f32 %v6818, 0.70710677
        %v6861 = vmul.f32 %v6823, 0.70710677
        %v6862 = vmul.f32 %v6828, 0.70710677
        %v6863 = vmul.f32 %v6833, 0.70710677
        %v6864 = vmul.f32 %v6838, 0.70710677
        %v6865 = vmul.f32 %v6843, 0.70710677
        %v6866 = vmul.f32 %v6848, 0.70710677
        %v6867 = vand.u32 2147483647, %v6859
        %v6868 = vand.u32 2147483647, %v6860
        %v6869 = vand.u32 2147483647, %v6861
        %v6870 = vand.u32 2147483647, %v6862
        %v6871 = vand.u32 2147483647, %v6863
        %v6872 = vand.u32 2147483647, %v6864
        %v6873 = vand.u32 2147483647, %v6865
        %v6874 = vand.u32 2147483647, %v6866
        %v6875 = vmul.f32 %v6867, 0.3275911
        %v6876 = vmul.f32 %v6868, 0.3275911
        %v6877 = vmul.f32 %v6869, 0.3275911
        %v6878 = vmul.f32 %v6870, 0.3275911
        %v6879 = vmul.f32 %v6871, 0.3275911
        %v6880 = vmul.f32 %v6872, 0.3275911
        %v6881 = vmul.f32 %v6873, 0.3275911
        %v6882 = vmul.f32 %v6874, 0.3275911
        %v6883 = vadd.f32 %v6875, 1.0
        %v6884 = vadd.f32 %v6876, 1.0
        %v6885 = vadd.f32 %v6877, 1.0
        %v6886 = vadd.f32 %v6878, 1.0
        %v6887 = vadd.f32 %v6879, 1.0
        %v6888 = vadd.f32 %v6880, 1.0
        %v6889 = vadd.f32 %v6881, 1.0
        %v6890 = vadd.f32 %v6882, 1.0
        %v6891 = vrcp.pop %v6883
        %v6892 = vmul.f32 1.0, %v6891
        %v6893 = vrcp.pop %v6884
        %v6894 = vmul.f32 1.0, %v6893
        %v6895 = vrcp.pop %v6885
        %v6896 = vmul.f32 1.0, %v6895
        %v6897 = vrcp.pop %v6886
        %v6898 = vmul.f32 1.0, %v6897
        %v6899 = vrcp.pop %v6887
        %v6900 = vmul.f32 1.0, %v6899
        %v6901 = vrcp.pop %v6888
        %v6902 = vmul.f32 1.0, %v6901
        %v6903 = vrcp.pop %v6889
        %v6904 = vmul.f32 1.0, %v6903
        %v6905 = vrcp.pop %v6890
        %v6906 = vmul.f32 1.0, %v6905
        %v6907 = vmul.f32 %v6892, 1.0614054
        %v6908 = vmul.f32 %v6894, 1.0614054
        %v6909 = vmul.f32 %v6896, 1.0614054
        %v6910 = vmul.f32 %v6898, 1.0614054
        %v6911 = vmul.f32 %v6900, 1.0614054
        %v6912 = vmul.f32 %v6902, 1.0614054
        %v6913 = vmul.f32 %v6904, 1.0614054
        %v6914 = vmul.f32 %v6906, 1.0614054
        %v6915 = vadd.f32 %v6907, -1.4531521
        %v6916 = vadd.f32 %v6908, -1.4531521
        %v6917 = vadd.f32 %v6909, -1.4531521
        %v6918 = vadd.f32 %v6910, -1.4531521
        %v6919 = vadd.f32 %v6911, -1.4531521
        %v6920 = vadd.f32 %v6912, -1.4531521
        %v6921 = vadd.f32 %v6913, -1.4531521
        %v6922 = vadd.f32 %v6914, -1.4531521
        %v6923 = vmul.f32 %v6915, %v6892
        %v6924 = vmul.f32 %v6916, %v6894
        %v6925 = vmul.f32 %v6917, %v6896
        %v6926 = vmul.f32 %v6918, %v6898
        %v6927 = vmul.f32 %v6919, %v6900
        %v6928 = vmul.f32 %v6920, %v6902
        %v6929 = vmul.f32 %v6921, %v6904
        %v6930 = vmul.f32 %v6922, %v6906
        %v6931 = vadd.f32 %v6923, 1.4214138
        %v6932 = vadd.f32 %v6924, 1.4214138
        %v6933 = vadd.f32 %v6925, 1.4214138
        %v6934 = vadd.f32 %v6926, 1.4214138
        %v6935 = vadd.f32 %v6927, 1.4214138
        %v6936 = vadd.f32 %v6928, 1.4214138
        %v6937 = vadd.f32 %v6929, 1.4214138
        %v6938 = vadd.f32 %v6930, 1.4214138
        %v6939 = vmul.f32 %v6931, %v6892
        %v6940 = vmul.f32 %v6932, %v6894
        %v6941 = vmul.f32 %v6933, %v6896
        %v6942 = vmul.f32 %v6934, %v6898
        %v6943 = vmul.f32 %v6935, %v6900
        %v6944 = vmul.f32 %v6936, %v6902
        %v6945 = vmul.f32 %v6937, %v6904
        %v6946 = vmul.f32 %v6938, %v6906
        %v6947 = vadd.f32 %v6939, -0.28449672
        %v6948 = vadd.f32 %v6940, -0.28449672
        %v6949 = vadd.f32 %v6941, -0.28449672
        %v6950 = vadd.f32 %v6942, -0.28449672
        %v6951 = vadd.f32 %v6943, -0.28449672
        %v6952 = vadd.f32 %v6944, -0.28449672
        %v6953 = vadd.f32 %v6945, -0.28449672
        %v6954 = vadd.f32 %v6946, -0.28449672
        %v6955 = vmul.f32 %v6947, %v6892
        %v6956 = vmul.f32 %v6948, %v6894
        %v6957 = vmul.f32 %v6949, %v6896
        %v6958 = vmul.f32 %v6950, %v6898
        %v6959 = vmul.f32 %v6951, %v6900
        %v6960 = vmul.f32 %v6952, %v6902
        %v6961 = vmul.f32 %v6953, %v6904
        %v6962 = vmul.f32 %v6954, %v6906
        %v6963 = vadd.f32 %v6955, 0.2548296
        %v6964 = vadd.f32 %v6956, 0.2548296
        %v6965 = vadd.f32 %v6957, 0.2548296
        %v6966 = vadd.f32 %v6958, 0.2548296
        %v6967 = vadd.f32 %v6959, 0.2548296
        %v6968 = vadd.f32 %v6960, 0.2548296
        %v6969 = vadd.f32 %v6961, 0.2548296
        %v6970 = vadd.f32 %v6962, 0.2548296
        %v6971 = vmul.f32 %v6963, %v6892
        %v6972 = vmul.f32 %v6964, %v6894
        %v6973 = vmul.f32 %v6965, %v6896
        %v6974 = vmul.f32 %v6966, %v6898
        %v6975 = vmul.f32 %v6967, %v6900
        %v6976 = vmul.f32 %v6968, %v6902
        %v6977 = vmul.f32 %v6969, %v6904
        %v6978 = vmul.f32 %v6970, %v6906
        %v6979 = vsub.f32 0.0, %v6867
        %v6980 = vsub.f32 0.0, %v6868
        %v6981 = vsub.f32 0.0, %v6869
        %v6982 = vsub.f32 0.0, %v6870
        %v6983 = vsub.f32 0.0, %v6871
        %v6984 = vsub.f32 0.0, %v6872
        %v6985 = vsub.f32 0.0, %v6873
        %v6986 = vsub.f32 0.0, %v6874
        %v6987 = vmul.f32 %v6979, %v6867
        %v6988 = vmul.f32 %v6980, %v6868
        %v6989 = vmul.f32 %v6981, %v6869
        %v6990 = vmul.f32 %v6982, %v6870
        %v6991 = vmul.f32 %v6983, %v6871
        %v6992 = vmul.f32 %v6984, %v6872
        %v6993 = vmul.f32 %v6985, %v6873
        %v6994 = vmul.f32 %v6986, %v6874
        %v6995 = vmul.f32 %v6987, 1.442695
        %v6996 = vpow.pop %v6995
        %v6997 = vmul.f32 %v6988, 1.442695
        %v6998 = vpow.pop %v6997
        %v6999 = vmul.f32 %v6989, 1.442695
        %v7000 = vpow.pop %v6999
        %v7001 = vmul.f32 %v6990, 1.442695
        %v7002 = vpow.pop %v7001
        %v7003 = vmul.f32 %v6991, 1.442695
        %v7004 = vpow.pop %v7003
        %v7005 = vmul.f32 %v6992, 1.442695
        %v7006 = vpow.pop %v7005
        %v7007 = vmul.f32 %v6993, 1.442695
        %v7008 = vpow.pop %v7007
        %v7009 = vmul.f32 %v6994, 1.442695
        %v7010 = vpow.pop %v7009
        %v7011 = vmul.f32 %v6971, %v6996
        %v7012 = vmul.f32 %v6972, %v6998
        %v7013 = vmul.f32 %v6973, %v7000
        %v7014 = vmul.f32 %v6974, %v7002
        %v7015 = vmul.f32 %v6975, %v7004
        %v7016 = vmul.f32 %v6976, %v7006
        %v7017 = vmul.f32 %v6977, %v7008
        %v7018 = vmul.f32 %v6978, %v7010
        %v7019 = vsub.f32 1.0, %v7011
        %v7020 = vsub.f32 1.0, %v7012
        %v7021 = vsub.f32 1.0, %v7013
        %v7022 = vsub.f32 1.0, %v7014
        %v7023 = vsub.f32 1.0, %v7015
        %v7024 = vsub.f32 1.0, %v7016
        %v7025 = vsub.f32 1.0, %v7017
        %v7026 = vsub.f32 1.0, %v7018
        %vm7027 = vcmp.ge.f32.partialorder %v6859, 0.0
        %vm7028 = vcmp.ge.f32.partialorder %v6860, 0.0
        %vm7029 = vcmp.ge.f32.partialorder %v6861, 0.0
        %vm7030 = vcmp.ge.f32.partialorder %v6862, 0.0
        %vm7031 = vcmp.ge.f32.partialorder %v6863, 0.0
        %vm7032 = vcmp.ge.f32.partialorder %v6864, 0.0
        %vm7033 = vcmp.ge.f32.partialorder %v6865, 0.0
        %vm7034 = vcmp.ge.f32.partialorder %v6866, 0.0
        %v7035 = vsub.f32 0.0, %v7019
        %v7036 = vsub.f32 0.0, %v7020
        %v7037 = vsub.f32 0.0, %v7021
        %v7038 = vsub.f32 0.0, %v7022
        %v7039 = vsub.f32 0.0, %v7023
        %v7040 = vsub.f32 0.0, %v7024
        %v7041 = vsub.f32 0.0, %v7025
        %v7042 = vsub.f32 0.0, %v7026
        %v7043 = vsel %vm7027, %v7019, %v7035
        %v7044 = vsel %vm7028, %v7020, %v7036
        %v7045 = vsel %vm7029, %v7021, %v7037
        %v7046 = vsel %vm7030, %v7022, %v7038
        %v7047 = vsel %vm7031, %v7023, %v7039
        %v7048 = vsel %vm7032, %v7024, %v7040
        %v7049 = vsel %vm7033, %v7025, %v7041
        %v7050 = vsel %vm7034, %v7026, %v7042
        %v7051 = vadd.f32 %v7043, 1.0
        %v7052 = vadd.f32 %v7044, 1.0
        %v7053 = vadd.f32 %v7045, 1.0
        %v7054 = vadd.f32 %v7046, 1.0
        %v7055 = vadd.f32 %v7047, 1.0
        %v7056 = vadd.f32 %v7048, 1.0
        %v7057 = vadd.f32 %v7049, 1.0
        %v7058 = vadd.f32 %v7050, 1.0
        %v7059 = vmul.f32 %v6851, %v7051
        %v7060 = vmul.f32 %v6852, %v7052
        %v7061 = vmul.f32 %v6853, %v7053
        %v7062 = vmul.f32 %v6854, %v7054
        %v7063 = vmul.f32 %v6855, %v7055
        %v7064 = vmul.f32 %v6856, %v7056
        %v7065 = vmul.f32 %v6857, %v7057
        %v7066 = vmul.f32 %v6858, %v7058
        %v7067 = vld [vmem:[%s11] sm:$0xff]
        %v7068 = vld [vmem:[%s11 + $0x8] sm:$0xff]
        %v7069 = vld [vmem:[%s11 + $0x10] sm:$0xff]
        %v7070 = vld [vmem:[%s11 + $0x18] sm:$0xff]
        %v7071 = vld [vmem:[%s11 + $0x20] sm:$0xff]
        %v7072 = vld [vmem:[%s11 + $0x28] sm:$0xff]
        %v7073 = vld [vmem:[%s11 + $0x30] sm:$0xff]
        %v7074 = vld [vmem:[%s11 + $0x38] sm:$0xff]
        %v7075 = vld [vmem:[%s12] sm:$0x1]
        %v7077 = vlaneseq
        %v7078 = vshrl.u32 %v7077, 7
        %v7079 = vsub.s32 0, %v7078
        %v7080 = vrot.slane %v7075, %v7079
        %vm7082 = vcmask 523264
        %v7084 = vsel %vm7082, %v7059, 0
        %v7087 = vsel %vm7082, %v7060, 0
        %v7090 = vsel %vm7082, %v7061, 0
        %v7093 = vsel %vm7082, %v7062, 0
        %v7096 = vsel %vm7082, %v7063, 0
        %v7099 = vsel %vm7082, %v7064, 0
        %v7102 = vsel %vm7082, %v7065, 0
        %v7105 = vsel %vm7082, %v7066, 0
        %7107 = vmatprep.subr.mxu0 0.0
        %7108 = vmatpush1.msra.mxu0 %v7067
        %7109 = vmatprep.subr.mxu0 0.0
        %7110 = vmatpush1.msra.mxu0 %v7068
        %7111 = vmatprep.subr.mxu0 0.0
        %7112 = vmatpush1.msra.mxu0 %v7069
        %7113 = vmatprep.subr.mxu0 0.0
        %7114 = vmatpush1.msra.mxu0 %v7070
        %7115 = vmatprep.subr.mxu0 0.0
        %7116 = vmatpush1.msra.mxu0 %v7071
        %7117 = vmatprep.subr.mxu0 0.0
        %7118 = vmatpush1.msra.mxu0 %v7072
        %7119 = vmatprep.subr.mxu0 0.0
        %7120 = vmatpush1.msra.mxu0 %v7073
        %7121 = vmatprep.subr.mxu0 0.0
        %7122 = vmatpush1.msra.mxu0 %v7074
        %7123 = vmatprep.subr.mxu0 0.0
        %7124 = vmatpush1.msra.mxu0 0.0
        %7125 = vmatprep.subr.mxu0 0.0
        %7126 = vmatpush1.msra.mxu0 0.0
        %7127 = vmatprep.subr.mxu0 0.0
        %7128 = vmatpush1.msra.mxu0 0.0
        %7129 = vmatprep.subr.mxu0 0.0
        %7130 = vmatpush1.msra.mxu0 0.0
        %7131 = vmatprep.subr.mxu0 0.0
        %7132 = vmatpush1.msra.mxu0 0.0
        %7133 = vmatprep.subr.mxu0 0.0
        %7134 = vmatpush1.msra.mxu0 0.0
        %7135 = vmatprep.subr.mxu0 0.0
        %7136 = vmatpush1.msra.mxu0 0.0
        %7137 = vmatprep.subr.mxu0 0.0
        %7138 = vmatpush1.msra.mxu0 0.0
        %7139 = vmatprep.subr.mxu0 0.0
        %7140 = vmatpush1.msra.mxu0 0.0
        %7141 = vmatprep.subr.mxu0 0.0
        %7142 = vmatpush1.msra.mxu0 0.0
        %7143 = vmatprep.subr.mxu0 0.0
        %7144 = vmatpush1.msra.mxu0 0.0
        %7145 = vmatprep.subr.mxu0 0.0
        %7146 = vmatpush1.msra.mxu0 0.0
        %7147 = vmatprep.subr.mxu0 0.0
        %7148 = vmatpush1.msra.mxu0 0.0
        %7149 = vmatprep.subr.mxu0 0.0
        %7150 = vmatpush1.msra.mxu0 0.0
        %7151 = vmatprep.subr.mxu0 0.0
        %7152 = vmatpush1.msra.mxu0 0.0
        %7153 = vmatprep.subr.mxu0 0.0
        %7154 = vmatpush1.msra.mxu0 0.0
        %7155 = vmatprep.subr.mxu0 0.0
        %7156 = vmatpush1.msra.mxu0 0.0
        %7157 = vmatprep.subr.mxu0 0.0
        %7158 = vmatpush1.msra.mxu0 0.0
        %7159 = vmatprep.subr.mxu0 0.0
        %7160 = vmatpush1.msra.mxu0 0.0
        %7161 = vmatprep.subr.mxu0 0.0
        %7162 = vmatpush1.msra.mxu0 0.0
        %7163 = vmatprep.subr.mxu0 0.0
        %7164 = vmatpush1.msra.mxu0 0.0
        %7165 = vmatprep.subr.mxu0 0.0
        %7166 = vmatpush1.msra.mxu0 0.0
        %7167 = vmatprep.subr.mxu0 0.0
        %7168 = vmatpush1.msra.mxu0 0.0
        %7169 = vmatprep.subr.mxu0 0.0
        %7170 = vmatpush1.msra.mxu0 0.0
        %7171 = vmatprep.mubr.f32.mxu0 0.0
        %7172 = vmatmul.mubr.f32.gmra.mrb[0].mxu0 %v7084
        %v7173 = vpop.f32.mrb[0].mxu0
        %v7174 = vadd.f32 %v7080, %v7173
        %v7175 = vpop.f32.mrb[0].mxu0
        %7176 = vmatprep.mubr.f32.mxu0 0.0
        %7177 = vmatmul.mubr.f32.gmra.mrb[0].mxu0 %v7087
        %v7178 = vpop.f32.mrb[0].mxu0
        %v7179 = vadd.f32 %v7080, %v7178
        %v7180 = vpop.f32.mrb[0].mxu0
        %7181 = vmatprep.mubr.f32.mxu0 0.0
        %7182 = vmatmul.mubr.f32.gmra.mrb[0].mxu0 %v7090
        %v7183 = vpop.f32.mrb[0].mxu0
        %v7184 = vadd.f32 %v7080, %v7183
        %v7185 = vpop.f32.mrb[0].mxu0
        %7186 = vmatprep.mubr.f32.mxu0 0.0
        %7187 = vmatmul.mubr.f32.gmra.mrb[0].mxu0 %v7093
        %v7188 = vpop.f32.mrb[0].mxu0
        %v7189 = vadd.f32 %v7080, %v7188
        %v7190 = vpop.f32.mrb[0].mxu0
        %7191 = vmatprep.mubr.f32.mxu0 0.0
        %7192 = vmatmul.mubr.f32.gmra.mrb[0].mxu0 %v7096
        %v7193 = vpop.f32.mrb[0].mxu0
        %v7194 = vadd.f32 %v7080, %v7193
        %v7195 = vpop.f32.mrb[0].mxu0
        %7196 = vmatprep.mubr.f32.mxu0 0.0
        %7197 = vmatmul.mubr.f32.gmra.mrb[0].mxu0 %v7099
        %v7198 = vpop.f32.mrb[0].mxu0
        %v7199 = vadd.f32 %v7080, %v7198
        %v7200 = vpop.f32.mrb[0].mxu0
        %7201 = vmatprep.mubr.f32.mxu0 0.0
        %7202 = vmatmul.mubr.f32.gmra.mrb[0].mxu0 %v7102
        %v7203 = vpop.f32.mrb[0].mxu0
        %v7204 = vadd.f32 %v7080, %v7203
        %v7205 = vpop.f32.mrb[0].mxu0
        %7206 = vmatprep.mubr.f32.mxu0 0.0
        %7207 = vmatmul.mubr.f32.gmra.mrb[0].mxu0 %v7105
        %v7208 = vpop.f32.mrb[0].mxu0
        %v7209 = vadd.f32 %v7080, %v7208
        %v7210 = vpop.f32.mrb[0].mxu0
        %7211 = vdwg.mxu0
        %v7212 = vadd.f32 %v6569, %v7174
        %v7213 = vadd.f32 %v6570, %v7179
        %v7214 = vadd.f32 %v6571, %v7184
        %v7215 = vadd.f32 %v6572, %v7189
        %v7216 = vadd.f32 %v6573, %v7194
        %v7217 = vadd.f32 %v6574, %v7199
        %v7218 = vadd.f32 %v6575, %v7204
        %v7219 = vadd.f32 %v6576, %v7209
        %7220 = vst.msk [vmem:[%s458] sm:$0xff] %vm469, %v7212
        %7221 = vst.msk [vmem:[%s458 + $0x8] sm:$0xff] %vm469, %v7213
        %7222 = vst.msk [vmem:[%s458 + $0x10] sm:$0xff] %vm469, %v7214
        %7223 = vst.msk [vmem:[%s458 + $0x18] sm:$0xff] %vm469, %v7215
        %7224 = vst.msk [vmem:[%s458 + $0x20] sm:$0xff] %vm469, %v7216
        %7225 = vst.msk [vmem:[%s458 + $0x28] sm:$0xff] %vm469, %v7217
        %7226 = vst.msk [vmem:[%s458 + $0x30] sm:$0xff] %vm469, %v7218
        %7227 = vst.msk [vmem:[%s458 + $0x38] sm:$0xff] %vm469, %v7219
        %s7228 = sand.u32 %s316, 1
        %s7229 = scalar_lea.sflag [#allocation4], %s7228
        %s7230 = sand.u32 %s316, 1
        %s7231 = smul.addr %s7230, 64
        %s7232 = scalar_lea.vmem [#allocation5], %s7231
        // Predicated region
        $region77: #{tpu_custom_call.1} parent=71 // pred_check
          %p7233 = pneg %p326
        $region78: #{tpu_custom_call.1} parent=71 // pred_check_branch
          %7235 = sbr.rel (%p7233) target = $region80
        $region79: #{tpu_custom_call.1} parent=71 // pred_region
          %s7236 = smul.u32 8, %s30
          %s7238 = ssub.s32 1024, 1024
          %7239 = vsyncadd %s7229, %s7238
          %s7240 = smul.addr %s7236, 128
          %s7241 = scalar_lea.hbm %s13, %s7240
          %s7242 = sshll.u32 %s7232, 4
          %s7243 = int_to_ptr.vmem [resolvable:$true] %s7242
          %7248 = dma.vmem_to_hbm [thread:$0]  %s7243, 1024, %s7241, %s7229, 128, 128, 8
        $region80: #{tpu_custom_call.1} parent=71 // pred_fallthru
          _
      $region72: #{tpu_custom_call.1} parent=5 // pred_fallthru
        _
      %p7249 = scmp.le.s32.totalorder 2, %s25
      // Predicated region
      $region81: #{tpu_custom_call.1} parent=5 // pred_check
        %p7250 = pneg %p7249
      $region82: #{tpu_custom_call.1} parent=5 // pred_check_branch
        %7252 = sbr.rel (%p7250) target = $region84
      $region83: #{tpu_custom_call.1} parent=5 // pred_region
        %s7253 = ssub.s32 %s25, 2
        // Predicated region
        $region85: #{tpu_custom_call.1} parent=83 // pred_check
          %p7254 = pneg %p332
        $region86: #{tpu_custom_call.1} parent=83 // pred_check_branch
          %7256 = sbr.rel (%p7254) target = $region88
        $region87: #{tpu_custom_call.1} parent=83 // pred_region
          %s7257 = sand.u32 %s317, 1
          %s7258 = scalar_lea.sflag [#allocation4], %s7257
          %s7259 = sand.u32 %s317, 1
          %s7260 = smul.addr %s7259, 64
          %s7261 = scalar_lea.vmem [#allocation5], %s7260
          %7262 = dma.done %s7258, 1024
        $region88: #{tpu_custom_call.1} parent=83 // pred_fallthru
          _
      $region84: #{tpu_custom_call.1} parent=5 // pred_fallthru
        _
    $region6: #{tpu_custom_call.1} parent=1 // loop_footer
      %s29 = sadd.s32 1, %s25
    $region7: #{tpu_custom_call.1} parent=1 // loop_footer_branch
      %24 = sbr.rel target = $region3
    $region8: #{tpu_custom_call.1} parent=1 // loop_exit
      _
    %7263 = vsyncpa [#allocation3], 1
    %s7264 = scalar_lea.sflag [#allocation3], 1
    %7265 = vsyncpa %s7264, 1
    %7266 = vsyncpa [#allocation4], 1
    %s7267 = scalar_lea.sflag [#allocation4], 1
    %7268 = vsyncpa %s7267, 1

</llo_original>
